<compile_context>
chip_gen: v7x
topology: tpu7x:2x2x1
jax: 0.10.0
libtpu: 0.0.40
codegen_flags: <defaults>
</compile_context>

<pallas_src>
import functools

import jax
import jax.numpy as jnp
from jax.experimental import pallas as pl
from jax.experimental.pallas import tpu as pltpu

_NEG_SLOPE = 0.01   # nn.LeakyReLU() default
_BN_EPS = 1e-5


def _leaky(x):
    return jnp.where(x >= 0.0, x, _NEG_SLOPE * x)


def _const_map(nd):
    return lambda b: (0,) * nd


def _pick_batch_tile(B, max_tile=8):
    """Largest divisor of B that is <= max_tile (keeps blocks exact)."""
    tb = min(B, max_tile)
    while B % tb:
        tb -= 1
    return tb


# ---------------------------------------------------------------------------
# The fused kernel: TB batch samples per grid step, everything in VMEM.
# ---------------------------------------------------------------------------
def _cnn_fused_kernel(x_ref,
                      bw1_ref, b1_ref, a1_ref, c1_ref,
                      bw2_ref, b2_ref, a2_ref, c2_ref,
                      bw3_ref, b3_ref, a3_ref, c3_ref,
                      fw1_ref, fa_ref, fsh_ref, fw2_ref, fb2_ref,
                      o_ref, *, TB, H1, H2, H3, Hp, W, C3):
    # ---- conv1 (2,1)/s(2,1) + LeakyReLU + folded BN: one lane-dense matmul --
    # x lanes are already the two conv1 taps: column = kh*W + w (free reshape
    # in the wrapper), so the whole stage is a single (TB*H1, 2W) @ (2W, W*16).
    x1 = x_ref[...].reshape(TB * H1, 2 * W)
    z1 = jnp.dot(x1, bw1_ref[...], preferred_element_type=jnp.float32)
    y1 = a1_ref[...] * _leaky(z1 + b1_ref[...]) + c1_ref[...]      # (TB*H1, W*16)

    # ---- conv2 (5,1)/s(5,1) + LeakyReLU + folded BN -------------------------
    # Rows h1 = 5*h2 + kh (within each sample; H1 % 5 == 0 keeps groups intact):
    # split the sublane dim and sum 5 block-diagonal matmuls.
    y1r = y1.reshape(TB * H2, 5, W * 16)
    z2 = jnp.dot(y1r[:, 0, :], bw2_ref[0], preferred_element_type=jnp.float32)
    for kh in range(1, 5):
        z2 = z2 + jnp.dot(y1r[:, kh, :], bw2_ref[kh],
                          preferred_element_type=jnp.float32)
    y2 = a2_ref[...] * _leaky(z2 + b2_ref[...]) + c2_ref[...]      # (TB*H2, W*32)

    # ---- conv3 (5,1)/s(5,1) + LeakyReLU + folded BN -------------------------
    y2r = y2.reshape(TB * H3, 5, W * 32)
    z3 = jnp.dot(y2r[:, 0, :], bw3_ref[0], preferred_element_type=jnp.float32)
    for kh in range(1, 5):
        z3 = z3 + jnp.dot(y2r[:, kh, :], bw3_ref[kh],
                          preferred_element_type=jnp.float32)
    y3 = a3_ref[...] * _leaky(z3 + b3_ref[...]) + c3_ref[...]      # (TB*H3, W*16)

    # ---- MaxPool2d((2,1),(2,1)) over H: fused, one jnp.maximum --------------
    y3r = y3.reshape(TB * Hp, 2, W * C3)
    pooled = jnp.maximum(y3r[:, 0, :], y3r[:, 1, :])               # (TB*Hp, W*C3)

    # ---- fc1 as Hp lane-dense taps (no lane-crossing flatten in-kernel) -----
    pr = pooled.reshape(TB, Hp, W * C3)
    h = jnp.dot(pr[:, 0, :], fw1_ref[0], preferred_element_type=jnp.float32)
    for hp in range(1, Hp):
        h = h + jnp.dot(pr[:, hp, :], fw1_ref[hp],
                        preferred_element_type=jnp.float32)
    h = fa_ref[...] * h + fsh_ref[...]                             # folded BN1d + fc1 bias
    # TODO(synk): nn.Dropout(0.5) is identity at inference (no RNG mask).
    logits = jnp.dot(h, fw2_ref[...], preferred_element_type=jnp.float32)
    logits = logits + fb2_ref[...]
    # numerically stable softplus: log(1 + exp(x))
    o_ref[...] = (jnp.maximum(logits, 0.0)
                  + jnp.log1p(jnp.exp(-jnp.abs(logits)))).reshape(o_ref.shape)


# ---------------------------------------------------------------------------
# Forward wrapper: one pallas_call, grid over batch tiles.
# ---------------------------------------------------------------------------
def cnnnet_forward(x, kparams, *, num_classes):
    B, H, W = x.shape
    assert H % 100 == 0, "output_len must be a multiple of 100"
    H1, H2, H3 = H // 2, H // 10, H // 50
    Hp = H3 // 2
    C3 = 16
    TB = _pick_batch_tile(B)

    # Free contiguous reshape: groups the 2 conv1 taps into lanes (kh major).
    x3 = x.reshape(B, H1, 2 * W)

    kernel = functools.partial(_cnn_fused_kernel,
                               TB=TB, H1=H1, H2=H2, H3=H3, Hp=Hp, W=W, C3=C3)

    in_specs = [pl.BlockSpec((TB, H1, 2 * W), lambda b: (b, 0, 0))]
    in_specs += [pl.BlockSpec(p.shape, _const_map(p.ndim)) for p in kparams]

    out = pl.pallas_call(
        kernel,
        out_shape=jax.ShapeDtypeStruct((B, 1, num_classes), jnp.float32),
        grid=(B // TB,),
        in_specs=in_specs,
        out_specs=pl.BlockSpec((TB, 1, num_classes), lambda b: (b, 0, 0)),
        compiler_params=pltpu.CompilerParams(
            dimension_semantics=("parallel",),
            vmem_limit_bytes=32 * 1024 * 1024),
    )(x3, *kparams)
    return out[:, 0, :]


# ---------------------------------------------------------------------------
# Parameters: PyTorch-layout tensors -> one-time kernel-layout preparation.
# ---------------------------------------------------------------------------
def init_torch_like_params(key, num_classes, output_len, output_size):
    """Deterministic random params in PyTorch layouts (eval-mode BN stats)."""
    def conv(k, cout, cin, kh):
        k1, k2, k3, k4, k5, k6 = jax.random.split(k, 6)
        return dict(
            w=0.1 * jax.random.normal(k1, (cout, cin, kh, 1), jnp.float32),
            b=0.1 * jax.random.normal(k2, (cout,), jnp.float32),
            gamma=1.0 + 0.1 * jax.random.normal(k3, (cout,), jnp.float32),
            beta=0.1 * jax.random.normal(k4, (cout,), jnp.float32),
            mean=0.1 * jax.random.normal(k5, (cout,), jnp.float32),
            var=0.5 + jax.random.uniform(k6, (cout,), jnp.float32),
        )

    kc1, kc2, kc3, kf = jax.random.split(key, 4)
    D = 16 * (output_len // 100) * output_size
    kfs = jax.random.split(kf, 8)
    fc = dict(
        w1=0.05 * jax.random.normal(kfs[0], (64, D), jnp.float32),
        b1=0.05 * jax.random.normal(kfs[1], (64,), jnp.float32),
        gamma=1.0 + 0.1 * jax.random.normal(kfs[2], (64,), jnp.float32),
        beta=0.1 * jax.random.normal(kfs[3], (64,), jnp.float32),
        mean=0.1 * jax.random.normal(kfs[4], (64,), jnp.float32),
        var=0.5 + jax.random.uniform(kfs[5], (64,), jnp.float32),
        w2=0.05 * jax.random.normal(kfs[6], (num_classes, 64), jnp.float32),
        b2=0.05 * jax.random.normal(kfs[7], (num_classes,), jnp.float32),
    )
    return dict(conv1=conv(kc1, 16, 1, 2), conv2=conv(kc2, 32, 16, 5),
                conv3=conv(kc3, 16, 32, 5), fc=fc)


def prepare_kernel_params(tp, output_len, output_size):
    """Fold BN, build lane-dense block-diagonal conv weights, permute fc1."""
    W = output_size

    def conv_pack(p, k, cin, cout):
        wt = p["w"][:, :, :, 0]                     # (cout, cin, k)
        dk = jnp.transpose(wt, (2, 1, 0))           # (k, cin, cout)
        eye = jnp.eye(W, dtype=jnp.float32)
        # bw[kh, w*cin+ci, v*cout+co] = wt[co,ci,kh] * (w==v)
        bw = jnp.einsum("wv,kio->kwivo", eye, dk).reshape(k, W * cin, W * cout)
        a = p["gamma"] * jax.lax.rsqrt(p["var"] + _BN_EPS)
        c = p["beta"] - p["mean"] * a
        tile = lambda v: jnp.tile(v, (W,))[None, :]   # lane = w*cout + co
        return bw, tile(p["b"]), tile(a), tile(c)

    bw1, b1, a1, c1 = conv_pack(tp["conv1"], 2, 1, 16)
    bw1 = bw1.reshape(2 * W, W * 16)                # merged taps: rows = kh*W + w
    bw2, b2, a2, c2 = conv_pack(tp["conv2"], 5, 16, 32)
    bw3, b3, a3, c3 = conv_pack(tp["conv3"], 5, 32, 16)

    # fc head: fold BN1d + fc1 bias; permute fc1 rows from torch NCHW-flatten
    # order (c, hp, w) to our NHWC-flatten order (hp, w, c); split into Hp taps
    # so the kernel never has to merge sublanes into lanes.
    fc = tp["fc"]
    C3 = 16
    Hp = output_len // 100
    g = jnp.arange(Hp * W * C3)
    hp, rem = g // (W * C3), g % (W * C3)
    w_idx, c_idx = rem // C3, rem % C3
    f = c_idx * (Hp * W) + hp * W + w_idx
    fw1 = fc["w1"][:, f].T.reshape(Hp, W * C3, 64)  # (Hp, W*C3, 64) kernel order
    a = fc["gamma"] * jax.lax.rsqrt(fc["var"] + _BN_EPS)
    fa = a[None, :]
    fsh = (a * fc["b1"] + fc["beta"] - fc["mean"] * a)[None, :]
    fw2 = fc["w2"].T                                # (64, num_classes)
    fb2 = fc["b2"][None, :]

    return (bw1, b1, a1, c1, bw2, b2, a2, c2, bw3, b3, a3, c3,
            fw1, fa, fsh, fw2, fb2)


# ---------------------------------------------------------------------------
# Pure-JAX reference (mirrors the PyTorch module, eval mode) for validation.
# ---------------------------------------------------------------------------
def cnnnet_reference(x, tp):
    def conv_block(h, p, k):
        B, Cin, H, W = h.shape
        wnd = h.reshape(B, Cin, H // k, k, W)
        z = jnp.einsum("bihkw,oik->bohw", wnd, p["w"][..., 0],
                       precision="highest") + p["b"][None, :, None, None]
        z = jnp.where(z >= 0, z, _NEG_SLOPE * z)
        a = p["gamma"] * jax.lax.rsqrt(p["var"] + _BN_EPS)
        c = p["beta"] - p["mean"] * a
        return a[None, :, None, None] * z + c[None, :, None, None]

    h = x[:, None, :, :]
    h = conv_block(h, tp["conv1"], 2)
    h = conv_block(h, tp["conv2"], 5)
    h = conv_block(h, tp["conv3"], 5)
    B, C, H, W = h.shape
    h = jnp.max(h.reshape(B, C, H // 2, 2, W), axis=3)
    feat = h.reshape(B, -1)
    fc = tp["fc"]
    z = jnp.dot(feat, fc["w1"].T, precision="highest") + fc["b1"]
    a = fc["gamma"] * jax.lax.rsqrt(fc["var"] + _BN_EPS)
    z = a * (z - fc["mean"]) + fc["beta"]
    z = jnp.dot(z, fc["w2"].T, precision="highest") + fc["b2"]
    return jnp.maximum(z, 0.0) + jnp.log1p(jnp.exp(-jnp.abs(z)))


if __name__ == "__main__":
    num_classes, output_len, output_size = 4, 100, 16
    batch = 2

    key = jax.random.PRNGKey(0)
    kx, kp = jax.random.split(key)
    x = jax.random.normal(kx, (batch, output_len, output_size), jnp.float32)

    torch_params = init_torch_like_params(kp, num_classes, output_len, output_size)
    kparams = prepare_kernel_params(torch_params, output_len, output_size)

    fwd = jax.jit(functools.partial(cnnnet_forward, num_classes=num_classes))
    out = jax.block_until_ready(fwd(x, kparams))

    ref = cnnnet_reference(x, torch_params)

    assert out.shape == (batch, num_classes)
    assert bool(jnp.all(jnp.isfinite(out)))
    assert bool(jnp.all(out >= 0.0))          # softplus is non-negative
    assert bool(jnp.allclose(out, ref, atol=5e-2, rtol=5e-2)), (out, ref)
    print("KERNEL_OK")
</pallas_src>

<mosaic_0001>
module attributes {stable_mosaic.version = 11 : i64} {
  func.func @_cnn_fused_kernel(%arg0: i32, %arg1: memref<2x50x32xf32, #tpu.memory_space<vmem>>, %arg2: memref<32x256xf32, #tpu.memory_space<vmem>>, %arg3: memref<1x256xf32, #tpu.memory_space<vmem>>, %arg4: memref<1x256xf32, #tpu.memory_space<vmem>>, %arg5: memref<1x256xf32, #tpu.memory_space<vmem>>, %arg6: memref<5x256x512xf32, #tpu.memory_space<vmem>>, %arg7: memref<1x512xf32, #tpu.memory_space<vmem>>, %arg8: memref<1x512xf32, #tpu.memory_space<vmem>>, %arg9: memref<1x512xf32, #tpu.memory_space<vmem>>, %arg10: memref<5x512x256xf32, #tpu.memory_space<vmem>>, %arg11: memref<1x256xf32, #tpu.memory_space<vmem>>, %arg12: memref<1x256xf32, #tpu.memory_space<vmem>>, %arg13: memref<1x256xf32, #tpu.memory_space<vmem>>, %arg14: memref<1x256x64xf32, #tpu.memory_space<vmem>>, %arg15: memref<1x64xf32, #tpu.memory_space<vmem>>, %arg16: memref<1x64xf32, #tpu.memory_space<vmem>>, %arg17: memref<64x4xf32, #tpu.memory_space<vmem>>, %arg18: memref<1x4xf32, #tpu.memory_space<vmem>>, %arg19: memref<2x1x4xf32, #tpu.memory_space<vmem>>) attributes {dimension_semantics = [#tpu.dimension_semantics<parallel>], iteration_bounds = array<i64: 1>, scalar_prefetch = 0 : i64, scratch_operands = 0 : i64, tpu.core_type = #tpu.core_type<tc>, window_params = [{transform_indices = @transform_0, window_bounds = array<i64: 2, 50, 32>}, {pipeline_mode = #tpu.pipeline_mode<synchronous>, transform_indices = @transform_1, window_bounds = array<i64: 32, 256>}, {pipeline_mode = #tpu.pipeline_mode<synchronous>, transform_indices = @transform_2, window_bounds = array<i64: 1, 256>}, {pipeline_mode = #tpu.pipeline_mode<synchronous>, transform_indices = @transform_3, window_bounds = array<i64: 1, 256>}, {pipeline_mode = #tpu.pipeline_mode<synchronous>, transform_indices = @transform_4, window_bounds = array<i64: 1, 256>}, {pipeline_mode = #tpu.pipeline_mode<synchronous>, transform_indices = @transform_5, window_bounds = array<i64: 5, 256, 512>}, {pipeline_mode = #tpu.pipeline_mode<synchronous>, transform_indices = @transform_6, window_bounds = array<i64: 1, 512>}, {pipeline_mode = #tpu.pipeline_mode<synchronous>, transform_indices = @transform_7, window_bounds = array<i64: 1, 512>}, {pipeline_mode = #tpu.pipeline_mode<synchronous>, transform_indices = @transform_8, window_bounds = array<i64: 1, 512>}, {pipeline_mode = #tpu.pipeline_mode<synchronous>, transform_indices = @transform_9, window_bounds = array<i64: 5, 512, 256>}, {pipeline_mode = #tpu.pipeline_mode<synchronous>, transform_indices = @transform_10, window_bounds = array<i64: 1, 256>}, {pipeline_mode = #tpu.pipeline_mode<synchronous>, transform_indices = @transform_11, window_bounds = array<i64: 1, 256>}, {pipeline_mode = #tpu.pipeline_mode<synchronous>, transform_indices = @transform_12, window_bounds = array<i64: 1, 256>}, {pipeline_mode = #tpu.pipeline_mode<synchronous>, transform_indices = @transform_13, window_bounds = array<i64: 1, 256, 64>}, {pipeline_mode = #tpu.pipeline_mode<synchronous>, transform_indices = @transform_14, window_bounds = array<i64: 1, 64>}, {pipeline_mode = #tpu.pipeline_mode<synchronous>, transform_indices = @transform_15, window_bounds = array<i64: 1, 64>}, {pipeline_mode = #tpu.pipeline_mode<synchronous>, transform_indices = @transform_16, window_bounds = array<i64: 64, 4>}, {pipeline_mode = #tpu.pipeline_mode<synchronous>, transform_indices = @transform_17, window_bounds = array<i64: 1, 4>}, {transform_indices = @transform_18, window_bounds = array<i64: 2, 1, 4>}]} {
    %c0 = arith.constant 0 : index
    %c0_0 = arith.constant 0 : index
    %c0_1 = arith.constant 0 : index
    %0 = vector.load %arg1[%c0, %c0_0, %c0_1] : memref<2x50x32xf32, #tpu.memory_space<vmem>>, vector<2x50x32xf32>
    %1 = vector.shape_cast %0 : vector<2x50x32xf32> to vector<100x32xf32>
    %c0_2 = arith.constant 0 : index
    %c0_3 = arith.constant 0 : index
    %2 = vector.load %arg2[%c0_2, %c0_3] : memref<32x256xf32, #tpu.memory_space<vmem>>, vector<32x256xf32>
    %cst = arith.constant dense<0.000000e+00> : vector<100x256xf32>
    %3 = tpu.matmul %1, %2, %cst {dimension_numbers = #tpu.dot_dimension_numbers<[1], [0], [0], [1], [0, 0, 1, 1], [], []>} : vector<100x32xf32>, vector<32x256xf32>, vector<100x256xf32> -> vector<100x256xf32>
    %c0_4 = arith.constant 0 : index
    %c0_5 = arith.constant 0 : index
    %4 = vector.load %arg4[%c0_4, %c0_5] : memref<1x256xf32, #tpu.memory_space<vmem>>, vector<1x256xf32>
    %c0_6 = arith.constant 0 : index
    %c0_7 = arith.constant 0 : index
    %5 = vector.load %arg3[%c0_6, %c0_7] : memref<1x256xf32, #tpu.memory_space<vmem>>, vector<1x256xf32>
    %6 = vector.broadcast %5 : vector<1x256xf32> to vector<100x256xf32>
    %7 = arith.addf %3, %6 : vector<100x256xf32>
    %cst_8 = arith.constant 0.000000e+00 : f32
    %8 = vector.broadcast %cst_8 : f32 to vector<100x256xf32>
    %9 = arith.cmpf oge, %7, %8 : vector<100x256xf32>
    %cst_9 = arith.constant 0.00999999977 : f32
    %10 = vector.broadcast %cst_9 : f32 to vector<100x256xf32>
    %11 = arith.mulf %10, %7 : vector<100x256xf32>
    %12 = arith.select %9, %7, %11 : vector<100x256xi1>, vector<100x256xf32>
    %13 = vector.broadcast %4 : vector<1x256xf32> to vector<100x256xf32>
    %14 = arith.mulf %13, %12 : vector<100x256xf32>
    %c0_10 = arith.constant 0 : index
    %c0_11 = arith.constant 0 : index
    %15 = vector.load %arg5[%c0_10, %c0_11] : memref<1x256xf32, #tpu.memory_space<vmem>>, vector<1x256xf32>
    %16 = vector.broadcast %15 : vector<1x256xf32> to vector<100x256xf32>
    %17 = arith.addf %14, %16 : vector<100x256xf32>
    %18 = vector.shape_cast %17 : vector<100x256xf32> to vector<20x5x256xf32>
    %19 = vector.extract_strided_slice %18 {offsets = [0, 0, 0], sizes = [20, 1, 256], strides = [1, 1, 1]} : vector<20x5x256xf32> to vector<20x1x256xf32>
    %20 = vector.shape_cast %19 : vector<20x1x256xf32> to vector<20x256xf32>
    %c0_12 = arith.constant 0 : index
    %c0_13 = arith.constant 0 : index
    %c0_14 = arith.constant 0 : index
    %21 = vector.load %arg6[%c0_12, %c0_13, %c0_14] : memref<5x256x512xf32, #tpu.memory_space<vmem>>, vector<1x256x512xf32>
    %22 = vector.shape_cast %21 : vector<1x256x512xf32> to vector<256x512xf32>
    %cst_15 = arith.constant dense<0.000000e+00> : vector<20x512xf32>
    %23 = tpu.matmul %20, %22, %cst_15 {dimension_numbers = #tpu.dot_dimension_numbers<[1], [0], [0], [1], [0, 0, 1, 1], [], []>} : vector<20x256xf32>, vector<256x512xf32>, vector<20x512xf32> -> vector<20x512xf32>
    %24 = vector.extract_strided_slice %18 {offsets = [0, 1, 0], sizes = [20, 1, 256], strides = [1, 1, 1]} : vector<20x5x256xf32> to vector<20x1x256xf32>
    %25 = vector.shape_cast %24 : vector<20x1x256xf32> to vector<20x256xf32>
    %c1 = arith.constant 1 : index
    %c0_16 = arith.constant 0 : index
    %c0_17 = arith.constant 0 : index
    %26 = vector.load %arg6[%c1, %c0_16, %c0_17] : memref<5x256x512xf32, #tpu.memory_space<vmem>>, vector<1x256x512xf32>
    %27 = vector.shape_cast %26 : vector<1x256x512xf32> to vector<256x512xf32>
    %cst_18 = arith.constant dense<0.000000e+00> : vector<20x512xf32>
    %28 = tpu.matmul %25, %27, %cst_18 {dimension_numbers = #tpu.dot_dimension_numbers<[1], [0], [0], [1], [0, 0, 1, 1], [], []>} : vector<20x256xf32>, vector<256x512xf32>, vector<20x512xf32> -> vector<20x512xf32>
    %29 = arith.addf %23, %28 : vector<20x512xf32>
    %30 = vector.extract_strided_slice %18 {offsets = [0, 2, 0], sizes = [20, 1, 256], strides = [1, 1, 1]} : vector<20x5x256xf32> to vector<20x1x256xf32>
    %31 = vector.shape_cast %30 : vector<20x1x256xf32> to vector<20x256xf32>
    %c2 = arith.constant 2 : index
    %c0_19 = arith.constant 0 : index
    %c0_20 = arith.constant 0 : index
    %32 = vector.load %arg6[%c2, %c0_19, %c0_20] : memref<5x256x512xf32, #tpu.memory_space<vmem>>, vector<1x256x512xf32>
    %33 = vector.shape_cast %32 : vector<1x256x512xf32> to vector<256x512xf32>
    %cst_21 = arith.constant dense<0.000000e+00> : vector<20x512xf32>
    %34 = tpu.matmul %31, %33, %cst_21 {dimension_numbers = #tpu.dot_dimension_numbers<[1], [0], [0], [1], [0, 0, 1, 1], [], []>} : vector<20x256xf32>, vector<256x512xf32>, vector<20x512xf32> -> vector<20x512xf32>
    %35 = arith.addf %29, %34 : vector<20x512xf32>
    %36 = vector.extract_strided_slice %18 {offsets = [0, 3, 0], sizes = [20, 1, 256], strides = [1, 1, 1]} : vector<20x5x256xf32> to vector<20x1x256xf32>
    %37 = vector.shape_cast %36 : vector<20x1x256xf32> to vector<20x256xf32>
    %c3 = arith.constant 3 : index
    %c0_22 = arith.constant 0 : index
    %c0_23 = arith.constant 0 : index
    %38 = vector.load %arg6[%c3, %c0_22, %c0_23] : memref<5x256x512xf32, #tpu.memory_space<vmem>>, vector<1x256x512xf32>
    %39 = vector.shape_cast %38 : vector<1x256x512xf32> to vector<256x512xf32>
    %cst_24 = arith.constant dense<0.000000e+00> : vector<20x512xf32>
    %40 = tpu.matmul %37, %39, %cst_24 {dimension_numbers = #tpu.dot_dimension_numbers<[1], [0], [0], [1], [0, 0, 1, 1], [], []>} : vector<20x256xf32>, vector<256x512xf32>, vector<20x512xf32> -> vector<20x512xf32>
    %41 = arith.addf %35, %40 : vector<20x512xf32>
    %42 = vector.extract_strided_slice %18 {offsets = [0, 4, 0], sizes = [20, 1, 256], strides = [1, 1, 1]} : vector<20x5x256xf32> to vector<20x1x256xf32>
    %43 = vector.shape_cast %42 : vector<20x1x256xf32> to vector<20x256xf32>
    %c4 = arith.constant 4 : index
    %c0_25 = arith.constant 0 : index
    %c0_26 = arith.constant 0 : index
    %44 = vector.load %arg6[%c4, %c0_25, %c0_26] : memref<5x256x512xf32, #tpu.memory_space<vmem>>, vector<1x256x512xf32>
    %45 = vector.shape_cast %44 : vector<1x256x512xf32> to vector<256x512xf32>
    %cst_27 = arith.constant dense<0.000000e+00> : vector<20x512xf32>
    %46 = tpu.matmul %43, %45, %cst_27 {dimension_numbers = #tpu.dot_dimension_numbers<[1], [0], [0], [1], [0, 0, 1, 1], [], []>} : vector<20x256xf32>, vector<256x512xf32>, vector<20x512xf32> -> vector<20x512xf32>
    %47 = arith.addf %41, %46 : vector<20x512xf32>
    %c0_28 = arith.constant 0 : index
    %c0_29 = arith.constant 0 : index
    %48 = vector.load %arg8[%c0_28, %c0_29] : memref<1x512xf32, #tpu.memory_space<vmem>>, vector<1x512xf32>
    %c0_30 = arith.constant 0 : index
    %c0_31 = arith.constant 0 : index
    %49 = vector.load %arg7[%c0_30, %c0_31] : memref<1x512xf32, #tpu.memory_space<vmem>>, vector<1x512xf32>
    %50 = vector.broadcast %49 : vector<1x512xf32> to vector<20x512xf32>
    %51 = arith.addf %47, %50 : vector<20x512xf32>
    %cst_32 = arith.constant 0.000000e+00 : f32
    %52 = vector.broadcast %cst_32 : f32 to vector<20x512xf32>
    %53 = arith.cmpf oge, %51, %52 : vector<20x512xf32>
    %cst_33 = arith.constant 0.00999999977 : f32
    %54 = vector.broadcast %cst_33 : f32 to vector<20x512xf32>
    %55 = arith.mulf %54, %51 : vector<20x512xf32>
    %56 = arith.select %53, %51, %55 : vector<20x512xi1>, vector<20x512xf32>
    %57 = vector.broadcast %48 : vector<1x512xf32> to vector<20x512xf32>
    %58 = arith.mulf %57, %56 : vector<20x512xf32>
    %c0_34 = arith.constant 0 : index
    %c0_35 = arith.constant 0 : index
    %59 = vector.load %arg9[%c0_34, %c0_35] : memref<1x512xf32, #tpu.memory_space<vmem>>, vector<1x512xf32>
    %60 = vector.broadcast %59 : vector<1x512xf32> to vector<20x512xf32>
    %61 = arith.addf %58, %60 : vector<20x512xf32>
    %62 = vector.shape_cast %61 : vector<20x512xf32> to vector<4x5x512xf32>
    %63 = vector.extract_strided_slice %62 {offsets = [0, 0, 0], sizes = [4, 1, 512], strides = [1, 1, 1]} : vector<4x5x512xf32> to vector<4x1x512xf32>
    %64 = vector.shape_cast %63 : vector<4x1x512xf32> to vector<4x512xf32>
    %c0_36 = arith.constant 0 : index
    %c0_37 = arith.constant 0 : index
    %c0_38 = arith.constant 0 : index
    %65 = vector.load %arg10[%c0_36, %c0_37, %c0_38] : memref<5x512x256xf32, #tpu.memory_space<vmem>>, vector<1x512x256xf32>
    %66 = vector.shape_cast %65 : vector<1x512x256xf32> to vector<512x256xf32>
    %cst_39 = arith.constant dense<0.000000e+00> : vector<4x256xf32>
    %67 = tpu.matmul %64, %66, %cst_39 {dimension_numbers = #tpu.dot_dimension_numbers<[1], [0], [0], [1], [0, 0, 1, 1], [], []>} : vector<4x512xf32>, vector<512x256xf32>, vector<4x256xf32> -> vector<4x256xf32>
    %68 = vector.extract_strided_slice %62 {offsets = [0, 1, 0], sizes = [4, 1, 512], strides = [1, 1, 1]} : vector<4x5x512xf32> to vector<4x1x512xf32>
    %69 = vector.shape_cast %68 : vector<4x1x512xf32> to vector<4x512xf32>
    %c1_40 = arith.constant 1 : index
    %c0_41 = arith.constant 0 : index
    %c0_42 = arith.constant 0 : index
    %70 = vector.load %arg10[%c1_40, %c0_41, %c0_42] : memref<5x512x256xf32, #tpu.memory_space<vmem>>, vector<1x512x256xf32>
    %71 = vector.shape_cast %70 : vector<1x512x256xf32> to vector<512x256xf32>
    %cst_43 = arith.constant dense<0.000000e+00> : vector<4x256xf32>
    %72 = tpu.matmul %69, %71, %cst_43 {dimension_numbers = #tpu.dot_dimension_numbers<[1], [0], [0], [1], [0, 0, 1, 1], [], []>} : vector<4x512xf32>, vector<512x256xf32>, vector<4x256xf32> -> vector<4x256xf32>
    %73 = arith.addf %67, %72 : vector<4x256xf32>
    %74 = vector.extract_strided_slice %62 {offsets = [0, 2, 0], sizes = [4, 1, 512], strides = [1, 1, 1]} : vector<4x5x512xf32> to vector<4x1x512xf32>
    %75 = vector.shape_cast %74 : vector<4x1x512xf32> to vector<4x512xf32>
    %c2_44 = arith.constant 2 : index
    %c0_45 = arith.constant 0 : index
    %c0_46 = arith.constant 0 : index
    %76 = vector.load %arg10[%c2_44, %c0_45, %c0_46] : memref<5x512x256xf32, #tpu.memory_space<vmem>>, vector<1x512x256xf32>
    %77 = vector.shape_cast %76 : vector<1x512x256xf32> to vector<512x256xf32>
    %cst_47 = arith.constant dense<0.000000e+00> : vector<4x256xf32>
    %78 = tpu.matmul %75, %77, %cst_47 {dimension_numbers = #tpu.dot_dimension_numbers<[1], [0], [0], [1], [0, 0, 1, 1], [], []>} : vector<4x512xf32>, vector<512x256xf32>, vector<4x256xf32> -> vector<4x256xf32>
    %79 = arith.addf %73, %78 : vector<4x256xf32>
    %80 = vector.extract_strided_slice %62 {offsets = [0, 3, 0], sizes = [4, 1, 512], strides = [1, 1, 1]} : vector<4x5x512xf32> to vector<4x1x512xf32>
    %81 = vector.shape_cast %80 : vector<4x1x512xf32> to vector<4x512xf32>
    %c3_48 = arith.constant 3 : index
    %c0_49 = arith.constant 0 : index
    %c0_50 = arith.constant 0 : index
    %82 = vector.load %arg10[%c3_48, %c0_49, %c0_50] : memref<5x512x256xf32, #tpu.memory_space<vmem>>, vector<1x512x256xf32>
    %83 = vector.shape_cast %82 : vector<1x512x256xf32> to vector<512x256xf32>
    %cst_51 = arith.constant dense<0.000000e+00> : vector<4x256xf32>
    %84 = tpu.matmul %81, %83, %cst_51 {dimension_numbers = #tpu.dot_dimension_numbers<[1], [0], [0], [1], [0, 0, 1, 1], [], []>} : vector<4x512xf32>, vector<512x256xf32>, vector<4x256xf32> -> vector<4x256xf32>
    %85 = arith.addf %79, %84 : vector<4x256xf32>
    %86 = vector.extract_strided_slice %62 {offsets = [0, 4, 0], sizes = [4, 1, 512], strides = [1, 1, 1]} : vector<4x5x512xf32> to vector<4x1x512xf32>
    %87 = vector.shape_cast %86 : vector<4x1x512xf32> to vector<4x512xf32>
    %c4_52 = arith.constant 4 : index
    %c0_53 = arith.constant 0 : index
    %c0_54 = arith.constant 0 : index
    %88 = vector.load %arg10[%c4_52, %c0_53, %c0_54] : memref<5x512x256xf32, #tpu.memory_space<vmem>>, vector<1x512x256xf32>
    %89 = vector.shape_cast %88 : vector<1x512x256xf32> to vector<512x256xf32>
    %cst_55 = arith.constant dense<0.000000e+00> : vector<4x256xf32>
    %90 = tpu.matmul %87, %89, %cst_55 {dimension_numbers = #tpu.dot_dimension_numbers<[1], [0], [0], [1], [0, 0, 1, 1], [], []>} : vector<4x512xf32>, vector<512x256xf32>, vector<4x256xf32> -> vector<4x256xf32>
    %91 = arith.addf %85, %90 : vector<4x256xf32>
    %c0_56 = arith.constant 0 : index
    %c0_57 = arith.constant 0 : index
    %92 = vector.load %arg12[%c0_56, %c0_57] : memref<1x256xf32, #tpu.memory_space<vmem>>, vector<1x256xf32>
    %c0_58 = arith.constant 0 : index
    %c0_59 = arith.constant 0 : index
    %93 = vector.load %arg11[%c0_58, %c0_59] : memref<1x256xf32, #tpu.memory_space<vmem>>, vector<1x256xf32>
    %94 = vector.broadcast %93 : vector<1x256xf32> to vector<4x256xf32>
    %95 = arith.addf %91, %94 : vector<4x256xf32>
    %cst_60 = arith.constant 0.000000e+00 : f32
    %96 = vector.broadcast %cst_60 : f32 to vector<4x256xf32>
    %97 = arith.cmpf oge, %95, %96 : vector<4x256xf32>
    %cst_61 = arith.constant 0.00999999977 : f32
    %98 = vector.broadcast %cst_61 : f32 to vector<4x256xf32>
    %99 = arith.mulf %98, %95 : vector<4x256xf32>
    %100 = arith.select %97, %95, %99 : vector<4x256xi1>, vector<4x256xf32>
    %101 = vector.broadcast %92 : vector<1x256xf32> to vector<4x256xf32>
    %102 = arith.mulf %101, %100 : vector<4x256xf32>
    %c0_62 = arith.constant 0 : index
    %c0_63 = arith.constant 0 : index
    %103 = vector.load %arg13[%c0_62, %c0_63] : memref<1x256xf32, #tpu.memory_space<vmem>>, vector<1x256xf32>
    %104 = vector.broadcast %103 : vector<1x256xf32> to vector<4x256xf32>
    %105 = arith.addf %102, %104 : vector<4x256xf32>
    %106 = vector.shape_cast %105 : vector<4x256xf32> to vector<2x2x256xf32>
    %107 = vector.extract_strided_slice %106 {offsets = [0, 0, 0], sizes = [2, 1, 256], strides = [1, 1, 1]} : vector<2x2x256xf32> to vector<2x1x256xf32>
    %108 = vector.shape_cast %107 : vector<2x1x256xf32> to vector<2x256xf32>
    %109 = vector.extract_strided_slice %106 {offsets = [0, 1, 0], sizes = [2, 1, 256], strides = [1, 1, 1]} : vector<2x2x256xf32> to vector<2x1x256xf32>
    %110 = vector.shape_cast %109 : vector<2x1x256xf32> to vector<2x256xf32>
    %111 = arith.maximumf %108, %110 : vector<2x256xf32>
    %112 = vector.shape_cast %111 : vector<2x256xf32> to vector<2x1x256xf32>
    %113 = vector.shape_cast %112 : vector<2x1x256xf32> to vector<2x256xf32>
    %c0_64 = arith.constant 0 : index
    %c0_65 = arith.constant 0 : index
    %c0_66 = arith.constant 0 : index
    %114 = vector.load %arg14[%c0_64, %c0_65, %c0_66] : memref<1x256x64xf32, #tpu.memory_space<vmem>>, vector<1x256x64xf32>
    %115 = vector.shape_cast %114 : vector<1x256x64xf32> to vector<256x64xf32>
    %cst_67 = arith.constant dense<0.000000e+00> : vector<2x64xf32>
    %116 = tpu.matmul %113, %115, %cst_67 {dimension_numbers = #tpu.dot_dimension_numbers<[1], [0], [0], [1], [0, 0, 1, 1], [], []>} : vector<2x256xf32>, vector<256x64xf32>, vector<2x64xf32> -> vector<2x64xf32>
    %c0_68 = arith.constant 0 : index
    %c0_69 = arith.constant 0 : index
    %117 = vector.load %arg15[%c0_68, %c0_69] : memref<1x64xf32, #tpu.memory_space<vmem>>, vector<1x64xf32>
    %118 = vector.broadcast %117 : vector<1x64xf32> to vector<2x64xf32>
    %119 = arith.mulf %118, %116 : vector<2x64xf32>
    %c0_70 = arith.constant 0 : index
    %c0_71 = arith.constant 0 : index
    %120 = vector.load %arg16[%c0_70, %c0_71] : memref<1x64xf32, #tpu.memory_space<vmem>>, vector<1x64xf32>
    %121 = vector.broadcast %120 : vector<1x64xf32> to vector<2x64xf32>
    %122 = arith.addf %119, %121 : vector<2x64xf32>
    %c0_72 = arith.constant 0 : index
    %c0_73 = arith.constant 0 : index
    %123 = vector.load %arg17[%c0_72, %c0_73] : memref<64x4xf32, #tpu.memory_space<vmem>>, vector<64x4xf32>
    %cst_74 = arith.constant dense<0.000000e+00> : vector<2x4xf32>
    %124 = tpu.matmul %122, %123, %cst_74 {dimension_numbers = #tpu.dot_dimension_numbers<[1], [0], [0], [1], [0, 0, 1, 1], [], []>} : vector<2x64xf32>, vector<64x4xf32>, vector<2x4xf32> -> vector<2x4xf32>
    %c0_75 = arith.constant 0 : index
    %c0_76 = arith.constant 0 : index
    %125 = vector.load %arg18[%c0_75, %c0_76] : memref<1x4xf32, #tpu.memory_space<vmem>>, vector<1x4xf32>
    %126 = vector.broadcast %125 : vector<1x4xf32> to vector<2x4xf32>
    %127 = arith.addf %124, %126 : vector<2x4xf32>
    %cst_77 = arith.constant 0.000000e+00 : f32
    %128 = vector.broadcast %cst_77 : f32 to vector<2x4xf32>
    %129 = arith.maximumf %127, %128 : vector<2x4xf32>
    %130 = math.absf %127 : vector<2x4xf32>
    %cst_78 = arith.constant 0.000000e+00 : f32
    %131 = vector.broadcast %cst_78 : f32 to vector<2x4xf32>
    %132 = arith.subf %131, %130 : vector<2x4xf32>
    %133 = math.exp %132 : vector<2x4xf32>
    %134 = math.log1p %133 : vector<2x4xf32>
    %135 = arith.addf %129, %134 : vector<2x4xf32>
    %136 = vector.shape_cast %135 : vector<2x4xf32> to vector<2x1x4xf32>
    %c0_79 = arith.constant 0 : index
    %c0_80 = arith.constant 0 : index
    %c0_81 = arith.constant 0 : index
    %137 = vector.load %arg19[%c0_79, %c0_80, %c0_81] : memref<2x1x4xf32, #tpu.memory_space<vmem>>, vector<2x1x4xf32>
    tpu.vector_store %arg19[%c0_79, %c0_80, %c0_81], %136 {strides = array<i32>} : memref<2x1x4xf32, #tpu.memory_space<vmem>>, vector<2x1x4xf32>,
    return
  }
  func.func @transform_0(%arg0: i32) -> (i32, i32, i32) {
    %c0_i32 = arith.constant 0 : i32
    %c0_i32_0 = arith.constant 0 : i32
    %c0_i32_1 = arith.constant 0 : i32
    return %arg0, %c0_i32, %c0_i32_0 : i32, i32, i32
  }
  func.func @transform_1(%arg0: i32) -> (i32, i32) {
    %c0_i32 = arith.constant 0 : i32
    %c0_i32_0 = arith.constant 0 : i32
    %c0_i32_1 = arith.constant 0 : i32
    return %c0_i32, %c0_i32_0 : i32, i32
  }
  func.func @transform_2(%arg0: i32) -> (i32, i32) {
    %c0_i32 = arith.constant 0 : i32
    %c0_i32_0 = arith.constant 0 : i32
    %c0_i32_1 = arith.constant 0 : i32
    return %c0_i32, %c0_i32_0 : i32, i32
  }
  func.func @transform_3(%arg0: i32) -> (i32, i32) {
    %c0_i32 = arith.constant 0 : i32
    %c0_i32_0 = arith.constant 0 : i32
    %c0_i32_1 = arith.constant 0 : i32
    return %c0_i32, %c0_i32_0 : i32, i32
  }
  func.func @transform_4(%arg0: i32) -> (i32, i32) {
    %c0_i32 = arith.constant 0 : i32
    %c0_i32_0 = arith.constant 0 : i32
    %c0_i32_1 = arith.constant 0 : i32
    return %c0_i32, %c0_i32_0 : i32, i32
  }
  func.func @transform_5(%arg0: i32) -> (i32, i32, i32) {
    %c0_i32 = arith.constant 0 : i32
    %c0_i32_0 = arith.constant 0 : i32
    %c0_i32_1 = arith.constant 0 : i32
    %c0_i32_2 = arith.constant 0 : i32
    return %c0_i32, %c0_i32_0, %c0_i32_1 : i32, i32, i32
  }
  func.func @transform_6(%arg0: i32) -> (i32, i32) {
    %c0_i32 = arith.constant 0 : i32
    %c0_i32_0 = arith.constant 0 : i32
    %c0_i32_1 = arith.constant 0 : i32
    return %c0_i32, %c0_i32_0 : i32, i32
  }
  func.func @transform_7(%arg0: i32) -> (i32, i32) {
    %c0_i32 = arith.constant 0 : i32
    %c0_i32_0 = arith.constant 0 : i32
    %c0_i32_1 = arith.constant 0 : i32
    return %c0_i32, %c0_i32_0 : i32, i32
  }
  func.func @transform_8(%arg0: i32) -> (i32, i32) {
    %c0_i32 = arith.constant 0 : i32
    %c0_i32_0 = arith.constant 0 : i32
    %c0_i32_1 = arith.constant 0 : i32
    return %c0_i32, %c0_i32_0 : i32, i32
  }
  func.func @transform_9(%arg0: i32) -> (i32, i32, i32) {
    %c0_i32 = arith.constant 0 : i32
    %c0_i32_0 = arith.constant 0 : i32
    %c0_i32_1 = arith.constant 0 : i32
    %c0_i32_2 = arith.constant 0 : i32
    return %c0_i32, %c0_i32_0, %c0_i32_1 : i32, i32, i32
  }
  func.func @transform_10(%arg0: i32) -> (i32, i32) {
    %c0_i32 = arith.constant 0 : i32
    %c0_i32_0 = arith.constant 0 : i32
    %c0_i32_1 = arith.constant 0 : i32
    return %c0_i32, %c0_i32_0 : i32, i32
  }
  func.func @transform_11(%arg0: i32) -> (i32, i32) {
    %c0_i32 = arith.constant 0 : i32
    %c0_i32_0 = arith.constant 0 : i32
    %c0_i32_1 = arith.constant 0 : i32
    return %c0_i32, %c0_i32_0 : i32, i32
  }
  func.func @transform_12(%arg0: i32) -> (i32, i32) {
    %c0_i32 = arith.constant 0 : i32
    %c0_i32_0 = arith.constant 0 : i32
    %c0_i32_1 = arith.constant 0 : i32
    return %c0_i32, %c0_i32_0 : i32, i32
  }
  func.func @transform_13(%arg0: i32) -> (i32, i32, i32) {
    %c0_i32 = arith.constant 0 : i32
    %c0_i32_0 = arith.constant 0 : i32
    %c0_i32_1 = arith.constant 0 : i32
    %c0_i32_2 = arith.constant 0 : i32
    return %c0_i32, %c0_i32_0, %c0_i32_1 : i32, i32, i32
  }
  func.func @transform_14(%arg0: i32) -> (i32, i32) {
    %c0_i32 = arith.constant 0 : i32
    %c0_i32_0 = arith.constant 0 : i32
    %c0_i32_1 = arith.constant 0 : i32
    return %c0_i32, %c0_i32_0 : i32, i32
  }
  func.func @transform_15(%arg0: i32) -> (i32, i32) {
    %c0_i32 = arith.constant 0 : i32
    %c0_i32_0 = arith.constant 0 : i32
    %c0_i32_1 = arith.constant 0 : i32
    return %c0_i32, %c0_i32_0 : i32, i32
  }
  func.func @transform_16(%arg0: i32) -> (i32, i32) {
    %c0_i32 = arith.constant 0 : i32
    %c0_i32_0 = arith.constant 0 : i32
    %c0_i32_1 = arith.constant 0 : i32
    return %c0_i32, %c0_i32_0 : i32, i32
  }
  func.func @transform_17(%arg0: i32) -> (i32, i32) {
    %c0_i32 = arith.constant 0 : i32
    %c0_i32_0 = arith.constant 0 : i32
    %c0_i32_1 = arith.constant 0 : i32
    return %c0_i32, %c0_i32_0 : i32, i32
  }
  func.func @transform_18(%arg0: i32) -> (i32, i32, i32) {
    %c0_i32 = arith.constant 0 : i32
    %c0_i32_0 = arith.constant 0 : i32
    %c0_i32_1 = arith.constant 0 : i32
    return %arg0, %c0_i32, %c0_i32_0 : i32, i32, i32
  }
}

</mosaic_0001>

<llo_original>
// kernel: cnnnet_forward.1
$region0: #{cnnnet_forward.1}
  #allocation0 [shape = 'u32[]', space=smem, size = 0x4, offset = 0x4, fixed_abs, tag = 'smem constant byte address 0x4 - core index']
  #allocation1 [shape = 'u32[144,128]{1,0:T(1,128)}', space=vmem, size = 0x12000, scoped, tag = 'internal scratch']
  %s0 = inlined_call_operand.vmem [shape: f32[2,50,32], index: 0, kind: input, shape index: {}]
  %s1 = inlined_call_operand.hbm [shape: f32[32,256], index: 1, kind: input, shape index: {}]
  %s2 = inlined_call_operand.hbm [shape: f32[1,256], index: 2, kind: input, shape index: {}]
  %s3 = inlined_call_operand.hbm [shape: f32[1,256], index: 3, kind: input, shape index: {}]
  %s4 = inlined_call_operand.hbm [shape: f32[1,256], index: 4, kind: input, shape index: {}]
  %s5 = inlined_call_operand.hbm [shape: f32[5,256,512], index: 5, kind: input, shape index: {}]
  %s6 = inlined_call_operand.hbm [shape: f32[1,512], index: 6, kind: input, shape index: {}]
  %s7 = inlined_call_operand.hbm [shape: f32[1,512], index: 7, kind: input, shape index: {}]
  %s8 = inlined_call_operand.hbm [shape: f32[1,512], index: 8, kind: input, shape index: {}]
  %s9 = inlined_call_operand.hbm [shape: f32[5,512,256], index: 9, kind: input, shape index: {}]
  %s10 = inlined_call_operand.hbm [shape: f32[1,256], index: 10, kind: input, shape index: {}]
  %s11 = inlined_call_operand.hbm [shape: f32[1,256], index: 11, kind: input, shape index: {}]
  %s12 = inlined_call_operand.hbm [shape: f32[1,256], index: 12, kind: input, shape index: {}]
  %s13 = inlined_call_operand.vmem [shape: f32[1,256,64], index: 13, kind: input, shape index: {}]
  %s14 = inlined_call_operand.hbm [shape: f32[1,64], index: 14, kind: input, shape index: {}]
  %s15 = inlined_call_operand.hbm [shape: f32[1,64], index: 15, kind: input, shape index: {}]
  %s16 = inlined_call_operand.vmem [shape: f32[64,4], index: 16, kind: input, shape index: {}]
  %s17 = inlined_call_operand.hbm [shape: f32[1,4], index: 17, kind: input, shape index: {}]
  %s18 = inlined_call_operand.hbm [shape: f32[2,1,4], index: 18, kind: output, shape index: {}]
  %s19 = sld [smem:[#allocation0]]
  $region142: #{cnnnet_forward.1} parent=0
    _
  %s21 = ssub.s32 1, %s19
  %s22 = scalar_select 0, %s21, %s19
  $region1: #{cnnnet_forward.1} parent=0
    #allocation2 [shape = 'u8[32768]{0}', space=vmem, size = 0x8000, scoped, tag = 'input window, operand 1, single buffered']
    #allocation3 [shape = 's32[1]{0}', space=sflag, size = 0x4, scoped, tag = 'scoped memory for cnnnet_forward.1']
    #allocation4 [shape = 's32[1]{0}', space=sflag, size = 0x4, scoped, tag = 'scoped memory for cnnnet_forward.1']
    #allocation5 [shape = 'u8[1024]{0}', space=vmem, size = 0x400, scoped, tag = 'input window, operand 2, single buffered']
    #allocation6 [shape = 's32[1]{0}', space=sflag, size = 0x4, scoped, tag = 'scoped memory for cnnnet_forward.1']
    #allocation7 [shape = 'u8[1024]{0}', space=vmem, size = 0x400, scoped, tag = 'input window, operand 3, single buffered']
    #allocation8 [shape = 'u8[1024]{0}', space=vmem, size = 0x400, scoped, tag = 'input window, operand 4, single buffered']
    #allocation9 [shape = 's32[1]{0}', space=sflag, size = 0x4, scoped, tag = 'scoped memory for cnnnet_forward.1']
    #allocation10 [shape = 'u8[2621440]{0}', space=vmem, size = 0x280000, scoped, tag = 'input window, operand 5, single buffered']
    #allocation11 [shape = 'u8[2048]{0}', space=vmem, size = 0x800, scoped, tag = 'input window, operand 6, single buffered']
    #allocation12 [shape = 's32[1]{0}', space=sflag, size = 0x4, scoped, tag = 'scoped memory for cnnnet_forward.1']
    #allocation13 [shape = 'u8[2048]{0}', space=vmem, size = 0x800, scoped, tag = 'input window, operand 7, single buffered']
    #allocation14 [shape = 'u8[2048]{0}', space=vmem, size = 0x800, scoped, tag = 'input window, operand 8, single buffered']
    #allocation15 [shape = 's32[1]{0}', space=sflag, size = 0x4, scoped, tag = 'scoped memory for cnnnet_forward.1']
    #allocation16 [shape = 'u8[2621440]{0}', space=vmem, size = 0x280000, scoped, tag = 'input window, operand 9, single buffered']
    #allocation17 [shape = 'u8[1024]{0}', space=vmem, size = 0x400, scoped, tag = 'input window, operand 10, single buffered']
    #allocation18 [shape = 's32[1]{0}', space=sflag, size = 0x4, scoped, tag = 'scoped memory for cnnnet_forward.1']
    #allocation19 [shape = 'u8[1024]{0}', space=vmem, size = 0x400, scoped, tag = 'input window, operand 11, single buffered']
    #allocation20 [shape = 'u8[1024]{0}', space=vmem, size = 0x400, scoped, tag = 'input window, operand 12, single buffered']
    #allocation21 [shape = 's32[1]{0}', space=sflag, size = 0x4, scoped, tag = 'scoped memory for cnnnet_forward.1']
    #allocation22 [shape = 'u8[512]{0}', space=vmem, size = 0x400, scoped, tag = 'input window, operand 14, single buffered']
    #allocation23 [shape = 'u8[512]{0}', space=vmem, size = 0x400, scoped, tag = 'input window, operand 15, single buffered']
    #allocation24 [shape = 's32[1]{0}', space=sflag, size = 0x4, scoped, tag = 'scoped memory for cnnnet_forward.1']
    #allocation25 [shape = 'u8[512]{0}', space=vmem, size = 0x400, scoped, tag = 'input window, operand 17, single buffered']
    #allocation26 [shape = 'u8[1024]{0}', space=vmem, size = 0x400, scoped, tag = 'output window, operand 0, single buffered']
    %23 = vsyncpa [#allocation3], 0
    %24 = vsyncpa [#allocation6], 0
    %25 = vsyncpa [#allocation9], 0
    %26 = vsyncpa [#allocation12], 0
    %27 = vsyncpa [#allocation15], 0
    %28 = vsyncpa [#allocation18], 0
    %29 = vsyncpa [#allocation21], 0
    %30 = vsyncpa [#allocation24], 0
    %31 = vsyncpa [#allocation4], 0
    // Predicated region
    $region2: #{cnnnet_forward.1} parent=1 // pred_check
      _
    $region3: #{cnnnet_forward.1} parent=1 // pred_check_branch
      %33 = sbr.rel (0) target = $region5
    $region4: #{cnnnet_forward.1} parent=1 // pred_region
      _
    $region5: #{cnnnet_forward.1} parent=1 // pred_fallthru
      _
    // Predicated region
    $region6: #{cnnnet_forward.1} parent=1 // pred_check
      _
    $region7: #{cnnnet_forward.1} parent=1 // pred_check_branch
      %35 = sbr.rel (0) target = $region9
    $region8: #{cnnnet_forward.1} parent=1 // pred_region
      %s37 = ssub.s32 1024, 1024
      %38 = vsyncadd [#allocation3], %s37
      %s39 = sshll.u32 [#allocation2], 4
      %s40 = int_to_ptr.vmem [resolvable:$true] %s39
      %45 = dma.hbm_to_vmem [thread:$0]  %s1, 1024, %s40, [#allocation3], 256, 256, 16
    $region9: #{cnnnet_forward.1} parent=1 // pred_fallthru
      _
    // Predicated region
    $region10: #{cnnnet_forward.1} parent=1 // pred_check
      _
    $region11: #{cnnnet_forward.1} parent=1 // pred_check_branch
      %47 = sbr.rel (0) target = $region13
    $region12: #{cnnnet_forward.1} parent=1 // pred_region
      %s49 = ssub.s32 32, 32
      %50 = vsyncadd [#allocation6], %s49
      %s52 = sshll.u32 [#allocation5], 4
      %s53 = int_to_ptr.vmem [resolvable:$true] %s52
      %55 = dma.hbm_to_vmem [thread:$0]  %s2, 32, %s53, [#allocation6]
    $region13: #{cnnnet_forward.1} parent=1 // pred_fallthru
      _
    // Predicated region
    $region14: #{cnnnet_forward.1} parent=1 // pred_check
      _
    $region15: #{cnnnet_forward.1} parent=1 // pred_check_branch
      %57 = sbr.rel (0) target = $region17
    $region16: #{cnnnet_forward.1} parent=1 // pred_region
      %s59 = ssub.s32 32, 32
      %60 = vsyncadd [#allocation6], %s59
      %s62 = sshll.u32 [#allocation7], 4
      %s63 = int_to_ptr.vmem [resolvable:$true] %s62
      %65 = dma.hbm_to_vmem [thread:$0]  %s3, 32, %s63, [#allocation6]
    $region17: #{cnnnet_forward.1} parent=1 // pred_fallthru
      _
    // Predicated region
    $region18: #{cnnnet_forward.1} parent=1 // pred_check
      _
    $region19: #{cnnnet_forward.1} parent=1 // pred_check_branch
      %67 = sbr.rel (0) target = $region21
    $region20: #{cnnnet_forward.1} parent=1 // pred_region
      %s69 = ssub.s32 32, 32
      %70 = vsyncadd [#allocation9], %s69
      %s72 = sshll.u32 [#allocation8], 4
      %s73 = int_to_ptr.vmem [resolvable:$true] %s72
      %75 = dma.hbm_to_vmem [thread:$0]  %s4, 32, %s73, [#allocation9]
    $region21: #{cnnnet_forward.1} parent=1 // pred_fallthru
      _
    // Predicated region
    $region22: #{cnnnet_forward.1} parent=1 // pred_check
      _
    $region23: #{cnnnet_forward.1} parent=1 // pred_check_branch
      %77 = sbr.rel (0) target = $region25
    $region24: #{cnnnet_forward.1} parent=1 // pred_region
      %s79 = ssub.s32 81920, 81920
      %80 = vsyncadd [#allocation9], %s79
      %s81 = sshll.u32 [#allocation10], 4
      %s82 = int_to_ptr.vmem [resolvable:$true] %s81
      %87 = dma.hbm_to_vmem [thread:$0]  %s5, 81920, %s82, [#allocation9], 512, 512, 32
    $region25: #{cnnnet_forward.1} parent=1 // pred_fallthru
      _
    // Predicated region
    $region26: #{cnnnet_forward.1} parent=1 // pred_check
      _
    $region27: #{cnnnet_forward.1} parent=1 // pred_check_branch
      %89 = sbr.rel (0) target = $region29
    $region28: #{cnnnet_forward.1} parent=1 // pred_region
      %s91 = ssub.s32 64, 64
      %92 = vsyncadd [#allocation12], %s91
      %s94 = sshll.u32 [#allocation11], 4
      %s95 = int_to_ptr.vmem [resolvable:$true] %s94
      %97 = dma.hbm_to_vmem [thread:$0]  %s6, 64, %s95, [#allocation12]
    $region29: #{cnnnet_forward.1} parent=1 // pred_fallthru
      _
    // Predicated region
    $region30: #{cnnnet_forward.1} parent=1 // pred_check
      _
    $region31: #{cnnnet_forward.1} parent=1 // pred_check_branch
      %99 = sbr.rel (0) target = $region33
    $region32: #{cnnnet_forward.1} parent=1 // pred_region
      %s101 = ssub.s32 64, 64
      %102 = vsyncadd [#allocation12], %s101
      %s104 = sshll.u32 [#allocation13], 4
      %s105 = int_to_ptr.vmem [resolvable:$true] %s104
      %107 = dma.hbm_to_vmem [thread:$0]  %s7, 64, %s105, [#allocation12]
    $region33: #{cnnnet_forward.1} parent=1 // pred_fallthru
      _
    // Predicated region
    $region34: #{cnnnet_forward.1} parent=1 // pred_check
      _
    $region35: #{cnnnet_forward.1} parent=1 // pred_check_branch
      %109 = sbr.rel (0) target = $region37
    $region36: #{cnnnet_forward.1} parent=1 // pred_region
      %s111 = ssub.s32 64, 64
      %112 = vsyncadd [#allocation15], %s111
      %s114 = sshll.u32 [#allocation14], 4
      %s115 = int_to_ptr.vmem [resolvable:$true] %s114
      %117 = dma.hbm_to_vmem [thread:$0]  %s8, 64, %s115, [#allocation15]
    $region37: #{cnnnet_forward.1} parent=1 // pred_fallthru
      _
    // Predicated region
    $region38: #{cnnnet_forward.1} parent=1 // pred_check
      _
    $region39: #{cnnnet_forward.1} parent=1 // pred_check_branch
      %119 = sbr.rel (0) target = $region41
    $region40: #{cnnnet_forward.1} parent=1 // pred_region
      %s121 = ssub.s32 81920, 81920
      %122 = vsyncadd [#allocation15], %s121
      %s123 = sshll.u32 [#allocation16], 4
      %s124 = int_to_ptr.vmem [resolvable:$true] %s123
      %129 = dma.hbm_to_vmem [thread:$0]  %s9, 81920, %s124, [#allocation15], 256, 256, 16
    $region41: #{cnnnet_forward.1} parent=1 // pred_fallthru
      _
    // Predicated region
    $region42: #{cnnnet_forward.1} parent=1 // pred_check
      _
    $region43: #{cnnnet_forward.1} parent=1 // pred_check_branch
      %131 = sbr.rel (0) target = $region45
    $region44: #{cnnnet_forward.1} parent=1 // pred_region
      %s133 = ssub.s32 32, 32
      %134 = vsyncadd [#allocation18], %s133
      %s136 = sshll.u32 [#allocation17], 4
      %s137 = int_to_ptr.vmem [resolvable:$true] %s136
      %139 = dma.hbm_to_vmem [thread:$0]  %s10, 32, %s137, [#allocation18]
    $region45: #{cnnnet_forward.1} parent=1 // pred_fallthru
      _
    // Predicated region
    $region46: #{cnnnet_forward.1} parent=1 // pred_check
      _
    $region47: #{cnnnet_forward.1} parent=1 // pred_check_branch
      %141 = sbr.rel (0) target = $region49
    $region48: #{cnnnet_forward.1} parent=1 // pred_region
      %s143 = ssub.s32 32, 32
      %144 = vsyncadd [#allocation18], %s143
      %s146 = sshll.u32 [#allocation19], 4
      %s147 = int_to_ptr.vmem [resolvable:$true] %s146
      %149 = dma.hbm_to_vmem [thread:$0]  %s11, 32, %s147, [#allocation18]
    $region49: #{cnnnet_forward.1} parent=1 // pred_fallthru
      _
    // Predicated region
    $region50: #{cnnnet_forward.1} parent=1 // pred_check
      _
    $region51: #{cnnnet_forward.1} parent=1 // pred_check_branch
      %151 = sbr.rel (0) target = $region53
    $region52: #{cnnnet_forward.1} parent=1 // pred_region
      %s153 = ssub.s32 32, 32
      %154 = vsyncadd [#allocation21], %s153
      %s156 = sshll.u32 [#allocation20], 4
      %s157 = int_to_ptr.vmem [resolvable:$true] %s156
      %159 = dma.hbm_to_vmem [thread:$0]  %s12, 32, %s157, [#allocation21]
    $region53: #{cnnnet_forward.1} parent=1 // pred_fallthru
      _
    // Predicated region
    $region54: #{cnnnet_forward.1} parent=1 // pred_check
      _
    $region55: #{cnnnet_forward.1} parent=1 // pred_check_branch
      %161 = sbr.rel (0) target = $region57
    $region56: #{cnnnet_forward.1} parent=1 // pred_region
      _
    $region57: #{cnnnet_forward.1} parent=1 // pred_fallthru
      _
    // Predicated region
    $region58: #{cnnnet_forward.1} parent=1 // pred_check
      _
    $region59: #{cnnnet_forward.1} parent=1 // pred_check_branch
      %163 = sbr.rel (0) target = $region61
    $region60: #{cnnnet_forward.1} parent=1 // pred_region
      %s165 = ssub.s32 16, 16
      %166 = vsyncadd [#allocation21], %s165
      %s168 = sshll.u32 [#allocation22], 4
      %s169 = int_to_ptr.vmem [resolvable:$true] %s168
      %171 = dma.hbm_to_vmem [thread:$0]  %s14, 16, %s169, [#allocation21]
    $region61: #{cnnnet_forward.1} parent=1 // pred_fallthru
      _
    // Predicated region
    $region62: #{cnnnet_forward.1} parent=1 // pred_check
      _
    $region63: #{cnnnet_forward.1} parent=1 // pred_check_branch
      %173 = sbr.rel (0) target = $region65
    $region64: #{cnnnet_forward.1} parent=1 // pred_region
      %s175 = ssub.s32 16, 16
      %176 = vsyncadd [#allocation24], %s175
      %s178 = sshll.u32 [#allocation23], 4
      %s179 = int_to_ptr.vmem [resolvable:$true] %s178
      %181 = dma.hbm_to_vmem [thread:$0]  %s15, 16, %s179, [#allocation24]
    $region65: #{cnnnet_forward.1} parent=1 // pred_fallthru
      _
    // Predicated region
    $region66: #{cnnnet_forward.1} parent=1 // pred_check
      _
    $region67: #{cnnnet_forward.1} parent=1 // pred_check_branch
      %183 = sbr.rel (0) target = $region69
    $region68: #{cnnnet_forward.1} parent=1 // pred_region
      _
    $region69: #{cnnnet_forward.1} parent=1 // pred_fallthru
      _
    // Predicated region
    $region70: #{cnnnet_forward.1} parent=1 // pred_check
      _
    $region71: #{cnnnet_forward.1} parent=1 // pred_check_branch
      %185 = sbr.rel (0) target = $region73
    $region72: #{cnnnet_forward.1} parent=1 // pred_region
      %s187 = ssub.s32 16, 16
      %188 = vsyncadd [#allocation24], %s187
      %s190 = sshll.u32 [#allocation25], 4
      %s191 = int_to_ptr.vmem [resolvable:$true] %s190
      %193 = dma.hbm_to_vmem [thread:$0]  %s17, 16, %s191, [#allocation24]
    $region73: #{cnnnet_forward.1} parent=1 // pred_fallthru
      _
    // Predicated region
    $region74: #{cnnnet_forward.1} parent=1 // pred_check
      _
    $region75: #{cnnnet_forward.1} parent=1 // pred_check_branch
      %195 = sbr.rel (0) target = $region77
    $region76: #{cnnnet_forward.1} parent=1 // pred_region
      %196 = dma.done [#allocation3], 1024
    $region77: #{cnnnet_forward.1} parent=1 // pred_fallthru
      _
    // Predicated region
    $region78: #{cnnnet_forward.1} parent=1 // pred_check
      _
    $region79: #{cnnnet_forward.1} parent=1 // pred_check_branch
      %198 = sbr.rel (0) target = $region81
    $region80: #{cnnnet_forward.1} parent=1 // pred_region
      %199 = dma.done [#allocation6], 32
    $region81: #{cnnnet_forward.1} parent=1 // pred_fallthru
      _
    // Predicated region
    $region82: #{cnnnet_forward.1} parent=1 // pred_check
      _
    $region83: #{cnnnet_forward.1} parent=1 // pred_check_branch
      %201 = sbr.rel (0) target = $region85
    $region84: #{cnnnet_forward.1} parent=1 // pred_region
      %202 = dma.done [#allocation6], 32
    $region85: #{cnnnet_forward.1} parent=1 // pred_fallthru
      _
    // Predicated region
    $region86: #{cnnnet_forward.1} parent=1 // pred_check
      _
    $region87: #{cnnnet_forward.1} parent=1 // pred_check_branch
      %204 = sbr.rel (0) target = $region89
    $region88: #{cnnnet_forward.1} parent=1 // pred_region
      %205 = dma.done [#allocation9], 32
    $region89: #{cnnnet_forward.1} parent=1 // pred_fallthru
      _
    // Predicated region
    $region90: #{cnnnet_forward.1} parent=1 // pred_check
      _
    $region91: #{cnnnet_forward.1} parent=1 // pred_check_branch
      %207 = sbr.rel (0) target = $region93
    $region92: #{cnnnet_forward.1} parent=1 // pred_region
      %208 = dma.done [#allocation9], 81920
    $region93: #{cnnnet_forward.1} parent=1 // pred_fallthru
      _
    // Predicated region
    $region94: #{cnnnet_forward.1} parent=1 // pred_check
      _
    $region95: #{cnnnet_forward.1} parent=1 // pred_check_branch
      %210 = sbr.rel (0) target = $region97
    $region96: #{cnnnet_forward.1} parent=1 // pred_region
      %211 = dma.done [#allocation12], 64
    $region97: #{cnnnet_forward.1} parent=1 // pred_fallthru
      _
    // Predicated region
    $region98: #{cnnnet_forward.1} parent=1 // pred_check
      _
    $region99: #{cnnnet_forward.1} parent=1 // pred_check_branch
      %213 = sbr.rel (0) target = $region101
    $region100: #{cnnnet_forward.1} parent=1 // pred_region
      %214 = dma.done [#allocation12], 64
    $region101: #{cnnnet_forward.1} parent=1 // pred_fallthru
      _
    // Predicated region
    $region102: #{cnnnet_forward.1} parent=1 // pred_check
      _
    $region103: #{cnnnet_forward.1} parent=1 // pred_check_branch
      %216 = sbr.rel (0) target = $region105
    $region104: #{cnnnet_forward.1} parent=1 // pred_region
      %217 = dma.done [#allocation15], 64
    $region105: #{cnnnet_forward.1} parent=1 // pred_fallthru
      _
    // Predicated region
    $region106: #{cnnnet_forward.1} parent=1 // pred_check
      _
    $region107: #{cnnnet_forward.1} parent=1 // pred_check_branch
      %219 = sbr.rel (0) target = $region109
    $region108: #{cnnnet_forward.1} parent=1 // pred_region
      %220 = dma.done [#allocation15], 81920
    $region109: #{cnnnet_forward.1} parent=1 // pred_fallthru
      _
    // Predicated region
    $region110: #{cnnnet_forward.1} parent=1 // pred_check
      _
    $region111: #{cnnnet_forward.1} parent=1 // pred_check_branch
      %222 = sbr.rel (0) target = $region113
    $region112: #{cnnnet_forward.1} parent=1 // pred_region
      %223 = dma.done [#allocation18], 32
    $region113: #{cnnnet_forward.1} parent=1 // pred_fallthru
      _
    // Predicated region
    $region114: #{cnnnet_forward.1} parent=1 // pred_check
      _
    $region115: #{cnnnet_forward.1} parent=1 // pred_check_branch
      %225 = sbr.rel (0) target = $region117
    $region116: #{cnnnet_forward.1} parent=1 // pred_region
      %226 = dma.done [#allocation18], 32
    $region117: #{cnnnet_forward.1} parent=1 // pred_fallthru
      _
    // Predicated region
    $region118: #{cnnnet_forward.1} parent=1 // pred_check
      _
    $region119: #{cnnnet_forward.1} parent=1 // pred_check_branch
      %228 = sbr.rel (0) target = $region121
    $region120: #{cnnnet_forward.1} parent=1 // pred_region
      %229 = dma.done [#allocation21], 32
    $region121: #{cnnnet_forward.1} parent=1 // pred_fallthru
      _
    // Predicated region
    $region122: #{cnnnet_forward.1} parent=1 // pred_check
      _
    $region123: #{cnnnet_forward.1} parent=1 // pred_check_branch
      %231 = sbr.rel (0) target = $region125
    $region124: #{cnnnet_forward.1} parent=1 // pred_region
      %232 = dma.done [#allocation21], 16
    $region125: #{cnnnet_forward.1} parent=1 // pred_fallthru
      _
    // Predicated region
    $region126: #{cnnnet_forward.1} parent=1 // pred_check
      _
    $region127: #{cnnnet_forward.1} parent=1 // pred_check_branch
      %234 = sbr.rel (0) target = $region129
    $region128: #{cnnnet_forward.1} parent=1 // pred_region
      %235 = dma.done [#allocation24], 16
    $region129: #{cnnnet_forward.1} parent=1 // pred_fallthru
      _
    // Predicated region
    $region130: #{cnnnet_forward.1} parent=1 // pred_check
      _
    $region131: #{cnnnet_forward.1} parent=1 // pred_check_branch
      %237 = sbr.rel (0) target = $region133
    $region132: #{cnnnet_forward.1} parent=1 // pred_region
      %238 = dma.done [#allocation24], 16
    $region133: #{cnnnet_forward.1} parent=1 // pred_fallthru
      _
    %v239 = vld [vmem:[%s0] sm:$0xff]
    %v240 = vld [vmem:[%s0 + $0x8] sm:$0xff]
    %v241 = vld [vmem:[%s0 + $0x10] sm:$0xff]
    %v242 = vld [vmem:[%s0 + $0x18] sm:$0xff]
    %v243 = vld [vmem:[%s0 + $0x20] sm:$0xff]
    %v244 = vld [vmem:[%s0 + $0x28] sm:$0xff]
    %v245 = vld [vmem:[%s0 + $0x30] sm:$0x3]
    %v246 = vld [vmem:[%s0 + $0x38] sm:$0xff]
    %v247 = vld [vmem:[%s0 + $0x40] sm:$0xff]
    %v248 = vld [vmem:[%s0 + $0x48] sm:$0xff]
    %v249 = vld [vmem:[%s0 + $0x50] sm:$0xff]
    %v250 = vld [vmem:[%s0 + $0x58] sm:$0xff]
    %v251 = vld [vmem:[%s0 + $0x60] sm:$0xff]
    %v252 = vld [vmem:[%s0 + $0x68] sm:$0x3]
    %v267 = vcombine.high %v239, %v239
    %v269 = vunpack.c.l.s4 1983009808
    %v270 = vunpack.c.0.s8 %v269
    %v271 = vlaneseq
    %v272 = vshrl.u32 %v271, 7
    %v273 = vsub.s32 %v270, %v272
    %v274 = vrot.slane %v239, %v273
    %v276 = vunpack.c.l.s4 1983009808
    %v277 = vunpack.c.0.s8 %v276
    %v278 = vlaneseq
    %v279 = vshrl.u32 %v278, 7
    %v280 = vsub.s32 %v277, %v279
    %v281 = vrot.slane %v267, %v280
    %v282 = vcombine.high %v274, %v274
    %v283 = vcombine.high %v281, %v281
    %v284 = vcombine.high %v240, %v240
    %v286 = vunpack.c.l.s4 1983009808
    %v287 = vunpack.c.0.s8 %v286
    %v288 = vlaneseq
    %v289 = vshrl.u32 %v288, 7
    %v290 = vsub.s32 %v287, %v289
    %v291 = vrot.slane %v240, %v290
    %v293 = vunpack.c.l.s4 1983009808
    %v294 = vunpack.c.0.s8 %v293
    %v295 = vlaneseq
    %v296 = vshrl.u32 %v295, 7
    %v297 = vsub.s32 %v294, %v296
    %v298 = vrot.slane %v284, %v297
    %v299 = vcombine.high %v291, %v291
    %v300 = vcombine.high %v298, %v298
    %v301 = vcombine.high %v241, %v241
    %v303 = vunpack.c.l.s4 1983009808
    %v304 = vunpack.c.0.s8 %v303
    %v305 = vlaneseq
    %v306 = vshrl.u32 %v305, 7
    %v307 = vsub.s32 %v304, %v306
    %v308 = vrot.slane %v241, %v307
    %v310 = vunpack.c.l.s4 1983009808
    %v311 = vunpack.c.0.s8 %v310
    %v312 = vlaneseq
    %v313 = vshrl.u32 %v312, 7
    %v314 = vsub.s32 %v311, %v313
    %v315 = vrot.slane %v301, %v314
    %v316 = vcombine.high %v308, %v308
    %v317 = vcombine.high %v315, %v315
    %v318 = vcombine.high %v242, %v242
    %v320 = vunpack.c.l.s4 1983009808
    %v321 = vunpack.c.0.s8 %v320
    %v322 = vlaneseq
    %v323 = vshrl.u32 %v322, 7
    %v324 = vsub.s32 %v321, %v323
    %v325 = vrot.slane %v242, %v324
    %v327 = vunpack.c.l.s4 1983009808
    %v328 = vunpack.c.0.s8 %v327
    %v329 = vlaneseq
    %v330 = vshrl.u32 %v329, 7
    %v331 = vsub.s32 %v328, %v330
    %v332 = vrot.slane %v318, %v331
    %v333 = vcombine.high %v325, %v325
    %v334 = vcombine.high %v332, %v332
    %v335 = vcombine.high %v243, %v243
    %v337 = vunpack.c.l.s4 1983009808
    %v338 = vunpack.c.0.s8 %v337
    %v339 = vlaneseq
    %v340 = vshrl.u32 %v339, 7
    %v341 = vsub.s32 %v338, %v340
    %v342 = vrot.slane %v243, %v341
    %v344 = vunpack.c.l.s4 1983009808
    %v345 = vunpack.c.0.s8 %v344
    %v346 = vlaneseq
    %v347 = vshrl.u32 %v346, 7
    %v348 = vsub.s32 %v345, %v347
    %v349 = vrot.slane %v335, %v348
    %v350 = vcombine.high %v342, %v342
    %v351 = vcombine.high %v349, %v349
    %v352 = vcombine.high %v244, %v244
    %v354 = vunpack.c.l.s4 1983009808
    %v355 = vunpack.c.0.s8 %v354
    %v356 = vlaneseq
    %v357 = vshrl.u32 %v356, 7
    %v358 = vsub.s32 %v355, %v357
    %v359 = vrot.slane %v244, %v358
    %v361 = vunpack.c.l.s4 1983009808
    %v362 = vunpack.c.0.s8 %v361
    %v363 = vlaneseq
    %v364 = vshrl.u32 %v363, 7
    %v365 = vsub.s32 %v362, %v364
    %v366 = vrot.slane %v352, %v365
    %v367 = vcombine.high %v359, %v359
    %v368 = vcombine.high %v366, %v366
    %v370 = vunpack.c.l.s4 1983009808
    %v371 = vunpack.c.0.s8 %v370
    %v372 = vlaneseq
    %v373 = vshrl.u32 %v372, 7
    %v374 = vsub.s32 %v371, %v373
    %v375 = vrot.slane %v245, %v374
    %v376 = vcombine.high %v246, %v246
    %v378 = vunpack.c.l.s4 1983009808
    %v379 = vunpack.c.0.s8 %v378
    %v380 = vlaneseq
    %v381 = vshrl.u32 %v380, 7
    %v382 = vsub.s32 %v379, %v381
    %v383 = vrot.slane %v246, %v382
    %v385 = vunpack.c.l.s4 1983009808
    %v386 = vunpack.c.0.s8 %v385
    %v387 = vlaneseq
    %v388 = vshrl.u32 %v387, 7
    %v389 = vsub.s32 %v386, %v388
    %v390 = vrot.slane %v376, %v389
    %v391 = vcombine.high %v383, %v383
    %v392 = vcombine.high %v390, %v390
    %v393 = vcombine.high %v247, %v247
    %v395 = vunpack.c.l.s4 1983009808
    %v396 = vunpack.c.0.s8 %v395
    %v397 = vlaneseq
    %v398 = vshrl.u32 %v397, 7
    %v399 = vsub.s32 %v396, %v398
    %v400 = vrot.slane %v247, %v399
    %v402 = vunpack.c.l.s4 1983009808
    %v403 = vunpack.c.0.s8 %v402
    %v404 = vlaneseq
    %v405 = vshrl.u32 %v404, 7
    %v406 = vsub.s32 %v403, %v405
    %v407 = vrot.slane %v393, %v406
    %v408 = vcombine.high %v400, %v400
    %v409 = vcombine.high %v407, %v407
    %v410 = vcombine.high %v248, %v248
    %v412 = vunpack.c.l.s4 1983009808
    %v413 = vunpack.c.0.s8 %v412
    %v414 = vlaneseq
    %v415 = vshrl.u32 %v414, 7
    %v416 = vsub.s32 %v413, %v415
    %v417 = vrot.slane %v248, %v416
    %v419 = vunpack.c.l.s4 1983009808
    %v420 = vunpack.c.0.s8 %v419
    %v421 = vlaneseq
    %v422 = vshrl.u32 %v421, 7
    %v423 = vsub.s32 %v420, %v422
    %v424 = vrot.slane %v410, %v423
    %v425 = vcombine.high %v417, %v417
    %v426 = vcombine.high %v424, %v424
    %v427 = vcombine.high %v249, %v249
    %v429 = vunpack.c.l.s4 1983009808
    %v430 = vunpack.c.0.s8 %v429
    %v431 = vlaneseq
    %v432 = vshrl.u32 %v431, 7
    %v433 = vsub.s32 %v430, %v432
    %v434 = vrot.slane %v249, %v433
    %v436 = vunpack.c.l.s4 1983009808
    %v437 = vunpack.c.0.s8 %v436
    %v438 = vlaneseq
    %v439 = vshrl.u32 %v438, 7
    %v440 = vsub.s32 %v437, %v439
    %v441 = vrot.slane %v427, %v440
    %v442 = vcombine.high %v434, %v434
    %v443 = vcombine.high %v441, %v441
    %v444 = vcombine.high %v250, %v250
    %v446 = vunpack.c.l.s4 1983009808
    %v447 = vunpack.c.0.s8 %v446
    %v448 = vlaneseq
    %v449 = vshrl.u32 %v448, 7
    %v450 = vsub.s32 %v447, %v449
    %v451 = vrot.slane %v250, %v450
    %v453 = vunpack.c.l.s4 1983009808
    %v454 = vunpack.c.0.s8 %v453
    %v455 = vlaneseq
    %v456 = vshrl.u32 %v455, 7
    %v457 = vsub.s32 %v454, %v456
    %v458 = vrot.slane %v444, %v457
    %v459 = vcombine.high %v451, %v451
    %v460 = vcombine.high %v458, %v458
    %v461 = vcombine.high %v251, %v251
    %v463 = vunpack.c.l.s4 1983009808
    %v464 = vunpack.c.0.s8 %v463
    %v465 = vlaneseq
    %v466 = vshrl.u32 %v465, 7
    %v467 = vsub.s32 %v464, %v466
    %v468 = vrot.slane %v251, %v467
    %v470 = vunpack.c.l.s4 1983009808
    %v471 = vunpack.c.0.s8 %v470
    %v472 = vlaneseq
    %v473 = vshrl.u32 %v472, 7
    %v474 = vsub.s32 %v471, %v473
    %v475 = vrot.slane %v461, %v474
    %v476 = vcombine.high %v468, %v468
    %v477 = vcombine.high %v475, %v475
    %v479 = vunpack.c.l.s4 1983009808
    %v480 = vunpack.c.0.s8 %v479
    %v481 = vlaneseq
    %v482 = vshrl.u32 %v481, 7
    %v483 = vsub.s32 %v480, %v482
    %v484 = vrot.slane %v252, %v483
    %v485 = vld [vmem:[#allocation2] sm:$0xff]
    %v486 = vld [vmem:[#allocation2 + $0x8] sm:$0xff]
    %v487 = vld [vmem:[#allocation2 + $0x10] sm:$0xff]
    %v488 = vld [vmem:[#allocation2 + $0x18] sm:$0xff]
    %v489 = vld [vmem:[#allocation2 + $0x20] sm:$0xff]
    %v490 = vld [vmem:[#allocation2 + $0x28] sm:$0xff]
    %v491 = vld [vmem:[#allocation2 + $0x30] sm:$0xff]
    %v492 = vld [vmem:[#allocation2 + $0x38] sm:$0xff]
    %v493 = vld [vmem:[#allocation7] sm:$0x3]
    %v494 = vld [vmem:[#allocation5] sm:$0x3]
    %v496 = vlaneseq
    %v497 = vshrl.u32 %v496, 7
    %v498 = vsub.s32 0, %v497
    %v499 = vrot.slane %v494, %v498
    %v500 = vlaneseq
    %v501 = vshrl.u32 %v500, 7
    %v502 = vsub.s32 1, %v501
    %v503 = vrot.slane %v494, %v502
    %v506 = vcombine.low %v274, %v282
    %v507 = vcombine.low %v281, %v283
    %v509 = vunpack.c.l.s4 1983009808
    %v510 = vunpack.c.0.s8 %v509
    %v511 = vlaneseq
    %v512 = vshrl.u32 %v511, 7
    %v513 = vsub.s32 %v510, %v512
    %v514 = vrot.slane %v506, %v513
    %v516 = vunpack.c.l.s4 1983009808
    %v517 = vunpack.c.0.s8 %v516
    %v518 = vlaneseq
    %v519 = vshrl.u32 %v518, 7
    %v520 = vsub.s32 %v517, %v519
    %v521 = vrot.slane %v507, %v520
    %v522 = vcombine.low %v514, %v521
    %v523 = vcombine.low %v291, %v299
    %v524 = vcombine.low %v298, %v300
    %v526 = vunpack.c.l.s4 1983009808
    %v527 = vunpack.c.0.s8 %v526
    %v528 = vlaneseq
    %v529 = vshrl.u32 %v528, 7
    %v530 = vsub.s32 %v527, %v529
    %v531 = vrot.slane %v523, %v530
    %v533 = vunpack.c.l.s4 1983009808
    %v534 = vunpack.c.0.s8 %v533
    %v535 = vlaneseq
    %v536 = vshrl.u32 %v535, 7
    %v537 = vsub.s32 %v534, %v536
    %v538 = vrot.slane %v524, %v537
    %v539 = vcombine.low %v531, %v538
    %v540 = vcombine.low %v308, %v316
    %v541 = vcombine.low %v315, %v317
    %v543 = vunpack.c.l.s4 1983009808
    %v544 = vunpack.c.0.s8 %v543
    %v545 = vlaneseq
    %v546 = vshrl.u32 %v545, 7
    %v547 = vsub.s32 %v544, %v546
    %v548 = vrot.slane %v540, %v547
    %v550 = vunpack.c.l.s4 1983009808
    %v551 = vunpack.c.0.s8 %v550
    %v552 = vlaneseq
    %v553 = vshrl.u32 %v552, 7
    %v554 = vsub.s32 %v551, %v553
    %v555 = vrot.slane %v541, %v554
    %v556 = vcombine.low %v548, %v555
    %v557 = vcombine.low %v325, %v333
    %v558 = vcombine.low %v332, %v334
    %v560 = vunpack.c.l.s4 1983009808
    %v561 = vunpack.c.0.s8 %v560
    %v562 = vlaneseq
    %v563 = vshrl.u32 %v562, 7
    %v564 = vsub.s32 %v561, %v563
    %v565 = vrot.slane %v557, %v564
    %v567 = vunpack.c.l.s4 1983009808
    %v568 = vunpack.c.0.s8 %v567
    %v569 = vlaneseq
    %v570 = vshrl.u32 %v569, 7
    %v571 = vsub.s32 %v568, %v570
    %v572 = vrot.slane %v558, %v571
    %v573 = vcombine.low %v565, %v572
    %v574 = vcombine.low %v342, %v350
    %v575 = vcombine.low %v349, %v351
    %v577 = vunpack.c.l.s4 1983009808
    %v578 = vunpack.c.0.s8 %v577
    %v579 = vlaneseq
    %v580 = vshrl.u32 %v579, 7
    %v581 = vsub.s32 %v578, %v580
    %v582 = vrot.slane %v574, %v581
    %v584 = vunpack.c.l.s4 1983009808
    %v585 = vunpack.c.0.s8 %v584
    %v586 = vlaneseq
    %v587 = vshrl.u32 %v586, 7
    %v588 = vsub.s32 %v585, %v587
    %v589 = vrot.slane %v575, %v588
    %v590 = vcombine.low %v582, %v589
    %v591 = vcombine.low %v359, %v367
    %v592 = vcombine.low %v366, %v368
    %v594 = vunpack.c.l.s4 1983009808
    %v595 = vunpack.c.0.s8 %v594
    %v596 = vlaneseq
    %v597 = vshrl.u32 %v596, 7
    %v598 = vsub.s32 %v595, %v597
    %v599 = vrot.slane %v591, %v598
    %v601 = vunpack.c.l.s4 1983009808
    %v602 = vunpack.c.0.s8 %v601
    %v603 = vlaneseq
    %v604 = vshrl.u32 %v603, 7
    %v605 = vsub.s32 %v602, %v604
    %v606 = vrot.slane %v592, %v605
    %v607 = vcombine.low %v599, %v606
    %v608 = vcombine.low %v375, %v383
    %v609 = vcombine.low %v391, %v390
    %v611 = vunpack.c.l.s4 1983009808
    %v612 = vunpack.c.0.s8 %v611
    %v613 = vlaneseq
    %v614 = vshrl.u32 %v613, 7
    %v615 = vsub.s32 %v612, %v614
    %v616 = vrot.slane %v608, %v615
    %v618 = vunpack.c.l.s4 1983009808
    %v619 = vunpack.c.0.s8 %v618
    %v620 = vlaneseq
    %v621 = vshrl.u32 %v620, 7
    %v622 = vsub.s32 %v619, %v621
    %v623 = vrot.slane %v609, %v622
    %v624 = vcombine.low %v616, %v623
    %v625 = vcombine.low %v392, %v400
    %v626 = vcombine.low %v408, %v407
    %v628 = vunpack.c.l.s4 1983009808
    %v629 = vunpack.c.0.s8 %v628
    %v630 = vlaneseq
    %v631 = vshrl.u32 %v630, 7
    %v632 = vsub.s32 %v629, %v631
    %v633 = vrot.slane %v625, %v632
    %v635 = vunpack.c.l.s4 1983009808
    %v636 = vunpack.c.0.s8 %v635
    %v637 = vlaneseq
    %v638 = vshrl.u32 %v637, 7
    %v639 = vsub.s32 %v636, %v638
    %v640 = vrot.slane %v626, %v639
    %v641 = vcombine.low %v633, %v640
    %v642 = vcombine.low %v409, %v417
    %v643 = vcombine.low %v425, %v424
    %v645 = vunpack.c.l.s4 1983009808
    %v646 = vunpack.c.0.s8 %v645
    %v647 = vlaneseq
    %v648 = vshrl.u32 %v647, 7
    %v649 = vsub.s32 %v646, %v648
    %v650 = vrot.slane %v642, %v649
    %v652 = vunpack.c.l.s4 1983009808
    %v653 = vunpack.c.0.s8 %v652
    %v654 = vlaneseq
    %v655 = vshrl.u32 %v654, 7
    %v656 = vsub.s32 %v653, %v655
    %v657 = vrot.slane %v643, %v656
    %v658 = vcombine.low %v650, %v657
    %v659 = vcombine.low %v426, %v434
    %v660 = vcombine.low %v442, %v441
    %v662 = vunpack.c.l.s4 1983009808
    %v663 = vunpack.c.0.s8 %v662
    %v664 = vlaneseq
    %v665 = vshrl.u32 %v664, 7
    %v666 = vsub.s32 %v663, %v665
    %v667 = vrot.slane %v659, %v666
    %v669 = vunpack.c.l.s4 1983009808
    %v670 = vunpack.c.0.s8 %v669
    %v671 = vlaneseq
    %v672 = vshrl.u32 %v671, 7
    %v673 = vsub.s32 %v670, %v672
    %v674 = vrot.slane %v660, %v673
    %v675 = vcombine.low %v667, %v674
    %v676 = vcombine.low %v443, %v451
    %v677 = vcombine.low %v459, %v458
    %v679 = vunpack.c.l.s4 1983009808
    %v680 = vunpack.c.0.s8 %v679
    %v681 = vlaneseq
    %v682 = vshrl.u32 %v681, 7
    %v683 = vsub.s32 %v680, %v682
    %v684 = vrot.slane %v676, %v683
    %v686 = vunpack.c.l.s4 1983009808
    %v687 = vunpack.c.0.s8 %v686
    %v688 = vlaneseq
    %v689 = vshrl.u32 %v688, 7
    %v690 = vsub.s32 %v687, %v689
    %v691 = vrot.slane %v677, %v690
    %v692 = vcombine.low %v684, %v691
    %v693 = vcombine.low %v460, %v468
    %v694 = vcombine.low %v476, %v475
    %v696 = vunpack.c.l.s4 1983009808
    %v697 = vunpack.c.0.s8 %v696
    %v698 = vlaneseq
    %v699 = vshrl.u32 %v698, 7
    %v700 = vsub.s32 %v697, %v699
    %v701 = vrot.slane %v693, %v700
    %v703 = vunpack.c.l.s4 1983009808
    %v704 = vunpack.c.0.s8 %v703
    %v705 = vlaneseq
    %v706 = vshrl.u32 %v705, 7
    %v707 = vsub.s32 %v704, %v706
    %v708 = vrot.slane %v694, %v707
    %v709 = vcombine.low %v701, %v708
    %v710 = vcombine.low %v477, %v484
    %v712 = vunpack.c.l.s4 1983009808
    %v713 = vunpack.c.0.s8 %v712
    %v714 = vlaneseq
    %v715 = vshrl.u32 %v714, 7
    %v716 = vsub.s32 %v713, %v715
    %v717 = vrot.slane %v710, %v716
    %vm718 = vcmask 261120
    %v719 = vsel %vm718, %v522, 0
    %v721 = vsel %vm718, %v539, 0
    %v723 = vsel %vm718, %v556, 0
    %v725 = vsel %vm718, %v573, 0
    %v727 = vsel %vm718, %v590, 0
    %v729 = vsel %vm718, %v607, 0
    %v731 = vsel %vm718, %v624, 0
    %v733 = vsel %vm718, %v641, 0
    %v735 = vsel %vm718, %v658, 0
    %v737 = vsel %vm718, %v675, 0
    %v739 = vsel %vm718, %v692, 0
    %v741 = vsel %vm718, %v709, 0
    %v743 = vsel %vm718, %v717, 0
    %745 = vmatprep.subr.mxu0 %v486
    %746 = vmatpush1.msra.mxu0 %v485
    %747 = vmatprep.subr.mxu0 %v488
    %748 = vmatpush1.msra.mxu0 %v487
    %749 = vmatprep.subr.mxu0 %v490
    %750 = vmatpush1.msra.mxu0 %v489
    %751 = vmatprep.subr.mxu0 %v492
    %752 = vmatpush1.msra.mxu0 %v491
    %753 = vmatprep.subr.mxu0 0.0
    %754 = vmatpush1.msra.mxu0 0.0
    %755 = vmatprep.subr.mxu0 0.0
    %756 = vmatpush1.msra.mxu0 0.0
    %757 = vmatprep.subr.mxu0 0.0
    %758 = vmatpush1.msra.mxu0 0.0
    %759 = vmatprep.subr.mxu0 0.0
    %760 = vmatpush1.msra.mxu0 0.0
    %761 = vmatprep.subr.mxu0 0.0
    %762 = vmatpush1.msra.mxu0 0.0
    %763 = vmatprep.subr.mxu0 0.0
    %764 = vmatpush1.msra.mxu0 0.0
    %765 = vmatprep.subr.mxu0 0.0
    %766 = vmatpush1.msra.mxu0 0.0
    %767 = vmatprep.subr.mxu0 0.0
    %768 = vmatpush1.msra.mxu0 0.0
    %769 = vmatprep.subr.mxu0 0.0
    %770 = vmatpush1.msra.mxu0 0.0
    %771 = vmatprep.subr.mxu0 0.0
    %772 = vmatpush1.msra.mxu0 0.0
    %773 = vmatprep.subr.mxu0 0.0
    %774 = vmatpush1.msra.mxu0 0.0
    %775 = vmatprep.subr.mxu0 0.0
    %776 = vmatpush1.msra.mxu0 0.0
    %777 = vmatprep.subr.mxu0 0.0
    %778 = vmatpush1.msra.mxu0 0.0
    %779 = vmatprep.subr.mxu0 0.0
    %780 = vmatpush1.msra.mxu0 0.0
    %781 = vmatprep.subr.mxu0 0.0
    %782 = vmatpush1.msra.mxu0 0.0
    %783 = vmatprep.subr.mxu0 0.0
    %784 = vmatpush1.msra.mxu0 0.0
    %785 = vmatprep.subr.mxu0 0.0
    %786 = vmatpush1.msra.mxu0 0.0
    %787 = vmatprep.subr.mxu0 0.0
    %788 = vmatpush1.msra.mxu0 0.0
    %789 = vmatprep.subr.mxu0 0.0
    %790 = vmatpush1.msra.mxu0 0.0
    %791 = vmatprep.subr.mxu0 0.0
    %792 = vmatpush1.msra.mxu0 0.0
    %793 = vmatprep.subr.mxu0 0.0
    %794 = vmatpush1.msra.mxu0 0.0
    %795 = vmatprep.subr.mxu0 0.0
    %796 = vmatpush1.msra.mxu0 0.0
    %797 = vmatprep.subr.mxu0 0.0
    %798 = vmatpush1.msra.mxu0 0.0
    %799 = vmatprep.subr.mxu0 0.0
    %800 = vmatpush1.msra.mxu0 0.0
    %801 = vmatprep.subr.mxu0 0.0
    %802 = vmatpush1.msra.mxu0 0.0
    %803 = vmatprep.subr.mxu0 0.0
    %804 = vmatpush1.msra.mxu0 0.0
    %805 = vmatprep.subr.mxu0 0.0
    %806 = vmatpush1.msra.mxu0 0.0
    %807 = vmatprep.subr.mxu0 0.0
    %808 = vmatpush1.msra.mxu0 0.0
    %809 = vmatprep.mubr.f32.mxu0 0.0
    %810 = vmatmul.mubr.f32.gmra.mrb[0].mxu0 %v719
    %v811 = vpop.f32.mrb[0].mxu0
    %v812 = vadd.f32 %v499, %v811
    %v813 = vpop.f32.mrb[0].mxu0
    %v814 = vadd.f32 %v503, %v813
    %815 = vmatprep.mubr.f32.mxu0 0.0
    %816 = vmatmul.mubr.f32.gmra.mrb[0].mxu0 %v721
    %v817 = vpop.f32.mrb[0].mxu0
    %v818 = vadd.f32 %v499, %v817
    %v819 = vpop.f32.mrb[0].mxu0
    %v820 = vadd.f32 %v503, %v819
    %821 = vmatprep.mubr.f32.mxu0 0.0
    %822 = vmatmul.mubr.f32.gmra.mrb[0].mxu0 %v723
    %v823 = vpop.f32.mrb[0].mxu0
    %v824 = vadd.f32 %v499, %v823
    %v825 = vpop.f32.mrb[0].mxu0
    %v826 = vadd.f32 %v503, %v825
    %827 = vmatprep.mubr.f32.mxu0 0.0
    %828 = vmatmul.mubr.f32.gmra.mrb[0].mxu0 %v725
    %v829 = vpop.f32.mrb[0].mxu0
    %v830 = vadd.f32 %v499, %v829
    %v831 = vpop.f32.mrb[0].mxu0
    %v832 = vadd.f32 %v503, %v831
    %833 = vmatprep.mubr.f32.mxu0 0.0
    %834 = vmatmul.mubr.f32.gmra.mrb[0].mxu0 %v727
    %v835 = vpop.f32.mrb[0].mxu0
    %v836 = vadd.f32 %v499, %v835
    %v837 = vpop.f32.mrb[0].mxu0
    %v838 = vadd.f32 %v503, %v837
    %839 = vmatprep.mubr.f32.mxu0 0.0
    %840 = vmatmul.mubr.f32.gmra.mrb[0].mxu0 %v729
    %v841 = vpop.f32.mrb[0].mxu0
    %v842 = vadd.f32 %v499, %v841
    %v843 = vpop.f32.mrb[0].mxu0
    %v844 = vadd.f32 %v503, %v843
    %845 = vmatprep.mubr.f32.mxu0 0.0
    %846 = vmatmul.mubr.f32.gmra.mrb[0].mxu0 %v731
    %v847 = vpop.f32.mrb[0].mxu0
    %v848 = vadd.f32 %v499, %v847
    %v849 = vpop.f32.mrb[0].mxu0
    %v850 = vadd.f32 %v503, %v849
    %851 = vmatprep.mubr.f32.mxu0 0.0
    %852 = vmatmul.mubr.f32.gmra.mrb[0].mxu0 %v733
    %v853 = vpop.f32.mrb[0].mxu0
    %v854 = vadd.f32 %v499, %v853
    %v855 = vpop.f32.mrb[0].mxu0
    %v856 = vadd.f32 %v503, %v855
    %857 = vmatprep.mubr.f32.mxu0 0.0
    %858 = vmatmul.mubr.f32.gmra.mrb[0].mxu0 %v735
    %v859 = vpop.f32.mrb[0].mxu0
    %v860 = vadd.f32 %v499, %v859
    %v861 = vpop.f32.mrb[0].mxu0
    %v862 = vadd.f32 %v503, %v861
    %863 = vmatprep.mubr.f32.mxu0 0.0
    %864 = vmatmul.mubr.f32.gmra.mrb[0].mxu0 %v737
    %v865 = vpop.f32.mrb[0].mxu0
    %v866 = vadd.f32 %v499, %v865
    %v867 = vpop.f32.mrb[0].mxu0
    %v868 = vadd.f32 %v503, %v867
    %869 = vmatprep.mubr.f32.mxu0 0.0
    %870 = vmatmul.mubr.f32.gmra.mrb[0].mxu0 %v739
    %v871 = vpop.f32.mrb[0].mxu0
    %v872 = vadd.f32 %v499, %v871
    %v873 = vpop.f32.mrb[0].mxu0
    %v874 = vadd.f32 %v503, %v873
    %875 = vmatprep.mubr.f32.mxu0 0.0
    %876 = vmatmul.mubr.f32.gmra.mrb[0].mxu0 %v741
    %v877 = vpop.f32.mrb[0].mxu0
    %v878 = vadd.f32 %v499, %v877
    %v879 = vpop.f32.mrb[0].mxu0
    %v880 = vadd.f32 %v503, %v879
    %881 = vmatprep.mubr.f32.mxu0 0.0
    %882 = vmatmul.mubr.f32.gmra.mrb[0].mxu0 %v743
    %v883 = vpop.f32.mrb[0].mxu0
    %v884 = vadd.f32 %v499, %v883
    %v885 = vpop.f32.mrb[0].mxu0
    %v886 = vadd.f32 %v503, %v885
    %887 = vdwg.mxu0
    %vm888 = vcmp.ge.f32.partialorder %v812, 0.0
    %vm889 = vcmp.ge.f32.partialorder %v814, 0.0
    %vm890 = vcmp.ge.f32.partialorder %v818, 0.0
    %vm891 = vcmp.ge.f32.partialorder %v820, 0.0
    %vm892 = vcmp.ge.f32.partialorder %v824, 0.0
    %vm893 = vcmp.ge.f32.partialorder %v826, 0.0
    %vm894 = vcmp.ge.f32.partialorder %v830, 0.0
    %vm895 = vcmp.ge.f32.partialorder %v832, 0.0
    %vm896 = vcmp.ge.f32.partialorder %v836, 0.0
    %vm897 = vcmp.ge.f32.partialorder %v838, 0.0
    %vm898 = vcmp.ge.f32.partialorder %v842, 0.0
    %vm899 = vcmp.ge.f32.partialorder %v844, 0.0
    %vm900 = vcmp.ge.f32.partialorder %v848, 0.0
    %vm901 = vcmp.ge.f32.partialorder %v850, 0.0
    %vm902 = vcmp.ge.f32.partialorder %v854, 0.0
    %vm903 = vcmp.ge.f32.partialorder %v856, 0.0
    %vm904 = vcmp.ge.f32.partialorder %v860, 0.0
    %vm905 = vcmp.ge.f32.partialorder %v862, 0.0
    %vm906 = vcmp.ge.f32.partialorder %v866, 0.0
    %vm907 = vcmp.ge.f32.partialorder %v868, 0.0
    %vm908 = vcmp.ge.f32.partialorder %v872, 0.0
    %vm909 = vcmp.ge.f32.partialorder %v874, 0.0
    %vm910 = vcmp.ge.f32.partialorder %v878, 0.0
    %vm911 = vcmp.ge.f32.partialorder %v880, 0.0
    %vm912 = vcmp.ge.f32.partialorder %v884, 0.0
    %vm913 = vcmp.ge.f32.partialorder %v886, 0.0
    %v914 = vmul.f32 %v812, 0.01
    %v915 = vmul.f32 %v814, 0.01
    %v916 = vmul.f32 %v818, 0.01
    %v917 = vmul.f32 %v820, 0.01
    %v918 = vmul.f32 %v824, 0.01
    %v919 = vmul.f32 %v826, 0.01
    %v920 = vmul.f32 %v830, 0.01
    %v921 = vmul.f32 %v832, 0.01
    %v922 = vmul.f32 %v836, 0.01
    %v923 = vmul.f32 %v838, 0.01
    %v924 = vmul.f32 %v842, 0.01
    %v925 = vmul.f32 %v844, 0.01
    %v926 = vmul.f32 %v848, 0.01
    %v927 = vmul.f32 %v850, 0.01
    %v928 = vmul.f32 %v854, 0.01
    %v929 = vmul.f32 %v856, 0.01
    %v930 = vmul.f32 %v860, 0.01
    %v931 = vmul.f32 %v862, 0.01
    %v932 = vmul.f32 %v866, 0.01
    %v933 = vmul.f32 %v868, 0.01
    %v934 = vmul.f32 %v872, 0.01
    %v935 = vmul.f32 %v874, 0.01
    %v936 = vmul.f32 %v878, 0.01
    %v937 = vmul.f32 %v880, 0.01
    %v938 = vmul.f32 %v884, 0.01
    %v939 = vmul.f32 %v886, 0.01
    %v940 = vsel %vm888, %v812, %v914
    %v941 = vsel %vm889, %v814, %v915
    %v942 = vsel %vm890, %v818, %v916
    %v943 = vsel %vm891, %v820, %v917
    %v944 = vsel %vm892, %v824, %v918
    %v945 = vsel %vm893, %v826, %v919
    %v946 = vsel %vm894, %v830, %v920
    %v947 = vsel %vm895, %v832, %v921
    %v948 = vsel %vm896, %v836, %v922
    %v949 = vsel %vm897, %v838, %v923
    %v950 = vsel %vm898, %v842, %v924
    %v951 = vsel %vm899, %v844, %v925
    %v952 = vsel %vm900, %v848, %v926
    %v953 = vsel %vm901, %v850, %v927
    %v954 = vsel %vm902, %v854, %v928
    %v955 = vsel %vm903, %v856, %v929
    %v956 = vsel %vm904, %v860, %v930
    %v957 = vsel %vm905, %v862, %v931
    %v958 = vsel %vm906, %v866, %v932
    %v959 = vsel %vm907, %v868, %v933
    %v960 = vsel %vm908, %v872, %v934
    %v961 = vsel %vm909, %v874, %v935
    %v962 = vsel %vm910, %v878, %v936
    %v963 = vsel %vm911, %v880, %v937
    %v964 = vsel %vm912, %v884, %v938
    %v965 = vsel %vm913, %v886, %v939
    %v967 = vlaneseq
    %v968 = vshrl.u32 %v967, 7
    %v969 = vsub.s32 0, %v968
    %v970 = vrot.slane %v493, %v969
    %v971 = vlaneseq
    %v972 = vshrl.u32 %v971, 7
    %v973 = vsub.s32 1, %v972
    %v974 = vrot.slane %v493, %v973
    %v977 = vmul.f32 %v970, %v940
    %v978 = vmul.f32 %v974, %v941
    %v979 = vmul.f32 %v970, %v942
    %v980 = vmul.f32 %v974, %v943
    %v981 = vmul.f32 %v970, %v944
    %v982 = vmul.f32 %v974, %v945
    %v983 = vmul.f32 %v970, %v946
    %v984 = vmul.f32 %v974, %v947
    %v985 = vmul.f32 %v970, %v948
    %v986 = vmul.f32 %v974, %v949
    %v987 = vmul.f32 %v970, %v950
    %v988 = vmul.f32 %v974, %v951
    %v989 = vmul.f32 %v970, %v952
    %v990 = vmul.f32 %v974, %v953
    %v991 = vmul.f32 %v970, %v954
    %v992 = vmul.f32 %v974, %v955
    %v993 = vmul.f32 %v970, %v956
    %v994 = vmul.f32 %v974, %v957
    %v995 = vmul.f32 %v970, %v958
    %v996 = vmul.f32 %v974, %v959
    %v997 = vmul.f32 %v970, %v960
    %v998 = vmul.f32 %v974, %v961
    %v999 = vmul.f32 %v970, %v962
    %v1000 = vmul.f32 %v974, %v963
    %v1001 = vmul.f32 %v970, %v964
    %v1002 = vmul.f32 %v974, %v965
    %v1003 = vld [vmem:[#allocation8] sm:$0x3]
    %v1005 = vlaneseq
    %v1006 = vshrl.u32 %v1005, 7
    %v1007 = vsub.s32 0, %v1006
    %v1008 = vrot.slane %v1003, %v1007
    %v1009 = vlaneseq
    %v1010 = vshrl.u32 %v1009, 7
    %v1011 = vsub.s32 1, %v1010
    %v1012 = vrot.slane %v1003, %v1011
    %v1015 = vadd.f32 %v977, %v1008
    %v1016 = vadd.f32 %v978, %v1012
    %v1017 = vadd.f32 %v979, %v1008
    %v1018 = vadd.f32 %v980, %v1012
    %v1019 = vadd.f32 %v981, %v1008
    %v1020 = vadd.f32 %v982, %v1012
    %v1021 = vadd.f32 %v983, %v1008
    %v1022 = vadd.f32 %v984, %v1012
    %v1023 = vadd.f32 %v985, %v1008
    %v1024 = vadd.f32 %v986, %v1012
    %v1025 = vadd.f32 %v987, %v1008
    %v1026 = vadd.f32 %v988, %v1012
    %v1027 = vadd.f32 %v989, %v1008
    %v1028 = vadd.f32 %v990, %v1012
    %v1029 = vadd.f32 %v991, %v1008
    %v1030 = vadd.f32 %v992, %v1012
    %v1031 = vadd.f32 %v993, %v1008
    %v1032 = vadd.f32 %v994, %v1012
    %v1033 = vadd.f32 %v995, %v1008
    %v1034 = vadd.f32 %v996, %v1012
    %v1035 = vadd.f32 %v997, %v1008
    %v1036 = vadd.f32 %v998, %v1012
    %v1037 = vadd.f32 %v999, %v1008
    %v1038 = vadd.f32 %v1000, %v1012
    %v1039 = vadd.f32 %v1001, %v1008
    %v1040 = vadd.f32 %v1002, %v1012
    %v1067 = vcombine.low %v1015, %v1016
    %v1068 = vcombine.high %v1015, %v1016
    %v1070 = vunpack.c.l.s4 1966171168
    %v1071 = vunpack.c.0.s8 %v1070
    %v1072 = vlaneseq
    %v1073 = vshrl.u32 %v1072, 7
    %v1074 = vsub.s32 %v1071, %v1073
    %v1075 = vrot.slane %v1067, %v1074
    %v1077 = vunpack.c.l.s4 1966171168
    %v1078 = vunpack.c.0.s8 %v1077
    %v1079 = vlaneseq
    %v1080 = vshrl.u32 %v1079, 7
    %v1081 = vsub.s32 %v1078, %v1080
    %v1082 = vrot.slane %v1068, %v1081
    %v1083 = vcombine.high %v1075, %v1075
    %v1084 = vcombine.high %v1082, %v1082
    %v1086 = vunpack.c.l.s4 1966171168
    %v1087 = vunpack.c.0.s8 %v1086
    %v1088 = vlaneseq
    %v1089 = vshrl.u32 %v1088, 7
    %v1090 = vsub.s32 %v1087, %v1089
    %v1091 = vrot.slane %v1075, %v1090
    %v1093 = vunpack.c.l.s4 1966171168
    %v1094 = vunpack.c.0.s8 %v1093
    %v1095 = vlaneseq
    %v1096 = vshrl.u32 %v1095, 7
    %v1097 = vsub.s32 %v1094, %v1096
    %v1098 = vrot.slane %v1082, %v1097
    %v1100 = vunpack.c.l.s4 1966171168
    %v1101 = vunpack.c.0.s8 %v1100
    %v1102 = vlaneseq
    %v1103 = vshrl.u32 %v1102, 7
    %v1104 = vsub.s32 %v1101, %v1103
    %v1105 = vrot.slane %v1083, %v1104
    %v1107 = vunpack.c.l.s4 1966171168
    %v1108 = vunpack.c.0.s8 %v1107
    %v1109 = vlaneseq
    %v1110 = vshrl.u32 %v1109, 7
    %v1111 = vsub.s32 %v1108, %v1110
    %v1112 = vrot.slane %v1084, %v1111
    %v1113 = vcombine.high %v1091, %v1091
    %v1114 = vcombine.high %v1098, %v1098
    %v1115 = vcombine.high %v1105, %v1105
    %v1116 = vcombine.high %v1112, %v1112
    %v1117 = vcombine.low %v1017, %v1018
    %v1118 = vcombine.high %v1017, %v1018
    %v1120 = vunpack.c.l.s4 1966171168
    %v1121 = vunpack.c.0.s8 %v1120
    %v1122 = vlaneseq
    %v1123 = vshrl.u32 %v1122, 7
    %v1124 = vsub.s32 %v1121, %v1123
    %v1125 = vrot.slane %v1117, %v1124
    %v1127 = vunpack.c.l.s4 1966171168
    %v1128 = vunpack.c.0.s8 %v1127
    %v1129 = vlaneseq
    %v1130 = vshrl.u32 %v1129, 7
    %v1131 = vsub.s32 %v1128, %v1130
    %v1132 = vrot.slane %v1118, %v1131
    %v1133 = vcombine.high %v1125, %v1125
    %v1134 = vcombine.high %v1132, %v1132
    %v1136 = vunpack.c.l.s4 1966171168
    %v1137 = vunpack.c.0.s8 %v1136
    %v1138 = vlaneseq
    %v1139 = vshrl.u32 %v1138, 7
    %v1140 = vsub.s32 %v1137, %v1139
    %v1141 = vrot.slane %v1125, %v1140
    %v1143 = vunpack.c.l.s4 1966171168
    %v1144 = vunpack.c.0.s8 %v1143
    %v1145 = vlaneseq
    %v1146 = vshrl.u32 %v1145, 7
    %v1147 = vsub.s32 %v1144, %v1146
    %v1148 = vrot.slane %v1132, %v1147
    %v1150 = vunpack.c.l.s4 1966171168
    %v1151 = vunpack.c.0.s8 %v1150
    %v1152 = vlaneseq
    %v1153 = vshrl.u32 %v1152, 7
    %v1154 = vsub.s32 %v1151, %v1153
    %v1155 = vrot.slane %v1133, %v1154
    %v1157 = vunpack.c.l.s4 1966171168
    %v1158 = vunpack.c.0.s8 %v1157
    %v1159 = vlaneseq
    %v1160 = vshrl.u32 %v1159, 7
    %v1161 = vsub.s32 %v1158, %v1160
    %v1162 = vrot.slane %v1134, %v1161
    %v1163 = vcombine.high %v1141, %v1141
    %v1164 = vcombine.high %v1148, %v1148
    %v1165 = vcombine.high %v1155, %v1155
    %v1166 = vcombine.high %v1162, %v1162
    %v1167 = vcombine.low %v1019, %v1020
    %v1168 = vcombine.high %v1019, %v1020
    %v1170 = vunpack.c.l.s4 1966171168
    %v1171 = vunpack.c.0.s8 %v1170
    %v1172 = vlaneseq
    %v1173 = vshrl.u32 %v1172, 7
    %v1174 = vsub.s32 %v1171, %v1173
    %v1175 = vrot.slane %v1167, %v1174
    %v1177 = vunpack.c.l.s4 1966171168
    %v1178 = vunpack.c.0.s8 %v1177
    %v1179 = vlaneseq
    %v1180 = vshrl.u32 %v1179, 7
    %v1181 = vsub.s32 %v1178, %v1180
    %v1182 = vrot.slane %v1168, %v1181
    %v1183 = vcombine.high %v1175, %v1175
    %v1184 = vcombine.high %v1182, %v1182
    %v1186 = vunpack.c.l.s4 1966171168
    %v1187 = vunpack.c.0.s8 %v1186
    %v1188 = vlaneseq
    %v1189 = vshrl.u32 %v1188, 7
    %v1190 = vsub.s32 %v1187, %v1189
    %v1191 = vrot.slane %v1175, %v1190
    %v1193 = vunpack.c.l.s4 1966171168
    %v1194 = vunpack.c.0.s8 %v1193
    %v1195 = vlaneseq
    %v1196 = vshrl.u32 %v1195, 7
    %v1197 = vsub.s32 %v1194, %v1196
    %v1198 = vrot.slane %v1182, %v1197
    %v1200 = vunpack.c.l.s4 1966171168
    %v1201 = vunpack.c.0.s8 %v1200
    %v1202 = vlaneseq
    %v1203 = vshrl.u32 %v1202, 7
    %v1204 = vsub.s32 %v1201, %v1203
    %v1205 = vrot.slane %v1183, %v1204
    %v1207 = vunpack.c.l.s4 1966171168
    %v1208 = vunpack.c.0.s8 %v1207
    %v1209 = vlaneseq
    %v1210 = vshrl.u32 %v1209, 7
    %v1211 = vsub.s32 %v1208, %v1210
    %v1212 = vrot.slane %v1184, %v1211
    %v1213 = vcombine.high %v1191, %v1191
    %v1214 = vcombine.high %v1198, %v1198
    %v1215 = vcombine.high %v1205, %v1205
    %v1216 = vcombine.high %v1212, %v1212
    %v1217 = vcombine.low %v1021, %v1022
    %v1218 = vcombine.high %v1021, %v1022
    %v1220 = vunpack.c.l.s4 1966171168
    %v1221 = vunpack.c.0.s8 %v1220
    %v1222 = vlaneseq
    %v1223 = vshrl.u32 %v1222, 7
    %v1224 = vsub.s32 %v1221, %v1223
    %v1225 = vrot.slane %v1217, %v1224
    %v1227 = vunpack.c.l.s4 1966171168
    %v1228 = vunpack.c.0.s8 %v1227
    %v1229 = vlaneseq
    %v1230 = vshrl.u32 %v1229, 7
    %v1231 = vsub.s32 %v1228, %v1230
    %v1232 = vrot.slane %v1218, %v1231
    %v1233 = vcombine.high %v1225, %v1225
    %v1234 = vcombine.high %v1232, %v1232
    %v1236 = vunpack.c.l.s4 1966171168
    %v1237 = vunpack.c.0.s8 %v1236
    %v1238 = vlaneseq
    %v1239 = vshrl.u32 %v1238, 7
    %v1240 = vsub.s32 %v1237, %v1239
    %v1241 = vrot.slane %v1225, %v1240
    %v1243 = vunpack.c.l.s4 1966171168
    %v1244 = vunpack.c.0.s8 %v1243
    %v1245 = vlaneseq
    %v1246 = vshrl.u32 %v1245, 7
    %v1247 = vsub.s32 %v1244, %v1246
    %v1248 = vrot.slane %v1232, %v1247
    %v1250 = vunpack.c.l.s4 1966171168
    %v1251 = vunpack.c.0.s8 %v1250
    %v1252 = vlaneseq
    %v1253 = vshrl.u32 %v1252, 7
    %v1254 = vsub.s32 %v1251, %v1253
    %v1255 = vrot.slane %v1233, %v1254
    %v1257 = vunpack.c.l.s4 1966171168
    %v1258 = vunpack.c.0.s8 %v1257
    %v1259 = vlaneseq
    %v1260 = vshrl.u32 %v1259, 7
    %v1261 = vsub.s32 %v1258, %v1260
    %v1262 = vrot.slane %v1234, %v1261
    %v1263 = vcombine.high %v1241, %v1241
    %v1264 = vcombine.high %v1248, %v1248
    %v1265 = vcombine.high %v1255, %v1255
    %v1266 = vcombine.high %v1262, %v1262
    %v1267 = vcombine.low %v1023, %v1024
    %v1268 = vcombine.high %v1023, %v1024
    %v1270 = vunpack.c.l.s4 1966171168
    %v1271 = vunpack.c.0.s8 %v1270
    %v1272 = vlaneseq
    %v1273 = vshrl.u32 %v1272, 7
    %v1274 = vsub.s32 %v1271, %v1273
    %v1275 = vrot.slane %v1267, %v1274
    %v1277 = vunpack.c.l.s4 1966171168
    %v1278 = vunpack.c.0.s8 %v1277
    %v1279 = vlaneseq
    %v1280 = vshrl.u32 %v1279, 7
    %v1281 = vsub.s32 %v1278, %v1280
    %v1282 = vrot.slane %v1268, %v1281
    %v1283 = vcombine.high %v1275, %v1275
    %v1284 = vcombine.high %v1282, %v1282
    %v1286 = vunpack.c.l.s4 1966171168
    %v1287 = vunpack.c.0.s8 %v1286
    %v1288 = vlaneseq
    %v1289 = vshrl.u32 %v1288, 7
    %v1290 = vsub.s32 %v1287, %v1289
    %v1291 = vrot.slane %v1275, %v1290
    %v1293 = vunpack.c.l.s4 1966171168
    %v1294 = vunpack.c.0.s8 %v1293
    %v1295 = vlaneseq
    %v1296 = vshrl.u32 %v1295, 7
    %v1297 = vsub.s32 %v1294, %v1296
    %v1298 = vrot.slane %v1282, %v1297
    %v1300 = vunpack.c.l.s4 1966171168
    %v1301 = vunpack.c.0.s8 %v1300
    %v1302 = vlaneseq
    %v1303 = vshrl.u32 %v1302, 7
    %v1304 = vsub.s32 %v1301, %v1303
    %v1305 = vrot.slane %v1283, %v1304
    %v1307 = vunpack.c.l.s4 1966171168
    %v1308 = vunpack.c.0.s8 %v1307
    %v1309 = vlaneseq
    %v1310 = vshrl.u32 %v1309, 7
    %v1311 = vsub.s32 %v1308, %v1310
    %v1312 = vrot.slane %v1284, %v1311
    %v1313 = vcombine.high %v1291, %v1291
    %v1314 = vcombine.high %v1298, %v1298
    %v1315 = vcombine.high %v1305, %v1305
    %v1316 = vcombine.high %v1312, %v1312
    %v1317 = vcombine.low %v1025, %v1026
    %v1318 = vcombine.high %v1025, %v1026
    %v1320 = vunpack.c.l.s4 1966171168
    %v1321 = vunpack.c.0.s8 %v1320
    %v1322 = vlaneseq
    %v1323 = vshrl.u32 %v1322, 7
    %v1324 = vsub.s32 %v1321, %v1323
    %v1325 = vrot.slane %v1317, %v1324
    %v1327 = vunpack.c.l.s4 1966171168
    %v1328 = vunpack.c.0.s8 %v1327
    %v1329 = vlaneseq
    %v1330 = vshrl.u32 %v1329, 7
    %v1331 = vsub.s32 %v1328, %v1330
    %v1332 = vrot.slane %v1318, %v1331
    %v1333 = vcombine.high %v1325, %v1325
    %v1334 = vcombine.high %v1332, %v1332
    %v1336 = vunpack.c.l.s4 1966171168
    %v1337 = vunpack.c.0.s8 %v1336
    %v1338 = vlaneseq
    %v1339 = vshrl.u32 %v1338, 7
    %v1340 = vsub.s32 %v1337, %v1339
    %v1341 = vrot.slane %v1325, %v1340
    %v1343 = vunpack.c.l.s4 1966171168
    %v1344 = vunpack.c.0.s8 %v1343
    %v1345 = vlaneseq
    %v1346 = vshrl.u32 %v1345, 7
    %v1347 = vsub.s32 %v1344, %v1346
    %v1348 = vrot.slane %v1332, %v1347
    %v1350 = vunpack.c.l.s4 1966171168
    %v1351 = vunpack.c.0.s8 %v1350
    %v1352 = vlaneseq
    %v1353 = vshrl.u32 %v1352, 7
    %v1354 = vsub.s32 %v1351, %v1353
    %v1355 = vrot.slane %v1333, %v1354
    %v1357 = vunpack.c.l.s4 1966171168
    %v1358 = vunpack.c.0.s8 %v1357
    %v1359 = vlaneseq
    %v1360 = vshrl.u32 %v1359, 7
    %v1361 = vsub.s32 %v1358, %v1360
    %v1362 = vrot.slane %v1334, %v1361
    %v1363 = vcombine.high %v1341, %v1341
    %v1364 = vcombine.high %v1348, %v1348
    %v1365 = vcombine.high %v1355, %v1355
    %v1366 = vcombine.high %v1362, %v1362
    %v1367 = vcombine.low %v1027, %v1028
    %v1368 = vcombine.high %v1027, %v1028
    %v1370 = vunpack.c.l.s4 1966171168
    %v1371 = vunpack.c.0.s8 %v1370
    %v1372 = vlaneseq
    %v1373 = vshrl.u32 %v1372, 7
    %v1374 = vsub.s32 %v1371, %v1373
    %v1375 = vrot.slane %v1367, %v1374
    %v1377 = vunpack.c.l.s4 1966171168
    %v1378 = vunpack.c.0.s8 %v1377
    %v1379 = vlaneseq
    %v1380 = vshrl.u32 %v1379, 7
    %v1381 = vsub.s32 %v1378, %v1380
    %v1382 = vrot.slane %v1368, %v1381
    %v1383 = vcombine.high %v1375, %v1375
    %v1384 = vcombine.high %v1382, %v1382
    %v1386 = vunpack.c.l.s4 1966171168
    %v1387 = vunpack.c.0.s8 %v1386
    %v1388 = vlaneseq
    %v1389 = vshrl.u32 %v1388, 7
    %v1390 = vsub.s32 %v1387, %v1389
    %v1391 = vrot.slane %v1375, %v1390
    %v1393 = vunpack.c.l.s4 1966171168
    %v1394 = vunpack.c.0.s8 %v1393
    %v1395 = vlaneseq
    %v1396 = vshrl.u32 %v1395, 7
    %v1397 = vsub.s32 %v1394, %v1396
    %v1398 = vrot.slane %v1382, %v1397
    %v1400 = vunpack.c.l.s4 1966171168
    %v1401 = vunpack.c.0.s8 %v1400
    %v1402 = vlaneseq
    %v1403 = vshrl.u32 %v1402, 7
    %v1404 = vsub.s32 %v1401, %v1403
    %v1405 = vrot.slane %v1383, %v1404
    %v1407 = vunpack.c.l.s4 1966171168
    %v1408 = vunpack.c.0.s8 %v1407
    %v1409 = vlaneseq
    %v1410 = vshrl.u32 %v1409, 7
    %v1411 = vsub.s32 %v1408, %v1410
    %v1412 = vrot.slane %v1384, %v1411
    %v1413 = vcombine.high %v1391, %v1391
    %v1414 = vcombine.high %v1398, %v1398
    %v1415 = vcombine.high %v1405, %v1405
    %v1416 = vcombine.high %v1412, %v1412
    %v1417 = vcombine.low %v1029, %v1030
    %v1418 = vcombine.high %v1029, %v1030
    %v1420 = vunpack.c.l.s4 1966171168
    %v1421 = vunpack.c.0.s8 %v1420
    %v1422 = vlaneseq
    %v1423 = vshrl.u32 %v1422, 7
    %v1424 = vsub.s32 %v1421, %v1423
    %v1425 = vrot.slane %v1417, %v1424
    %v1427 = vunpack.c.l.s4 1966171168
    %v1428 = vunpack.c.0.s8 %v1427
    %v1429 = vlaneseq
    %v1430 = vshrl.u32 %v1429, 7
    %v1431 = vsub.s32 %v1428, %v1430
    %v1432 = vrot.slane %v1418, %v1431
    %v1433 = vcombine.high %v1425, %v1425
    %v1434 = vcombine.high %v1432, %v1432
    %v1436 = vunpack.c.l.s4 1966171168
    %v1437 = vunpack.c.0.s8 %v1436
    %v1438 = vlaneseq
    %v1439 = vshrl.u32 %v1438, 7
    %v1440 = vsub.s32 %v1437, %v1439
    %v1441 = vrot.slane %v1425, %v1440
    %v1443 = vunpack.c.l.s4 1966171168
    %v1444 = vunpack.c.0.s8 %v1443
    %v1445 = vlaneseq
    %v1446 = vshrl.u32 %v1445, 7
    %v1447 = vsub.s32 %v1444, %v1446
    %v1448 = vrot.slane %v1432, %v1447
    %v1450 = vunpack.c.l.s4 1966171168
    %v1451 = vunpack.c.0.s8 %v1450
    %v1452 = vlaneseq
    %v1453 = vshrl.u32 %v1452, 7
    %v1454 = vsub.s32 %v1451, %v1453
    %v1455 = vrot.slane %v1433, %v1454
    %v1457 = vunpack.c.l.s4 1966171168
    %v1458 = vunpack.c.0.s8 %v1457
    %v1459 = vlaneseq
    %v1460 = vshrl.u32 %v1459, 7
    %v1461 = vsub.s32 %v1458, %v1460
    %v1462 = vrot.slane %v1434, %v1461
    %v1463 = vcombine.high %v1441, %v1441
    %v1464 = vcombine.high %v1448, %v1448
    %v1465 = vcombine.high %v1455, %v1455
    %v1466 = vcombine.high %v1462, %v1462
    %v1467 = vcombine.low %v1031, %v1032
    %v1468 = vcombine.high %v1031, %v1032
    %v1470 = vunpack.c.l.s4 1966171168
    %v1471 = vunpack.c.0.s8 %v1470
    %v1472 = vlaneseq
    %v1473 = vshrl.u32 %v1472, 7
    %v1474 = vsub.s32 %v1471, %v1473
    %v1475 = vrot.slane %v1467, %v1474
    %v1477 = vunpack.c.l.s4 1966171168
    %v1478 = vunpack.c.0.s8 %v1477
    %v1479 = vlaneseq
    %v1480 = vshrl.u32 %v1479, 7
    %v1481 = vsub.s32 %v1478, %v1480
    %v1482 = vrot.slane %v1468, %v1481
    %v1483 = vcombine.high %v1475, %v1475
    %v1484 = vcombine.high %v1482, %v1482
    %v1486 = vunpack.c.l.s4 1966171168
    %v1487 = vunpack.c.0.s8 %v1486
    %v1488 = vlaneseq
    %v1489 = vshrl.u32 %v1488, 7
    %v1490 = vsub.s32 %v1487, %v1489
    %v1491 = vrot.slane %v1475, %v1490
    %v1493 = vunpack.c.l.s4 1966171168
    %v1494 = vunpack.c.0.s8 %v1493
    %v1495 = vlaneseq
    %v1496 = vshrl.u32 %v1495, 7
    %v1497 = vsub.s32 %v1494, %v1496
    %v1498 = vrot.slane %v1482, %v1497
    %v1500 = vunpack.c.l.s4 1966171168
    %v1501 = vunpack.c.0.s8 %v1500
    %v1502 = vlaneseq
    %v1503 = vshrl.u32 %v1502, 7
    %v1504 = vsub.s32 %v1501, %v1503
    %v1505 = vrot.slane %v1483, %v1504
    %v1507 = vunpack.c.l.s4 1966171168
    %v1508 = vunpack.c.0.s8 %v1507
    %v1509 = vlaneseq
    %v1510 = vshrl.u32 %v1509, 7
    %v1511 = vsub.s32 %v1508, %v1510
    %v1512 = vrot.slane %v1484, %v1511
    %v1513 = vcombine.high %v1491, %v1491
    %v1514 = vcombine.high %v1498, %v1498
    %v1515 = vcombine.high %v1505, %v1505
    %v1516 = vcombine.high %v1512, %v1512
    %v1517 = vcombine.low %v1033, %v1034
    %v1518 = vcombine.high %v1033, %v1034
    %v1520 = vunpack.c.l.s4 1966171168
    %v1521 = vunpack.c.0.s8 %v1520
    %v1522 = vlaneseq
    %v1523 = vshrl.u32 %v1522, 7
    %v1524 = vsub.s32 %v1521, %v1523
    %v1525 = vrot.slane %v1517, %v1524
    %v1527 = vunpack.c.l.s4 1966171168
    %v1528 = vunpack.c.0.s8 %v1527
    %v1529 = vlaneseq
    %v1530 = vshrl.u32 %v1529, 7
    %v1531 = vsub.s32 %v1528, %v1530
    %v1532 = vrot.slane %v1518, %v1531
    %v1533 = vcombine.high %v1525, %v1525
    %v1534 = vcombine.high %v1532, %v1532
    %v1536 = vunpack.c.l.s4 1966171168
    %v1537 = vunpack.c.0.s8 %v1536
    %v1538 = vlaneseq
    %v1539 = vshrl.u32 %v1538, 7
    %v1540 = vsub.s32 %v1537, %v1539
    %v1541 = vrot.slane %v1525, %v1540
    %v1543 = vunpack.c.l.s4 1966171168
    %v1544 = vunpack.c.0.s8 %v1543
    %v1545 = vlaneseq
    %v1546 = vshrl.u32 %v1545, 7
    %v1547 = vsub.s32 %v1544, %v1546
    %v1548 = vrot.slane %v1532, %v1547
    %v1550 = vunpack.c.l.s4 1966171168
    %v1551 = vunpack.c.0.s8 %v1550
    %v1552 = vlaneseq
    %v1553 = vshrl.u32 %v1552, 7
    %v1554 = vsub.s32 %v1551, %v1553
    %v1555 = vrot.slane %v1533, %v1554
    %v1557 = vunpack.c.l.s4 1966171168
    %v1558 = vunpack.c.0.s8 %v1557
    %v1559 = vlaneseq
    %v1560 = vshrl.u32 %v1559, 7
    %v1561 = vsub.s32 %v1558, %v1560
    %v1562 = vrot.slane %v1534, %v1561
    %v1563 = vcombine.high %v1541, %v1541
    %v1564 = vcombine.high %v1548, %v1548
    %v1565 = vcombine.high %v1555, %v1555
    %v1566 = vcombine.high %v1562, %v1562
    %v1567 = vcombine.low %v1035, %v1036
    %v1568 = vcombine.high %v1035, %v1036
    %v1570 = vunpack.c.l.s4 1966171168
    %v1571 = vunpack.c.0.s8 %v1570
    %v1572 = vlaneseq
    %v1573 = vshrl.u32 %v1572, 7
    %v1574 = vsub.s32 %v1571, %v1573
    %v1575 = vrot.slane %v1567, %v1574
    %v1577 = vunpack.c.l.s4 1966171168
    %v1578 = vunpack.c.0.s8 %v1577
    %v1579 = vlaneseq
    %v1580 = vshrl.u32 %v1579, 7
    %v1581 = vsub.s32 %v1578, %v1580
    %v1582 = vrot.slane %v1568, %v1581
    %v1583 = vcombine.high %v1575, %v1575
    %v1584 = vcombine.high %v1582, %v1582
    %v1586 = vunpack.c.l.s4 1966171168
    %v1587 = vunpack.c.0.s8 %v1586
    %v1588 = vlaneseq
    %v1589 = vshrl.u32 %v1588, 7
    %v1590 = vsub.s32 %v1587, %v1589
    %v1591 = vrot.slane %v1575, %v1590
    %v1593 = vunpack.c.l.s4 1966171168
    %v1594 = vunpack.c.0.s8 %v1593
    %v1595 = vlaneseq
    %v1596 = vshrl.u32 %v1595, 7
    %v1597 = vsub.s32 %v1594, %v1596
    %v1598 = vrot.slane %v1582, %v1597
    %v1600 = vunpack.c.l.s4 1966171168
    %v1601 = vunpack.c.0.s8 %v1600
    %v1602 = vlaneseq
    %v1603 = vshrl.u32 %v1602, 7
    %v1604 = vsub.s32 %v1601, %v1603
    %v1605 = vrot.slane %v1583, %v1604
    %v1607 = vunpack.c.l.s4 1966171168
    %v1608 = vunpack.c.0.s8 %v1607
    %v1609 = vlaneseq
    %v1610 = vshrl.u32 %v1609, 7
    %v1611 = vsub.s32 %v1608, %v1610
    %v1612 = vrot.slane %v1584, %v1611
    %v1613 = vcombine.high %v1591, %v1591
    %v1614 = vcombine.high %v1598, %v1598
    %v1615 = vcombine.high %v1605, %v1605
    %v1616 = vcombine.high %v1612, %v1612
    %v1617 = vcombine.low %v1037, %v1038
    %v1618 = vcombine.high %v1037, %v1038
    %v1620 = vunpack.c.l.s4 1966171168
    %v1621 = vunpack.c.0.s8 %v1620
    %v1622 = vlaneseq
    %v1623 = vshrl.u32 %v1622, 7
    %v1624 = vsub.s32 %v1621, %v1623
    %v1625 = vrot.slane %v1617, %v1624
    %v1627 = vunpack.c.l.s4 1966171168
    %v1628 = vunpack.c.0.s8 %v1627
    %v1629 = vlaneseq
    %v1630 = vshrl.u32 %v1629, 7
    %v1631 = vsub.s32 %v1628, %v1630
    %v1632 = vrot.slane %v1618, %v1631
    %v1633 = vcombine.high %v1625, %v1625
    %v1634 = vcombine.high %v1632, %v1632
    %v1636 = vunpack.c.l.s4 1966171168
    %v1637 = vunpack.c.0.s8 %v1636
    %v1638 = vlaneseq
    %v1639 = vshrl.u32 %v1638, 7
    %v1640 = vsub.s32 %v1637, %v1639
    %v1641 = vrot.slane %v1625, %v1640
    %v1643 = vunpack.c.l.s4 1966171168
    %v1644 = vunpack.c.0.s8 %v1643
    %v1645 = vlaneseq
    %v1646 = vshrl.u32 %v1645, 7
    %v1647 = vsub.s32 %v1644, %v1646
    %v1648 = vrot.slane %v1632, %v1647
    %v1650 = vunpack.c.l.s4 1966171168
    %v1651 = vunpack.c.0.s8 %v1650
    %v1652 = vlaneseq
    %v1653 = vshrl.u32 %v1652, 7
    %v1654 = vsub.s32 %v1651, %v1653
    %v1655 = vrot.slane %v1633, %v1654
    %v1657 = vunpack.c.l.s4 1966171168
    %v1658 = vunpack.c.0.s8 %v1657
    %v1659 = vlaneseq
    %v1660 = vshrl.u32 %v1659, 7
    %v1661 = vsub.s32 %v1658, %v1660
    %v1662 = vrot.slane %v1634, %v1661
    %v1663 = vcombine.high %v1641, %v1641
    %v1664 = vcombine.high %v1648, %v1648
    %v1665 = vcombine.high %v1655, %v1655
    %v1666 = vcombine.high %v1662, %v1662
    %v1667 = vcombine.low %v1039, %v1040
    %v1669 = vunpack.c.l.s4 1966171168
    %v1670 = vunpack.c.0.s8 %v1669
    %v1671 = vlaneseq
    %v1672 = vshrl.u32 %v1671, 7
    %v1673 = vsub.s32 %v1670, %v1672
    %v1674 = vrot.slane %v1667, %v1673
    %v1675 = vcombine.high %v1674, %v1674
    %v1677 = vunpack.c.l.s4 1966171168
    %v1678 = vunpack.c.0.s8 %v1677
    %v1679 = vlaneseq
    %v1680 = vshrl.u32 %v1679, 7
    %v1681 = vsub.s32 %v1678, %v1680
    %v1682 = vrot.slane %v1674, %v1681
    %v1684 = vunpack.c.l.s4 1966171168
    %v1685 = vunpack.c.0.s8 %v1684
    %v1686 = vlaneseq
    %v1687 = vshrl.u32 %v1686, 7
    %v1688 = vsub.s32 %v1685, %v1687
    %v1689 = vrot.slane %v1675, %v1688
    %v1690 = vcombine.high %v1682, %v1682
    %v1691 = vcombine.high %v1689, %v1689
    %v1692 = vld [vmem:[#allocation10] sm:$0xff]
    %v1693 = vld [vmem:[#allocation10 + $0x8] sm:$0xff]
    %v1694 = vld [vmem:[#allocation10 + $0x10] sm:$0xff]
    %v1695 = vld [vmem:[#allocation10 + $0x18] sm:$0xff]
    %v1696 = vld [vmem:[#allocation10 + $0x20] sm:$0xff]
    %v1697 = vld [vmem:[#allocation10 + $0x28] sm:$0xff]
    %v1698 = vld [vmem:[#allocation10 + $0x30] sm:$0xff]
    %v1699 = vld [vmem:[#allocation10 + $0x38] sm:$0xff]
    %v1700 = vld [vmem:[#allocation10 + $0x40] sm:$0xff]
    %v1701 = vld [vmem:[#allocation10 + $0x48] sm:$0xff]
    %v1702 = vld [vmem:[#allocation10 + $0x50] sm:$0xff]
    %v1703 = vld [vmem:[#allocation10 + $0x58] sm:$0xff]
    %v1704 = vld [vmem:[#allocation10 + $0x60] sm:$0xff]
    %v1705 = vld [vmem:[#allocation10 + $0x68] sm:$0xff]
    %v1706 = vld [vmem:[#allocation10 + $0x70] sm:$0xff]
    %v1707 = vld [vmem:[#allocation10 + $0x78] sm:$0xff]
    %v1708 = vld [vmem:[#allocation10 + $0x80] sm:$0xff]
    %v1709 = vld [vmem:[#allocation10 + $0x88] sm:$0xff]
    %v1710 = vld [vmem:[#allocation10 + $0x90] sm:$0xff]
    %v1711 = vld [vmem:[#allocation10 + $0x98] sm:$0xff]
    %v1712 = vld [vmem:[#allocation10 + $0xa0] sm:$0xff]
    %v1713 = vld [vmem:[#allocation10 + $0xa8] sm:$0xff]
    %v1714 = vld [vmem:[#allocation10 + $0xb0] sm:$0xff]
    %v1715 = vld [vmem:[#allocation10 + $0xb8] sm:$0xff]
    %v1716 = vld [vmem:[#allocation10 + $0xc0] sm:$0xff]
    %v1717 = vld [vmem:[#allocation10 + $0xc8] sm:$0xff]
    %v1718 = vld [vmem:[#allocation10 + $0xd0] sm:$0xff]
    %v1719 = vld [vmem:[#allocation10 + $0xd8] sm:$0xff]
    %v1720 = vld [vmem:[#allocation10 + $0xe0] sm:$0xff]
    %v1721 = vld [vmem:[#allocation10 + $0xe8] sm:$0xff]
    %v1722 = vld [vmem:[#allocation10 + $0xf0] sm:$0xff]
    %v1723 = vld [vmem:[#allocation10 + $0xf8] sm:$0xff]
    %v1724 = vld [vmem:[#allocation10 + $0x100] sm:$0xff]
    %v1725 = vld [vmem:[#allocation10 + $0x108] sm:$0xff]
    %v1726 = vld [vmem:[#allocation10 + $0x110] sm:$0xff]
    %v1727 = vld [vmem:[#allocation10 + $0x118] sm:$0xff]
    %v1728 = vld [vmem:[#allocation10 + $0x120] sm:$0xff]
    %v1729 = vld [vmem:[#allocation10 + $0x128] sm:$0xff]
    %v1730 = vld [vmem:[#allocation10 + $0x130] sm:$0xff]
    %v1731 = vld [vmem:[#allocation10 + $0x138] sm:$0xff]
    %v1732 = vld [vmem:[#allocation10 + $0x140] sm:$0xff]
    %v1733 = vld [vmem:[#allocation10 + $0x148] sm:$0xff]
    %v1734 = vld [vmem:[#allocation10 + $0x150] sm:$0xff]
    %v1735 = vld [vmem:[#allocation10 + $0x158] sm:$0xff]
    %v1736 = vld [vmem:[#allocation10 + $0x160] sm:$0xff]
    %v1737 = vld [vmem:[#allocation10 + $0x168] sm:$0xff]
    %v1738 = vld [vmem:[#allocation10 + $0x170] sm:$0xff]
    %v1739 = vld [vmem:[#allocation10 + $0x178] sm:$0xff]
    %v1740 = vld [vmem:[#allocation10 + $0x180] sm:$0xff]
    %v1741 = vld [vmem:[#allocation10 + $0x188] sm:$0xff]
    %v1742 = vld [vmem:[#allocation10 + $0x190] sm:$0xff]
    %v1743 = vld [vmem:[#allocation10 + $0x198] sm:$0xff]
    %v1744 = vld [vmem:[#allocation10 + $0x1a0] sm:$0xff]
    %v1745 = vld [vmem:[#allocation10 + $0x1a8] sm:$0xff]
    %v1746 = vld [vmem:[#allocation10 + $0x1b0] sm:$0xff]
    %v1747 = vld [vmem:[#allocation10 + $0x1b8] sm:$0xff]
    %v1748 = vld [vmem:[#allocation10 + $0x1c0] sm:$0xff]
    %v1749 = vld [vmem:[#allocation10 + $0x1c8] sm:$0xff]
    %v1750 = vld [vmem:[#allocation10 + $0x1d0] sm:$0xff]
    %v1751 = vld [vmem:[#allocation10 + $0x1d8] sm:$0xff]
    %v1752 = vld [vmem:[#allocation10 + $0x1e0] sm:$0xff]
    %v1753 = vld [vmem:[#allocation10 + $0x1e8] sm:$0xff]
    %v1754 = vld [vmem:[#allocation10 + $0x1f0] sm:$0xff]
    %v1755 = vld [vmem:[#allocation10 + $0x1f8] sm:$0xff]
    %v1756 = vld [vmem:[#allocation10 + $0x200] sm:$0xff]
    %v1757 = vld [vmem:[#allocation10 + $0x208] sm:$0xff]
    %v1758 = vld [vmem:[#allocation10 + $0x210] sm:$0xff]
    %v1759 = vld [vmem:[#allocation10 + $0x218] sm:$0xff]
    %v1760 = vld [vmem:[#allocation10 + $0x220] sm:$0xff]
    %v1761 = vld [vmem:[#allocation10 + $0x228] sm:$0xff]
    %v1762 = vld [vmem:[#allocation10 + $0x230] sm:$0xff]
    %v1763 = vld [vmem:[#allocation10 + $0x238] sm:$0xff]
    %v1764 = vld [vmem:[#allocation10 + $0x240] sm:$0xff]
    %v1765 = vld [vmem:[#allocation10 + $0x248] sm:$0xff]
    %v1766 = vld [vmem:[#allocation10 + $0x250] sm:$0xff]
    %v1767 = vld [vmem:[#allocation10 + $0x258] sm:$0xff]
    %v1768 = vld [vmem:[#allocation10 + $0x260] sm:$0xff]
    %v1769 = vld [vmem:[#allocation10 + $0x268] sm:$0xff]
    %v1770 = vld [vmem:[#allocation10 + $0x270] sm:$0xff]
    %v1771 = vld [vmem:[#allocation10 + $0x278] sm:$0xff]
    %v1772 = vld [vmem:[#allocation10 + $0x280] sm:$0xff]
    %v1773 = vld [vmem:[#allocation10 + $0x288] sm:$0xff]
    %v1774 = vld [vmem:[#allocation10 + $0x290] sm:$0xff]
    %v1775 = vld [vmem:[#allocation10 + $0x298] sm:$0xff]
    %v1776 = vld [vmem:[#allocation10 + $0x2a0] sm:$0xff]
    %v1777 = vld [vmem:[#allocation10 + $0x2a8] sm:$0xff]
    %v1778 = vld [vmem:[#allocation10 + $0x2b0] sm:$0xff]
    %v1779 = vld [vmem:[#allocation10 + $0x2b8] sm:$0xff]
    %v1780 = vld [vmem:[#allocation10 + $0x2c0] sm:$0xff]
    %v1781 = vld [vmem:[#allocation10 + $0x2c8] sm:$0xff]
    %v1782 = vld [vmem:[#allocation10 + $0x2d0] sm:$0xff]
    %v1783 = vld [vmem:[#allocation10 + $0x2d8] sm:$0xff]
    %v1784 = vld [vmem:[#allocation10 + $0x2e0] sm:$0xff]
    %v1785 = vld [vmem:[#allocation10 + $0x2e8] sm:$0xff]
    %v1786 = vld [vmem:[#allocation10 + $0x2f0] sm:$0xff]
    %v1787 = vld [vmem:[#allocation10 + $0x2f8] sm:$0xff]
    %v1788 = vld [vmem:[#allocation10 + $0x300] sm:$0xff]
    %v1789 = vld [vmem:[#allocation10 + $0x308] sm:$0xff]
    %v1790 = vld [vmem:[#allocation10 + $0x310] sm:$0xff]
    %v1791 = vld [vmem:[#allocation10 + $0x318] sm:$0xff]
    %v1792 = vld [vmem:[#allocation10 + $0x320] sm:$0xff]
    %v1793 = vld [vmem:[#allocation10 + $0x328] sm:$0xff]
    %v1794 = vld [vmem:[#allocation10 + $0x330] sm:$0xff]
    %v1795 = vld [vmem:[#allocation10 + $0x338] sm:$0xff]
    %v1796 = vld [vmem:[#allocation10 + $0x340] sm:$0xff]
    %v1797 = vld [vmem:[#allocation10 + $0x348] sm:$0xff]
    %v1798 = vld [vmem:[#allocation10 + $0x350] sm:$0xff]
    %v1799 = vld [vmem:[#allocation10 + $0x358] sm:$0xff]
    %v1800 = vld [vmem:[#allocation10 + $0x360] sm:$0xff]
    %v1801 = vld [vmem:[#allocation10 + $0x368] sm:$0xff]
    %v1802 = vld [vmem:[#allocation10 + $0x370] sm:$0xff]
    %v1803 = vld [vmem:[#allocation10 + $0x378] sm:$0xff]
    %v1804 = vld [vmem:[#allocation10 + $0x380] sm:$0xff]
    %v1805 = vld [vmem:[#allocation10 + $0x388] sm:$0xff]
    %v1806 = vld [vmem:[#allocation10 + $0x390] sm:$0xff]
    %v1807 = vld [vmem:[#allocation10 + $0x398] sm:$0xff]
    %v1808 = vld [vmem:[#allocation10 + $0x3a0] sm:$0xff]
    %v1809 = vld [vmem:[#allocation10 + $0x3a8] sm:$0xff]
    %v1810 = vld [vmem:[#allocation10 + $0x3b0] sm:$0xff]
    %v1811 = vld [vmem:[#allocation10 + $0x3b8] sm:$0xff]
    %v1812 = vld [vmem:[#allocation10 + $0x3c0] sm:$0xff]
    %v1813 = vld [vmem:[#allocation10 + $0x3c8] sm:$0xff]
    %v1814 = vld [vmem:[#allocation10 + $0x3d0] sm:$0xff]
    %v1815 = vld [vmem:[#allocation10 + $0x3d8] sm:$0xff]
    %v1816 = vld [vmem:[#allocation10 + $0x3e0] sm:$0xff]
    %v1817 = vld [vmem:[#allocation10 + $0x3e8] sm:$0xff]
    %v1818 = vld [vmem:[#allocation10 + $0x3f0] sm:$0xff]
    %v1819 = vld [vmem:[#allocation10 + $0x3f8] sm:$0xff]
    %s1820 = scalar_lea.vmem [#allocation10], 1024
    %v1821 = vld [vmem:[%s1820] sm:$0xff]
    %v1822 = vld [vmem:[%s1820 + $0x8] sm:$0xff]
    %v1823 = vld [vmem:[%s1820 + $0x10] sm:$0xff]
    %v1824 = vld [vmem:[%s1820 + $0x18] sm:$0xff]
    %v1825 = vld [vmem:[%s1820 + $0x20] sm:$0xff]
    %v1826 = vld [vmem:[%s1820 + $0x28] sm:$0xff]
    %v1827 = vld [vmem:[%s1820 + $0x30] sm:$0xff]
    %v1828 = vld [vmem:[%s1820 + $0x38] sm:$0xff]
    %v1829 = vld [vmem:[%s1820 + $0x40] sm:$0xff]
    %v1830 = vld [vmem:[%s1820 + $0x48] sm:$0xff]
    %v1831 = vld [vmem:[%s1820 + $0x50] sm:$0xff]
    %v1832 = vld [vmem:[%s1820 + $0x58] sm:$0xff]
    %v1833 = vld [vmem:[%s1820 + $0x60] sm:$0xff]
    %v1834 = vld [vmem:[%s1820 + $0x68] sm:$0xff]
    %v1835 = vld [vmem:[%s1820 + $0x70] sm:$0xff]
    %v1836 = vld [vmem:[%s1820 + $0x78] sm:$0xff]
    %v1837 = vld [vmem:[%s1820 + $0x80] sm:$0xff]
    %v1838 = vld [vmem:[%s1820 + $0x88] sm:$0xff]
    %v1839 = vld [vmem:[%s1820 + $0x90] sm:$0xff]
    %v1840 = vld [vmem:[%s1820 + $0x98] sm:$0xff]
    %v1841 = vld [vmem:[%s1820 + $0xa0] sm:$0xff]
    %v1842 = vld [vmem:[%s1820 + $0xa8] sm:$0xff]
    %v1843 = vld [vmem:[%s1820 + $0xb0] sm:$0xff]
    %v1844 = vld [vmem:[%s1820 + $0xb8] sm:$0xff]
    %v1845 = vld [vmem:[%s1820 + $0xc0] sm:$0xff]
    %v1846 = vld [vmem:[%s1820 + $0xc8] sm:$0xff]
    %v1847 = vld [vmem:[%s1820 + $0xd0] sm:$0xff]
    %v1848 = vld [vmem:[%s1820 + $0xd8] sm:$0xff]
    %v1849 = vld [vmem:[%s1820 + $0xe0] sm:$0xff]
    %v1850 = vld [vmem:[%s1820 + $0xe8] sm:$0xff]
    %v1851 = vld [vmem:[%s1820 + $0xf0] sm:$0xff]
    %v1852 = vld [vmem:[%s1820 + $0xf8] sm:$0xff]
    %v1853 = vld [vmem:[%s1820 + $0x100] sm:$0xff]
    %v1854 = vld [vmem:[%s1820 + $0x108] sm:$0xff]
    %v1855 = vld [vmem:[%s1820 + $0x110] sm:$0xff]
    %v1856 = vld [vmem:[%s1820 + $0x118] sm:$0xff]
    %v1857 = vld [vmem:[%s1820 + $0x120] sm:$0xff]
    %v1858 = vld [vmem:[%s1820 + $0x128] sm:$0xff]
    %v1859 = vld [vmem:[%s1820 + $0x130] sm:$0xff]
    %v1860 = vld [vmem:[%s1820 + $0x138] sm:$0xff]
    %v1861 = vld [vmem:[%s1820 + $0x140] sm:$0xff]
    %v1862 = vld [vmem:[%s1820 + $0x148] sm:$0xff]
    %v1863 = vld [vmem:[%s1820 + $0x150] sm:$0xff]
    %v1864 = vld [vmem:[%s1820 + $0x158] sm:$0xff]
    %v1865 = vld [vmem:[%s1820 + $0x160] sm:$0xff]
    %v1866 = vld [vmem:[%s1820 + $0x168] sm:$0xff]
    %v1867 = vld [vmem:[%s1820 + $0x170] sm:$0xff]
    %v1868 = vld [vmem:[%s1820 + $0x178] sm:$0xff]
    %v1869 = vld [vmem:[%s1820 + $0x180] sm:$0xff]
    %v1870 = vld [vmem:[%s1820 + $0x188] sm:$0xff]
    %v1871 = vld [vmem:[%s1820 + $0x190] sm:$0xff]
    %v1872 = vld [vmem:[%s1820 + $0x198] sm:$0xff]
    %v1873 = vld [vmem:[%s1820 + $0x1a0] sm:$0xff]
    %v1874 = vld [vmem:[%s1820 + $0x1a8] sm:$0xff]
    %v1875 = vld [vmem:[%s1820 + $0x1b0] sm:$0xff]
    %v1876 = vld [vmem:[%s1820 + $0x1b8] sm:$0xff]
    %v1877 = vld [vmem:[%s1820 + $0x1c0] sm:$0xff]
    %v1878 = vld [vmem:[%s1820 + $0x1c8] sm:$0xff]
    %v1879 = vld [vmem:[%s1820 + $0x1d0] sm:$0xff]
    %v1880 = vld [vmem:[%s1820 + $0x1d8] sm:$0xff]
    %v1881 = vld [vmem:[%s1820 + $0x1e0] sm:$0xff]
    %v1882 = vld [vmem:[%s1820 + $0x1e8] sm:$0xff]
    %v1883 = vld [vmem:[%s1820 + $0x1f0] sm:$0xff]
    %v1884 = vld [vmem:[%s1820 + $0x1f8] sm:$0xff]
    %v1885 = vld [vmem:[%s1820 + $0x200] sm:$0xff]
    %v1886 = vld [vmem:[%s1820 + $0x208] sm:$0xff]
    %v1887 = vld [vmem:[%s1820 + $0x210] sm:$0xff]
    %v1888 = vld [vmem:[%s1820 + $0x218] sm:$0xff]
    %v1889 = vld [vmem:[%s1820 + $0x220] sm:$0xff]
    %v1890 = vld [vmem:[%s1820 + $0x228] sm:$0xff]
    %v1891 = vld [vmem:[%s1820 + $0x230] sm:$0xff]
    %v1892 = vld [vmem:[%s1820 + $0x238] sm:$0xff]
    %v1893 = vld [vmem:[%s1820 + $0x240] sm:$0xff]
    %v1894 = vld [vmem:[%s1820 + $0x248] sm:$0xff]
    %v1895 = vld [vmem:[%s1820 + $0x250] sm:$0xff]
    %v1896 = vld [vmem:[%s1820 + $0x258] sm:$0xff]
    %v1897 = vld [vmem:[%s1820 + $0x260] sm:$0xff]
    %v1898 = vld [vmem:[%s1820 + $0x268] sm:$0xff]
    %v1899 = vld [vmem:[%s1820 + $0x270] sm:$0xff]
    %v1900 = vld [vmem:[%s1820 + $0x278] sm:$0xff]
    %v1901 = vld [vmem:[%s1820 + $0x280] sm:$0xff]
    %v1902 = vld [vmem:[%s1820 + $0x288] sm:$0xff]
    %v1903 = vld [vmem:[%s1820 + $0x290] sm:$0xff]
    %v1904 = vld [vmem:[%s1820 + $0x298] sm:$0xff]
    %v1905 = vld [vmem:[%s1820 + $0x2a0] sm:$0xff]
    %v1906 = vld [vmem:[%s1820 + $0x2a8] sm:$0xff]
    %v1907 = vld [vmem:[%s1820 + $0x2b0] sm:$0xff]
    %v1908 = vld [vmem:[%s1820 + $0x2b8] sm:$0xff]
    %v1909 = vld [vmem:[%s1820 + $0x2c0] sm:$0xff]
    %v1910 = vld [vmem:[%s1820 + $0x2c8] sm:$0xff]
    %v1911 = vld [vmem:[%s1820 + $0x2d0] sm:$0xff]
    %v1912 = vld [vmem:[%s1820 + $0x2d8] sm:$0xff]
    %v1913 = vld [vmem:[%s1820 + $0x2e0] sm:$0xff]
    %v1914 = vld [vmem:[%s1820 + $0x2e8] sm:$0xff]
    %v1915 = vld [vmem:[%s1820 + $0x2f0] sm:$0xff]
    %v1916 = vld [vmem:[%s1820 + $0x2f8] sm:$0xff]
    %v1917 = vld [vmem:[%s1820 + $0x300] sm:$0xff]
    %v1918 = vld [vmem:[%s1820 + $0x308] sm:$0xff]
    %v1919 = vld [vmem:[%s1820 + $0x310] sm:$0xff]
    %v1920 = vld [vmem:[%s1820 + $0x318] sm:$0xff]
    %v1921 = vld [vmem:[%s1820 + $0x320] sm:$0xff]
    %v1922 = vld [vmem:[%s1820 + $0x328] sm:$0xff]
    %v1923 = vld [vmem:[%s1820 + $0x330] sm:$0xff]
    %v1924 = vld [vmem:[%s1820 + $0x338] sm:$0xff]
    %v1925 = vld [vmem:[%s1820 + $0x340] sm:$0xff]
    %v1926 = vld [vmem:[%s1820 + $0x348] sm:$0xff]
    %v1927 = vld [vmem:[%s1820 + $0x350] sm:$0xff]
    %v1928 = vld [vmem:[%s1820 + $0x358] sm:$0xff]
    %v1929 = vld [vmem:[%s1820 + $0x360] sm:$0xff]
    %v1930 = vld [vmem:[%s1820 + $0x368] sm:$0xff]
    %v1931 = vld [vmem:[%s1820 + $0x370] sm:$0xff]
    %v1932 = vld [vmem:[%s1820 + $0x378] sm:$0xff]
    %v1933 = vld [vmem:[%s1820 + $0x380] sm:$0xff]
    %v1934 = vld [vmem:[%s1820 + $0x388] sm:$0xff]
    %v1935 = vld [vmem:[%s1820 + $0x390] sm:$0xff]
    %v1936 = vld [vmem:[%s1820 + $0x398] sm:$0xff]
    %v1937 = vld [vmem:[%s1820 + $0x3a0] sm:$0xff]
    %v1938 = vld [vmem:[%s1820 + $0x3a8] sm:$0xff]
    %v1939 = vld [vmem:[%s1820 + $0x3b0] sm:$0xff]
    %v1940 = vld [vmem:[%s1820 + $0x3b8] sm:$0xff]
    %v1941 = vld [vmem:[%s1820 + $0x3c0] sm:$0xff]
    %v1942 = vld [vmem:[%s1820 + $0x3c8] sm:$0xff]
    %v1943 = vld [vmem:[%s1820 + $0x3d0] sm:$0xff]
    %v1944 = vld [vmem:[%s1820 + $0x3d8] sm:$0xff]
    %v1945 = vld [vmem:[%s1820 + $0x3e0] sm:$0xff]
    %v1946 = vld [vmem:[%s1820 + $0x3e8] sm:$0xff]
    %v1947 = vld [vmem:[%s1820 + $0x3f0] sm:$0xff]
    %v1948 = vld [vmem:[%s1820 + $0x3f8] sm:$0xff]
    %v1949 = vcombine.low %v1105, %v1114
    %v1950 = vcombine.low %v1165, %v1191
    %v1951 = vcombine.low %v1212, %v1263
    %v1952 = vcombine.low %v1266, %v1298
    %v1954 = vunpack.c.l.s4 1966171168
    %v1955 = vunpack.c.0.s8 %v1954
    %v1956 = vlaneseq
    %v1957 = vshrl.u32 %v1956, 7
    %v1958 = vsub.s32 %v1955, %v1957
    %v1959 = vrot.slane %v1949, %v1958
    %v1961 = vunpack.c.l.s4 1966171168
    %v1962 = vunpack.c.0.s8 %v1961
    %v1963 = vlaneseq
    %v1964 = vshrl.u32 %v1963, 7
    %v1965 = vsub.s32 %v1962, %v1964
    %v1966 = vrot.slane %v1950, %v1965
    %v1968 = vunpack.c.l.s4 1966171168
    %v1969 = vunpack.c.0.s8 %v1968
    %v1970 = vlaneseq
    %v1971 = vshrl.u32 %v1970, 7
    %v1972 = vsub.s32 %v1969, %v1971
    %v1973 = vrot.slane %v1951, %v1972
    %v1975 = vunpack.c.l.s4 1966171168
    %v1976 = vunpack.c.0.s8 %v1975
    %v1977 = vlaneseq
    %v1978 = vshrl.u32 %v1977, 7
    %v1979 = vsub.s32 %v1976, %v1978
    %v1980 = vrot.slane %v1952, %v1979
    %v1981 = vcombine.low %v1959, %v1966
    %v1982 = vcombine.high %v1959, %v1966
    %v1983 = vcombine.low %v1973, %v1980
    %v1984 = vcombine.high %v1973, %v1980
    %v1986 = vunpack.c.l.s4 1966171168
    %v1987 = vunpack.c.0.s8 %v1986
    %v1988 = vlaneseq
    %v1989 = vshrl.u32 %v1988, 7
    %v1990 = vsub.s32 %v1987, %v1989
    %v1991 = vrot.slane %v1981, %v1990
    %v1993 = vunpack.c.l.s4 1966171168
    %v1994 = vunpack.c.0.s8 %v1993
    %v1995 = vlaneseq
    %v1996 = vshrl.u32 %v1995, 7
    %v1997 = vsub.s32 %v1994, %v1996
    %v1998 = vrot.slane %v1982, %v1997
    %v2000 = vunpack.c.l.s4 1966171168
    %v2001 = vunpack.c.0.s8 %v2000
    %v2002 = vlaneseq
    %v2003 = vshrl.u32 %v2002, 7
    %v2004 = vsub.s32 %v2001, %v2003
    %v2005 = vrot.slane %v1983, %v2004
    %v2007 = vunpack.c.l.s4 1966171168
    %v2008 = vunpack.c.0.s8 %v2007
    %v2009 = vlaneseq
    %v2010 = vshrl.u32 %v2009, 7
    %v2011 = vsub.s32 %v2008, %v2010
    %v2012 = vrot.slane %v1984, %v2011
    %v2013 = vcombine.low %v1991, %v2005
    %v2014 = vcombine.low %v1998, %v2012
    %v2015 = vcombine.low %v1355, %v1364
    %v2016 = vcombine.low %v1415, %v1441
    %v2017 = vcombine.low %v1462, %v1513
    %v2018 = vcombine.low %v1516, %v1548
    %v2020 = vunpack.c.l.s4 1966171168
    %v2021 = vunpack.c.0.s8 %v2020
    %v2022 = vlaneseq
    %v2023 = vshrl.u32 %v2022, 7
    %v2024 = vsub.s32 %v2021, %v2023
    %v2025 = vrot.slane %v2015, %v2024
    %v2027 = vunpack.c.l.s4 1966171168
    %v2028 = vunpack.c.0.s8 %v2027
    %v2029 = vlaneseq
    %v2030 = vshrl.u32 %v2029, 7
    %v2031 = vsub.s32 %v2028, %v2030
    %v2032 = vrot.slane %v2016, %v2031
    %v2034 = vunpack.c.l.s4 1966171168
    %v2035 = vunpack.c.0.s8 %v2034
    %v2036 = vlaneseq
    %v2037 = vshrl.u32 %v2036, 7
    %v2038 = vsub.s32 %v2035, %v2037
    %v2039 = vrot.slane %v2017, %v2038
    %v2041 = vunpack.c.l.s4 1966171168
    %v2042 = vunpack.c.0.s8 %v2041
    %v2043 = vlaneseq
    %v2044 = vshrl.u32 %v2043, 7
    %v2045 = vsub.s32 %v2042, %v2044
    %v2046 = vrot.slane %v2018, %v2045
    %v2047 = vcombine.low %v2025, %v2032
    %v2048 = vcombine.high %v2025, %v2032
    %v2049 = vcombine.low %v2039, %v2046
    %v2050 = vcombine.high %v2039, %v2046
    %v2052 = vunpack.c.l.s4 1966171168
    %v2053 = vunpack.c.0.s8 %v2052
    %v2054 = vlaneseq
    %v2055 = vshrl.u32 %v2054, 7
    %v2056 = vsub.s32 %v2053, %v2055
    %v2057 = vrot.slane %v2047, %v2056
    %v2059 = vunpack.c.l.s4 1966171168
    %v2060 = vunpack.c.0.s8 %v2059
    %v2061 = vlaneseq
    %v2062 = vshrl.u32 %v2061, 7
    %v2063 = vsub.s32 %v2060, %v2062
    %v2064 = vrot.slane %v2048, %v2063
    %v2066 = vunpack.c.l.s4 1966171168
    %v2067 = vunpack.c.0.s8 %v2066
    %v2068 = vlaneseq
    %v2069 = vshrl.u32 %v2068, 7
    %v2070 = vsub.s32 %v2067, %v2069
    %v2071 = vrot.slane %v2049, %v2070
    %v2073 = vunpack.c.l.s4 1966171168
    %v2074 = vunpack.c.0.s8 %v2073
    %v2075 = vlaneseq
    %v2076 = vshrl.u32 %v2075, 7
    %v2077 = vsub.s32 %v2074, %v2076
    %v2078 = vrot.slane %v2050, %v2077
    %v2079 = vcombine.low %v2057, %v2071
    %v2080 = vcombine.low %v2064, %v2078
    %v2081 = vcombine.low %v1605, %v1614
    %v2082 = vcombine.low %v1665, %v1682
    %v2084 = vunpack.c.l.s4 1966171168
    %v2085 = vunpack.c.0.s8 %v2084
    %v2086 = vlaneseq
    %v2087 = vshrl.u32 %v2086, 7
    %v2088 = vsub.s32 %v2085, %v2087
    %v2089 = vrot.slane %v2081, %v2088
    %v2091 = vunpack.c.l.s4 1966171168
    %v2092 = vunpack.c.0.s8 %v2091
    %v2093 = vlaneseq
    %v2094 = vshrl.u32 %v2093, 7
    %v2095 = vsub.s32 %v2092, %v2094
    %v2096 = vrot.slane %v2082, %v2095
    %v2097 = vcombine.low %v2089, %v2096
    %v2098 = vcombine.high %v2089, %v2096
    %v2100 = vunpack.c.l.s4 1966171168
    %v2101 = vunpack.c.0.s8 %v2100
    %v2102 = vlaneseq
    %v2103 = vshrl.u32 %v2102, 7
    %v2104 = vsub.s32 %v2101, %v2103
    %v2105 = vrot.slane %v2097, %v2104
    %v2107 = vunpack.c.l.s4 1966171168
    %v2108 = vunpack.c.0.s8 %v2107
    %v2109 = vlaneseq
    %v2110 = vshrl.u32 %v2109, 7
    %v2111 = vsub.s32 %v2108, %v2110
    %v2112 = vrot.slane %v2098, %v2111
    %2119 = vmatprep.subr.mxu0 %v1822
    %2120 = vmatpush1.msra.mxu0 %v1821
    %2121 = vmatprep.subr.mxu0 %v1826
    %2122 = vmatpush1.msra.mxu0 %v1825
    %2123 = vmatprep.subr.mxu0 %v1830
    %2124 = vmatpush1.msra.mxu0 %v1829
    %2125 = vmatprep.subr.mxu0 %v1834
    %2126 = vmatpush1.msra.mxu0 %v1833
    %2127 = vmatprep.subr.mxu0 %v1838
    %2128 = vmatpush1.msra.mxu0 %v1837
    %2129 = vmatprep.subr.mxu0 %v1842
    %2130 = vmatpush1.msra.mxu0 %v1841
    %2131 = vmatprep.subr.mxu0 %v1846
    %2132 = vmatpush1.msra.mxu0 %v1845
    %2133 = vmatprep.subr.mxu0 %v1850
    %2134 = vmatpush1.msra.mxu0 %v1849
    %2135 = vmatprep.subr.mxu0 %v1854
    %2136 = vmatpush1.msra.mxu0 %v1853
    %2137 = vmatprep.subr.mxu0 %v1858
    %2138 = vmatpush1.msra.mxu0 %v1857
    %2139 = vmatprep.subr.mxu0 %v1862
    %2140 = vmatpush1.msra.mxu0 %v1861
    %2141 = vmatprep.subr.mxu0 %v1866
    %2142 = vmatpush1.msra.mxu0 %v1865
    %2143 = vmatprep.subr.mxu0 %v1870
    %2144 = vmatpush1.msra.mxu0 %v1869
    %2145 = vmatprep.subr.mxu0 %v1874
    %2146 = vmatpush1.msra.mxu0 %v1873
    %2147 = vmatprep.subr.mxu0 %v1878
    %2148 = vmatpush1.msra.mxu0 %v1877
    %2149 = vmatprep.subr.mxu0 %v1882
    %2150 = vmatpush1.msra.mxu0 %v1881
    %2151 = vmatprep.subr.mxu0 %v1886
    %2152 = vmatpush1.msra.mxu0 %v1885
    %2153 = vmatprep.subr.mxu0 %v1890
    %2154 = vmatpush1.msra.mxu0 %v1889
    %2155 = vmatprep.subr.mxu0 %v1894
    %2156 = vmatpush1.msra.mxu0 %v1893
    %2157 = vmatprep.subr.mxu0 %v1898
    %2158 = vmatpush1.msra.mxu0 %v1897
    %2159 = vmatprep.subr.mxu0 %v1902
    %2160 = vmatpush1.msra.mxu0 %v1901
    %2161 = vmatprep.subr.mxu0 %v1906
    %2162 = vmatpush1.msra.mxu0 %v1905
    %2163 = vmatprep.subr.mxu0 %v1910
    %2164 = vmatpush1.msra.mxu0 %v1909
    %2165 = vmatprep.subr.mxu0 %v1914
    %2166 = vmatpush1.msra.mxu0 %v1913
    %2167 = vmatprep.subr.mxu0 %v1918
    %2168 = vmatpush1.msra.mxu0 %v1917
    %2169 = vmatprep.subr.mxu0 %v1922
    %2170 = vmatpush1.msra.mxu0 %v1921
    %2171 = vmatprep.subr.mxu0 %v1926
    %2172 = vmatpush1.msra.mxu0 %v1925
    %2173 = vmatprep.subr.mxu0 %v1930
    %2174 = vmatpush1.msra.mxu0 %v1929
    %2175 = vmatprep.subr.mxu0 %v1934
    %2176 = vmatpush1.msra.mxu0 %v1933
    %2177 = vmatprep.subr.mxu0 %v1938
    %2178 = vmatpush1.msra.mxu0 %v1937
    %2179 = vmatprep.subr.mxu0 %v1942
    %2180 = vmatpush1.msra.mxu0 %v1941
    %2181 = vmatprep.subr.mxu0 %v1946
    %2182 = vmatpush1.msra.mxu0 %v1945
    %2183 = vmatprep.mubr.f32.mxu0 %v2014
    %2184 = vmatmul.mubr.f32.gmra.mrb[0].mxu0 %v2013
    %v2185 = vpop.f32.mrb[0].mxu0
    %v2186 = vadd.f32 0.0, %v2185
    %v2187 = vpop.f32.mrb[0].mxu0
    %v2188 = vadd.f32 0.0, %v2187
    %2189 = vmatprep.mubr.f32.mxu0 %v2080
    %2190 = vmatmul.mubr.f32.gmra.mrb[0].mxu0 %v2079
    %v2191 = vpop.f32.mrb[0].mxu0
    %v2192 = vadd.f32 0.0, %v2191
    %v2193 = vpop.f32.mrb[0].mxu0
    %v2194 = vadd.f32 0.0, %v2193
    %2195 = vmatprep.mubr.f32.mxu0 %v2112
    %2196 = vmatmul.mubr.f32.gmra.mrb[0].mxu0 %v2105
    %v2197 = vpop.f32.mrb[0].mxu0
    %v2198 = vadd.f32 0.0, %v2197
    %v2199 = vpop.f32.mrb[0].mxu0
    %v2200 = vadd.f32 0.0, %v2199
    %2201 = vdwg.mxu0
    %2202 = vmatprep.subr.mxu0 %v1824
    %2203 = vmatpush1.msra.mxu0 %v1823
    %2204 = vmatprep.subr.mxu0 %v1828
    %2205 = vmatpush1.msra.mxu0 %v1827
    %2206 = vmatprep.subr.mxu0 %v1832
    %2207 = vmatpush1.msra.mxu0 %v1831
    %2208 = vmatprep.subr.mxu0 %v1836
    %2209 = vmatpush1.msra.mxu0 %v1835
    %2210 = vmatprep.subr.mxu0 %v1840
    %2211 = vmatpush1.msra.mxu0 %v1839
    %2212 = vmatprep.subr.mxu0 %v1844
    %2213 = vmatpush1.msra.mxu0 %v1843
    %2214 = vmatprep.subr.mxu0 %v1848
    %2215 = vmatpush1.msra.mxu0 %v1847
    %2216 = vmatprep.subr.mxu0 %v1852
    %2217 = vmatpush1.msra.mxu0 %v1851
    %2218 = vmatprep.subr.mxu0 %v1856
    %2219 = vmatpush1.msra.mxu0 %v1855
    %2220 = vmatprep.subr.mxu0 %v1860
    %2221 = vmatpush1.msra.mxu0 %v1859
    %2222 = vmatprep.subr.mxu0 %v1864
    %2223 = vmatpush1.msra.mxu0 %v1863
    %2224 = vmatprep.subr.mxu0 %v1868
    %2225 = vmatpush1.msra.mxu0 %v1867
    %2226 = vmatprep.subr.mxu0 %v1872
    %2227 = vmatpush1.msra.mxu0 %v1871
    %2228 = vmatprep.subr.mxu0 %v1876
    %2229 = vmatpush1.msra.mxu0 %v1875
    %2230 = vmatprep.subr.mxu0 %v1880
    %2231 = vmatpush1.msra.mxu0 %v1879
    %2232 = vmatprep.subr.mxu0 %v1884
    %2233 = vmatpush1.msra.mxu0 %v1883
    %2234 = vmatprep.subr.mxu0 %v1888
    %2235 = vmatpush1.msra.mxu0 %v1887
    %2236 = vmatprep.subr.mxu0 %v1892
    %2237 = vmatpush1.msra.mxu0 %v1891
    %2238 = vmatprep.subr.mxu0 %v1896
    %2239 = vmatpush1.msra.mxu0 %v1895
    %2240 = vmatprep.subr.mxu0 %v1900
    %2241 = vmatpush1.msra.mxu0 %v1899
    %2242 = vmatprep.subr.mxu0 %v1904
    %2243 = vmatpush1.msra.mxu0 %v1903
    %2244 = vmatprep.subr.mxu0 %v1908
    %2245 = vmatpush1.msra.mxu0 %v1907
    %2246 = vmatprep.subr.mxu0 %v1912
    %2247 = vmatpush1.msra.mxu0 %v1911
    %2248 = vmatprep.subr.mxu0 %v1916
    %2249 = vmatpush1.msra.mxu0 %v1915
    %2250 = vmatprep.subr.mxu0 %v1920
    %2251 = vmatpush1.msra.mxu0 %v1919
    %2252 = vmatprep.subr.mxu0 %v1924
    %2253 = vmatpush1.msra.mxu0 %v1923
    %2254 = vmatprep.subr.mxu0 %v1928
    %2255 = vmatpush1.msra.mxu0 %v1927
    %2256 = vmatprep.subr.mxu0 %v1932
    %2257 = vmatpush1.msra.mxu0 %v1931
    %2258 = vmatprep.subr.mxu0 %v1936
    %2259 = vmatpush1.msra.mxu0 %v1935
    %2260 = vmatprep.subr.mxu0 %v1940
    %2261 = vmatpush1.msra.mxu0 %v1939
    %2262 = vmatprep.subr.mxu0 %v1944
    %2263 = vmatpush1.msra.mxu0 %v1943
    %2264 = vmatprep.subr.mxu0 %v1948
    %2265 = vmatpush1.msra.mxu0 %v1947
    %2266 = vmatprep.mubr.f32.mxu0 %v2014
    %2267 = vmatmul.mubr.f32.gmra.mrb[0].mxu0 %v2013
    %v2268 = vpop.f32.mrb[0].mxu0
    %v2269 = vadd.f32 0.0, %v2268
    %v2270 = vpop.f32.mrb[0].mxu0
    %v2271 = vadd.f32 0.0, %v2270
    %2272 = vmatprep.mubr.f32.mxu0 %v2080
    %2273 = vmatmul.mubr.f32.gmra.mrb[0].mxu0 %v2079
    %v2274 = vpop.f32.mrb[0].mxu0
    %v2275 = vadd.f32 0.0, %v2274
    %v2276 = vpop.f32.mrb[0].mxu0
    %v2277 = vadd.f32 0.0, %v2276
    %2278 = vmatprep.mubr.f32.mxu0 %v2112
    %2279 = vmatmul.mubr.f32.gmra.mrb[0].mxu0 %v2105
    %v2280 = vpop.f32.mrb[0].mxu0
    %v2281 = vadd.f32 0.0, %v2280
    %v2282 = vpop.f32.mrb[0].mxu0
    %v2283 = vadd.f32 0.0, %v2282
    %2284 = vdwg.mxu0
    %v2285 = vcombine.low %v1091, %v1112
    %v2286 = vcombine.low %v1163, %v1166
    %v2287 = vcombine.low %v1198, %v1255
    %v2288 = vcombine.low %v1264, %v1315
    %v2290 = vunpack.c.l.s4 1966171168
    %v2291 = vunpack.c.0.s8 %v2290
    %v2292 = vlaneseq
    %v2293 = vshrl.u32 %v2292, 7
    %v2294 = vsub.s32 %v2291, %v2293
    %v2295 = vrot.slane %v2285, %v2294
    %v2297 = vunpack.c.l.s4 1966171168
    %v2298 = vunpack.c.0.s8 %v2297
    %v2299 = vlaneseq
    %v2300 = vshrl.u32 %v2299, 7
    %v2301 = vsub.s32 %v2298, %v2300
    %v2302 = vrot.slane %v2286, %v2301
    %v2304 = vunpack.c.l.s4 1966171168
    %v2305 = vunpack.c.0.s8 %v2304
    %v2306 = vlaneseq
    %v2307 = vshrl.u32 %v2306, 7
    %v2308 = vsub.s32 %v2305, %v2307
    %v2309 = vrot.slane %v2287, %v2308
    %v2311 = vunpack.c.l.s4 1966171168
    %v2312 = vunpack.c.0.s8 %v2311
    %v2313 = vlaneseq
    %v2314 = vshrl.u32 %v2313, 7
    %v2315 = vsub.s32 %v2312, %v2314
    %v2316 = vrot.slane %v2288, %v2315
    %v2317 = vcombine.low %v2295, %v2302
    %v2318 = vcombine.high %v2295, %v2302
    %v2319 = vcombine.low %v2309, %v2316
    %v2320 = vcombine.high %v2309, %v2316
    %v2322 = vunpack.c.l.s4 1966171168
    %v2323 = vunpack.c.0.s8 %v2322
    %v2324 = vlaneseq
    %v2325 = vshrl.u32 %v2324, 7
    %v2326 = vsub.s32 %v2323, %v2325
    %v2327 = vrot.slane %v2317, %v2326
    %v2329 = vunpack.c.l.s4 1966171168
    %v2330 = vunpack.c.0.s8 %v2329
    %v2331 = vlaneseq
    %v2332 = vshrl.u32 %v2331, 7
    %v2333 = vsub.s32 %v2330, %v2332
    %v2334 = vrot.slane %v2318, %v2333
    %v2336 = vunpack.c.l.s4 1966171168
    %v2337 = vunpack.c.0.s8 %v2336
    %v2338 = vlaneseq
    %v2339 = vshrl.u32 %v2338, 7
    %v2340 = vsub.s32 %v2337, %v2339
    %v2341 = vrot.slane %v2319, %v2340
    %v2343 = vunpack.c.l.s4 1966171168
    %v2344 = vunpack.c.0.s8 %v2343
    %v2345 = vlaneseq
    %v2346 = vshrl.u32 %v2345, 7
    %v2347 = vsub.s32 %v2344, %v2346
    %v2348 = vrot.slane %v2320, %v2347
    %v2349 = vcombine.low %v2327, %v2341
    %v2350 = vcombine.low %v2334, %v2348
    %v2351 = vcombine.low %v1341, %v1362
    %v2352 = vcombine.low %v1413, %v1416
    %v2353 = vcombine.low %v1448, %v1505
    %v2354 = vcombine.low %v1514, %v1565
    %v2356 = vunpack.c.l.s4 1966171168
    %v2357 = vunpack.c.0.s8 %v2356
    %v2358 = vlaneseq
    %v2359 = vshrl.u32 %v2358, 7
    %v2360 = vsub.s32 %v2357, %v2359
    %v2361 = vrot.slane %v2351, %v2360
    %v2363 = vunpack.c.l.s4 1966171168
    %v2364 = vunpack.c.0.s8 %v2363
    %v2365 = vlaneseq
    %v2366 = vshrl.u32 %v2365, 7
    %v2367 = vsub.s32 %v2364, %v2366
    %v2368 = vrot.slane %v2352, %v2367
    %v2370 = vunpack.c.l.s4 1966171168
    %v2371 = vunpack.c.0.s8 %v2370
    %v2372 = vlaneseq
    %v2373 = vshrl.u32 %v2372, 7
    %v2374 = vsub.s32 %v2371, %v2373
    %v2375 = vrot.slane %v2353, %v2374
    %v2377 = vunpack.c.l.s4 1966171168
    %v2378 = vunpack.c.0.s8 %v2377
    %v2379 = vlaneseq
    %v2380 = vshrl.u32 %v2379, 7
    %v2381 = vsub.s32 %v2378, %v2380
    %v2382 = vrot.slane %v2354, %v2381
    %v2383 = vcombine.low %v2361, %v2368
    %v2384 = vcombine.high %v2361, %v2368
    %v2385 = vcombine.low %v2375, %v2382
    %v2386 = vcombine.high %v2375, %v2382
    %v2388 = vunpack.c.l.s4 1966171168
    %v2389 = vunpack.c.0.s8 %v2388
    %v2390 = vlaneseq
    %v2391 = vshrl.u32 %v2390, 7
    %v2392 = vsub.s32 %v2389, %v2391
    %v2393 = vrot.slane %v2383, %v2392
    %v2395 = vunpack.c.l.s4 1966171168
    %v2396 = vunpack.c.0.s8 %v2395
    %v2397 = vlaneseq
    %v2398 = vshrl.u32 %v2397, 7
    %v2399 = vsub.s32 %v2396, %v2398
    %v2400 = vrot.slane %v2384, %v2399
    %v2402 = vunpack.c.l.s4 1966171168
    %v2403 = vunpack.c.0.s8 %v2402
    %v2404 = vlaneseq
    %v2405 = vshrl.u32 %v2404, 7
    %v2406 = vsub.s32 %v2403, %v2405
    %v2407 = vrot.slane %v2385, %v2406
    %v2409 = vunpack.c.l.s4 1966171168
    %v2410 = vunpack.c.0.s8 %v2409
    %v2411 = vlaneseq
    %v2412 = vshrl.u32 %v2411, 7
    %v2413 = vsub.s32 %v2410, %v2412
    %v2414 = vrot.slane %v2386, %v2413
    %v2415 = vcombine.low %v2393, %v2407
    %v2416 = vcombine.low %v2400, %v2414
    %v2417 = vcombine.low %v1591, %v1612
    %v2418 = vcombine.low %v1663, %v1666
    %v2420 = vunpack.c.l.s4 1966171168
    %v2421 = vunpack.c.0.s8 %v2420
    %v2422 = vlaneseq
    %v2423 = vshrl.u32 %v2422, 7
    %v2424 = vsub.s32 %v2421, %v2423
    %v2425 = vrot.slane %v2417, %v2424
    %v2427 = vunpack.c.l.s4 1966171168
    %v2428 = vunpack.c.0.s8 %v2427
    %v2429 = vlaneseq
    %v2430 = vshrl.u32 %v2429, 7
    %v2431 = vsub.s32 %v2428, %v2430
    %v2432 = vrot.slane %v2418, %v2431
    %v2433 = vcombine.low %v2425, %v2432
    %v2434 = vcombine.high %v2425, %v2432
    %v2436 = vunpack.c.l.s4 1966171168
    %v2437 = vunpack.c.0.s8 %v2436
    %v2438 = vlaneseq
    %v2439 = vshrl.u32 %v2438, 7
    %v2440 = vsub.s32 %v2437, %v2439
    %v2441 = vrot.slane %v2433, %v2440
    %v2443 = vunpack.c.l.s4 1966171168
    %v2444 = vunpack.c.0.s8 %v2443
    %v2445 = vlaneseq
    %v2446 = vshrl.u32 %v2445, 7
    %v2447 = vsub.s32 %v2444, %v2446
    %v2448 = vrot.slane %v2434, %v2447
    %2455 = vmatprep.subr.mxu0 %v1693
    %2456 = vmatpush1.msra.mxu0 %v1692
    %2457 = vmatprep.subr.mxu0 %v1697
    %2458 = vmatpush1.msra.mxu0 %v1696
    %2459 = vmatprep.subr.mxu0 %v1701
    %2460 = vmatpush1.msra.mxu0 %v1700
    %2461 = vmatprep.subr.mxu0 %v1705
    %2462 = vmatpush1.msra.mxu0 %v1704
    %2463 = vmatprep.subr.mxu0 %v1709
    %2464 = vmatpush1.msra.mxu0 %v1708
    %2465 = vmatprep.subr.mxu0 %v1713
    %2466 = vmatpush1.msra.mxu0 %v1712
    %2467 = vmatprep.subr.mxu0 %v1717
    %2468 = vmatpush1.msra.mxu0 %v1716
    %2469 = vmatprep.subr.mxu0 %v1721
    %2470 = vmatpush1.msra.mxu0 %v1720
    %2471 = vmatprep.subr.mxu0 %v1725
    %2472 = vmatpush1.msra.mxu0 %v1724
    %2473 = vmatprep.subr.mxu0 %v1729
    %2474 = vmatpush1.msra.mxu0 %v1728
    %2475 = vmatprep.subr.mxu0 %v1733
    %2476 = vmatpush1.msra.mxu0 %v1732
    %2477 = vmatprep.subr.mxu0 %v1737
    %2478 = vmatpush1.msra.mxu0 %v1736
    %2479 = vmatprep.subr.mxu0 %v1741
    %2480 = vmatpush1.msra.mxu0 %v1740
    %2481 = vmatprep.subr.mxu0 %v1745
    %2482 = vmatpush1.msra.mxu0 %v1744
    %2483 = vmatprep.subr.mxu0 %v1749
    %2484 = vmatpush1.msra.mxu0 %v1748
    %2485 = vmatprep.subr.mxu0 %v1753
    %2486 = vmatpush1.msra.mxu0 %v1752
    %2487 = vmatprep.subr.mxu0 %v1757
    %2488 = vmatpush1.msra.mxu0 %v1756
    %2489 = vmatprep.subr.mxu0 %v1761
    %2490 = vmatpush1.msra.mxu0 %v1760
    %2491 = vmatprep.subr.mxu0 %v1765
    %2492 = vmatpush1.msra.mxu0 %v1764
    %2493 = vmatprep.subr.mxu0 %v1769
    %2494 = vmatpush1.msra.mxu0 %v1768
    %2495 = vmatprep.subr.mxu0 %v1773
    %2496 = vmatpush1.msra.mxu0 %v1772
    %2497 = vmatprep.subr.mxu0 %v1777
    %2498 = vmatpush1.msra.mxu0 %v1776
    %2499 = vmatprep.subr.mxu0 %v1781
    %2500 = vmatpush1.msra.mxu0 %v1780
    %2501 = vmatprep.subr.mxu0 %v1785
    %2502 = vmatpush1.msra.mxu0 %v1784
    %2503 = vmatprep.subr.mxu0 %v1789
    %2504 = vmatpush1.msra.mxu0 %v1788
    %2505 = vmatprep.subr.mxu0 %v1793
    %2506 = vmatpush1.msra.mxu0 %v1792
    %2507 = vmatprep.subr.mxu0 %v1797
    %2508 = vmatpush1.msra.mxu0 %v1796
    %2509 = vmatprep.subr.mxu0 %v1801
    %2510 = vmatpush1.msra.mxu0 %v1800
    %2511 = vmatprep.subr.mxu0 %v1805
    %2512 = vmatpush1.msra.mxu0 %v1804
    %2513 = vmatprep.subr.mxu0 %v1809
    %2514 = vmatpush1.msra.mxu0 %v1808
    %2515 = vmatprep.subr.mxu0 %v1813
    %2516 = vmatpush1.msra.mxu0 %v1812
    %2517 = vmatprep.subr.mxu0 %v1817
    %2518 = vmatpush1.msra.mxu0 %v1816
    %2519 = vmatprep.mubr.f32.mxu0 %v2350
    %2520 = vmatmul.mubr.f32.gmra.mrb[0].mxu0 %v2349
    %v2521 = vpop.f32.mrb[0].mxu0
    %v2522 = vadd.f32 %v2186, %v2521
    %v2523 = vpop.f32.mrb[0].mxu0
    %v2524 = vadd.f32 %v2188, %v2523
    %2525 = vmatprep.mubr.f32.mxu0 %v2416
    %2526 = vmatmul.mubr.f32.gmra.mrb[0].mxu0 %v2415
    %v2527 = vpop.f32.mrb[0].mxu0
    %v2528 = vadd.f32 %v2192, %v2527
    %v2529 = vpop.f32.mrb[0].mxu0
    %v2530 = vadd.f32 %v2194, %v2529
    %2531 = vmatprep.mubr.f32.mxu0 %v2448
    %2532 = vmatmul.mubr.f32.gmra.mrb[0].mxu0 %v2441
    %v2533 = vpop.f32.mrb[0].mxu0
    %v2534 = vadd.f32 %v2198, %v2533
    %v2535 = vpop.f32.mrb[0].mxu0
    %v2536 = vadd.f32 %v2200, %v2535
    %2537 = vdwg.mxu0
    %2538 = vmatprep.subr.mxu0 %v1695
    %2539 = vmatpush1.msra.mxu0 %v1694
    %2540 = vmatprep.subr.mxu0 %v1699
    %2541 = vmatpush1.msra.mxu0 %v1698
    %2542 = vmatprep.subr.mxu0 %v1703
    %2543 = vmatpush1.msra.mxu0 %v1702
    %2544 = vmatprep.subr.mxu0 %v1707
    %2545 = vmatpush1.msra.mxu0 %v1706
    %2546 = vmatprep.subr.mxu0 %v1711
    %2547 = vmatpush1.msra.mxu0 %v1710
    %2548 = vmatprep.subr.mxu0 %v1715
    %2549 = vmatpush1.msra.mxu0 %v1714
    %2550 = vmatprep.subr.mxu0 %v1719
    %2551 = vmatpush1.msra.mxu0 %v1718
    %2552 = vmatprep.subr.mxu0 %v1723
    %2553 = vmatpush1.msra.mxu0 %v1722
    %2554 = vmatprep.subr.mxu0 %v1727
    %2555 = vmatpush1.msra.mxu0 %v1726
    %2556 = vmatprep.subr.mxu0 %v1731
    %2557 = vmatpush1.msra.mxu0 %v1730
    %2558 = vmatprep.subr.mxu0 %v1735
    %2559 = vmatpush1.msra.mxu0 %v1734
    %2560 = vmatprep.subr.mxu0 %v1739
    %2561 = vmatpush1.msra.mxu0 %v1738
    %2562 = vmatprep.subr.mxu0 %v1743
    %2563 = vmatpush1.msra.mxu0 %v1742
    %2564 = vmatprep.subr.mxu0 %v1747
    %2565 = vmatpush1.msra.mxu0 %v1746
    %2566 = vmatprep.subr.mxu0 %v1751
    %2567 = vmatpush1.msra.mxu0 %v1750
    %2568 = vmatprep.subr.mxu0 %v1755
    %2569 = vmatpush1.msra.mxu0 %v1754
    %2570 = vmatprep.subr.mxu0 %v1759
    %2571 = vmatpush1.msra.mxu0 %v1758
    %2572 = vmatprep.subr.mxu0 %v1763
    %2573 = vmatpush1.msra.mxu0 %v1762
    %2574 = vmatprep.subr.mxu0 %v1767
    %2575 = vmatpush1.msra.mxu0 %v1766
    %2576 = vmatprep.subr.mxu0 %v1771
    %2577 = vmatpush1.msra.mxu0 %v1770
    %2578 = vmatprep.subr.mxu0 %v1775
    %2579 = vmatpush1.msra.mxu0 %v1774
    %2580 = vmatprep.subr.mxu0 %v1779
    %2581 = vmatpush1.msra.mxu0 %v1778
    %2582 = vmatprep.subr.mxu0 %v1783
    %2583 = vmatpush1.msra.mxu0 %v1782
    %2584 = vmatprep.subr.mxu0 %v1787
    %2585 = vmatpush1.msra.mxu0 %v1786
    %2586 = vmatprep.subr.mxu0 %v1791
    %2587 = vmatpush1.msra.mxu0 %v1790
    %2588 = vmatprep.subr.mxu0 %v1795
    %2589 = vmatpush1.msra.mxu0 %v1794
    %2590 = vmatprep.subr.mxu0 %v1799
    %2591 = vmatpush1.msra.mxu0 %v1798
    %2592 = vmatprep.subr.mxu0 %v1803
    %2593 = vmatpush1.msra.mxu0 %v1802
    %2594 = vmatprep.subr.mxu0 %v1807
    %2595 = vmatpush1.msra.mxu0 %v1806
    %2596 = vmatprep.subr.mxu0 %v1811
    %2597 = vmatpush1.msra.mxu0 %v1810
    %2598 = vmatprep.subr.mxu0 %v1815
    %2599 = vmatpush1.msra.mxu0 %v1814
    %2600 = vmatprep.subr.mxu0 %v1819
    %2601 = vmatpush1.msra.mxu0 %v1818
    %2602 = vmatprep.mubr.f32.mxu0 %v2350
    %2603 = vmatmul.mubr.f32.gmra.mrb[0].mxu0 %v2349
    %v2604 = vpop.f32.mrb[0].mxu0
    %v2605 = vadd.f32 %v2269, %v2604
    %v2606 = vpop.f32.mrb[0].mxu0
    %v2607 = vadd.f32 %v2271, %v2606
    %2608 = vmatprep.mubr.f32.mxu0 %v2416
    %2609 = vmatmul.mubr.f32.gmra.mrb[0].mxu0 %v2415
    %v2610 = vpop.f32.mrb[0].mxu0
    %v2611 = vadd.f32 %v2275, %v2610
    %v2612 = vpop.f32.mrb[0].mxu0
    %v2613 = vadd.f32 %v2277, %v2612
    %2614 = vmatprep.mubr.f32.mxu0 %v2448
    %2615 = vmatmul.mubr.f32.gmra.mrb[0].mxu0 %v2441
    %v2616 = vpop.f32.mrb[0].mxu0
    %v2617 = vadd.f32 %v2281, %v2616
    %v2618 = vpop.f32.mrb[0].mxu0
    %v2619 = vadd.f32 %v2283, %v2618
    %2620 = vdwg.mxu0
    %s2621 = scalar_lea.vmem [#allocation10], 2048
    %v2622 = vld [vmem:[%s2621] sm:$0xff]
    %v2623 = vld [vmem:[%s2621 + $0x8] sm:$0xff]
    %v2624 = vld [vmem:[%s2621 + $0x10] sm:$0xff]
    %v2625 = vld [vmem:[%s2621 + $0x18] sm:$0xff]
    %v2626 = vld [vmem:[%s2621 + $0x20] sm:$0xff]
    %v2627 = vld [vmem:[%s2621 + $0x28] sm:$0xff]
    %v2628 = vld [vmem:[%s2621 + $0x30] sm:$0xff]
    %v2629 = vld [vmem:[%s2621 + $0x38] sm:$0xff]
    %v2630 = vld [vmem:[%s2621 + $0x40] sm:$0xff]
    %v2631 = vld [vmem:[%s2621 + $0x48] sm:$0xff]
    %v2632 = vld [vmem:[%s2621 + $0x50] sm:$0xff]
    %v2633 = vld [vmem:[%s2621 + $0x58] sm:$0xff]
    %v2634 = vld [vmem:[%s2621 + $0x60] sm:$0xff]
    %v2635 = vld [vmem:[%s2621 + $0x68] sm:$0xff]
    %v2636 = vld [vmem:[%s2621 + $0x70] sm:$0xff]
    %v2637 = vld [vmem:[%s2621 + $0x78] sm:$0xff]
    %v2638 = vld [vmem:[%s2621 + $0x80] sm:$0xff]
    %v2639 = vld [vmem:[%s2621 + $0x88] sm:$0xff]
    %v2640 = vld [vmem:[%s2621 + $0x90] sm:$0xff]
    %v2641 = vld [vmem:[%s2621 + $0x98] sm:$0xff]
    %v2642 = vld [vmem:[%s2621 + $0xa0] sm:$0xff]
    %v2643 = vld [vmem:[%s2621 + $0xa8] sm:$0xff]
    %v2644 = vld [vmem:[%s2621 + $0xb0] sm:$0xff]
    %v2645 = vld [vmem:[%s2621 + $0xb8] sm:$0xff]
    %v2646 = vld [vmem:[%s2621 + $0xc0] sm:$0xff]
    %v2647 = vld [vmem:[%s2621 + $0xc8] sm:$0xff]
    %v2648 = vld [vmem:[%s2621 + $0xd0] sm:$0xff]
    %v2649 = vld [vmem:[%s2621 + $0xd8] sm:$0xff]
    %v2650 = vld [vmem:[%s2621 + $0xe0] sm:$0xff]
    %v2651 = vld [vmem:[%s2621 + $0xe8] sm:$0xff]
    %v2652 = vld [vmem:[%s2621 + $0xf0] sm:$0xff]
    %v2653 = vld [vmem:[%s2621 + $0xf8] sm:$0xff]
    %v2654 = vld [vmem:[%s2621 + $0x100] sm:$0xff]
    %v2655 = vld [vmem:[%s2621 + $0x108] sm:$0xff]
    %v2656 = vld [vmem:[%s2621 + $0x110] sm:$0xff]
    %v2657 = vld [vmem:[%s2621 + $0x118] sm:$0xff]
    %v2658 = vld [vmem:[%s2621 + $0x120] sm:$0xff]
    %v2659 = vld [vmem:[%s2621 + $0x128] sm:$0xff]
    %v2660 = vld [vmem:[%s2621 + $0x130] sm:$0xff]
    %v2661 = vld [vmem:[%s2621 + $0x138] sm:$0xff]
    %v2662 = vld [vmem:[%s2621 + $0x140] sm:$0xff]
    %v2663 = vld [vmem:[%s2621 + $0x148] sm:$0xff]
    %v2664 = vld [vmem:[%s2621 + $0x150] sm:$0xff]
    %v2665 = vld [vmem:[%s2621 + $0x158] sm:$0xff]
    %v2666 = vld [vmem:[%s2621 + $0x160] sm:$0xff]
    %v2667 = vld [vmem:[%s2621 + $0x168] sm:$0xff]
    %v2668 = vld [vmem:[%s2621 + $0x170] sm:$0xff]
    %v2669 = vld [vmem:[%s2621 + $0x178] sm:$0xff]
    %v2670 = vld [vmem:[%s2621 + $0x180] sm:$0xff]
    %v2671 = vld [vmem:[%s2621 + $0x188] sm:$0xff]
    %v2672 = vld [vmem:[%s2621 + $0x190] sm:$0xff]
    %v2673 = vld [vmem:[%s2621 + $0x198] sm:$0xff]
    %v2674 = vld [vmem:[%s2621 + $0x1a0] sm:$0xff]
    %v2675 = vld [vmem:[%s2621 + $0x1a8] sm:$0xff]
    %v2676 = vld [vmem:[%s2621 + $0x1b0] sm:$0xff]
    %v2677 = vld [vmem:[%s2621 + $0x1b8] sm:$0xff]
    %v2678 = vld [vmem:[%s2621 + $0x1c0] sm:$0xff]
    %v2679 = vld [vmem:[%s2621 + $0x1c8] sm:$0xff]
    %v2680 = vld [vmem:[%s2621 + $0x1d0] sm:$0xff]
    %v2681 = vld [vmem:[%s2621 + $0x1d8] sm:$0xff]
    %v2682 = vld [vmem:[%s2621 + $0x1e0] sm:$0xff]
    %v2683 = vld [vmem:[%s2621 + $0x1e8] sm:$0xff]
    %v2684 = vld [vmem:[%s2621 + $0x1f0] sm:$0xff]
    %v2685 = vld [vmem:[%s2621 + $0x1f8] sm:$0xff]
    %v2686 = vld [vmem:[%s2621 + $0x200] sm:$0xff]
    %v2687 = vld [vmem:[%s2621 + $0x208] sm:$0xff]
    %v2688 = vld [vmem:[%s2621 + $0x210] sm:$0xff]
    %v2689 = vld [vmem:[%s2621 + $0x218] sm:$0xff]
    %v2690 = vld [vmem:[%s2621 + $0x220] sm:$0xff]
    %v2691 = vld [vmem:[%s2621 + $0x228] sm:$0xff]
    %v2692 = vld [vmem:[%s2621 + $0x230] sm:$0xff]
    %v2693 = vld [vmem:[%s2621 + $0x238] sm:$0xff]
    %v2694 = vld [vmem:[%s2621 + $0x240] sm:$0xff]
    %v2695 = vld [vmem:[%s2621 + $0x248] sm:$0xff]
    %v2696 = vld [vmem:[%s2621 + $0x250] sm:$0xff]
    %v2697 = vld [vmem:[%s2621 + $0x258] sm:$0xff]
    %v2698 = vld [vmem:[%s2621 + $0x260] sm:$0xff]
    %v2699 = vld [vmem:[%s2621 + $0x268] sm:$0xff]
    %v2700 = vld [vmem:[%s2621 + $0x270] sm:$0xff]
    %v2701 = vld [vmem:[%s2621 + $0x278] sm:$0xff]
    %v2702 = vld [vmem:[%s2621 + $0x280] sm:$0xff]
    %v2703 = vld [vmem:[%s2621 + $0x288] sm:$0xff]
    %v2704 = vld [vmem:[%s2621 + $0x290] sm:$0xff]
    %v2705 = vld [vmem:[%s2621 + $0x298] sm:$0xff]
    %v2706 = vld [vmem:[%s2621 + $0x2a0] sm:$0xff]
    %v2707 = vld [vmem:[%s2621 + $0x2a8] sm:$0xff]
    %v2708 = vld [vmem:[%s2621 + $0x2b0] sm:$0xff]
    %v2709 = vld [vmem:[%s2621 + $0x2b8] sm:$0xff]
    %v2710 = vld [vmem:[%s2621 + $0x2c0] sm:$0xff]
    %v2711 = vld [vmem:[%s2621 + $0x2c8] sm:$0xff]
    %v2712 = vld [vmem:[%s2621 + $0x2d0] sm:$0xff]
    %v2713 = vld [vmem:[%s2621 + $0x2d8] sm:$0xff]
    %v2714 = vld [vmem:[%s2621 + $0x2e0] sm:$0xff]
    %v2715 = vld [vmem:[%s2621 + $0x2e8] sm:$0xff]
    %v2716 = vld [vmem:[%s2621 + $0x2f0] sm:$0xff]
    %v2717 = vld [vmem:[%s2621 + $0x2f8] sm:$0xff]
    %v2718 = vld [vmem:[%s2621 + $0x300] sm:$0xff]
    %v2719 = vld [vmem:[%s2621 + $0x308] sm:$0xff]
    %v2720 = vld [vmem:[%s2621 + $0x310] sm:$0xff]
    %v2721 = vld [vmem:[%s2621 + $0x318] sm:$0xff]
    %v2722 = vld [vmem:[%s2621 + $0x320] sm:$0xff]
    %v2723 = vld [vmem:[%s2621 + $0x328] sm:$0xff]
    %v2724 = vld [vmem:[%s2621 + $0x330] sm:$0xff]
    %v2725 = vld [vmem:[%s2621 + $0x338] sm:$0xff]
    %v2726 = vld [vmem:[%s2621 + $0x340] sm:$0xff]
    %v2727 = vld [vmem:[%s2621 + $0x348] sm:$0xff]
    %v2728 = vld [vmem:[%s2621 + $0x350] sm:$0xff]
    %v2729 = vld [vmem:[%s2621 + $0x358] sm:$0xff]
    %v2730 = vld [vmem:[%s2621 + $0x360] sm:$0xff]
    %v2731 = vld [vmem:[%s2621 + $0x368] sm:$0xff]
    %v2732 = vld [vmem:[%s2621 + $0x370] sm:$0xff]
    %v2733 = vld [vmem:[%s2621 + $0x378] sm:$0xff]
    %v2734 = vld [vmem:[%s2621 + $0x380] sm:$0xff]
    %v2735 = vld [vmem:[%s2621 + $0x388] sm:$0xff]
    %v2736 = vld [vmem:[%s2621 + $0x390] sm:$0xff]
    %v2737 = vld [vmem:[%s2621 + $0x398] sm:$0xff]
    %v2738 = vld [vmem:[%s2621 + $0x3a0] sm:$0xff]
    %v2739 = vld [vmem:[%s2621 + $0x3a8] sm:$0xff]
    %v2740 = vld [vmem:[%s2621 + $0x3b0] sm:$0xff]
    %v2741 = vld [vmem:[%s2621 + $0x3b8] sm:$0xff]
    %v2742 = vld [vmem:[%s2621 + $0x3c0] sm:$0xff]
    %v2743 = vld [vmem:[%s2621 + $0x3c8] sm:$0xff]
    %v2744 = vld [vmem:[%s2621 + $0x3d0] sm:$0xff]
    %v2745 = vld [vmem:[%s2621 + $0x3d8] sm:$0xff]
    %v2746 = vld [vmem:[%s2621 + $0x3e0] sm:$0xff]
    %v2747 = vld [vmem:[%s2621 + $0x3e8] sm:$0xff]
    %v2748 = vld [vmem:[%s2621 + $0x3f0] sm:$0xff]
    %v2749 = vld [vmem:[%s2621 + $0x3f8] sm:$0xff]
    %v2750 = vcombine.low %v1113, %v1116
    %v2751 = vcombine.low %v1148, %v1205
    %v2752 = vcombine.low %v1214, %v1265
    %v2753 = vcombine.low %v1291, %v1312
    %v2755 = vunpack.c.l.s4 1966171168
    %v2756 = vunpack.c.0.s8 %v2755
    %v2757 = vlaneseq
    %v2758 = vshrl.u32 %v2757, 7
    %v2759 = vsub.s32 %v2756, %v2758
    %v2760 = vrot.slane %v2750, %v2759
    %v2762 = vunpack.c.l.s4 1966171168
    %v2763 = vunpack.c.0.s8 %v2762
    %v2764 = vlaneseq
    %v2765 = vshrl.u32 %v2764, 7
    %v2766 = vsub.s32 %v2763, %v2765
    %v2767 = vrot.slane %v2751, %v2766
    %v2769 = vunpack.c.l.s4 1966171168
    %v2770 = vunpack.c.0.s8 %v2769
    %v2771 = vlaneseq
    %v2772 = vshrl.u32 %v2771, 7
    %v2773 = vsub.s32 %v2770, %v2772
    %v2774 = vrot.slane %v2752, %v2773
    %v2776 = vunpack.c.l.s4 1966171168
    %v2777 = vunpack.c.0.s8 %v2776
    %v2778 = vlaneseq
    %v2779 = vshrl.u32 %v2778, 7
    %v2780 = vsub.s32 %v2777, %v2779
    %v2781 = vrot.slane %v2753, %v2780
    %v2782 = vcombine.low %v2760, %v2767
    %v2783 = vcombine.high %v2760, %v2767
    %v2784 = vcombine.low %v2774, %v2781
    %v2785 = vcombine.high %v2774, %v2781
    %v2787 = vunpack.c.l.s4 1966171168
    %v2788 = vunpack.c.0.s8 %v2787
    %v2789 = vlaneseq
    %v2790 = vshrl.u32 %v2789, 7
    %v2791 = vsub.s32 %v2788, %v2790
    %v2792 = vrot.slane %v2782, %v2791
    %v2794 = vunpack.c.l.s4 1966171168
    %v2795 = vunpack.c.0.s8 %v2794
    %v2796 = vlaneseq
    %v2797 = vshrl.u32 %v2796, 7
    %v2798 = vsub.s32 %v2795, %v2797
    %v2799 = vrot.slane %v2783, %v2798
    %v2801 = vunpack.c.l.s4 1966171168
    %v2802 = vunpack.c.0.s8 %v2801
    %v2803 = vlaneseq
    %v2804 = vshrl.u32 %v2803, 7
    %v2805 = vsub.s32 %v2802, %v2804
    %v2806 = vrot.slane %v2784, %v2805
    %v2808 = vunpack.c.l.s4 1966171168
    %v2809 = vunpack.c.0.s8 %v2808
    %v2810 = vlaneseq
    %v2811 = vshrl.u32 %v2810, 7
    %v2812 = vsub.s32 %v2809, %v2811
    %v2813 = vrot.slane %v2785, %v2812
    %v2814 = vcombine.low %v2792, %v2806
    %v2815 = vcombine.low %v2799, %v2813
    %v2816 = vcombine.low %v1363, %v1366
    %v2817 = vcombine.low %v1398, %v1455
    %v2818 = vcombine.low %v1464, %v1515
    %v2819 = vcombine.low %v1541, %v1562
    %v2821 = vunpack.c.l.s4 1966171168
    %v2822 = vunpack.c.0.s8 %v2821
    %v2823 = vlaneseq
    %v2824 = vshrl.u32 %v2823, 7
    %v2825 = vsub.s32 %v2822, %v2824
    %v2826 = vrot.slane %v2816, %v2825
    %v2828 = vunpack.c.l.s4 1966171168
    %v2829 = vunpack.c.0.s8 %v2828
    %v2830 = vlaneseq
    %v2831 = vshrl.u32 %v2830, 7
    %v2832 = vsub.s32 %v2829, %v2831
    %v2833 = vrot.slane %v2817, %v2832
    %v2835 = vunpack.c.l.s4 1966171168
    %v2836 = vunpack.c.0.s8 %v2835
    %v2837 = vlaneseq
    %v2838 = vshrl.u32 %v2837, 7
    %v2839 = vsub.s32 %v2836, %v2838
    %v2840 = vrot.slane %v2818, %v2839
    %v2842 = vunpack.c.l.s4 1966171168
    %v2843 = vunpack.c.0.s8 %v2842
    %v2844 = vlaneseq
    %v2845 = vshrl.u32 %v2844, 7
    %v2846 = vsub.s32 %v2843, %v2845
    %v2847 = vrot.slane %v2819, %v2846
    %v2848 = vcombine.low %v2826, %v2833
    %v2849 = vcombine.high %v2826, %v2833
    %v2850 = vcombine.low %v2840, %v2847
    %v2851 = vcombine.high %v2840, %v2847
    %v2853 = vunpack.c.l.s4 1966171168
    %v2854 = vunpack.c.0.s8 %v2853
    %v2855 = vlaneseq
    %v2856 = vshrl.u32 %v2855, 7
    %v2857 = vsub.s32 %v2854, %v2856
    %v2858 = vrot.slane %v2848, %v2857
    %v2860 = vunpack.c.l.s4 1966171168
    %v2861 = vunpack.c.0.s8 %v2860
    %v2862 = vlaneseq
    %v2863 = vshrl.u32 %v2862, 7
    %v2864 = vsub.s32 %v2861, %v2863
    %v2865 = vrot.slane %v2849, %v2864
    %v2867 = vunpack.c.l.s4 1966171168
    %v2868 = vunpack.c.0.s8 %v2867
    %v2869 = vlaneseq
    %v2870 = vshrl.u32 %v2869, 7
    %v2871 = vsub.s32 %v2868, %v2870
    %v2872 = vrot.slane %v2850, %v2871
    %v2874 = vunpack.c.l.s4 1966171168
    %v2875 = vunpack.c.0.s8 %v2874
    %v2876 = vlaneseq
    %v2877 = vshrl.u32 %v2876, 7
    %v2878 = vsub.s32 %v2875, %v2877
    %v2879 = vrot.slane %v2851, %v2878
    %v2880 = vcombine.low %v2858, %v2872
    %v2881 = vcombine.low %v2865, %v2879
    %v2882 = vcombine.low %v1613, %v1616
    %v2883 = vcombine.low %v1648, %v1689
    %v2885 = vunpack.c.l.s4 1966171168
    %v2886 = vunpack.c.0.s8 %v2885
    %v2887 = vlaneseq
    %v2888 = vshrl.u32 %v2887, 7
    %v2889 = vsub.s32 %v2886, %v2888
    %v2890 = vrot.slane %v2882, %v2889
    %v2892 = vunpack.c.l.s4 1966171168
    %v2893 = vunpack.c.0.s8 %v2892
    %v2894 = vlaneseq
    %v2895 = vshrl.u32 %v2894, 7
    %v2896 = vsub.s32 %v2893, %v2895
    %v2897 = vrot.slane %v2883, %v2896
    %v2898 = vcombine.low %v2890, %v2897
    %v2899 = vcombine.high %v2890, %v2897
    %v2901 = vunpack.c.l.s4 1966171168
    %v2902 = vunpack.c.0.s8 %v2901
    %v2903 = vlaneseq
    %v2904 = vshrl.u32 %v2903, 7
    %v2905 = vsub.s32 %v2902, %v2904
    %v2906 = vrot.slane %v2898, %v2905
    %v2908 = vunpack.c.l.s4 1966171168
    %v2909 = vunpack.c.0.s8 %v2908
    %v2910 = vlaneseq
    %v2911 = vshrl.u32 %v2910, 7
    %v2912 = vsub.s32 %v2909, %v2911
    %v2913 = vrot.slane %v2899, %v2912
    %2920 = vmatprep.subr.mxu0 %v2623
    %2921 = vmatpush1.msra.mxu0 %v2622
    %2922 = vmatprep.subr.mxu0 %v2627
    %2923 = vmatpush1.msra.mxu0 %v2626
    %2924 = vmatprep.subr.mxu0 %v2631
    %2925 = vmatpush1.msra.mxu0 %v2630
    %2926 = vmatprep.subr.mxu0 %v2635
    %2927 = vmatpush1.msra.mxu0 %v2634
    %2928 = vmatprep.subr.mxu0 %v2639
    %2929 = vmatpush1.msra.mxu0 %v2638
    %2930 = vmatprep.subr.mxu0 %v2643
    %2931 = vmatpush1.msra.mxu0 %v2642
    %2932 = vmatprep.subr.mxu0 %v2647
    %2933 = vmatpush1.msra.mxu0 %v2646
    %2934 = vmatprep.subr.mxu0 %v2651
    %2935 = vmatpush1.msra.mxu0 %v2650
    %2936 = vmatprep.subr.mxu0 %v2655
    %2937 = vmatpush1.msra.mxu0 %v2654
    %2938 = vmatprep.subr.mxu0 %v2659
    %2939 = vmatpush1.msra.mxu0 %v2658
    %2940 = vmatprep.subr.mxu0 %v2663
    %2941 = vmatpush1.msra.mxu0 %v2662
    %2942 = vmatprep.subr.mxu0 %v2667
    %2943 = vmatpush1.msra.mxu0 %v2666
    %2944 = vmatprep.subr.mxu0 %v2671
    %2945 = vmatpush1.msra.mxu0 %v2670
    %2946 = vmatprep.subr.mxu0 %v2675
    %2947 = vmatpush1.msra.mxu0 %v2674
    %2948 = vmatprep.subr.mxu0 %v2679
    %2949 = vmatpush1.msra.mxu0 %v2678
    %2950 = vmatprep.subr.mxu0 %v2683
    %2951 = vmatpush1.msra.mxu0 %v2682
    %2952 = vmatprep.subr.mxu0 %v2687
    %2953 = vmatpush1.msra.mxu0 %v2686
    %2954 = vmatprep.subr.mxu0 %v2691
    %2955 = vmatpush1.msra.mxu0 %v2690
    %2956 = vmatprep.subr.mxu0 %v2695
    %2957 = vmatpush1.msra.mxu0 %v2694
    %2958 = vmatprep.subr.mxu0 %v2699
    %2959 = vmatpush1.msra.mxu0 %v2698
    %2960 = vmatprep.subr.mxu0 %v2703
    %2961 = vmatpush1.msra.mxu0 %v2702
    %2962 = vmatprep.subr.mxu0 %v2707
    %2963 = vmatpush1.msra.mxu0 %v2706
    %2964 = vmatprep.subr.mxu0 %v2711
    %2965 = vmatpush1.msra.mxu0 %v2710
    %2966 = vmatprep.subr.mxu0 %v2715
    %2967 = vmatpush1.msra.mxu0 %v2714
    %2968 = vmatprep.subr.mxu0 %v2719
    %2969 = vmatpush1.msra.mxu0 %v2718
    %2970 = vmatprep.subr.mxu0 %v2723
    %2971 = vmatpush1.msra.mxu0 %v2722
    %2972 = vmatprep.subr.mxu0 %v2727
    %2973 = vmatpush1.msra.mxu0 %v2726
    %2974 = vmatprep.subr.mxu0 %v2731
    %2975 = vmatpush1.msra.mxu0 %v2730
    %2976 = vmatprep.subr.mxu0 %v2735
    %2977 = vmatpush1.msra.mxu0 %v2734
    %2978 = vmatprep.subr.mxu0 %v2739
    %2979 = vmatpush1.msra.mxu0 %v2738
    %2980 = vmatprep.subr.mxu0 %v2743
    %2981 = vmatpush1.msra.mxu0 %v2742
    %2982 = vmatprep.subr.mxu0 %v2747
    %2983 = vmatpush1.msra.mxu0 %v2746
    %2984 = vmatprep.mubr.f32.mxu0 %v2815
    %2985 = vmatmul.mubr.f32.gmra.mrb[0].mxu0 %v2814
    %v2986 = vpop.f32.mrb[0].mxu0
    %v2987 = vadd.f32 0.0, %v2986
    %v2988 = vpop.f32.mrb[0].mxu0
    %v2989 = vadd.f32 0.0, %v2988
    %2990 = vmatprep.mubr.f32.mxu0 %v2881
    %2991 = vmatmul.mubr.f32.gmra.mrb[0].mxu0 %v2880
    %v2992 = vpop.f32.mrb[0].mxu0
    %v2993 = vadd.f32 0.0, %v2992
    %v2994 = vpop.f32.mrb[0].mxu0
    %v2995 = vadd.f32 0.0, %v2994
    %2996 = vmatprep.mubr.f32.mxu0 %v2913
    %2997 = vmatmul.mubr.f32.gmra.mrb[0].mxu0 %v2906
    %v2998 = vpop.f32.mrb[0].mxu0
    %v2999 = vadd.f32 0.0, %v2998
    %v3000 = vpop.f32.mrb[0].mxu0
    %v3001 = vadd.f32 0.0, %v3000
    %3002 = vdwg.mxu0
    %3003 = vmatprep.subr.mxu0 %v2625
    %3004 = vmatpush1.msra.mxu0 %v2624
    %3005 = vmatprep.subr.mxu0 %v2629
    %3006 = vmatpush1.msra.mxu0 %v2628
    %3007 = vmatprep.subr.mxu0 %v2633
    %3008 = vmatpush1.msra.mxu0 %v2632
    %3009 = vmatprep.subr.mxu0 %v2637
    %3010 = vmatpush1.msra.mxu0 %v2636
    %3011 = vmatprep.subr.mxu0 %v2641
    %3012 = vmatpush1.msra.mxu0 %v2640
    %3013 = vmatprep.subr.mxu0 %v2645
    %3014 = vmatpush1.msra.mxu0 %v2644
    %3015 = vmatprep.subr.mxu0 %v2649
    %3016 = vmatpush1.msra.mxu0 %v2648
    %3017 = vmatprep.subr.mxu0 %v2653
    %3018 = vmatpush1.msra.mxu0 %v2652
    %3019 = vmatprep.subr.mxu0 %v2657
    %3020 = vmatpush1.msra.mxu0 %v2656
    %3021 = vmatprep.subr.mxu0 %v2661
    %3022 = vmatpush1.msra.mxu0 %v2660
    %3023 = vmatprep.subr.mxu0 %v2665
    %3024 = vmatpush1.msra.mxu0 %v2664
    %3025 = vmatprep.subr.mxu0 %v2669
    %3026 = vmatpush1.msra.mxu0 %v2668
    %3027 = vmatprep.subr.mxu0 %v2673
    %3028 = vmatpush1.msra.mxu0 %v2672
    %3029 = vmatprep.subr.mxu0 %v2677
    %3030 = vmatpush1.msra.mxu0 %v2676
    %3031 = vmatprep.subr.mxu0 %v2681
    %3032 = vmatpush1.msra.mxu0 %v2680
    %3033 = vmatprep.subr.mxu0 %v2685
    %3034 = vmatpush1.msra.mxu0 %v2684
    %3035 = vmatprep.subr.mxu0 %v2689
    %3036 = vmatpush1.msra.mxu0 %v2688
    %3037 = vmatprep.subr.mxu0 %v2693
    %3038 = vmatpush1.msra.mxu0 %v2692
    %3039 = vmatprep.subr.mxu0 %v2697
    %3040 = vmatpush1.msra.mxu0 %v2696
    %3041 = vmatprep.subr.mxu0 %v2701
    %3042 = vmatpush1.msra.mxu0 %v2700
    %3043 = vmatprep.subr.mxu0 %v2705
    %3044 = vmatpush1.msra.mxu0 %v2704
    %3045 = vmatprep.subr.mxu0 %v2709
    %3046 = vmatpush1.msra.mxu0 %v2708
    %3047 = vmatprep.subr.mxu0 %v2713
    %3048 = vmatpush1.msra.mxu0 %v2712
    %3049 = vmatprep.subr.mxu0 %v2717
    %3050 = vmatpush1.msra.mxu0 %v2716
    %3051 = vmatprep.subr.mxu0 %v2721
    %3052 = vmatpush1.msra.mxu0 %v2720
    %3053 = vmatprep.subr.mxu0 %v2725
    %3054 = vmatpush1.msra.mxu0 %v2724
    %3055 = vmatprep.subr.mxu0 %v2729
    %3056 = vmatpush1.msra.mxu0 %v2728
    %3057 = vmatprep.subr.mxu0 %v2733
    %3058 = vmatpush1.msra.mxu0 %v2732
    %3059 = vmatprep.subr.mxu0 %v2737
    %3060 = vmatpush1.msra.mxu0 %v2736
    %3061 = vmatprep.subr.mxu0 %v2741
    %3062 = vmatpush1.msra.mxu0 %v2740
    %3063 = vmatprep.subr.mxu0 %v2745
    %3064 = vmatpush1.msra.mxu0 %v2744
    %3065 = vmatprep.subr.mxu0 %v2749
    %3066 = vmatpush1.msra.mxu0 %v2748
    %3067 = vmatprep.mubr.f32.mxu0 %v2815
    %3068 = vmatmul.mubr.f32.gmra.mrb[0].mxu0 %v2814
    %v3069 = vpop.f32.mrb[0].mxu0
    %v3070 = vadd.f32 0.0, %v3069
    %v3071 = vpop.f32.mrb[0].mxu0
    %v3072 = vadd.f32 0.0, %v3071
    %3073 = vmatprep.mubr.f32.mxu0 %v2881
    %3074 = vmatmul.mubr.f32.gmra.mrb[0].mxu0 %v2880
    %v3075 = vpop.f32.mrb[0].mxu0
    %v3076 = vadd.f32 0.0, %v3075
    %v3077 = vpop.f32.mrb[0].mxu0
    %v3078 = vadd.f32 0.0, %v3077
    %3079 = vmatprep.mubr.f32.mxu0 %v2913
    %3080 = vmatmul.mubr.f32.gmra.mrb[0].mxu0 %v2906
    %v3081 = vpop.f32.mrb[0].mxu0
    %v3082 = vadd.f32 0.0, %v3081
    %v3083 = vpop.f32.mrb[0].mxu0
    %v3084 = vadd.f32 0.0, %v3083
    %3085 = vdwg.mxu0
    %v3086 = vadd.f32 %v2522, %v2987
    %v3087 = vadd.f32 %v2524, %v2989
    %v3088 = vadd.f32 %v2605, %v3070
    %v3089 = vadd.f32 %v2607, %v3072
    %v3090 = vadd.f32 %v2528, %v2993
    %v3091 = vadd.f32 %v2530, %v2995
    %v3092 = vadd.f32 %v2611, %v3076
    %v3093 = vadd.f32 %v2613, %v3078
    %v3094 = vadd.f32 %v2534, %v2999
    %v3095 = vadd.f32 %v2536, %v3001
    %v3096 = vadd.f32 %v2617, %v3082
    %v3097 = vadd.f32 %v2619, %v3084
    %s3098 = scalar_lea.vmem [#allocation10], 3072
    %v3099 = vld [vmem:[%s3098] sm:$0xff]
    %v3100 = vld [vmem:[%s3098 + $0x8] sm:$0xff]
    %v3101 = vld [vmem:[%s3098 + $0x10] sm:$0xff]
    %v3102 = vld [vmem:[%s3098 + $0x18] sm:$0xff]
    %v3103 = vld [vmem:[%s3098 + $0x20] sm:$0xff]
    %v3104 = vld [vmem:[%s3098 + $0x28] sm:$0xff]
    %v3105 = vld [vmem:[%s3098 + $0x30] sm:$0xff]
    %v3106 = vld [vmem:[%s3098 + $0x38] sm:$0xff]
    %v3107 = vld [vmem:[%s3098 + $0x40] sm:$0xff]
    %v3108 = vld [vmem:[%s3098 + $0x48] sm:$0xff]
    %v3109 = vld [vmem:[%s3098 + $0x50] sm:$0xff]
    %v3110 = vld [vmem:[%s3098 + $0x58] sm:$0xff]
    %v3111 = vld [vmem:[%s3098 + $0x60] sm:$0xff]
    %v3112 = vld [vmem:[%s3098 + $0x68] sm:$0xff]
    %v3113 = vld [vmem:[%s3098 + $0x70] sm:$0xff]
    %v3114 = vld [vmem:[%s3098 + $0x78] sm:$0xff]
    %v3115 = vld [vmem:[%s3098 + $0x80] sm:$0xff]
    %v3116 = vld [vmem:[%s3098 + $0x88] sm:$0xff]
    %v3117 = vld [vmem:[%s3098 + $0x90] sm:$0xff]
    %v3118 = vld [vmem:[%s3098 + $0x98] sm:$0xff]
    %v3119 = vld [vmem:[%s3098 + $0xa0] sm:$0xff]
    %v3120 = vld [vmem:[%s3098 + $0xa8] sm:$0xff]
    %v3121 = vld [vmem:[%s3098 + $0xb0] sm:$0xff]
    %v3122 = vld [vmem:[%s3098 + $0xb8] sm:$0xff]
    %v3123 = vld [vmem:[%s3098 + $0xc0] sm:$0xff]
    %v3124 = vld [vmem:[%s3098 + $0xc8] sm:$0xff]
    %v3125 = vld [vmem:[%s3098 + $0xd0] sm:$0xff]
    %v3126 = vld [vmem:[%s3098 + $0xd8] sm:$0xff]
    %v3127 = vld [vmem:[%s3098 + $0xe0] sm:$0xff]
    %v3128 = vld [vmem:[%s3098 + $0xe8] sm:$0xff]
    %v3129 = vld [vmem:[%s3098 + $0xf0] sm:$0xff]
    %v3130 = vld [vmem:[%s3098 + $0xf8] sm:$0xff]
    %v3131 = vld [vmem:[%s3098 + $0x100] sm:$0xff]
    %v3132 = vld [vmem:[%s3098 + $0x108] sm:$0xff]
    %v3133 = vld [vmem:[%s3098 + $0x110] sm:$0xff]
    %v3134 = vld [vmem:[%s3098 + $0x118] sm:$0xff]
    %v3135 = vld [vmem:[%s3098 + $0x120] sm:$0xff]
    %v3136 = vld [vmem:[%s3098 + $0x128] sm:$0xff]
    %v3137 = vld [vmem:[%s3098 + $0x130] sm:$0xff]
    %v3138 = vld [vmem:[%s3098 + $0x138] sm:$0xff]
    %v3139 = vld [vmem:[%s3098 + $0x140] sm:$0xff]
    %v3140 = vld [vmem:[%s3098 + $0x148] sm:$0xff]
    %v3141 = vld [vmem:[%s3098 + $0x150] sm:$0xff]
    %v3142 = vld [vmem:[%s3098 + $0x158] sm:$0xff]
    %v3143 = vld [vmem:[%s3098 + $0x160] sm:$0xff]
    %v3144 = vld [vmem:[%s3098 + $0x168] sm:$0xff]
    %v3145 = vld [vmem:[%s3098 + $0x170] sm:$0xff]
    %v3146 = vld [vmem:[%s3098 + $0x178] sm:$0xff]
    %v3147 = vld [vmem:[%s3098 + $0x180] sm:$0xff]
    %v3148 = vld [vmem:[%s3098 + $0x188] sm:$0xff]
    %v3149 = vld [vmem:[%s3098 + $0x190] sm:$0xff]
    %v3150 = vld [vmem:[%s3098 + $0x198] sm:$0xff]
    %v3151 = vld [vmem:[%s3098 + $0x1a0] sm:$0xff]
    %v3152 = vld [vmem:[%s3098 + $0x1a8] sm:$0xff]
    %v3153 = vld [vmem:[%s3098 + $0x1b0] sm:$0xff]
    %v3154 = vld [vmem:[%s3098 + $0x1b8] sm:$0xff]
    %v3155 = vld [vmem:[%s3098 + $0x1c0] sm:$0xff]
    %v3156 = vld [vmem:[%s3098 + $0x1c8] sm:$0xff]
    %v3157 = vld [vmem:[%s3098 + $0x1d0] sm:$0xff]
    %v3158 = vld [vmem:[%s3098 + $0x1d8] sm:$0xff]
    %v3159 = vld [vmem:[%s3098 + $0x1e0] sm:$0xff]
    %v3160 = vld [vmem:[%s3098 + $0x1e8] sm:$0xff]
    %v3161 = vld [vmem:[%s3098 + $0x1f0] sm:$0xff]
    %v3162 = vld [vmem:[%s3098 + $0x1f8] sm:$0xff]
    %v3163 = vld [vmem:[%s3098 + $0x200] sm:$0xff]
    %v3164 = vld [vmem:[%s3098 + $0x208] sm:$0xff]
    %v3165 = vld [vmem:[%s3098 + $0x210] sm:$0xff]
    %v3166 = vld [vmem:[%s3098 + $0x218] sm:$0xff]
    %v3167 = vld [vmem:[%s3098 + $0x220] sm:$0xff]
    %v3168 = vld [vmem:[%s3098 + $0x228] sm:$0xff]
    %v3169 = vld [vmem:[%s3098 + $0x230] sm:$0xff]
    %v3170 = vld [vmem:[%s3098 + $0x238] sm:$0xff]
    %v3171 = vld [vmem:[%s3098 + $0x240] sm:$0xff]
    %v3172 = vld [vmem:[%s3098 + $0x248] sm:$0xff]
    %v3173 = vld [vmem:[%s3098 + $0x250] sm:$0xff]
    %v3174 = vld [vmem:[%s3098 + $0x258] sm:$0xff]
    %v3175 = vld [vmem:[%s3098 + $0x260] sm:$0xff]
    %v3176 = vld [vmem:[%s3098 + $0x268] sm:$0xff]
    %v3177 = vld [vmem:[%s3098 + $0x270] sm:$0xff]
    %v3178 = vld [vmem:[%s3098 + $0x278] sm:$0xff]
    %v3179 = vld [vmem:[%s3098 + $0x280] sm:$0xff]
    %v3180 = vld [vmem:[%s3098 + $0x288] sm:$0xff]
    %v3181 = vld [vmem:[%s3098 + $0x290] sm:$0xff]
    %v3182 = vld [vmem:[%s3098 + $0x298] sm:$0xff]
    %v3183 = vld [vmem:[%s3098 + $0x2a0] sm:$0xff]
    %v3184 = vld [vmem:[%s3098 + $0x2a8] sm:$0xff]
    %v3185 = vld [vmem:[%s3098 + $0x2b0] sm:$0xff]
    %v3186 = vld [vmem:[%s3098 + $0x2b8] sm:$0xff]
    %v3187 = vld [vmem:[%s3098 + $0x2c0] sm:$0xff]
    %v3188 = vld [vmem:[%s3098 + $0x2c8] sm:$0xff]
    %v3189 = vld [vmem:[%s3098 + $0x2d0] sm:$0xff]
    %v3190 = vld [vmem:[%s3098 + $0x2d8] sm:$0xff]
    %v3191 = vld [vmem:[%s3098 + $0x2e0] sm:$0xff]
    %v3192 = vld [vmem:[%s3098 + $0x2e8] sm:$0xff]
    %v3193 = vld [vmem:[%s3098 + $0x2f0] sm:$0xff]
    %v3194 = vld [vmem:[%s3098 + $0x2f8] sm:$0xff]
    %v3195 = vld [vmem:[%s3098 + $0x300] sm:$0xff]
    %v3196 = vld [vmem:[%s3098 + $0x308] sm:$0xff]
    %v3197 = vld [vmem:[%s3098 + $0x310] sm:$0xff]
    %v3198 = vld [vmem:[%s3098 + $0x318] sm:$0xff]
    %v3199 = vld [vmem:[%s3098 + $0x320] sm:$0xff]
    %v3200 = vld [vmem:[%s3098 + $0x328] sm:$0xff]
    %v3201 = vld [vmem:[%s3098 + $0x330] sm:$0xff]
    %v3202 = vld [vmem:[%s3098 + $0x338] sm:$0xff]
    %v3203 = vld [vmem:[%s3098 + $0x340] sm:$0xff]
    %v3204 = vld [vmem:[%s3098 + $0x348] sm:$0xff]
    %v3205 = vld [vmem:[%s3098 + $0x350] sm:$0xff]
    %v3206 = vld [vmem:[%s3098 + $0x358] sm:$0xff]
    %v3207 = vld [vmem:[%s3098 + $0x360] sm:$0xff]
    %v3208 = vld [vmem:[%s3098 + $0x368] sm:$0xff]
    %v3209 = vld [vmem:[%s3098 + $0x370] sm:$0xff]
    %v3210 = vld [vmem:[%s3098 + $0x378] sm:$0xff]
    %v3211 = vld [vmem:[%s3098 + $0x380] sm:$0xff]
    %v3212 = vld [vmem:[%s3098 + $0x388] sm:$0xff]
    %v3213 = vld [vmem:[%s3098 + $0x390] sm:$0xff]
    %v3214 = vld [vmem:[%s3098 + $0x398] sm:$0xff]
    %v3215 = vld [vmem:[%s3098 + $0x3a0] sm:$0xff]
    %v3216 = vld [vmem:[%s3098 + $0x3a8] sm:$0xff]
    %v3217 = vld [vmem:[%s3098 + $0x3b0] sm:$0xff]
    %v3218 = vld [vmem:[%s3098 + $0x3b8] sm:$0xff]
    %v3219 = vld [vmem:[%s3098 + $0x3c0] sm:$0xff]
    %v3220 = vld [vmem:[%s3098 + $0x3c8] sm:$0xff]
    %v3221 = vld [vmem:[%s3098 + $0x3d0] sm:$0xff]
    %v3222 = vld [vmem:[%s3098 + $0x3d8] sm:$0xff]
    %v3223 = vld [vmem:[%s3098 + $0x3e0] sm:$0xff]
    %v3224 = vld [vmem:[%s3098 + $0x3e8] sm:$0xff]
    %v3225 = vld [vmem:[%s3098 + $0x3f0] sm:$0xff]
    %v3226 = vld [vmem:[%s3098 + $0x3f8] sm:$0xff]
    %v3227 = vcombine.low %v1115, %v1141
    %v3228 = vcombine.low %v1162, %v1213
    %v3229 = vcombine.low %v1216, %v1248
    %v3230 = vcombine.low %v1305, %v1314
    %v3232 = vunpack.c.l.s4 1966171168
    %v3233 = vunpack.c.0.s8 %v3232
    %v3234 = vlaneseq
    %v3235 = vshrl.u32 %v3234, 7
    %v3236 = vsub.s32 %v3233, %v3235
    %v3237 = vrot.slane %v3227, %v3236
    %v3239 = vunpack.c.l.s4 1966171168
    %v3240 = vunpack.c.0.s8 %v3239
    %v3241 = vlaneseq
    %v3242 = vshrl.u32 %v3241, 7
    %v3243 = vsub.s32 %v3240, %v3242
    %v3244 = vrot.slane %v3228, %v3243
    %v3246 = vunpack.c.l.s4 1966171168
    %v3247 = vunpack.c.0.s8 %v3246
    %v3248 = vlaneseq
    %v3249 = vshrl.u32 %v3248, 7
    %v3250 = vsub.s32 %v3247, %v3249
    %v3251 = vrot.slane %v3229, %v3250
    %v3253 = vunpack.c.l.s4 1966171168
    %v3254 = vunpack.c.0.s8 %v3253
    %v3255 = vlaneseq
    %v3256 = vshrl.u32 %v3255, 7
    %v3257 = vsub.s32 %v3254, %v3256
    %v3258 = vrot.slane %v3230, %v3257
    %v3259 = vcombine.low %v3237, %v3244
    %v3260 = vcombine.high %v3237, %v3244
    %v3261 = vcombine.low %v3251, %v3258
    %v3262 = vcombine.high %v3251, %v3258
    %v3264 = vunpack.c.l.s4 1966171168
    %v3265 = vunpack.c.0.s8 %v3264
    %v3266 = vlaneseq
    %v3267 = vshrl.u32 %v3266, 7
    %v3268 = vsub.s32 %v3265, %v3267
    %v3269 = vrot.slane %v3259, %v3268
    %v3271 = vunpack.c.l.s4 1966171168
    %v3272 = vunpack.c.0.s8 %v3271
    %v3273 = vlaneseq
    %v3274 = vshrl.u32 %v3273, 7
    %v3275 = vsub.s32 %v3272, %v3274
    %v3276 = vrot.slane %v3260, %v3275
    %v3278 = vunpack.c.l.s4 1966171168
    %v3279 = vunpack.c.0.s8 %v3278
    %v3280 = vlaneseq
    %v3281 = vshrl.u32 %v3280, 7
    %v3282 = vsub.s32 %v3279, %v3281
    %v3283 = vrot.slane %v3261, %v3282
    %v3285 = vunpack.c.l.s4 1966171168
    %v3286 = vunpack.c.0.s8 %v3285
    %v3287 = vlaneseq
    %v3288 = vshrl.u32 %v3287, 7
    %v3289 = vsub.s32 %v3286, %v3288
    %v3290 = vrot.slane %v3262, %v3289
    %v3291 = vcombine.low %v3269, %v3283
    %v3292 = vcombine.low %v3276, %v3290
    %v3293 = vcombine.low %v1365, %v1391
    %v3294 = vcombine.low %v1412, %v1463
    %v3295 = vcombine.low %v1466, %v1498
    %v3296 = vcombine.low %v1555, %v1564
    %v3298 = vunpack.c.l.s4 1966171168
    %v3299 = vunpack.c.0.s8 %v3298
    %v3300 = vlaneseq
    %v3301 = vshrl.u32 %v3300, 7
    %v3302 = vsub.s32 %v3299, %v3301
    %v3303 = vrot.slane %v3293, %v3302
    %v3305 = vunpack.c.l.s4 1966171168
    %v3306 = vunpack.c.0.s8 %v3305
    %v3307 = vlaneseq
    %v3308 = vshrl.u32 %v3307, 7
    %v3309 = vsub.s32 %v3306, %v3308
    %v3310 = vrot.slane %v3294, %v3309
    %v3312 = vunpack.c.l.s4 1966171168
    %v3313 = vunpack.c.0.s8 %v3312
    %v3314 = vlaneseq
    %v3315 = vshrl.u32 %v3314, 7
    %v3316 = vsub.s32 %v3313, %v3315
    %v3317 = vrot.slane %v3295, %v3316
    %v3319 = vunpack.c.l.s4 1966171168
    %v3320 = vunpack.c.0.s8 %v3319
    %v3321 = vlaneseq
    %v3322 = vshrl.u32 %v3321, 7
    %v3323 = vsub.s32 %v3320, %v3322
    %v3324 = vrot.slane %v3296, %v3323
    %v3325 = vcombine.low %v3303, %v3310
    %v3326 = vcombine.high %v3303, %v3310
    %v3327 = vcombine.low %v3317, %v3324
    %v3328 = vcombine.high %v3317, %v3324
    %v3330 = vunpack.c.l.s4 1966171168
    %v3331 = vunpack.c.0.s8 %v3330
    %v3332 = vlaneseq
    %v3333 = vshrl.u32 %v3332, 7
    %v3334 = vsub.s32 %v3331, %v3333
    %v3335 = vrot.slane %v3325, %v3334
    %v3337 = vunpack.c.l.s4 1966171168
    %v3338 = vunpack.c.0.s8 %v3337
    %v3339 = vlaneseq
    %v3340 = vshrl.u32 %v3339, 7
    %v3341 = vsub.s32 %v3338, %v3340
    %v3342 = vrot.slane %v3326, %v3341
    %v3344 = vunpack.c.l.s4 1966171168
    %v3345 = vunpack.c.0.s8 %v3344
    %v3346 = vlaneseq
    %v3347 = vshrl.u32 %v3346, 7
    %v3348 = vsub.s32 %v3345, %v3347
    %v3349 = vrot.slane %v3327, %v3348
    %v3351 = vunpack.c.l.s4 1966171168
    %v3352 = vunpack.c.0.s8 %v3351
    %v3353 = vlaneseq
    %v3354 = vshrl.u32 %v3353, 7
    %v3355 = vsub.s32 %v3352, %v3354
    %v3356 = vrot.slane %v3328, %v3355
    %v3357 = vcombine.low %v3335, %v3349
    %v3358 = vcombine.low %v3342, %v3356
    %v3359 = vcombine.low %v1615, %v1641
    %v3360 = vcombine.low %v1662, %v1690
    %v3362 = vunpack.c.l.s4 1966171168
    %v3363 = vunpack.c.0.s8 %v3362
    %v3364 = vlaneseq
    %v3365 = vshrl.u32 %v3364, 7
    %v3366 = vsub.s32 %v3363, %v3365
    %v3367 = vrot.slane %v3359, %v3366
    %v3369 = vunpack.c.l.s4 1966171168
    %v3370 = vunpack.c.0.s8 %v3369
    %v3371 = vlaneseq
    %v3372 = vshrl.u32 %v3371, 7
    %v3373 = vsub.s32 %v3370, %v3372
    %v3374 = vrot.slane %v3360, %v3373
    %v3375 = vcombine.low %v3367, %v3374
    %v3376 = vcombine.high %v3367, %v3374
    %v3378 = vunpack.c.l.s4 1966171168
    %v3379 = vunpack.c.0.s8 %v3378
    %v3380 = vlaneseq
    %v3381 = vshrl.u32 %v3380, 7
    %v3382 = vsub.s32 %v3379, %v3381
    %v3383 = vrot.slane %v3375, %v3382
    %v3385 = vunpack.c.l.s4 1966171168
    %v3386 = vunpack.c.0.s8 %v3385
    %v3387 = vlaneseq
    %v3388 = vshrl.u32 %v3387, 7
    %v3389 = vsub.s32 %v3386, %v3388
    %v3390 = vrot.slane %v3376, %v3389
    %3397 = vmatprep.subr.mxu0 %v3100
    %3398 = vmatpush1.msra.mxu0 %v3099
    %3399 = vmatprep.subr.mxu0 %v3104
    %3400 = vmatpush1.msra.mxu0 %v3103
    %3401 = vmatprep.subr.mxu0 %v3108
    %3402 = vmatpush1.msra.mxu0 %v3107
    %3403 = vmatprep.subr.mxu0 %v3112
    %3404 = vmatpush1.msra.mxu0 %v3111
    %3405 = vmatprep.subr.mxu0 %v3116
    %3406 = vmatpush1.msra.mxu0 %v3115
    %3407 = vmatprep.subr.mxu0 %v3120
    %3408 = vmatpush1.msra.mxu0 %v3119
    %3409 = vmatprep.subr.mxu0 %v3124
    %3410 = vmatpush1.msra.mxu0 %v3123
    %3411 = vmatprep.subr.mxu0 %v3128
    %3412 = vmatpush1.msra.mxu0 %v3127
    %3413 = vmatprep.subr.mxu0 %v3132
    %3414 = vmatpush1.msra.mxu0 %v3131
    %3415 = vmatprep.subr.mxu0 %v3136
    %3416 = vmatpush1.msra.mxu0 %v3135
    %3417 = vmatprep.subr.mxu0 %v3140
    %3418 = vmatpush1.msra.mxu0 %v3139
    %3419 = vmatprep.subr.mxu0 %v3144
    %3420 = vmatpush1.msra.mxu0 %v3143
    %3421 = vmatprep.subr.mxu0 %v3148
    %3422 = vmatpush1.msra.mxu0 %v3147
    %3423 = vmatprep.subr.mxu0 %v3152
    %3424 = vmatpush1.msra.mxu0 %v3151
    %3425 = vmatprep.subr.mxu0 %v3156
    %3426 = vmatpush1.msra.mxu0 %v3155
    %3427 = vmatprep.subr.mxu0 %v3160
    %3428 = vmatpush1.msra.mxu0 %v3159
    %3429 = vmatprep.subr.mxu0 %v3164
    %3430 = vmatpush1.msra.mxu0 %v3163
    %3431 = vmatprep.subr.mxu0 %v3168
    %3432 = vmatpush1.msra.mxu0 %v3167
    %3433 = vmatprep.subr.mxu0 %v3172
    %3434 = vmatpush1.msra.mxu0 %v3171
    %3435 = vmatprep.subr.mxu0 %v3176
    %3436 = vmatpush1.msra.mxu0 %v3175
    %3437 = vmatprep.subr.mxu0 %v3180
    %3438 = vmatpush1.msra.mxu0 %v3179
    %3439 = vmatprep.subr.mxu0 %v3184
    %3440 = vmatpush1.msra.mxu0 %v3183
    %3441 = vmatprep.subr.mxu0 %v3188
    %3442 = vmatpush1.msra.mxu0 %v3187
    %3443 = vmatprep.subr.mxu0 %v3192
    %3444 = vmatpush1.msra.mxu0 %v3191
    %3445 = vmatprep.subr.mxu0 %v3196
    %3446 = vmatpush1.msra.mxu0 %v3195
    %3447 = vmatprep.subr.mxu0 %v3200
    %3448 = vmatpush1.msra.mxu0 %v3199
    %3449 = vmatprep.subr.mxu0 %v3204
    %3450 = vmatpush1.msra.mxu0 %v3203
    %3451 = vmatprep.subr.mxu0 %v3208
    %3452 = vmatpush1.msra.mxu0 %v3207
    %3453 = vmatprep.subr.mxu0 %v3212
    %3454 = vmatpush1.msra.mxu0 %v3211
    %3455 = vmatprep.subr.mxu0 %v3216
    %3456 = vmatpush1.msra.mxu0 %v3215
    %3457 = vmatprep.subr.mxu0 %v3220
    %3458 = vmatpush1.msra.mxu0 %v3219
    %3459 = vmatprep.subr.mxu0 %v3224
    %3460 = vmatpush1.msra.mxu0 %v3223
    %3461 = vmatprep.mubr.f32.mxu0 %v3292
    %3462 = vmatmul.mubr.f32.gmra.mrb[0].mxu0 %v3291
    %v3463 = vpop.f32.mrb[0].mxu0
    %v3464 = vadd.f32 0.0, %v3463
    %v3465 = vpop.f32.mrb[0].mxu0
    %v3466 = vadd.f32 0.0, %v3465
    %3467 = vmatprep.mubr.f32.mxu0 %v3358
    %3468 = vmatmul.mubr.f32.gmra.mrb[0].mxu0 %v3357
    %v3469 = vpop.f32.mrb[0].mxu0
    %v3470 = vadd.f32 0.0, %v3469
    %v3471 = vpop.f32.mrb[0].mxu0
    %v3472 = vadd.f32 0.0, %v3471
    %3473 = vmatprep.mubr.f32.mxu0 %v3390
    %3474 = vmatmul.mubr.f32.gmra.mrb[0].mxu0 %v3383
    %v3475 = vpop.f32.mrb[0].mxu0
    %v3476 = vadd.f32 0.0, %v3475
    %v3477 = vpop.f32.mrb[0].mxu0
    %v3478 = vadd.f32 0.0, %v3477
    %3479 = vdwg.mxu0
    %3480 = vmatprep.subr.mxu0 %v3102
    %3481 = vmatpush1.msra.mxu0 %v3101
    %3482 = vmatprep.subr.mxu0 %v3106
    %3483 = vmatpush1.msra.mxu0 %v3105
    %3484 = vmatprep.subr.mxu0 %v3110
    %3485 = vmatpush1.msra.mxu0 %v3109
    %3486 = vmatprep.subr.mxu0 %v3114
    %3487 = vmatpush1.msra.mxu0 %v3113
    %3488 = vmatprep.subr.mxu0 %v3118
    %3489 = vmatpush1.msra.mxu0 %v3117
    %3490 = vmatprep.subr.mxu0 %v3122
    %3491 = vmatpush1.msra.mxu0 %v3121
    %3492 = vmatprep.subr.mxu0 %v3126
    %3493 = vmatpush1.msra.mxu0 %v3125
    %3494 = vmatprep.subr.mxu0 %v3130
    %3495 = vmatpush1.msra.mxu0 %v3129
    %3496 = vmatprep.subr.mxu0 %v3134
    %3497 = vmatpush1.msra.mxu0 %v3133
    %3498 = vmatprep.subr.mxu0 %v3138
    %3499 = vmatpush1.msra.mxu0 %v3137
    %3500 = vmatprep.subr.mxu0 %v3142
    %3501 = vmatpush1.msra.mxu0 %v3141
    %3502 = vmatprep.subr.mxu0 %v3146
    %3503 = vmatpush1.msra.mxu0 %v3145
    %3504 = vmatprep.subr.mxu0 %v3150
    %3505 = vmatpush1.msra.mxu0 %v3149
    %3506 = vmatprep.subr.mxu0 %v3154
    %3507 = vmatpush1.msra.mxu0 %v3153
    %3508 = vmatprep.subr.mxu0 %v3158
    %3509 = vmatpush1.msra.mxu0 %v3157
    %3510 = vmatprep.subr.mxu0 %v3162
    %3511 = vmatpush1.msra.mxu0 %v3161
    %3512 = vmatprep.subr.mxu0 %v3166
    %3513 = vmatpush1.msra.mxu0 %v3165
    %3514 = vmatprep.subr.mxu0 %v3170
    %3515 = vmatpush1.msra.mxu0 %v3169
    %3516 = vmatprep.subr.mxu0 %v3174
    %3517 = vmatpush1.msra.mxu0 %v3173
    %3518 = vmatprep.subr.mxu0 %v3178
    %3519 = vmatpush1.msra.mxu0 %v3177
    %3520 = vmatprep.subr.mxu0 %v3182
    %3521 = vmatpush1.msra.mxu0 %v3181
    %3522 = vmatprep.subr.mxu0 %v3186
    %3523 = vmatpush1.msra.mxu0 %v3185
    %3524 = vmatprep.subr.mxu0 %v3190
    %3525 = vmatpush1.msra.mxu0 %v3189
    %3526 = vmatprep.subr.mxu0 %v3194
    %3527 = vmatpush1.msra.mxu0 %v3193
    %3528 = vmatprep.subr.mxu0 %v3198
    %3529 = vmatpush1.msra.mxu0 %v3197
    %3530 = vmatprep.subr.mxu0 %v3202
    %3531 = vmatpush1.msra.mxu0 %v3201
    %3532 = vmatprep.subr.mxu0 %v3206
    %3533 = vmatpush1.msra.mxu0 %v3205
    %3534 = vmatprep.subr.mxu0 %v3210
    %3535 = vmatpush1.msra.mxu0 %v3209
    %3536 = vmatprep.subr.mxu0 %v3214
    %3537 = vmatpush1.msra.mxu0 %v3213
    %3538 = vmatprep.subr.mxu0 %v3218
    %3539 = vmatpush1.msra.mxu0 %v3217
    %3540 = vmatprep.subr.mxu0 %v3222
    %3541 = vmatpush1.msra.mxu0 %v3221
    %3542 = vmatprep.subr.mxu0 %v3226
    %3543 = vmatpush1.msra.mxu0 %v3225
    %3544 = vmatprep.mubr.f32.mxu0 %v3292
    %3545 = vmatmul.mubr.f32.gmra.mrb[0].mxu0 %v3291
    %v3546 = vpop.f32.mrb[0].mxu0
    %v3547 = vadd.f32 0.0, %v3546
    %v3548 = vpop.f32.mrb[0].mxu0
    %v3549 = vadd.f32 0.0, %v3548
    %3550 = vmatprep.mubr.f32.mxu0 %v3358
    %3551 = vmatmul.mubr.f32.gmra.mrb[0].mxu0 %v3357
    %v3552 = vpop.f32.mrb[0].mxu0
    %v3553 = vadd.f32 0.0, %v3552
    %v3554 = vpop.f32.mrb[0].mxu0
    %v3555 = vadd.f32 0.0, %v3554
    %3556 = vmatprep.mubr.f32.mxu0 %v3390
    %3557 = vmatmul.mubr.f32.gmra.mrb[0].mxu0 %v3383
    %v3558 = vpop.f32.mrb[0].mxu0
    %v3559 = vadd.f32 0.0, %v3558
    %v3560 = vpop.f32.mrb[0].mxu0
    %v3561 = vadd.f32 0.0, %v3560
    %3562 = vdwg.mxu0
    %v3563 = vadd.f32 %v3086, %v3464
    %v3564 = vadd.f32 %v3087, %v3466
    %v3565 = vadd.f32 %v3088, %v3547
    %v3566 = vadd.f32 %v3089, %v3549
    %v3567 = vadd.f32 %v3090, %v3470
    %v3568 = vadd.f32 %v3091, %v3472
    %v3569 = vadd.f32 %v3092, %v3553
    %v3570 = vadd.f32 %v3093, %v3555
    %v3571 = vadd.f32 %v3094, %v3476
    %v3572 = vadd.f32 %v3095, %v3478
    %v3573 = vadd.f32 %v3096, %v3559
    %v3574 = vadd.f32 %v3097, %v3561
    %s3575 = scalar_lea.vmem [#allocation10], 4096
    %v3576 = vld [vmem:[%s3575] sm:$0xff]
    %v3577 = vld [vmem:[%s3575 + $0x8] sm:$0xff]
    %v3578 = vld [vmem:[%s3575 + $0x10] sm:$0xff]
    %v3579 = vld [vmem:[%s3575 + $0x18] sm:$0xff]
    %v3580 = vld [vmem:[%s3575 + $0x20] sm:$0xff]
    %v3581 = vld [vmem:[%s3575 + $0x28] sm:$0xff]
    %v3582 = vld [vmem:[%s3575 + $0x30] sm:$0xff]
    %v3583 = vld [vmem:[%s3575 + $0x38] sm:$0xff]
    %v3584 = vld [vmem:[%s3575 + $0x40] sm:$0xff]
    %v3585 = vld [vmem:[%s3575 + $0x48] sm:$0xff]
    %v3586 = vld [vmem:[%s3575 + $0x50] sm:$0xff]
    %v3587 = vld [vmem:[%s3575 + $0x58] sm:$0xff]
    %v3588 = vld [vmem:[%s3575 + $0x60] sm:$0xff]
    %v3589 = vld [vmem:[%s3575 + $0x68] sm:$0xff]
    %v3590 = vld [vmem:[%s3575 + $0x70] sm:$0xff]
    %v3591 = vld [vmem:[%s3575 + $0x78] sm:$0xff]
    %v3592 = vld [vmem:[%s3575 + $0x80] sm:$0xff]
    %v3593 = vld [vmem:[%s3575 + $0x88] sm:$0xff]
    %v3594 = vld [vmem:[%s3575 + $0x90] sm:$0xff]
    %v3595 = vld [vmem:[%s3575 + $0x98] sm:$0xff]
    %v3596 = vld [vmem:[%s3575 + $0xa0] sm:$0xff]
    %v3597 = vld [vmem:[%s3575 + $0xa8] sm:$0xff]
    %v3598 = vld [vmem:[%s3575 + $0xb0] sm:$0xff]
    %v3599 = vld [vmem:[%s3575 + $0xb8] sm:$0xff]
    %v3600 = vld [vmem:[%s3575 + $0xc0] sm:$0xff]
    %v3601 = vld [vmem:[%s3575 + $0xc8] sm:$0xff]
    %v3602 = vld [vmem:[%s3575 + $0xd0] sm:$0xff]
    %v3603 = vld [vmem:[%s3575 + $0xd8] sm:$0xff]
    %v3604 = vld [vmem:[%s3575 + $0xe0] sm:$0xff]
    %v3605 = vld [vmem:[%s3575 + $0xe8] sm:$0xff]
    %v3606 = vld [vmem:[%s3575 + $0xf0] sm:$0xff]
    %v3607 = vld [vmem:[%s3575 + $0xf8] sm:$0xff]
    %v3608 = vld [vmem:[%s3575 + $0x100] sm:$0xff]
    %v3609 = vld [vmem:[%s3575 + $0x108] sm:$0xff]
    %v3610 = vld [vmem:[%s3575 + $0x110] sm:$0xff]
    %v3611 = vld [vmem:[%s3575 + $0x118] sm:$0xff]
    %v3612 = vld [vmem:[%s3575 + $0x120] sm:$0xff]
    %v3613 = vld [vmem:[%s3575 + $0x128] sm:$0xff]
    %v3614 = vld [vmem:[%s3575 + $0x130] sm:$0xff]
    %v3615 = vld [vmem:[%s3575 + $0x138] sm:$0xff]
    %v3616 = vld [vmem:[%s3575 + $0x140] sm:$0xff]
    %v3617 = vld [vmem:[%s3575 + $0x148] sm:$0xff]
    %v3618 = vld [vmem:[%s3575 + $0x150] sm:$0xff]
    %v3619 = vld [vmem:[%s3575 + $0x158] sm:$0xff]
    %v3620 = vld [vmem:[%s3575 + $0x160] sm:$0xff]
    %v3621 = vld [vmem:[%s3575 + $0x168] sm:$0xff]
    %v3622 = vld [vmem:[%s3575 + $0x170] sm:$0xff]
    %v3623 = vld [vmem:[%s3575 + $0x178] sm:$0xff]
    %v3624 = vld [vmem:[%s3575 + $0x180] sm:$0xff]
    %v3625 = vld [vmem:[%s3575 + $0x188] sm:$0xff]
    %v3626 = vld [vmem:[%s3575 + $0x190] sm:$0xff]
    %v3627 = vld [vmem:[%s3575 + $0x198] sm:$0xff]
    %v3628 = vld [vmem:[%s3575 + $0x1a0] sm:$0xff]
    %v3629 = vld [vmem:[%s3575 + $0x1a8] sm:$0xff]
    %v3630 = vld [vmem:[%s3575 + $0x1b0] sm:$0xff]
    %v3631 = vld [vmem:[%s3575 + $0x1b8] sm:$0xff]
    %v3632 = vld [vmem:[%s3575 + $0x1c0] sm:$0xff]
    %v3633 = vld [vmem:[%s3575 + $0x1c8] sm:$0xff]
    %v3634 = vld [vmem:[%s3575 + $0x1d0] sm:$0xff]
    %v3635 = vld [vmem:[%s3575 + $0x1d8] sm:$0xff]
    %v3636 = vld [vmem:[%s3575 + $0x1e0] sm:$0xff]
    %v3637 = vld [vmem:[%s3575 + $0x1e8] sm:$0xff]
    %v3638 = vld [vmem:[%s3575 + $0x1f0] sm:$0xff]
    %v3639 = vld [vmem:[%s3575 + $0x1f8] sm:$0xff]
    %v3640 = vld [vmem:[%s3575 + $0x200] sm:$0xff]
    %v3641 = vld [vmem:[%s3575 + $0x208] sm:$0xff]
    %v3642 = vld [vmem:[%s3575 + $0x210] sm:$0xff]
    %v3643 = vld [vmem:[%s3575 + $0x218] sm:$0xff]
    %v3644 = vld [vmem:[%s3575 + $0x220] sm:$0xff]
    %v3645 = vld [vmem:[%s3575 + $0x228] sm:$0xff]
    %v3646 = vld [vmem:[%s3575 + $0x230] sm:$0xff]
    %v3647 = vld [vmem:[%s3575 + $0x238] sm:$0xff]
    %v3648 = vld [vmem:[%s3575 + $0x240] sm:$0xff]
    %v3649 = vld [vmem:[%s3575 + $0x248] sm:$0xff]
    %v3650 = vld [vmem:[%s3575 + $0x250] sm:$0xff]
    %v3651 = vld [vmem:[%s3575 + $0x258] sm:$0xff]
    %v3652 = vld [vmem:[%s3575 + $0x260] sm:$0xff]
    %v3653 = vld [vmem:[%s3575 + $0x268] sm:$0xff]
    %v3654 = vld [vmem:[%s3575 + $0x270] sm:$0xff]
    %v3655 = vld [vmem:[%s3575 + $0x278] sm:$0xff]
    %v3656 = vld [vmem:[%s3575 + $0x280] sm:$0xff]
    %v3657 = vld [vmem:[%s3575 + $0x288] sm:$0xff]
    %v3658 = vld [vmem:[%s3575 + $0x290] sm:$0xff]
    %v3659 = vld [vmem:[%s3575 + $0x298] sm:$0xff]
    %v3660 = vld [vmem:[%s3575 + $0x2a0] sm:$0xff]
    %v3661 = vld [vmem:[%s3575 + $0x2a8] sm:$0xff]
    %v3662 = vld [vmem:[%s3575 + $0x2b0] sm:$0xff]
    %v3663 = vld [vmem:[%s3575 + $0x2b8] sm:$0xff]
    %v3664 = vld [vmem:[%s3575 + $0x2c0] sm:$0xff]
    %v3665 = vld [vmem:[%s3575 + $0x2c8] sm:$0xff]
    %v3666 = vld [vmem:[%s3575 + $0x2d0] sm:$0xff]
    %v3667 = vld [vmem:[%s3575 + $0x2d8] sm:$0xff]
    %v3668 = vld [vmem:[%s3575 + $0x2e0] sm:$0xff]
    %v3669 = vld [vmem:[%s3575 + $0x2e8] sm:$0xff]
    %v3670 = vld [vmem:[%s3575 + $0x2f0] sm:$0xff]
    %v3671 = vld [vmem:[%s3575 + $0x2f8] sm:$0xff]
    %v3672 = vld [vmem:[%s3575 + $0x300] sm:$0xff]
    %v3673 = vld [vmem:[%s3575 + $0x308] sm:$0xff]
    %v3674 = vld [vmem:[%s3575 + $0x310] sm:$0xff]
    %v3675 = vld [vmem:[%s3575 + $0x318] sm:$0xff]
    %v3676 = vld [vmem:[%s3575 + $0x320] sm:$0xff]
    %v3677 = vld [vmem:[%s3575 + $0x328] sm:$0xff]
    %v3678 = vld [vmem:[%s3575 + $0x330] sm:$0xff]
    %v3679 = vld [vmem:[%s3575 + $0x338] sm:$0xff]
    %v3680 = vld [vmem:[%s3575 + $0x340] sm:$0xff]
    %v3681 = vld [vmem:[%s3575 + $0x348] sm:$0xff]
    %v3682 = vld [vmem:[%s3575 + $0x350] sm:$0xff]
    %v3683 = vld [vmem:[%s3575 + $0x358] sm:$0xff]
    %v3684 = vld [vmem:[%s3575 + $0x360] sm:$0xff]
    %v3685 = vld [vmem:[%s3575 + $0x368] sm:$0xff]
    %v3686 = vld [vmem:[%s3575 + $0x370] sm:$0xff]
    %v3687 = vld [vmem:[%s3575 + $0x378] sm:$0xff]
    %v3688 = vld [vmem:[%s3575 + $0x380] sm:$0xff]
    %v3689 = vld [vmem:[%s3575 + $0x388] sm:$0xff]
    %v3690 = vld [vmem:[%s3575 + $0x390] sm:$0xff]
    %v3691 = vld [vmem:[%s3575 + $0x398] sm:$0xff]
    %v3692 = vld [vmem:[%s3575 + $0x3a0] sm:$0xff]
    %v3693 = vld [vmem:[%s3575 + $0x3a8] sm:$0xff]
    %v3694 = vld [vmem:[%s3575 + $0x3b0] sm:$0xff]
    %v3695 = vld [vmem:[%s3575 + $0x3b8] sm:$0xff]
    %v3696 = vld [vmem:[%s3575 + $0x3c0] sm:$0xff]
    %v3697 = vld [vmem:[%s3575 + $0x3c8] sm:$0xff]
    %v3698 = vld [vmem:[%s3575 + $0x3d0] sm:$0xff]
    %v3699 = vld [vmem:[%s3575 + $0x3d8] sm:$0xff]
    %v3700 = vld [vmem:[%s3575 + $0x3e0] sm:$0xff]
    %v3701 = vld [vmem:[%s3575 + $0x3e8] sm:$0xff]
    %v3702 = vld [vmem:[%s3575 + $0x3f0] sm:$0xff]
    %v3703 = vld [vmem:[%s3575 + $0x3f8] sm:$0xff]
    %v3704 = vcombine.low %v1098, %v1155
    %v3705 = vcombine.low %v1164, %v1215
    %v3706 = vcombine.low %v1241, %v1262
    %v3707 = vcombine.low %v1313, %v1316
    %v3709 = vunpack.c.l.s4 1966171168
    %v3710 = vunpack.c.0.s8 %v3709
    %v3711 = vlaneseq
    %v3712 = vshrl.u32 %v3711, 7
    %v3713 = vsub.s32 %v3710, %v3712
    %v3714 = vrot.slane %v3704, %v3713
    %v3716 = vunpack.c.l.s4 1966171168
    %v3717 = vunpack.c.0.s8 %v3716
    %v3718 = vlaneseq
    %v3719 = vshrl.u32 %v3718, 7
    %v3720 = vsub.s32 %v3717, %v3719
    %v3721 = vrot.slane %v3705, %v3720
    %v3723 = vunpack.c.l.s4 1966171168
    %v3724 = vunpack.c.0.s8 %v3723
    %v3725 = vlaneseq
    %v3726 = vshrl.u32 %v3725, 7
    %v3727 = vsub.s32 %v3724, %v3726
    %v3728 = vrot.slane %v3706, %v3727
    %v3730 = vunpack.c.l.s4 1966171168
    %v3731 = vunpack.c.0.s8 %v3730
    %v3732 = vlaneseq
    %v3733 = vshrl.u32 %v3732, 7
    %v3734 = vsub.s32 %v3731, %v3733
    %v3735 = vrot.slane %v3707, %v3734
    %v3736 = vcombine.low %v3714, %v3721
    %v3737 = vcombine.high %v3714, %v3721
    %v3738 = vcombine.low %v3728, %v3735
    %v3739 = vcombine.high %v3728, %v3735
    %v3741 = vunpack.c.l.s4 1966171168
    %v3742 = vunpack.c.0.s8 %v3741
    %v3743 = vlaneseq
    %v3744 = vshrl.u32 %v3743, 7
    %v3745 = vsub.s32 %v3742, %v3744
    %v3746 = vrot.slane %v3736, %v3745
    %v3748 = vunpack.c.l.s4 1966171168
    %v3749 = vunpack.c.0.s8 %v3748
    %v3750 = vlaneseq
    %v3751 = vshrl.u32 %v3750, 7
    %v3752 = vsub.s32 %v3749, %v3751
    %v3753 = vrot.slane %v3737, %v3752
    %v3755 = vunpack.c.l.s4 1966171168
    %v3756 = vunpack.c.0.s8 %v3755
    %v3757 = vlaneseq
    %v3758 = vshrl.u32 %v3757, 7
    %v3759 = vsub.s32 %v3756, %v3758
    %v3760 = vrot.slane %v3738, %v3759
    %v3762 = vunpack.c.l.s4 1966171168
    %v3763 = vunpack.c.0.s8 %v3762
    %v3764 = vlaneseq
    %v3765 = vshrl.u32 %v3764, 7
    %v3766 = vsub.s32 %v3763, %v3765
    %v3767 = vrot.slane %v3739, %v3766
    %v3768 = vcombine.low %v3746, %v3760
    %v3769 = vcombine.low %v3753, %v3767
    %v3770 = vcombine.low %v1348, %v1405
    %v3771 = vcombine.low %v1414, %v1465
    %v3772 = vcombine.low %v1491, %v1512
    %v3773 = vcombine.low %v1563, %v1566
    %v3775 = vunpack.c.l.s4 1966171168
    %v3776 = vunpack.c.0.s8 %v3775
    %v3777 = vlaneseq
    %v3778 = vshrl.u32 %v3777, 7
    %v3779 = vsub.s32 %v3776, %v3778
    %v3780 = vrot.slane %v3770, %v3779
    %v3782 = vunpack.c.l.s4 1966171168
    %v3783 = vunpack.c.0.s8 %v3782
    %v3784 = vlaneseq
    %v3785 = vshrl.u32 %v3784, 7
    %v3786 = vsub.s32 %v3783, %v3785
    %v3787 = vrot.slane %v3771, %v3786
    %v3789 = vunpack.c.l.s4 1966171168
    %v3790 = vunpack.c.0.s8 %v3789
    %v3791 = vlaneseq
    %v3792 = vshrl.u32 %v3791, 7
    %v3793 = vsub.s32 %v3790, %v3792
    %v3794 = vrot.slane %v3772, %v3793
    %v3796 = vunpack.c.l.s4 1966171168
    %v3797 = vunpack.c.0.s8 %v3796
    %v3798 = vlaneseq
    %v3799 = vshrl.u32 %v3798, 7
    %v3800 = vsub.s32 %v3797, %v3799
    %v3801 = vrot.slane %v3773, %v3800
    %v3802 = vcombine.low %v3780, %v3787
    %v3803 = vcombine.high %v3780, %v3787
    %v3804 = vcombine.low %v3794, %v3801
    %v3805 = vcombine.high %v3794, %v3801
    %v3807 = vunpack.c.l.s4 1966171168
    %v3808 = vunpack.c.0.s8 %v3807
    %v3809 = vlaneseq
    %v3810 = vshrl.u32 %v3809, 7
    %v3811 = vsub.s32 %v3808, %v3810
    %v3812 = vrot.slane %v3802, %v3811
    %v3814 = vunpack.c.l.s4 1966171168
    %v3815 = vunpack.c.0.s8 %v3814
    %v3816 = vlaneseq
    %v3817 = vshrl.u32 %v3816, 7
    %v3818 = vsub.s32 %v3815, %v3817
    %v3819 = vrot.slane %v3803, %v3818
    %v3821 = vunpack.c.l.s4 1966171168
    %v3822 = vunpack.c.0.s8 %v3821
    %v3823 = vlaneseq
    %v3824 = vshrl.u32 %v3823, 7
    %v3825 = vsub.s32 %v3822, %v3824
    %v3826 = vrot.slane %v3804, %v3825
    %v3828 = vunpack.c.l.s4 1966171168
    %v3829 = vunpack.c.0.s8 %v3828
    %v3830 = vlaneseq
    %v3831 = vshrl.u32 %v3830, 7
    %v3832 = vsub.s32 %v3829, %v3831
    %v3833 = vrot.slane %v3805, %v3832
    %v3834 = vcombine.low %v3812, %v3826
    %v3835 = vcombine.low %v3819, %v3833
    %v3836 = vcombine.low %v1598, %v1655
    %v3837 = vcombine.low %v1664, %v1691
    %v3839 = vunpack.c.l.s4 1966171168
    %v3840 = vunpack.c.0.s8 %v3839
    %v3841 = vlaneseq
    %v3842 = vshrl.u32 %v3841, 7
    %v3843 = vsub.s32 %v3840, %v3842
    %v3844 = vrot.slane %v3836, %v3843
    %v3846 = vunpack.c.l.s4 1966171168
    %v3847 = vunpack.c.0.s8 %v3846
    %v3848 = vlaneseq
    %v3849 = vshrl.u32 %v3848, 7
    %v3850 = vsub.s32 %v3847, %v3849
    %v3851 = vrot.slane %v3837, %v3850
    %v3852 = vcombine.low %v3844, %v3851
    %v3853 = vcombine.high %v3844, %v3851
    %v3855 = vunpack.c.l.s4 1966171168
    %v3856 = vunpack.c.0.s8 %v3855
    %v3857 = vlaneseq
    %v3858 = vshrl.u32 %v3857, 7
    %v3859 = vsub.s32 %v3856, %v3858
    %v3860 = vrot.slane %v3852, %v3859
    %v3862 = vunpack.c.l.s4 1966171168
    %v3863 = vunpack.c.0.s8 %v3862
    %v3864 = vlaneseq
    %v3865 = vshrl.u32 %v3864, 7
    %v3866 = vsub.s32 %v3863, %v3865
    %v3867 = vrot.slane %v3853, %v3866
    %3874 = vmatprep.subr.mxu0 %v3577
    %3875 = vmatpush1.msra.mxu0 %v3576
    %3876 = vmatprep.subr.mxu0 %v3581
    %3877 = vmatpush1.msra.mxu0 %v3580
    %3878 = vmatprep.subr.mxu0 %v3585
    %3879 = vmatpush1.msra.mxu0 %v3584
    %3880 = vmatprep.subr.mxu0 %v3589
    %3881 = vmatpush1.msra.mxu0 %v3588
    %3882 = vmatprep.subr.mxu0 %v3593
    %3883 = vmatpush1.msra.mxu0 %v3592
    %3884 = vmatprep.subr.mxu0 %v3597
    %3885 = vmatpush1.msra.mxu0 %v3596
    %3886 = vmatprep.subr.mxu0 %v3601
    %3887 = vmatpush1.msra.mxu0 %v3600
    %3888 = vmatprep.subr.mxu0 %v3605
    %3889 = vmatpush1.msra.mxu0 %v3604
    %3890 = vmatprep.subr.mxu0 %v3609
    %3891 = vmatpush1.msra.mxu0 %v3608
    %3892 = vmatprep.subr.mxu0 %v3613
    %3893 = vmatpush1.msra.mxu0 %v3612
    %3894 = vmatprep.subr.mxu0 %v3617
    %3895 = vmatpush1.msra.mxu0 %v3616
    %3896 = vmatprep.subr.mxu0 %v3621
    %3897 = vmatpush1.msra.mxu0 %v3620
    %3898 = vmatprep.subr.mxu0 %v3625
    %3899 = vmatpush1.msra.mxu0 %v3624
    %3900 = vmatprep.subr.mxu0 %v3629
    %3901 = vmatpush1.msra.mxu0 %v3628
    %3902 = vmatprep.subr.mxu0 %v3633
    %3903 = vmatpush1.msra.mxu0 %v3632
    %3904 = vmatprep.subr.mxu0 %v3637
    %3905 = vmatpush1.msra.mxu0 %v3636
    %3906 = vmatprep.subr.mxu0 %v3641
    %3907 = vmatpush1.msra.mxu0 %v3640
    %3908 = vmatprep.subr.mxu0 %v3645
    %3909 = vmatpush1.msra.mxu0 %v3644
    %3910 = vmatprep.subr.mxu0 %v3649
    %3911 = vmatpush1.msra.mxu0 %v3648
    %3912 = vmatprep.subr.mxu0 %v3653
    %3913 = vmatpush1.msra.mxu0 %v3652
    %3914 = vmatprep.subr.mxu0 %v3657
    %3915 = vmatpush1.msra.mxu0 %v3656
    %3916 = vmatprep.subr.mxu0 %v3661
    %3917 = vmatpush1.msra.mxu0 %v3660
    %3918 = vmatprep.subr.mxu0 %v3665
    %3919 = vmatpush1.msra.mxu0 %v3664
    %3920 = vmatprep.subr.mxu0 %v3669
    %3921 = vmatpush1.msra.mxu0 %v3668
    %3922 = vmatprep.subr.mxu0 %v3673
    %3923 = vmatpush1.msra.mxu0 %v3672
    %3924 = vmatprep.subr.mxu0 %v3677
    %3925 = vmatpush1.msra.mxu0 %v3676
    %3926 = vmatprep.subr.mxu0 %v3681
    %3927 = vmatpush1.msra.mxu0 %v3680
    %3928 = vmatprep.subr.mxu0 %v3685
    %3929 = vmatpush1.msra.mxu0 %v3684
    %3930 = vmatprep.subr.mxu0 %v3689
    %3931 = vmatpush1.msra.mxu0 %v3688
    %3932 = vmatprep.subr.mxu0 %v3693
    %3933 = vmatpush1.msra.mxu0 %v3692
    %3934 = vmatprep.subr.mxu0 %v3697
    %3935 = vmatpush1.msra.mxu0 %v3696
    %3936 = vmatprep.subr.mxu0 %v3701
    %3937 = vmatpush1.msra.mxu0 %v3700
    %3938 = vmatprep.mubr.f32.mxu0 %v3769
    %3939 = vmatmul.mubr.f32.gmra.mrb[0].mxu0 %v3768
    %v3940 = vpop.f32.mrb[0].mxu0
    %v3941 = vadd.f32 0.0, %v3940
    %v3942 = vpop.f32.mrb[0].mxu0
    %v3943 = vadd.f32 0.0, %v3942
    %3944 = vmatprep.mubr.f32.mxu0 %v3835
    %3945 = vmatmul.mubr.f32.gmra.mrb[0].mxu0 %v3834
    %v3946 = vpop.f32.mrb[0].mxu0
    %v3947 = vadd.f32 0.0, %v3946
    %v3948 = vpop.f32.mrb[0].mxu0
    %v3949 = vadd.f32 0.0, %v3948
    %3950 = vmatprep.mubr.f32.mxu0 %v3867
    %3951 = vmatmul.mubr.f32.gmra.mrb[0].mxu0 %v3860
    %v3952 = vpop.f32.mrb[0].mxu0
    %v3953 = vadd.f32 0.0, %v3952
    %v3954 = vpop.f32.mrb[0].mxu0
    %v3955 = vadd.f32 0.0, %v3954
    %3956 = vdwg.mxu0
    %3957 = vmatprep.subr.mxu0 %v3579
    %3958 = vmatpush1.msra.mxu0 %v3578
    %3959 = vmatprep.subr.mxu0 %v3583
    %3960 = vmatpush1.msra.mxu0 %v3582
    %3961 = vmatprep.subr.mxu0 %v3587
    %3962 = vmatpush1.msra.mxu0 %v3586
    %3963 = vmatprep.subr.mxu0 %v3591
    %3964 = vmatpush1.msra.mxu0 %v3590
    %3965 = vmatprep.subr.mxu0 %v3595
    %3966 = vmatpush1.msra.mxu0 %v3594
    %3967 = vmatprep.subr.mxu0 %v3599
    %3968 = vmatpush1.msra.mxu0 %v3598
    %3969 = vmatprep.subr.mxu0 %v3603
    %3970 = vmatpush1.msra.mxu0 %v3602
    %3971 = vmatprep.subr.mxu0 %v3607
    %3972 = vmatpush1.msra.mxu0 %v3606
    %3973 = vmatprep.subr.mxu0 %v3611
    %3974 = vmatpush1.msra.mxu0 %v3610
    %3975 = vmatprep.subr.mxu0 %v3615
    %3976 = vmatpush1.msra.mxu0 %v3614
    %3977 = vmatprep.subr.mxu0 %v3619
    %3978 = vmatpush1.msra.mxu0 %v3618
    %3979 = vmatprep.subr.mxu0 %v3623
    %3980 = vmatpush1.msra.mxu0 %v3622
    %3981 = vmatprep.subr.mxu0 %v3627
    %3982 = vmatpush1.msra.mxu0 %v3626
    %3983 = vmatprep.subr.mxu0 %v3631
    %3984 = vmatpush1.msra.mxu0 %v3630
    %3985 = vmatprep.subr.mxu0 %v3635
    %3986 = vmatpush1.msra.mxu0 %v3634
    %3987 = vmatprep.subr.mxu0 %v3639
    %3988 = vmatpush1.msra.mxu0 %v3638
    %3989 = vmatprep.subr.mxu0 %v3643
    %3990 = vmatpush1.msra.mxu0 %v3642
    %3991 = vmatprep.subr.mxu0 %v3647
    %3992 = vmatpush1.msra.mxu0 %v3646
    %3993 = vmatprep.subr.mxu0 %v3651
    %3994 = vmatpush1.msra.mxu0 %v3650
    %3995 = vmatprep.subr.mxu0 %v3655
    %3996 = vmatpush1.msra.mxu0 %v3654
    %3997 = vmatprep.subr.mxu0 %v3659
    %3998 = vmatpush1.msra.mxu0 %v3658
    %3999 = vmatprep.subr.mxu0 %v3663
    %4000 = vmatpush1.msra.mxu0 %v3662
    %4001 = vmatprep.subr.mxu0 %v3667
    %4002 = vmatpush1.msra.mxu0 %v3666
    %4003 = vmatprep.subr.mxu0 %v3671
    %4004 = vmatpush1.msra.mxu0 %v3670
    %4005 = vmatprep.subr.mxu0 %v3675
    %4006 = vmatpush1.msra.mxu0 %v3674
    %4007 = vmatprep.subr.mxu0 %v3679
    %4008 = vmatpush1.msra.mxu0 %v3678
    %4009 = vmatprep.subr.mxu0 %v3683
    %4010 = vmatpush1.msra.mxu0 %v3682
    %4011 = vmatprep.subr.mxu0 %v3687
    %4012 = vmatpush1.msra.mxu0 %v3686
    %4013 = vmatprep.subr.mxu0 %v3691
    %4014 = vmatpush1.msra.mxu0 %v3690
    %4015 = vmatprep.subr.mxu0 %v3695
    %4016 = vmatpush1.msra.mxu0 %v3694
    %4017 = vmatprep.subr.mxu0 %v3699
    %4018 = vmatpush1.msra.mxu0 %v3698
    %4019 = vmatprep.subr.mxu0 %v3703
    %4020 = vmatpush1.msra.mxu0 %v3702
    %4021 = vmatprep.mubr.f32.mxu0 %v3769
    %4022 = vmatmul.mubr.f32.gmra.mrb[0].mxu0 %v3768
    %v4023 = vpop.f32.mrb[0].mxu0
    %v4024 = vadd.f32 0.0, %v4023
    %v4025 = vpop.f32.mrb[0].mxu0
    %v4026 = vadd.f32 0.0, %v4025
    %4027 = vmatprep.mubr.f32.mxu0 %v3835
    %4028 = vmatmul.mubr.f32.gmra.mrb[0].mxu0 %v3834
    %v4029 = vpop.f32.mrb[0].mxu0
    %v4030 = vadd.f32 0.0, %v4029
    %v4031 = vpop.f32.mrb[0].mxu0
    %v4032 = vadd.f32 0.0, %v4031
    %4033 = vmatprep.mubr.f32.mxu0 %v3867
    %4034 = vmatmul.mubr.f32.gmra.mrb[0].mxu0 %v3860
    %v4035 = vpop.f32.mrb[0].mxu0
    %v4036 = vadd.f32 0.0, %v4035
    %v4037 = vpop.f32.mrb[0].mxu0
    %v4038 = vadd.f32 0.0, %v4037
    %4039 = vdwg.mxu0
    %v4040 = vadd.f32 %v3563, %v3941
    %v4041 = vadd.f32 %v3564, %v3943
    %v4042 = vadd.f32 %v3565, %v4024
    %v4043 = vadd.f32 %v3566, %v4026
    %v4044 = vadd.f32 %v3567, %v3947
    %v4045 = vadd.f32 %v3568, %v3949
    %v4046 = vadd.f32 %v3569, %v4030
    %v4047 = vadd.f32 %v3570, %v4032
    %v4048 = vadd.f32 %v3571, %v3953
    %v4049 = vadd.f32 %v3572, %v3955
    %v4050 = vadd.f32 %v3573, %v4036
    %v4051 = vadd.f32 %v3574, %v4038
    %v4052 = vld [vmem:[#allocation13] sm:$0xf]
    %v4053 = vld [vmem:[#allocation11] sm:$0xf]
    %v4055 = vlaneseq
    %v4056 = vshrl.u32 %v4055, 7
    %v4057 = vsub.s32 0, %v4056
    %v4058 = vrot.slane %v4053, %v4057
    %v4059 = vlaneseq
    %v4060 = vshrl.u32 %v4059, 7
    %v4061 = vsub.s32 1, %v4060
    %v4062 = vrot.slane %v4053, %v4061
    %v4063 = vlaneseq
    %v4064 = vshrl.u32 %v4063, 7
    %v4065 = vsub.s32 2, %v4064
    %v4066 = vrot.slane %v4053, %v4065
    %v4067 = vlaneseq
    %v4068 = vshrl.u32 %v4067, 7
    %v4069 = vsub.s32 3, %v4068
    %v4070 = vrot.slane %v4053, %v4069
    %v4075 = vadd.f32 %v4040, %v4058
    %v4076 = vadd.f32 %v4041, %v4062
    %v4077 = vadd.f32 %v4042, %v4066
    %v4078 = vadd.f32 %v4043, %v4070
    %v4079 = vadd.f32 %v4044, %v4058
    %v4080 = vadd.f32 %v4045, %v4062
    %v4081 = vadd.f32 %v4046, %v4066
    %v4082 = vadd.f32 %v4047, %v4070
    %v4083 = vadd.f32 %v4048, %v4058
    %v4084 = vadd.f32 %v4049, %v4062
    %v4085 = vadd.f32 %v4050, %v4066
    %v4086 = vadd.f32 %v4051, %v4070
    %vm4087 = vcmp.ge.f32.partialorder %v4075, 0.0
    %vm4088 = vcmp.ge.f32.partialorder %v4076, 0.0
    %vm4089 = vcmp.ge.f32.partialorder %v4077, 0.0
    %vm4090 = vcmp.ge.f32.partialorder %v4078, 0.0
    %vm4091 = vcmp.ge.f32.partialorder %v4079, 0.0
    %vm4092 = vcmp.ge.f32.partialorder %v4080, 0.0
    %vm4093 = vcmp.ge.f32.partialorder %v4081, 0.0
    %vm4094 = vcmp.ge.f32.partialorder %v4082, 0.0
    %vm4095 = vcmp.ge.f32.partialorder %v4083, 0.0
    %vm4096 = vcmp.ge.f32.partialorder %v4084, 0.0
    %vm4097 = vcmp.ge.f32.partialorder %v4085, 0.0
    %vm4098 = vcmp.ge.f32.partialorder %v4086, 0.0
    %v4099 = vmul.f32 %v4075, 0.01
    %v4100 = vmul.f32 %v4076, 0.01
    %v4101 = vmul.f32 %v4077, 0.01
    %v4102 = vmul.f32 %v4078, 0.01
    %v4103 = vmul.f32 %v4079, 0.01
    %v4104 = vmul.f32 %v4080, 0.01
    %v4105 = vmul.f32 %v4081, 0.01
    %v4106 = vmul.f32 %v4082, 0.01
    %v4107 = vmul.f32 %v4083, 0.01
    %v4108 = vmul.f32 %v4084, 0.01
    %v4109 = vmul.f32 %v4085, 0.01
    %v4110 = vmul.f32 %v4086, 0.01
    %v4111 = vsel %vm4087, %v4075, %v4099
    %v4112 = vsel %vm4088, %v4076, %v4100
    %v4113 = vsel %vm4089, %v4077, %v4101
    %v4114 = vsel %vm4090, %v4078, %v4102
    %v4115 = vsel %vm4091, %v4079, %v4103
    %v4116 = vsel %vm4092, %v4080, %v4104
    %v4117 = vsel %vm4093, %v4081, %v4105
    %v4118 = vsel %vm4094, %v4082, %v4106
    %v4119 = vsel %vm4095, %v4083, %v4107
    %v4120 = vsel %vm4096, %v4084, %v4108
    %v4121 = vsel %vm4097, %v4085, %v4109
    %v4122 = vsel %vm4098, %v4086, %v4110
    %v4124 = vlaneseq
    %v4125 = vshrl.u32 %v4124, 7
    %v4126 = vsub.s32 0, %v4125
    %v4127 = vrot.slane %v4052, %v4126
    %v4128 = vlaneseq
    %v4129 = vshrl.u32 %v4128, 7
    %v4130 = vsub.s32 1, %v4129
    %v4131 = vrot.slane %v4052, %v4130
    %v4132 = vlaneseq
    %v4133 = vshrl.u32 %v4132, 7
    %v4134 = vsub.s32 2, %v4133
    %v4135 = vrot.slane %v4052, %v4134
    %v4136 = vlaneseq
    %v4137 = vshrl.u32 %v4136, 7
    %v4138 = vsub.s32 3, %v4137
    %v4139 = vrot.slane %v4052, %v4138
    %v4144 = vmul.f32 %v4127, %v4111
    %v4145 = vmul.f32 %v4131, %v4112
    %v4146 = vmul.f32 %v4135, %v4113
    %v4147 = vmul.f32 %v4139, %v4114
    %v4148 = vmul.f32 %v4127, %v4115
    %v4149 = vmul.f32 %v4131, %v4116
    %v4150 = vmul.f32 %v4135, %v4117
    %v4151 = vmul.f32 %v4139, %v4118
    %v4152 = vmul.f32 %v4127, %v4119
    %v4153 = vmul.f32 %v4131, %v4120
    %v4154 = vmul.f32 %v4135, %v4121
    %v4155 = vmul.f32 %v4139, %v4122
    %v4156 = vld [vmem:[#allocation14] sm:$0xf]
    %v4158 = vlaneseq
    %v4159 = vshrl.u32 %v4158, 7
    %v4160 = vsub.s32 0, %v4159
    %v4161 = vrot.slane %v4156, %v4160
    %v4162 = vlaneseq
    %v4163 = vshrl.u32 %v4162, 7
    %v4164 = vsub.s32 1, %v4163
    %v4165 = vrot.slane %v4156, %v4164
    %v4166 = vlaneseq
    %v4167 = vshrl.u32 %v4166, 7
    %v4168 = vsub.s32 2, %v4167
    %v4169 = vrot.slane %v4156, %v4168
    %v4170 = vlaneseq
    %v4171 = vshrl.u32 %v4170, 7
    %v4172 = vsub.s32 3, %v4171
    %v4173 = vrot.slane %v4156, %v4172
    %v4178 = vadd.f32 %v4144, %v4161
    %v4179 = vadd.f32 %v4145, %v4165
    %v4180 = vadd.f32 %v4146, %v4169
    %v4181 = vadd.f32 %v4147, %v4173
    %v4182 = vadd.f32 %v4148, %v4161
    %v4183 = vadd.f32 %v4149, %v4165
    %v4184 = vadd.f32 %v4150, %v4169
    %v4185 = vadd.f32 %v4151, %v4173
    %v4186 = vadd.f32 %v4152, %v4161
    %v4187 = vadd.f32 %v4153, %v4165
    %v4188 = vadd.f32 %v4154, %v4169
    %v4189 = vadd.f32 %v4155, %v4173
    %v4202 = vcombine.low %v4178, %v4179
    %v4203 = vcombine.high %v4178, %v4179
    %v4204 = vcombine.low %v4180, %v4181
    %v4205 = vcombine.high %v4180, %v4181
    %v4207 = vunpack.c.l.s4 1966171168
    %v4208 = vunpack.c.0.s8 %v4207
    %v4209 = vlaneseq
    %v4210 = vshrl.u32 %v4209, 7
    %v4211 = vsub.s32 %v4208, %v4210
    %v4212 = vrot.slane %v4202, %v4211
    %v4214 = vunpack.c.l.s4 1966171168
    %v4215 = vunpack.c.0.s8 %v4214
    %v4216 = vlaneseq
    %v4217 = vshrl.u32 %v4216, 7
    %v4218 = vsub.s32 %v4215, %v4217
    %v4219 = vrot.slane %v4203, %v4218
    %v4221 = vunpack.c.l.s4 1966171168
    %v4222 = vunpack.c.0.s8 %v4221
    %v4223 = vlaneseq
    %v4224 = vshrl.u32 %v4223, 7
    %v4225 = vsub.s32 %v4222, %v4224
    %v4226 = vrot.slane %v4204, %v4225
    %v4228 = vunpack.c.l.s4 1966171168
    %v4229 = vunpack.c.0.s8 %v4228
    %v4230 = vlaneseq
    %v4231 = vshrl.u32 %v4230, 7
    %v4232 = vsub.s32 %v4229, %v4231
    %v4233 = vrot.slane %v4205, %v4232
    %v4234 = vcombine.low %v4212, %v4226
    %v4235 = vcombine.high %v4212, %v4226
    %v4236 = vcombine.low %v4219, %v4233
    %v4237 = vcombine.high %v4219, %v4233
    %v4239 = vunpack.c.l.s4 1966171168
    %v4240 = vunpack.c.0.s8 %v4239
    %v4241 = vlaneseq
    %v4242 = vshrl.u32 %v4241, 7
    %v4243 = vsub.s32 %v4240, %v4242
    %v4244 = vrot.slane %v4234, %v4243
    %v4246 = vunpack.c.l.s4 1966171168
    %v4247 = vunpack.c.0.s8 %v4246
    %v4248 = vlaneseq
    %v4249 = vshrl.u32 %v4248, 7
    %v4250 = vsub.s32 %v4247, %v4249
    %v4251 = vrot.slane %v4236, %v4250
    %v4253 = vunpack.c.l.s4 1966171168
    %v4254 = vunpack.c.0.s8 %v4253
    %v4255 = vlaneseq
    %v4256 = vshrl.u32 %v4255, 7
    %v4257 = vsub.s32 %v4254, %v4256
    %v4258 = vrot.slane %v4235, %v4257
    %v4260 = vunpack.c.l.s4 1966171168
    %v4261 = vunpack.c.0.s8 %v4260
    %v4262 = vlaneseq
    %v4263 = vshrl.u32 %v4262, 7
    %v4264 = vsub.s32 %v4261, %v4263
    %v4265 = vrot.slane %v4237, %v4264
    %v4266 = vcombine.high %v4244, %v4244
    %v4267 = vcombine.high %v4251, %v4251
    %v4268 = vcombine.high %v4258, %v4258
    %v4269 = vcombine.high %v4265, %v4265
    %v4270 = vcombine.low %v4182, %v4183
    %v4271 = vcombine.high %v4182, %v4183
    %v4272 = vcombine.low %v4184, %v4185
    %v4273 = vcombine.high %v4184, %v4185
    %v4275 = vunpack.c.l.s4 1966171168
    %v4276 = vunpack.c.0.s8 %v4275
    %v4277 = vlaneseq
    %v4278 = vshrl.u32 %v4277, 7
    %v4279 = vsub.s32 %v4276, %v4278
    %v4280 = vrot.slane %v4270, %v4279
    %v4282 = vunpack.c.l.s4 1966171168
    %v4283 = vunpack.c.0.s8 %v4282
    %v4284 = vlaneseq
    %v4285 = vshrl.u32 %v4284, 7
    %v4286 = vsub.s32 %v4283, %v4285
    %v4287 = vrot.slane %v4271, %v4286
    %v4289 = vunpack.c.l.s4 1966171168
    %v4290 = vunpack.c.0.s8 %v4289
    %v4291 = vlaneseq
    %v4292 = vshrl.u32 %v4291, 7
    %v4293 = vsub.s32 %v4290, %v4292
    %v4294 = vrot.slane %v4272, %v4293
    %v4296 = vunpack.c.l.s4 1966171168
    %v4297 = vunpack.c.0.s8 %v4296
    %v4298 = vlaneseq
    %v4299 = vshrl.u32 %v4298, 7
    %v4300 = vsub.s32 %v4297, %v4299
    %v4301 = vrot.slane %v4273, %v4300
    %v4302 = vcombine.low %v4280, %v4294
    %v4303 = vcombine.high %v4280, %v4294
    %v4304 = vcombine.low %v4287, %v4301
    %v4305 = vcombine.high %v4287, %v4301
    %v4307 = vunpack.c.l.s4 1966171168
    %v4308 = vunpack.c.0.s8 %v4307
    %v4309 = vlaneseq
    %v4310 = vshrl.u32 %v4309, 7
    %v4311 = vsub.s32 %v4308, %v4310
    %v4312 = vrot.slane %v4302, %v4311
    %v4314 = vunpack.c.l.s4 1966171168
    %v4315 = vunpack.c.0.s8 %v4314
    %v4316 = vlaneseq
    %v4317 = vshrl.u32 %v4316, 7
    %v4318 = vsub.s32 %v4315, %v4317
    %v4319 = vrot.slane %v4304, %v4318
    %v4321 = vunpack.c.l.s4 1966171168
    %v4322 = vunpack.c.0.s8 %v4321
    %v4323 = vlaneseq
    %v4324 = vshrl.u32 %v4323, 7
    %v4325 = vsub.s32 %v4322, %v4324
    %v4326 = vrot.slane %v4303, %v4325
    %v4328 = vunpack.c.l.s4 1966171168
    %v4329 = vunpack.c.0.s8 %v4328
    %v4330 = vlaneseq
    %v4331 = vshrl.u32 %v4330, 7
    %v4332 = vsub.s32 %v4329, %v4331
    %v4333 = vrot.slane %v4305, %v4332
    %v4334 = vcombine.high %v4312, %v4312
    %v4335 = vcombine.high %v4319, %v4319
    %v4336 = vcombine.high %v4326, %v4326
    %v4337 = vcombine.high %v4333, %v4333
    %v4338 = vcombine.low %v4186, %v4187
    %v4339 = vcombine.low %v4188, %v4189
    %v4341 = vunpack.c.l.s4 1966171168
    %v4342 = vunpack.c.0.s8 %v4341
    %v4343 = vlaneseq
    %v4344 = vshrl.u32 %v4343, 7
    %v4345 = vsub.s32 %v4342, %v4344
    %v4346 = vrot.slane %v4338, %v4345
    %v4348 = vunpack.c.l.s4 1966171168
    %v4349 = vunpack.c.0.s8 %v4348
    %v4350 = vlaneseq
    %v4351 = vshrl.u32 %v4350, 7
    %v4352 = vsub.s32 %v4349, %v4351
    %v4353 = vrot.slane %v4339, %v4352
    %v4354 = vcombine.low %v4346, %v4353
    %v4355 = vcombine.high %v4346, %v4353
    %v4357 = vunpack.c.l.s4 1966171168
    %v4358 = vunpack.c.0.s8 %v4357
    %v4359 = vlaneseq
    %v4360 = vshrl.u32 %v4359, 7
    %v4361 = vsub.s32 %v4358, %v4360
    %v4362 = vrot.slane %v4354, %v4361
    %v4364 = vunpack.c.l.s4 1966171168
    %v4365 = vunpack.c.0.s8 %v4364
    %v4366 = vlaneseq
    %v4367 = vshrl.u32 %v4366, 7
    %v4368 = vsub.s32 %v4365, %v4367
    %v4369 = vrot.slane %v4355, %v4368
    %v4370 = vcombine.high %v4362, %v4362
    %v4371 = vcombine.high %v4369, %v4369
    %v4372 = vld [vmem:[#allocation16] sm:$0xff]
    %v4373 = vld [vmem:[#allocation16 + $0x8] sm:$0xff]
    %v4374 = vld [vmem:[#allocation16 + $0x10] sm:$0xff]
    %v4375 = vld [vmem:[#allocation16 + $0x18] sm:$0xff]
    %v4376 = vld [vmem:[#allocation16 + $0x20] sm:$0xff]
    %v4377 = vld [vmem:[#allocation16 + $0x28] sm:$0xff]
    %v4378 = vld [vmem:[#allocation16 + $0x30] sm:$0xff]
    %v4379 = vld [vmem:[#allocation16 + $0x38] sm:$0xff]
    %v4380 = vld [vmem:[#allocation16 + $0x40] sm:$0xff]
    %v4381 = vld [vmem:[#allocation16 + $0x48] sm:$0xff]
    %v4382 = vld [vmem:[#allocation16 + $0x50] sm:$0xff]
    %v4383 = vld [vmem:[#allocation16 + $0x58] sm:$0xff]
    %v4384 = vld [vmem:[#allocation16 + $0x60] sm:$0xff]
    %v4385 = vld [vmem:[#allocation16 + $0x68] sm:$0xff]
    %v4386 = vld [vmem:[#allocation16 + $0x70] sm:$0xff]
    %v4387 = vld [vmem:[#allocation16 + $0x78] sm:$0xff]
    %v4388 = vld [vmem:[#allocation16 + $0x80] sm:$0xff]
    %v4389 = vld [vmem:[#allocation16 + $0x88] sm:$0xff]
    %v4390 = vld [vmem:[#allocation16 + $0x90] sm:$0xff]
    %v4391 = vld [vmem:[#allocation16 + $0x98] sm:$0xff]
    %v4392 = vld [vmem:[#allocation16 + $0xa0] sm:$0xff]
    %v4393 = vld [vmem:[#allocation16 + $0xa8] sm:$0xff]
    %v4394 = vld [vmem:[#allocation16 + $0xb0] sm:$0xff]
    %v4395 = vld [vmem:[#allocation16 + $0xb8] sm:$0xff]
    %v4396 = vld [vmem:[#allocation16 + $0xc0] sm:$0xff]
    %v4397 = vld [vmem:[#allocation16 + $0xc8] sm:$0xff]
    %v4398 = vld [vmem:[#allocation16 + $0xd0] sm:$0xff]
    %v4399 = vld [vmem:[#allocation16 + $0xd8] sm:$0xff]
    %v4400 = vld [vmem:[#allocation16 + $0xe0] sm:$0xff]
    %v4401 = vld [vmem:[#allocation16 + $0xe8] sm:$0xff]
    %v4402 = vld [vmem:[#allocation16 + $0xf0] sm:$0xff]
    %v4403 = vld [vmem:[#allocation16 + $0xf8] sm:$0xff]
    %v4404 = vld [vmem:[#allocation16 + $0x100] sm:$0xff]
    %v4405 = vld [vmem:[#allocation16 + $0x108] sm:$0xff]
    %v4406 = vld [vmem:[#allocation16 + $0x110] sm:$0xff]
    %v4407 = vld [vmem:[#allocation16 + $0x118] sm:$0xff]
    %v4408 = vld [vmem:[#allocation16 + $0x120] sm:$0xff]
    %v4409 = vld [vmem:[#allocation16 + $0x128] sm:$0xff]
    %v4410 = vld [vmem:[#allocation16 + $0x130] sm:$0xff]
    %v4411 = vld [vmem:[#allocation16 + $0x138] sm:$0xff]
    %v4412 = vld [vmem:[#allocation16 + $0x140] sm:$0xff]
    %v4413 = vld [vmem:[#allocation16 + $0x148] sm:$0xff]
    %v4414 = vld [vmem:[#allocation16 + $0x150] sm:$0xff]
    %v4415 = vld [vmem:[#allocation16 + $0x158] sm:$0xff]
    %v4416 = vld [vmem:[#allocation16 + $0x160] sm:$0xff]
    %v4417 = vld [vmem:[#allocation16 + $0x168] sm:$0xff]
    %v4418 = vld [vmem:[#allocation16 + $0x170] sm:$0xff]
    %v4419 = vld [vmem:[#allocation16 + $0x178] sm:$0xff]
    %v4420 = vld [vmem:[#allocation16 + $0x180] sm:$0xff]
    %v4421 = vld [vmem:[#allocation16 + $0x188] sm:$0xff]
    %v4422 = vld [vmem:[#allocation16 + $0x190] sm:$0xff]
    %v4423 = vld [vmem:[#allocation16 + $0x198] sm:$0xff]
    %v4424 = vld [vmem:[#allocation16 + $0x1a0] sm:$0xff]
    %v4425 = vld [vmem:[#allocation16 + $0x1a8] sm:$0xff]
    %v4426 = vld [vmem:[#allocation16 + $0x1b0] sm:$0xff]
    %v4427 = vld [vmem:[#allocation16 + $0x1b8] sm:$0xff]
    %v4428 = vld [vmem:[#allocation16 + $0x1c0] sm:$0xff]
    %v4429 = vld [vmem:[#allocation16 + $0x1c8] sm:$0xff]
    %v4430 = vld [vmem:[#allocation16 + $0x1d0] sm:$0xff]
    %v4431 = vld [vmem:[#allocation16 + $0x1d8] sm:$0xff]
    %v4432 = vld [vmem:[#allocation16 + $0x1e0] sm:$0xff]
    %v4433 = vld [vmem:[#allocation16 + $0x1e8] sm:$0xff]
    %v4434 = vld [vmem:[#allocation16 + $0x1f0] sm:$0xff]
    %v4435 = vld [vmem:[#allocation16 + $0x1f8] sm:$0xff]
    %v4436 = vld [vmem:[#allocation16 + $0x200] sm:$0xff]
    %v4437 = vld [vmem:[#allocation16 + $0x208] sm:$0xff]
    %v4438 = vld [vmem:[#allocation16 + $0x210] sm:$0xff]
    %v4439 = vld [vmem:[#allocation16 + $0x218] sm:$0xff]
    %v4440 = vld [vmem:[#allocation16 + $0x220] sm:$0xff]
    %v4441 = vld [vmem:[#allocation16 + $0x228] sm:$0xff]
    %v4442 = vld [vmem:[#allocation16 + $0x230] sm:$0xff]
    %v4443 = vld [vmem:[#allocation16 + $0x238] sm:$0xff]
    %v4444 = vld [vmem:[#allocation16 + $0x240] sm:$0xff]
    %v4445 = vld [vmem:[#allocation16 + $0x248] sm:$0xff]
    %v4446 = vld [vmem:[#allocation16 + $0x250] sm:$0xff]
    %v4447 = vld [vmem:[#allocation16 + $0x258] sm:$0xff]
    %v4448 = vld [vmem:[#allocation16 + $0x260] sm:$0xff]
    %v4449 = vld [vmem:[#allocation16 + $0x268] sm:$0xff]
    %v4450 = vld [vmem:[#allocation16 + $0x270] sm:$0xff]
    %v4451 = vld [vmem:[#allocation16 + $0x278] sm:$0xff]
    %v4452 = vld [vmem:[#allocation16 + $0x280] sm:$0xff]
    %v4453 = vld [vmem:[#allocation16 + $0x288] sm:$0xff]
    %v4454 = vld [vmem:[#allocation16 + $0x290] sm:$0xff]
    %v4455 = vld [vmem:[#allocation16 + $0x298] sm:$0xff]
    %v4456 = vld [vmem:[#allocation16 + $0x2a0] sm:$0xff]
    %v4457 = vld [vmem:[#allocation16 + $0x2a8] sm:$0xff]
    %v4458 = vld [vmem:[#allocation16 + $0x2b0] sm:$0xff]
    %v4459 = vld [vmem:[#allocation16 + $0x2b8] sm:$0xff]
    %v4460 = vld [vmem:[#allocation16 + $0x2c0] sm:$0xff]
    %v4461 = vld [vmem:[#allocation16 + $0x2c8] sm:$0xff]
    %v4462 = vld [vmem:[#allocation16 + $0x2d0] sm:$0xff]
    %v4463 = vld [vmem:[#allocation16 + $0x2d8] sm:$0xff]
    %v4464 = vld [vmem:[#allocation16 + $0x2e0] sm:$0xff]
    %v4465 = vld [vmem:[#allocation16 + $0x2e8] sm:$0xff]
    %v4466 = vld [vmem:[#allocation16 + $0x2f0] sm:$0xff]
    %v4467 = vld [vmem:[#allocation16 + $0x2f8] sm:$0xff]
    %v4468 = vld [vmem:[#allocation16 + $0x300] sm:$0xff]
    %v4469 = vld [vmem:[#allocation16 + $0x308] sm:$0xff]
    %v4470 = vld [vmem:[#allocation16 + $0x310] sm:$0xff]
    %v4471 = vld [vmem:[#allocation16 + $0x318] sm:$0xff]
    %v4472 = vld [vmem:[#allocation16 + $0x320] sm:$0xff]
    %v4473 = vld [vmem:[#allocation16 + $0x328] sm:$0xff]
    %v4474 = vld [vmem:[#allocation16 + $0x330] sm:$0xff]
    %v4475 = vld [vmem:[#allocation16 + $0x338] sm:$0xff]
    %v4476 = vld [vmem:[#allocation16 + $0x340] sm:$0xff]
    %v4477 = vld [vmem:[#allocation16 + $0x348] sm:$0xff]
    %v4478 = vld [vmem:[#allocation16 + $0x350] sm:$0xff]
    %v4479 = vld [vmem:[#allocation16 + $0x358] sm:$0xff]
    %v4480 = vld [vmem:[#allocation16 + $0x360] sm:$0xff]
    %v4481 = vld [vmem:[#allocation16 + $0x368] sm:$0xff]
    %v4482 = vld [vmem:[#allocation16 + $0x370] sm:$0xff]
    %v4483 = vld [vmem:[#allocation16 + $0x378] sm:$0xff]
    %v4484 = vld [vmem:[#allocation16 + $0x380] sm:$0xff]
    %v4485 = vld [vmem:[#allocation16 + $0x388] sm:$0xff]
    %v4486 = vld [vmem:[#allocation16 + $0x390] sm:$0xff]
    %v4487 = vld [vmem:[#allocation16 + $0x398] sm:$0xff]
    %v4488 = vld [vmem:[#allocation16 + $0x3a0] sm:$0xff]
    %v4489 = vld [vmem:[#allocation16 + $0x3a8] sm:$0xff]
    %v4490 = vld [vmem:[#allocation16 + $0x3b0] sm:$0xff]
    %v4491 = vld [vmem:[#allocation16 + $0x3b8] sm:$0xff]
    %v4492 = vld [vmem:[#allocation16 + $0x3c0] sm:$0xff]
    %v4493 = vld [vmem:[#allocation16 + $0x3c8] sm:$0xff]
    %v4494 = vld [vmem:[#allocation16 + $0x3d0] sm:$0xff]
    %v4495 = vld [vmem:[#allocation16 + $0x3d8] sm:$0xff]
    %v4496 = vld [vmem:[#allocation16 + $0x3e0] sm:$0xff]
    %v4497 = vld [vmem:[#allocation16 + $0x3e8] sm:$0xff]
    %v4498 = vld [vmem:[#allocation16 + $0x3f0] sm:$0xff]
    %v4499 = vld [vmem:[#allocation16 + $0x3f8] sm:$0xff]
    %s4500 = scalar_lea.vmem [#allocation16], 1024
    %v4501 = vld [vmem:[%s4500] sm:$0xff]
    %v4502 = vld [vmem:[%s4500 + $0x8] sm:$0xff]
    %v4503 = vld [vmem:[%s4500 + $0x10] sm:$0xff]
    %v4504 = vld [vmem:[%s4500 + $0x18] sm:$0xff]
    %v4505 = vld [vmem:[%s4500 + $0x20] sm:$0xff]
    %v4506 = vld [vmem:[%s4500 + $0x28] sm:$0xff]
    %v4507 = vld [vmem:[%s4500 + $0x30] sm:$0xff]
    %v4508 = vld [vmem:[%s4500 + $0x38] sm:$0xff]
    %v4509 = vld [vmem:[%s4500 + $0x40] sm:$0xff]
    %v4510 = vld [vmem:[%s4500 + $0x48] sm:$0xff]
    %v4511 = vld [vmem:[%s4500 + $0x50] sm:$0xff]
    %v4512 = vld [vmem:[%s4500 + $0x58] sm:$0xff]
    %v4513 = vld [vmem:[%s4500 + $0x60] sm:$0xff]
    %v4514 = vld [vmem:[%s4500 + $0x68] sm:$0xff]
    %v4515 = vld [vmem:[%s4500 + $0x70] sm:$0xff]
    %v4516 = vld [vmem:[%s4500 + $0x78] sm:$0xff]
    %v4517 = vld [vmem:[%s4500 + $0x80] sm:$0xff]
    %v4518 = vld [vmem:[%s4500 + $0x88] sm:$0xff]
    %v4519 = vld [vmem:[%s4500 + $0x90] sm:$0xff]
    %v4520 = vld [vmem:[%s4500 + $0x98] sm:$0xff]
    %v4521 = vld [vmem:[%s4500 + $0xa0] sm:$0xff]
    %v4522 = vld [vmem:[%s4500 + $0xa8] sm:$0xff]
    %v4523 = vld [vmem:[%s4500 + $0xb0] sm:$0xff]
    %v4524 = vld [vmem:[%s4500 + $0xb8] sm:$0xff]
    %v4525 = vld [vmem:[%s4500 + $0xc0] sm:$0xff]
    %v4526 = vld [vmem:[%s4500 + $0xc8] sm:$0xff]
    %v4527 = vld [vmem:[%s4500 + $0xd0] sm:$0xff]
    %v4528 = vld [vmem:[%s4500 + $0xd8] sm:$0xff]
    %v4529 = vld [vmem:[%s4500 + $0xe0] sm:$0xff]
    %v4530 = vld [vmem:[%s4500 + $0xe8] sm:$0xff]
    %v4531 = vld [vmem:[%s4500 + $0xf0] sm:$0xff]
    %v4532 = vld [vmem:[%s4500 + $0xf8] sm:$0xff]
    %v4533 = vld [vmem:[%s4500 + $0x100] sm:$0xff]
    %v4534 = vld [vmem:[%s4500 + $0x108] sm:$0xff]
    %v4535 = vld [vmem:[%s4500 + $0x110] sm:$0xff]
    %v4536 = vld [vmem:[%s4500 + $0x118] sm:$0xff]
    %v4537 = vld [vmem:[%s4500 + $0x120] sm:$0xff]
    %v4538 = vld [vmem:[%s4500 + $0x128] sm:$0xff]
    %v4539 = vld [vmem:[%s4500 + $0x130] sm:$0xff]
    %v4540 = vld [vmem:[%s4500 + $0x138] sm:$0xff]
    %v4541 = vld [vmem:[%s4500 + $0x140] sm:$0xff]
    %v4542 = vld [vmem:[%s4500 + $0x148] sm:$0xff]
    %v4543 = vld [vmem:[%s4500 + $0x150] sm:$0xff]
    %v4544 = vld [vmem:[%s4500 + $0x158] sm:$0xff]
    %v4545 = vld [vmem:[%s4500 + $0x160] sm:$0xff]
    %v4546 = vld [vmem:[%s4500 + $0x168] sm:$0xff]
    %v4547 = vld [vmem:[%s4500 + $0x170] sm:$0xff]
    %v4548 = vld [vmem:[%s4500 + $0x178] sm:$0xff]
    %v4549 = vld [vmem:[%s4500 + $0x180] sm:$0xff]
    %v4550 = vld [vmem:[%s4500 + $0x188] sm:$0xff]
    %v4551 = vld [vmem:[%s4500 + $0x190] sm:$0xff]
    %v4552 = vld [vmem:[%s4500 + $0x198] sm:$0xff]
    %v4553 = vld [vmem:[%s4500 + $0x1a0] sm:$0xff]
    %v4554 = vld [vmem:[%s4500 + $0x1a8] sm:$0xff]
    %v4555 = vld [vmem:[%s4500 + $0x1b0] sm:$0xff]
    %v4556 = vld [vmem:[%s4500 + $0x1b8] sm:$0xff]
    %v4557 = vld [vmem:[%s4500 + $0x1c0] sm:$0xff]
    %v4558 = vld [vmem:[%s4500 + $0x1c8] sm:$0xff]
    %v4559 = vld [vmem:[%s4500 + $0x1d0] sm:$0xff]
    %v4560 = vld [vmem:[%s4500 + $0x1d8] sm:$0xff]
    %v4561 = vld [vmem:[%s4500 + $0x1e0] sm:$0xff]
    %v4562 = vld [vmem:[%s4500 + $0x1e8] sm:$0xff]
    %v4563 = vld [vmem:[%s4500 + $0x1f0] sm:$0xff]
    %v4564 = vld [vmem:[%s4500 + $0x1f8] sm:$0xff]
    %v4565 = vld [vmem:[%s4500 + $0x200] sm:$0xff]
    %v4566 = vld [vmem:[%s4500 + $0x208] sm:$0xff]
    %v4567 = vld [vmem:[%s4500 + $0x210] sm:$0xff]
    %v4568 = vld [vmem:[%s4500 + $0x218] sm:$0xff]
    %v4569 = vld [vmem:[%s4500 + $0x220] sm:$0xff]
    %v4570 = vld [vmem:[%s4500 + $0x228] sm:$0xff]
    %v4571 = vld [vmem:[%s4500 + $0x230] sm:$0xff]
    %v4572 = vld [vmem:[%s4500 + $0x238] sm:$0xff]
    %v4573 = vld [vmem:[%s4500 + $0x240] sm:$0xff]
    %v4574 = vld [vmem:[%s4500 + $0x248] sm:$0xff]
    %v4575 = vld [vmem:[%s4500 + $0x250] sm:$0xff]
    %v4576 = vld [vmem:[%s4500 + $0x258] sm:$0xff]
    %v4577 = vld [vmem:[%s4500 + $0x260] sm:$0xff]
    %v4578 = vld [vmem:[%s4500 + $0x268] sm:$0xff]
    %v4579 = vld [vmem:[%s4500 + $0x270] sm:$0xff]
    %v4580 = vld [vmem:[%s4500 + $0x278] sm:$0xff]
    %v4581 = vld [vmem:[%s4500 + $0x280] sm:$0xff]
    %v4582 = vld [vmem:[%s4500 + $0x288] sm:$0xff]
    %v4583 = vld [vmem:[%s4500 + $0x290] sm:$0xff]
    %v4584 = vld [vmem:[%s4500 + $0x298] sm:$0xff]
    %v4585 = vld [vmem:[%s4500 + $0x2a0] sm:$0xff]
    %v4586 = vld [vmem:[%s4500 + $0x2a8] sm:$0xff]
    %v4587 = vld [vmem:[%s4500 + $0x2b0] sm:$0xff]
    %v4588 = vld [vmem:[%s4500 + $0x2b8] sm:$0xff]
    %v4589 = vld [vmem:[%s4500 + $0x2c0] sm:$0xff]
    %v4590 = vld [vmem:[%s4500 + $0x2c8] sm:$0xff]
    %v4591 = vld [vmem:[%s4500 + $0x2d0] sm:$0xff]
    %v4592 = vld [vmem:[%s4500 + $0x2d8] sm:$0xff]
    %v4593 = vld [vmem:[%s4500 + $0x2e0] sm:$0xff]
    %v4594 = vld [vmem:[%s4500 + $0x2e8] sm:$0xff]
    %v4595 = vld [vmem:[%s4500 + $0x2f0] sm:$0xff]
    %v4596 = vld [vmem:[%s4500 + $0x2f8] sm:$0xff]
    %v4597 = vld [vmem:[%s4500 + $0x300] sm:$0xff]
    %v4598 = vld [vmem:[%s4500 + $0x308] sm:$0xff]
    %v4599 = vld [vmem:[%s4500 + $0x310] sm:$0xff]
    %v4600 = vld [vmem:[%s4500 + $0x318] sm:$0xff]
    %v4601 = vld [vmem:[%s4500 + $0x320] sm:$0xff]
    %v4602 = vld [vmem:[%s4500 + $0x328] sm:$0xff]
    %v4603 = vld [vmem:[%s4500 + $0x330] sm:$0xff]
    %v4604 = vld [vmem:[%s4500 + $0x338] sm:$0xff]
    %v4605 = vld [vmem:[%s4500 + $0x340] sm:$0xff]
    %v4606 = vld [vmem:[%s4500 + $0x348] sm:$0xff]
    %v4607 = vld [vmem:[%s4500 + $0x350] sm:$0xff]
    %v4608 = vld [vmem:[%s4500 + $0x358] sm:$0xff]
    %v4609 = vld [vmem:[%s4500 + $0x360] sm:$0xff]
    %v4610 = vld [vmem:[%s4500 + $0x368] sm:$0xff]
    %v4611 = vld [vmem:[%s4500 + $0x370] sm:$0xff]
    %v4612 = vld [vmem:[%s4500 + $0x378] sm:$0xff]
    %v4613 = vld [vmem:[%s4500 + $0x380] sm:$0xff]
    %v4614 = vld [vmem:[%s4500 + $0x388] sm:$0xff]
    %v4615 = vld [vmem:[%s4500 + $0x390] sm:$0xff]
    %v4616 = vld [vmem:[%s4500 + $0x398] sm:$0xff]
    %v4617 = vld [vmem:[%s4500 + $0x3a0] sm:$0xff]
    %v4618 = vld [vmem:[%s4500 + $0x3a8] sm:$0xff]
    %v4619 = vld [vmem:[%s4500 + $0x3b0] sm:$0xff]
    %v4620 = vld [vmem:[%s4500 + $0x3b8] sm:$0xff]
    %v4621 = vld [vmem:[%s4500 + $0x3c0] sm:$0xff]
    %v4622 = vld [vmem:[%s4500 + $0x3c8] sm:$0xff]
    %v4623 = vld [vmem:[%s4500 + $0x3d0] sm:$0xff]
    %v4624 = vld [vmem:[%s4500 + $0x3d8] sm:$0xff]
    %v4625 = vld [vmem:[%s4500 + $0x3e0] sm:$0xff]
    %v4626 = vld [vmem:[%s4500 + $0x3e8] sm:$0xff]
    %v4627 = vld [vmem:[%s4500 + $0x3f0] sm:$0xff]
    %v4628 = vld [vmem:[%s4500 + $0x3f8] sm:$0xff]
    %v4629 = vcombine.low %v4258, %v4267
    %v4630 = vcombine.low %v4336, %v4362
    %v4632 = vunpack.c.l.s4 1966171168
    %v4633 = vunpack.c.0.s8 %v4632
    %v4634 = vlaneseq
    %v4635 = vshrl.u32 %v4634, 7
    %v4636 = vsub.s32 %v4633, %v4635
    %v4637 = vrot.slane %v4629, %v4636
    %v4639 = vunpack.c.l.s4 1966171168
    %v4640 = vunpack.c.0.s8 %v4639
    %v4641 = vlaneseq
    %v4642 = vshrl.u32 %v4641, 7
    %v4643 = vsub.s32 %v4640, %v4642
    %v4644 = vrot.slane %v4630, %v4643
    %v4645 = vcombine.low %v4637, %v4644
    %v4646 = vcombine.high %v4637, %v4644
    %v4648 = vunpack.c.l.s4 1966171168
    %v4649 = vunpack.c.0.s8 %v4648
    %v4650 = vlaneseq
    %v4651 = vshrl.u32 %v4650, 7
    %v4652 = vsub.s32 %v4649, %v4651
    %v4653 = vrot.slane %v4645, %v4652
    %v4655 = vunpack.c.l.s4 1966171168
    %v4656 = vunpack.c.0.s8 %v4655
    %v4657 = vlaneseq
    %v4658 = vshrl.u32 %v4657, 7
    %v4659 = vsub.s32 %v4656, %v4658
    %v4660 = vrot.slane %v4646, %v4659
    %v4661 = vcombine.high %v4653, %v4653
    %v4662 = vcombine.high %v4660, %v4660
    %4667 = vmatprep.subr.mxu0 %v4502
    %4668 = vmatpush1.msra.mxu0 %v4501
    %4669 = vmatprep.subr.mxu0 %v4504
    %4670 = vmatpush1.msra.mxu0 %v4503
    %4671 = vmatprep.subr.mxu0 %v4506
    %4672 = vmatpush1.msra.mxu0 %v4505
    %4673 = vmatprep.subr.mxu0 %v4508
    %4674 = vmatpush1.msra.mxu0 %v4507
    %4675 = vmatprep.subr.mxu0 %v4510
    %4676 = vmatpush1.msra.mxu0 %v4509
    %4677 = vmatprep.subr.mxu0 %v4512
    %4678 = vmatpush1.msra.mxu0 %v4511
    %4679 = vmatprep.subr.mxu0 %v4514
    %4680 = vmatpush1.msra.mxu0 %v4513
    %4681 = vmatprep.subr.mxu0 %v4516
    %4682 = vmatpush1.msra.mxu0 %v4515
    %4683 = vmatprep.subr.mxu0 %v4518
    %4684 = vmatpush1.msra.mxu0 %v4517
    %4685 = vmatprep.subr.mxu0 %v4520
    %4686 = vmatpush1.msra.mxu0 %v4519
    %4687 = vmatprep.subr.mxu0 %v4522
    %4688 = vmatpush1.msra.mxu0 %v4521
    %4689 = vmatprep.subr.mxu0 %v4524
    %4690 = vmatpush1.msra.mxu0 %v4523
    %4691 = vmatprep.subr.mxu0 %v4526
    %4692 = vmatpush1.msra.mxu0 %v4525
    %4693 = vmatprep.subr.mxu0 %v4528
    %4694 = vmatpush1.msra.mxu0 %v4527
    %4695 = vmatprep.subr.mxu0 %v4530
    %4696 = vmatpush1.msra.mxu0 %v4529
    %4697 = vmatprep.subr.mxu0 %v4532
    %4698 = vmatpush1.msra.mxu0 %v4531
    %4699 = vmatprep.subr.mxu0 %v4534
    %4700 = vmatpush1.msra.mxu0 %v4533
    %4701 = vmatprep.subr.mxu0 %v4536
    %4702 = vmatpush1.msra.mxu0 %v4535
    %4703 = vmatprep.subr.mxu0 %v4538
    %4704 = vmatpush1.msra.mxu0 %v4537
    %4705 = vmatprep.subr.mxu0 %v4540
    %4706 = vmatpush1.msra.mxu0 %v4539
    %4707 = vmatprep.subr.mxu0 %v4542
    %4708 = vmatpush1.msra.mxu0 %v4541
    %4709 = vmatprep.subr.mxu0 %v4544
    %4710 = vmatpush1.msra.mxu0 %v4543
    %4711 = vmatprep.subr.mxu0 %v4546
    %4712 = vmatpush1.msra.mxu0 %v4545
    %4713 = vmatprep.subr.mxu0 %v4548
    %4714 = vmatpush1.msra.mxu0 %v4547
    %4715 = vmatprep.subr.mxu0 %v4550
    %4716 = vmatpush1.msra.mxu0 %v4549
    %4717 = vmatprep.subr.mxu0 %v4552
    %4718 = vmatpush1.msra.mxu0 %v4551
    %4719 = vmatprep.subr.mxu0 %v4554
    %4720 = vmatpush1.msra.mxu0 %v4553
    %4721 = vmatprep.subr.mxu0 %v4556
    %4722 = vmatpush1.msra.mxu0 %v4555
    %4723 = vmatprep.subr.mxu0 %v4558
    %4724 = vmatpush1.msra.mxu0 %v4557
    %4725 = vmatprep.subr.mxu0 %v4560
    %4726 = vmatpush1.msra.mxu0 %v4559
    %4727 = vmatprep.subr.mxu0 %v4562
    %4728 = vmatpush1.msra.mxu0 %v4561
    %4729 = vmatprep.subr.mxu0 %v4564
    %4730 = vmatpush1.msra.mxu0 %v4563
    %4731 = vmatprep.mubr.f32.mxu0 %v4660
    %4732 = vmatmul.mubr.f32.gmra.mrb[0].mxu0 %v4653
    %v4733 = vpop.f32.mrb[0].mxu0
    %v4734 = vadd.f32 0.0, %v4733
    %v4735 = vpop.f32.mrb[0].mxu0
    %v4736 = vadd.f32 0.0, %v4735
    %4737 = vdwg.mxu0
    %4738 = vmatprep.subr.mxu0 %v4566
    %4739 = vmatpush1.msra.mxu0 %v4565
    %4740 = vmatprep.subr.mxu0 %v4568
    %4741 = vmatpush1.msra.mxu0 %v4567
    %4742 = vmatprep.subr.mxu0 %v4570
    %4743 = vmatpush1.msra.mxu0 %v4569
    %4744 = vmatprep.subr.mxu0 %v4572
    %4745 = vmatpush1.msra.mxu0 %v4571
    %4746 = vmatprep.subr.mxu0 %v4574
    %4747 = vmatpush1.msra.mxu0 %v4573
    %4748 = vmatprep.subr.mxu0 %v4576
    %4749 = vmatpush1.msra.mxu0 %v4575
    %4750 = vmatprep.subr.mxu0 %v4578
    %4751 = vmatpush1.msra.mxu0 %v4577
    %4752 = vmatprep.subr.mxu0 %v4580
    %4753 = vmatpush1.msra.mxu0 %v4579
    %4754 = vmatprep.subr.mxu0 %v4582
    %4755 = vmatpush1.msra.mxu0 %v4581
    %4756 = vmatprep.subr.mxu0 %v4584
    %4757 = vmatpush1.msra.mxu0 %v4583
    %4758 = vmatprep.subr.mxu0 %v4586
    %4759 = vmatpush1.msra.mxu0 %v4585
    %4760 = vmatprep.subr.mxu0 %v4588
    %4761 = vmatpush1.msra.mxu0 %v4587
    %4762 = vmatprep.subr.mxu0 %v4590
    %4763 = vmatpush1.msra.mxu0 %v4589
    %4764 = vmatprep.subr.mxu0 %v4592
    %4765 = vmatpush1.msra.mxu0 %v4591
    %4766 = vmatprep.subr.mxu0 %v4594
    %4767 = vmatpush1.msra.mxu0 %v4593
    %4768 = vmatprep.subr.mxu0 %v4596
    %4769 = vmatpush1.msra.mxu0 %v4595
    %4770 = vmatprep.subr.mxu0 %v4598
    %4771 = vmatpush1.msra.mxu0 %v4597
    %4772 = vmatprep.subr.mxu0 %v4600
    %4773 = vmatpush1.msra.mxu0 %v4599
    %4774 = vmatprep.subr.mxu0 %v4602
    %4775 = vmatpush1.msra.mxu0 %v4601
    %4776 = vmatprep.subr.mxu0 %v4604
    %4777 = vmatpush1.msra.mxu0 %v4603
    %4778 = vmatprep.subr.mxu0 %v4606
    %4779 = vmatpush1.msra.mxu0 %v4605
    %4780 = vmatprep.subr.mxu0 %v4608
    %4781 = vmatpush1.msra.mxu0 %v4607
    %4782 = vmatprep.subr.mxu0 %v4610
    %4783 = vmatpush1.msra.mxu0 %v4609
    %4784 = vmatprep.subr.mxu0 %v4612
    %4785 = vmatpush1.msra.mxu0 %v4611
    %4786 = vmatprep.subr.mxu0 %v4614
    %4787 = vmatpush1.msra.mxu0 %v4613
    %4788 = vmatprep.subr.mxu0 %v4616
    %4789 = vmatpush1.msra.mxu0 %v4615
    %4790 = vmatprep.subr.mxu0 %v4618
    %4791 = vmatpush1.msra.mxu0 %v4617
    %4792 = vmatprep.subr.mxu0 %v4620
    %4793 = vmatpush1.msra.mxu0 %v4619
    %4794 = vmatprep.subr.mxu0 %v4622
    %4795 = vmatpush1.msra.mxu0 %v4621
    %4796 = vmatprep.subr.mxu0 %v4624
    %4797 = vmatpush1.msra.mxu0 %v4623
    %4798 = vmatprep.subr.mxu0 %v4626
    %4799 = vmatpush1.msra.mxu0 %v4625
    %4800 = vmatprep.subr.mxu0 %v4628
    %4801 = vmatpush1.msra.mxu0 %v4627
    %4802 = vmatprep.mubr.f32.mxu0 %v4662
    %4803 = vmatmul.mubr.f32.gmra.mrb[0].mxu0 %v4661
    %v4804 = vpop.f32.mrb[0].mxu0
    %v4805 = vadd.f32 %v4734, %v4804
    %v4806 = vpop.f32.mrb[0].mxu0
    %v4807 = vadd.f32 %v4736, %v4806
    %4808 = vdwg.mxu0
    %v4809 = vcombine.low %v4244, %v4265
    %v4810 = vcombine.low %v4334, %v4337
    %v4812 = vunpack.c.l.s4 1966171168
    %v4813 = vunpack.c.0.s8 %v4812
    %v4814 = vlaneseq
    %v4815 = vshrl.u32 %v4814, 7
    %v4816 = vsub.s32 %v4813, %v4815
    %v4817 = vrot.slane %v4809, %v4816
    %v4819 = vunpack.c.l.s4 1966171168
    %v4820 = vunpack.c.0.s8 %v4819
    %v4821 = vlaneseq
    %v4822 = vshrl.u32 %v4821, 7
    %v4823 = vsub.s32 %v4820, %v4822
    %v4824 = vrot.slane %v4810, %v4823
    %v4825 = vcombine.low %v4817, %v4824
    %v4826 = vcombine.high %v4817, %v4824
    %v4828 = vunpack.c.l.s4 1966171168
    %v4829 = vunpack.c.0.s8 %v4828
    %v4830 = vlaneseq
    %v4831 = vshrl.u32 %v4830, 7
    %v4832 = vsub.s32 %v4829, %v4831
    %v4833 = vrot.slane %v4825, %v4832
    %v4835 = vunpack.c.l.s4 1966171168
    %v4836 = vunpack.c.0.s8 %v4835
    %v4837 = vlaneseq
    %v4838 = vshrl.u32 %v4837, 7
    %v4839 = vsub.s32 %v4836, %v4838
    %v4840 = vrot.slane %v4826, %v4839
    %v4841 = vcombine.high %v4833, %v4833
    %v4842 = vcombine.high %v4840, %v4840
    %4847 = vmatprep.subr.mxu0 %v4373
    %4848 = vmatpush1.msra.mxu0 %v4372
    %4849 = vmatprep.subr.mxu0 %v4375
    %4850 = vmatpush1.msra.mxu0 %v4374
    %4851 = vmatprep.subr.mxu0 %v4377
    %4852 = vmatpush1.msra.mxu0 %v4376
    %4853 = vmatprep.subr.mxu0 %v4379
    %4854 = vmatpush1.msra.mxu0 %v4378
    %4855 = vmatprep.subr.mxu0 %v4381
    %4856 = vmatpush1.msra.mxu0 %v4380
    %4857 = vmatprep.subr.mxu0 %v4383
    %4858 = vmatpush1.msra.mxu0 %v4382
    %4859 = vmatprep.subr.mxu0 %v4385
    %4860 = vmatpush1.msra.mxu0 %v4384
    %4861 = vmatprep.subr.mxu0 %v4387
    %4862 = vmatpush1.msra.mxu0 %v4386
    %4863 = vmatprep.subr.mxu0 %v4389
    %4864 = vmatpush1.msra.mxu0 %v4388
    %4865 = vmatprep.subr.mxu0 %v4391
    %4866 = vmatpush1.msra.mxu0 %v4390
    %4867 = vmatprep.subr.mxu0 %v4393
    %4868 = vmatpush1.msra.mxu0 %v4392
    %4869 = vmatprep.subr.mxu0 %v4395
    %4870 = vmatpush1.msra.mxu0 %v4394
    %4871 = vmatprep.subr.mxu0 %v4397
    %4872 = vmatpush1.msra.mxu0 %v4396
    %4873 = vmatprep.subr.mxu0 %v4399
    %4874 = vmatpush1.msra.mxu0 %v4398
    %4875 = vmatprep.subr.mxu0 %v4401
    %4876 = vmatpush1.msra.mxu0 %v4400
    %4877 = vmatprep.subr.mxu0 %v4403
    %4878 = vmatpush1.msra.mxu0 %v4402
    %4879 = vmatprep.subr.mxu0 %v4405
    %4880 = vmatpush1.msra.mxu0 %v4404
    %4881 = vmatprep.subr.mxu0 %v4407
    %4882 = vmatpush1.msra.mxu0 %v4406
    %4883 = vmatprep.subr.mxu0 %v4409
    %4884 = vmatpush1.msra.mxu0 %v4408
    %4885 = vmatprep.subr.mxu0 %v4411
    %4886 = vmatpush1.msra.mxu0 %v4410
    %4887 = vmatprep.subr.mxu0 %v4413
    %4888 = vmatpush1.msra.mxu0 %v4412
    %4889 = vmatprep.subr.mxu0 %v4415
    %4890 = vmatpush1.msra.mxu0 %v4414
    %4891 = vmatprep.subr.mxu0 %v4417
    %4892 = vmatpush1.msra.mxu0 %v4416
    %4893 = vmatprep.subr.mxu0 %v4419
    %4894 = vmatpush1.msra.mxu0 %v4418
    %4895 = vmatprep.subr.mxu0 %v4421
    %4896 = vmatpush1.msra.mxu0 %v4420
    %4897 = vmatprep.subr.mxu0 %v4423
    %4898 = vmatpush1.msra.mxu0 %v4422
    %4899 = vmatprep.subr.mxu0 %v4425
    %4900 = vmatpush1.msra.mxu0 %v4424
    %4901 = vmatprep.subr.mxu0 %v4427
    %4902 = vmatpush1.msra.mxu0 %v4426
    %4903 = vmatprep.subr.mxu0 %v4429
    %4904 = vmatpush1.msra.mxu0 %v4428
    %4905 = vmatprep.subr.mxu0 %v4431
    %4906 = vmatpush1.msra.mxu0 %v4430
    %4907 = vmatprep.subr.mxu0 %v4433
    %4908 = vmatpush1.msra.mxu0 %v4432
    %4909 = vmatprep.subr.mxu0 %v4435
    %4910 = vmatpush1.msra.mxu0 %v4434
    %4911 = vmatprep.mubr.f32.mxu0 %v4840
    %4912 = vmatmul.mubr.f32.gmra.mrb[0].mxu0 %v4833
    %v4913 = vpop.f32.mrb[0].mxu0
    %v4914 = vadd.f32 %v4805, %v4913
    %v4915 = vpop.f32.mrb[0].mxu0
    %v4916 = vadd.f32 %v4807, %v4915
    %4917 = vdwg.mxu0
    %4918 = vmatprep.subr.mxu0 %v4437
    %4919 = vmatpush1.msra.mxu0 %v4436
    %4920 = vmatprep.subr.mxu0 %v4439
    %4921 = vmatpush1.msra.mxu0 %v4438
    %4922 = vmatprep.subr.mxu0 %v4441
    %4923 = vmatpush1.msra.mxu0 %v4440
    %4924 = vmatprep.subr.mxu0 %v4443
    %4925 = vmatpush1.msra.mxu0 %v4442
    %4926 = vmatprep.subr.mxu0 %v4445
    %4927 = vmatpush1.msra.mxu0 %v4444
    %4928 = vmatprep.subr.mxu0 %v4447
    %4929 = vmatpush1.msra.mxu0 %v4446
    %4930 = vmatprep.subr.mxu0 %v4449
    %4931 = vmatpush1.msra.mxu0 %v4448
    %4932 = vmatprep.subr.mxu0 %v4451
    %4933 = vmatpush1.msra.mxu0 %v4450
    %4934 = vmatprep.subr.mxu0 %v4453
    %4935 = vmatpush1.msra.mxu0 %v4452
    %4936 = vmatprep.subr.mxu0 %v4455
    %4937 = vmatpush1.msra.mxu0 %v4454
    %4938 = vmatprep.subr.mxu0 %v4457
    %4939 = vmatpush1.msra.mxu0 %v4456
    %4940 = vmatprep.subr.mxu0 %v4459
    %4941 = vmatpush1.msra.mxu0 %v4458
    %4942 = vmatprep.subr.mxu0 %v4461
    %4943 = vmatpush1.msra.mxu0 %v4460
    %4944 = vmatprep.subr.mxu0 %v4463
    %4945 = vmatpush1.msra.mxu0 %v4462
    %4946 = vmatprep.subr.mxu0 %v4465
    %4947 = vmatpush1.msra.mxu0 %v4464
    %4948 = vmatprep.subr.mxu0 %v4467
    %4949 = vmatpush1.msra.mxu0 %v4466
    %4950 = vmatprep.subr.mxu0 %v4469
    %4951 = vmatpush1.msra.mxu0 %v4468
    %4952 = vmatprep.subr.mxu0 %v4471
    %4953 = vmatpush1.msra.mxu0 %v4470
    %4954 = vmatprep.subr.mxu0 %v4473
    %4955 = vmatpush1.msra.mxu0 %v4472
    %4956 = vmatprep.subr.mxu0 %v4475
    %4957 = vmatpush1.msra.mxu0 %v4474
    %4958 = vmatprep.subr.mxu0 %v4477
    %4959 = vmatpush1.msra.mxu0 %v4476
    %4960 = vmatprep.subr.mxu0 %v4479
    %4961 = vmatpush1.msra.mxu0 %v4478
    %4962 = vmatprep.subr.mxu0 %v4481
    %4963 = vmatpush1.msra.mxu0 %v4480
    %4964 = vmatprep.subr.mxu0 %v4483
    %4965 = vmatpush1.msra.mxu0 %v4482
    %4966 = vmatprep.subr.mxu0 %v4485
    %4967 = vmatpush1.msra.mxu0 %v4484
    %4968 = vmatprep.subr.mxu0 %v4487
    %4969 = vmatpush1.msra.mxu0 %v4486
    %4970 = vmatprep.subr.mxu0 %v4489
    %4971 = vmatpush1.msra.mxu0 %v4488
    %4972 = vmatprep.subr.mxu0 %v4491
    %4973 = vmatpush1.msra.mxu0 %v4490
    %4974 = vmatprep.subr.mxu0 %v4493
    %4975 = vmatpush1.msra.mxu0 %v4492
    %4976 = vmatprep.subr.mxu0 %v4495
    %4977 = vmatpush1.msra.mxu0 %v4494
    %4978 = vmatprep.subr.mxu0 %v4497
    %4979 = vmatpush1.msra.mxu0 %v4496
    %4980 = vmatprep.subr.mxu0 %v4499
    %4981 = vmatpush1.msra.mxu0 %v4498
    %4982 = vmatprep.mubr.f32.mxu0 %v4842
    %4983 = vmatmul.mubr.f32.gmra.mrb[0].mxu0 %v4841
    %v4984 = vpop.f32.mrb[0].mxu0
    %v4985 = vadd.f32 %v4914, %v4984
    %v4986 = vpop.f32.mrb[0].mxu0
    %v4987 = vadd.f32 %v4916, %v4986
    %4988 = vdwg.mxu0
    %s4989 = scalar_lea.vmem [#allocation16], 2048
    %v4990 = vld [vmem:[%s4989] sm:$0xff]
    %v4991 = vld [vmem:[%s4989 + $0x8] sm:$0xff]
    %v4992 = vld [vmem:[%s4989 + $0x10] sm:$0xff]
    %v4993 = vld [vmem:[%s4989 + $0x18] sm:$0xff]
    %v4994 = vld [vmem:[%s4989 + $0x20] sm:$0xff]
    %v4995 = vld [vmem:[%s4989 + $0x28] sm:$0xff]
    %v4996 = vld [vmem:[%s4989 + $0x30] sm:$0xff]
    %v4997 = vld [vmem:[%s4989 + $0x38] sm:$0xff]
    %v4998 = vld [vmem:[%s4989 + $0x40] sm:$0xff]
    %v4999 = vld [vmem:[%s4989 + $0x48] sm:$0xff]
    %v5000 = vld [vmem:[%s4989 + $0x50] sm:$0xff]
    %v5001 = vld [vmem:[%s4989 + $0x58] sm:$0xff]
    %v5002 = vld [vmem:[%s4989 + $0x60] sm:$0xff]
    %v5003 = vld [vmem:[%s4989 + $0x68] sm:$0xff]
    %v5004 = vld [vmem:[%s4989 + $0x70] sm:$0xff]
    %v5005 = vld [vmem:[%s4989 + $0x78] sm:$0xff]
    %v5006 = vld [vmem:[%s4989 + $0x80] sm:$0xff]
    %v5007 = vld [vmem:[%s4989 + $0x88] sm:$0xff]
    %v5008 = vld [vmem:[%s4989 + $0x90] sm:$0xff]
    %v5009 = vld [vmem:[%s4989 + $0x98] sm:$0xff]
    %v5010 = vld [vmem:[%s4989 + $0xa0] sm:$0xff]
    %v5011 = vld [vmem:[%s4989 + $0xa8] sm:$0xff]
    %v5012 = vld [vmem:[%s4989 + $0xb0] sm:$0xff]
    %v5013 = vld [vmem:[%s4989 + $0xb8] sm:$0xff]
    %v5014 = vld [vmem:[%s4989 + $0xc0] sm:$0xff]
    %v5015 = vld [vmem:[%s4989 + $0xc8] sm:$0xff]
    %v5016 = vld [vmem:[%s4989 + $0xd0] sm:$0xff]
    %v5017 = vld [vmem:[%s4989 + $0xd8] sm:$0xff]
    %v5018 = vld [vmem:[%s4989 + $0xe0] sm:$0xff]
    %v5019 = vld [vmem:[%s4989 + $0xe8] sm:$0xff]
    %v5020 = vld [vmem:[%s4989 + $0xf0] sm:$0xff]
    %v5021 = vld [vmem:[%s4989 + $0xf8] sm:$0xff]
    %v5022 = vld [vmem:[%s4989 + $0x100] sm:$0xff]
    %v5023 = vld [vmem:[%s4989 + $0x108] sm:$0xff]
    %v5024 = vld [vmem:[%s4989 + $0x110] sm:$0xff]
    %v5025 = vld [vmem:[%s4989 + $0x118] sm:$0xff]
    %v5026 = vld [vmem:[%s4989 + $0x120] sm:$0xff]
    %v5027 = vld [vmem:[%s4989 + $0x128] sm:$0xff]
    %v5028 = vld [vmem:[%s4989 + $0x130] sm:$0xff]
    %v5029 = vld [vmem:[%s4989 + $0x138] sm:$0xff]
    %v5030 = vld [vmem:[%s4989 + $0x140] sm:$0xff]
    %v5031 = vld [vmem:[%s4989 + $0x148] sm:$0xff]
    %v5032 = vld [vmem:[%s4989 + $0x150] sm:$0xff]
    %v5033 = vld [vmem:[%s4989 + $0x158] sm:$0xff]
    %v5034 = vld [vmem:[%s4989 + $0x160] sm:$0xff]
    %v5035 = vld [vmem:[%s4989 + $0x168] sm:$0xff]
    %v5036 = vld [vmem:[%s4989 + $0x170] sm:$0xff]
    %v5037 = vld [vmem:[%s4989 + $0x178] sm:$0xff]
    %v5038 = vld [vmem:[%s4989 + $0x180] sm:$0xff]
    %v5039 = vld [vmem:[%s4989 + $0x188] sm:$0xff]
    %v5040 = vld [vmem:[%s4989 + $0x190] sm:$0xff]
    %v5041 = vld [vmem:[%s4989 + $0x198] sm:$0xff]
    %v5042 = vld [vmem:[%s4989 + $0x1a0] sm:$0xff]
    %v5043 = vld [vmem:[%s4989 + $0x1a8] sm:$0xff]
    %v5044 = vld [vmem:[%s4989 + $0x1b0] sm:$0xff]
    %v5045 = vld [vmem:[%s4989 + $0x1b8] sm:$0xff]
    %v5046 = vld [vmem:[%s4989 + $0x1c0] sm:$0xff]
    %v5047 = vld [vmem:[%s4989 + $0x1c8] sm:$0xff]
    %v5048 = vld [vmem:[%s4989 + $0x1d0] sm:$0xff]
    %v5049 = vld [vmem:[%s4989 + $0x1d8] sm:$0xff]
    %v5050 = vld [vmem:[%s4989 + $0x1e0] sm:$0xff]
    %v5051 = vld [vmem:[%s4989 + $0x1e8] sm:$0xff]
    %v5052 = vld [vmem:[%s4989 + $0x1f0] sm:$0xff]
    %v5053 = vld [vmem:[%s4989 + $0x1f8] sm:$0xff]
    %v5054 = vld [vmem:[%s4989 + $0x200] sm:$0xff]
    %v5055 = vld [vmem:[%s4989 + $0x208] sm:$0xff]
    %v5056 = vld [vmem:[%s4989 + $0x210] sm:$0xff]
    %v5057 = vld [vmem:[%s4989 + $0x218] sm:$0xff]
    %v5058 = vld [vmem:[%s4989 + $0x220] sm:$0xff]
    %v5059 = vld [vmem:[%s4989 + $0x228] sm:$0xff]
    %v5060 = vld [vmem:[%s4989 + $0x230] sm:$0xff]
    %v5061 = vld [vmem:[%s4989 + $0x238] sm:$0xff]
    %v5062 = vld [vmem:[%s4989 + $0x240] sm:$0xff]
    %v5063 = vld [vmem:[%s4989 + $0x248] sm:$0xff]
    %v5064 = vld [vmem:[%s4989 + $0x250] sm:$0xff]
    %v5065 = vld [vmem:[%s4989 + $0x258] sm:$0xff]
    %v5066 = vld [vmem:[%s4989 + $0x260] sm:$0xff]
    %v5067 = vld [vmem:[%s4989 + $0x268] sm:$0xff]
    %v5068 = vld [vmem:[%s4989 + $0x270] sm:$0xff]
    %v5069 = vld [vmem:[%s4989 + $0x278] sm:$0xff]
    %v5070 = vld [vmem:[%s4989 + $0x280] sm:$0xff]
    %v5071 = vld [vmem:[%s4989 + $0x288] sm:$0xff]
    %v5072 = vld [vmem:[%s4989 + $0x290] sm:$0xff]
    %v5073 = vld [vmem:[%s4989 + $0x298] sm:$0xff]
    %v5074 = vld [vmem:[%s4989 + $0x2a0] sm:$0xff]
    %v5075 = vld [vmem:[%s4989 + $0x2a8] sm:$0xff]
    %v5076 = vld [vmem:[%s4989 + $0x2b0] sm:$0xff]
    %v5077 = vld [vmem:[%s4989 + $0x2b8] sm:$0xff]
    %v5078 = vld [vmem:[%s4989 + $0x2c0] sm:$0xff]
    %v5079 = vld [vmem:[%s4989 + $0x2c8] sm:$0xff]
    %v5080 = vld [vmem:[%s4989 + $0x2d0] sm:$0xff]
    %v5081 = vld [vmem:[%s4989 + $0x2d8] sm:$0xff]
    %v5082 = vld [vmem:[%s4989 + $0x2e0] sm:$0xff]
    %v5083 = vld [vmem:[%s4989 + $0x2e8] sm:$0xff]
    %v5084 = vld [vmem:[%s4989 + $0x2f0] sm:$0xff]
    %v5085 = vld [vmem:[%s4989 + $0x2f8] sm:$0xff]
    %v5086 = vld [vmem:[%s4989 + $0x300] sm:$0xff]
    %v5087 = vld [vmem:[%s4989 + $0x308] sm:$0xff]
    %v5088 = vld [vmem:[%s4989 + $0x310] sm:$0xff]
    %v5089 = vld [vmem:[%s4989 + $0x318] sm:$0xff]
    %v5090 = vld [vmem:[%s4989 + $0x320] sm:$0xff]
    %v5091 = vld [vmem:[%s4989 + $0x328] sm:$0xff]
    %v5092 = vld [vmem:[%s4989 + $0x330] sm:$0xff]
    %v5093 = vld [vmem:[%s4989 + $0x338] sm:$0xff]
    %v5094 = vld [vmem:[%s4989 + $0x340] sm:$0xff]
    %v5095 = vld [vmem:[%s4989 + $0x348] sm:$0xff]
    %v5096 = vld [vmem:[%s4989 + $0x350] sm:$0xff]
    %v5097 = vld [vmem:[%s4989 + $0x358] sm:$0xff]
    %v5098 = vld [vmem:[%s4989 + $0x360] sm:$0xff]
    %v5099 = vld [vmem:[%s4989 + $0x368] sm:$0xff]
    %v5100 = vld [vmem:[%s4989 + $0x370] sm:$0xff]
    %v5101 = vld [vmem:[%s4989 + $0x378] sm:$0xff]
    %v5102 = vld [vmem:[%s4989 + $0x380] sm:$0xff]
    %v5103 = vld [vmem:[%s4989 + $0x388] sm:$0xff]
    %v5104 = vld [vmem:[%s4989 + $0x390] sm:$0xff]
    %v5105 = vld [vmem:[%s4989 + $0x398] sm:$0xff]
    %v5106 = vld [vmem:[%s4989 + $0x3a0] sm:$0xff]
    %v5107 = vld [vmem:[%s4989 + $0x3a8] sm:$0xff]
    %v5108 = vld [vmem:[%s4989 + $0x3b0] sm:$0xff]
    %v5109 = vld [vmem:[%s4989 + $0x3b8] sm:$0xff]
    %v5110 = vld [vmem:[%s4989 + $0x3c0] sm:$0xff]
    %v5111 = vld [vmem:[%s4989 + $0x3c8] sm:$0xff]
    %v5112 = vld [vmem:[%s4989 + $0x3d0] sm:$0xff]
    %v5113 = vld [vmem:[%s4989 + $0x3d8] sm:$0xff]
    %v5114 = vld [vmem:[%s4989 + $0x3e0] sm:$0xff]
    %v5115 = vld [vmem:[%s4989 + $0x3e8] sm:$0xff]
    %v5116 = vld [vmem:[%s4989 + $0x3f0] sm:$0xff]
    %v5117 = vld [vmem:[%s4989 + $0x3f8] sm:$0xff]
    %v5118 = vcombine.low %v4266, %v4269
    %v5119 = vcombine.low %v4319, %v4369
    %v5121 = vunpack.c.l.s4 1966171168
    %v5122 = vunpack.c.0.s8 %v5121
    %v5123 = vlaneseq
    %v5124 = vshrl.u32 %v5123, 7
    %v5125 = vsub.s32 %v5122, %v5124
    %v5126 = vrot.slane %v5118, %v5125
    %v5128 = vunpack.c.l.s4 1966171168
    %v5129 = vunpack.c.0.s8 %v5128
    %v5130 = vlaneseq
    %v5131 = vshrl.u32 %v5130, 7
    %v5132 = vsub.s32 %v5129, %v5131
    %v5133 = vrot.slane %v5119, %v5132
    %v5134 = vcombine.low %v5126, %v5133
    %v5135 = vcombine.high %v5126, %v5133
    %v5137 = vunpack.c.l.s4 1966171168
    %v5138 = vunpack.c.0.s8 %v5137
    %v5139 = vlaneseq
    %v5140 = vshrl.u32 %v5139, 7
    %v5141 = vsub.s32 %v5138, %v5140
    %v5142 = vrot.slane %v5134, %v5141
    %v5144 = vunpack.c.l.s4 1966171168
    %v5145 = vunpack.c.0.s8 %v5144
    %v5146 = vlaneseq
    %v5147 = vshrl.u32 %v5146, 7
    %v5148 = vsub.s32 %v5145, %v5147
    %v5149 = vrot.slane %v5135, %v5148
    %v5150 = vcombine.high %v5142, %v5142
    %v5151 = vcombine.high %v5149, %v5149
    %5156 = vmatprep.subr.mxu0 %v4991
    %5157 = vmatpush1.msra.mxu0 %v4990
    %5158 = vmatprep.subr.mxu0 %v4993
    %5159 = vmatpush1.msra.mxu0 %v4992
    %5160 = vmatprep.subr.mxu0 %v4995
    %5161 = vmatpush1.msra.mxu0 %v4994
    %5162 = vmatprep.subr.mxu0 %v4997
    %5163 = vmatpush1.msra.mxu0 %v4996
    %5164 = vmatprep.subr.mxu0 %v4999
    %5165 = vmatpush1.msra.mxu0 %v4998
    %5166 = vmatprep.subr.mxu0 %v5001
    %5167 = vmatpush1.msra.mxu0 %v5000
    %5168 = vmatprep.subr.mxu0 %v5003
    %5169 = vmatpush1.msra.mxu0 %v5002
    %5170 = vmatprep.subr.mxu0 %v5005
    %5171 = vmatpush1.msra.mxu0 %v5004
    %5172 = vmatprep.subr.mxu0 %v5007
    %5173 = vmatpush1.msra.mxu0 %v5006
    %5174 = vmatprep.subr.mxu0 %v5009
    %5175 = vmatpush1.msra.mxu0 %v5008
    %5176 = vmatprep.subr.mxu0 %v5011
    %5177 = vmatpush1.msra.mxu0 %v5010
    %5178 = vmatprep.subr.mxu0 %v5013
    %5179 = vmatpush1.msra.mxu0 %v5012
    %5180 = vmatprep.subr.mxu0 %v5015
    %5181 = vmatpush1.msra.mxu0 %v5014
    %5182 = vmatprep.subr.mxu0 %v5017
    %5183 = vmatpush1.msra.mxu0 %v5016
    %5184 = vmatprep.subr.mxu0 %v5019
    %5185 = vmatpush1.msra.mxu0 %v5018
    %5186 = vmatprep.subr.mxu0 %v5021
    %5187 = vmatpush1.msra.mxu0 %v5020
    %5188 = vmatprep.subr.mxu0 %v5023
    %5189 = vmatpush1.msra.mxu0 %v5022
    %5190 = vmatprep.subr.mxu0 %v5025
    %5191 = vmatpush1.msra.mxu0 %v5024
    %5192 = vmatprep.subr.mxu0 %v5027
    %5193 = vmatpush1.msra.mxu0 %v5026
    %5194 = vmatprep.subr.mxu0 %v5029
    %5195 = vmatpush1.msra.mxu0 %v5028
    %5196 = vmatprep.subr.mxu0 %v5031
    %5197 = vmatpush1.msra.mxu0 %v5030
    %5198 = vmatprep.subr.mxu0 %v5033
    %5199 = vmatpush1.msra.mxu0 %v5032
    %5200 = vmatprep.subr.mxu0 %v5035
    %5201 = vmatpush1.msra.mxu0 %v5034
    %5202 = vmatprep.subr.mxu0 %v5037
    %5203 = vmatpush1.msra.mxu0 %v5036
    %5204 = vmatprep.subr.mxu0 %v5039
    %5205 = vmatpush1.msra.mxu0 %v5038
    %5206 = vmatprep.subr.mxu0 %v5041
    %5207 = vmatpush1.msra.mxu0 %v5040
    %5208 = vmatprep.subr.mxu0 %v5043
    %5209 = vmatpush1.msra.mxu0 %v5042
    %5210 = vmatprep.subr.mxu0 %v5045
    %5211 = vmatpush1.msra.mxu0 %v5044
    %5212 = vmatprep.subr.mxu0 %v5047
    %5213 = vmatpush1.msra.mxu0 %v5046
    %5214 = vmatprep.subr.mxu0 %v5049
    %5215 = vmatpush1.msra.mxu0 %v5048
    %5216 = vmatprep.subr.mxu0 %v5051
    %5217 = vmatpush1.msra.mxu0 %v5050
    %5218 = vmatprep.subr.mxu0 %v5053
    %5219 = vmatpush1.msra.mxu0 %v5052
    %5220 = vmatprep.mubr.f32.mxu0 %v5149
    %5221 = vmatmul.mubr.f32.gmra.mrb[0].mxu0 %v5142
    %v5222 = vpop.f32.mrb[0].mxu0
    %v5223 = vadd.f32 0.0, %v5222
    %v5224 = vpop.f32.mrb[0].mxu0
    %v5225 = vadd.f32 0.0, %v5224
    %5226 = vdwg.mxu0
    %5227 = vmatprep.subr.mxu0 %v5055
    %5228 = vmatpush1.msra.mxu0 %v5054
    %5229 = vmatprep.subr.mxu0 %v5057
    %5230 = vmatpush1.msra.mxu0 %v5056
    %5231 = vmatprep.subr.mxu0 %v5059
    %5232 = vmatpush1.msra.mxu0 %v5058
    %5233 = vmatprep.subr.mxu0 %v5061
    %5234 = vmatpush1.msra.mxu0 %v5060
    %5235 = vmatprep.subr.mxu0 %v5063
    %5236 = vmatpush1.msra.mxu0 %v5062
    %5237 = vmatprep.subr.mxu0 %v5065
    %5238 = vmatpush1.msra.mxu0 %v5064
    %5239 = vmatprep.subr.mxu0 %v5067
    %5240 = vmatpush1.msra.mxu0 %v5066
    %5241 = vmatprep.subr.mxu0 %v5069
    %5242 = vmatpush1.msra.mxu0 %v5068
    %5243 = vmatprep.subr.mxu0 %v5071
    %5244 = vmatpush1.msra.mxu0 %v5070
    %5245 = vmatprep.subr.mxu0 %v5073
    %5246 = vmatpush1.msra.mxu0 %v5072
    %5247 = vmatprep.subr.mxu0 %v5075
    %5248 = vmatpush1.msra.mxu0 %v5074
    %5249 = vmatprep.subr.mxu0 %v5077
    %5250 = vmatpush1.msra.mxu0 %v5076
    %5251 = vmatprep.subr.mxu0 %v5079
    %5252 = vmatpush1.msra.mxu0 %v5078
    %5253 = vmatprep.subr.mxu0 %v5081
    %5254 = vmatpush1.msra.mxu0 %v5080
    %5255 = vmatprep.subr.mxu0 %v5083
    %5256 = vmatpush1.msra.mxu0 %v5082
    %5257 = vmatprep.subr.mxu0 %v5085
    %5258 = vmatpush1.msra.mxu0 %v5084
    %5259 = vmatprep.subr.mxu0 %v5087
    %5260 = vmatpush1.msra.mxu0 %v5086
    %5261 = vmatprep.subr.mxu0 %v5089
    %5262 = vmatpush1.msra.mxu0 %v5088
    %5263 = vmatprep.subr.mxu0 %v5091
    %5264 = vmatpush1.msra.mxu0 %v5090
    %5265 = vmatprep.subr.mxu0 %v5093
    %5266 = vmatpush1.msra.mxu0 %v5092
    %5267 = vmatprep.subr.mxu0 %v5095
    %5268 = vmatpush1.msra.mxu0 %v5094
    %5269 = vmatprep.subr.mxu0 %v5097
    %5270 = vmatpush1.msra.mxu0 %v5096
    %5271 = vmatprep.subr.mxu0 %v5099
    %5272 = vmatpush1.msra.mxu0 %v5098
    %5273 = vmatprep.subr.mxu0 %v5101
    %5274 = vmatpush1.msra.mxu0 %v5100
    %5275 = vmatprep.subr.mxu0 %v5103
    %5276 = vmatpush1.msra.mxu0 %v5102
    %5277 = vmatprep.subr.mxu0 %v5105
    %5278 = vmatpush1.msra.mxu0 %v5104
    %5279 = vmatprep.subr.mxu0 %v5107
    %5280 = vmatpush1.msra.mxu0 %v5106
    %5281 = vmatprep.subr.mxu0 %v5109
    %5282 = vmatpush1.msra.mxu0 %v5108
    %5283 = vmatprep.subr.mxu0 %v5111
    %5284 = vmatpush1.msra.mxu0 %v5110
    %5285 = vmatprep.subr.mxu0 %v5113
    %5286 = vmatpush1.msra.mxu0 %v5112
    %5287 = vmatprep.subr.mxu0 %v5115
    %5288 = vmatpush1.msra.mxu0 %v5114
    %5289 = vmatprep.subr.mxu0 %v5117
    %5290 = vmatpush1.msra.mxu0 %v5116
    %5291 = vmatprep.mubr.f32.mxu0 %v5151
    %5292 = vmatmul.mubr.f32.gmra.mrb[0].mxu0 %v5150
    %v5293 = vpop.f32.mrb[0].mxu0
    %v5294 = vadd.f32 %v5223, %v5293
    %v5295 = vpop.f32.mrb[0].mxu0
    %v5296 = vadd.f32 %v5225, %v5295
    %5297 = vdwg.mxu0
    %v5298 = vadd.f32 %v4985, %v5294
    %v5299 = vadd.f32 %v4987, %v5296
    %s5300 = scalar_lea.vmem [#allocation16], 3072
    %v5301 = vld [vmem:[%s5300] sm:$0xff]
    %v5302 = vld [vmem:[%s5300 + $0x8] sm:$0xff]
    %v5303 = vld [vmem:[%s5300 + $0x10] sm:$0xff]
    %v5304 = vld [vmem:[%s5300 + $0x18] sm:$0xff]
    %v5305 = vld [vmem:[%s5300 + $0x20] sm:$0xff]
    %v5306 = vld [vmem:[%s5300 + $0x28] sm:$0xff]
    %v5307 = vld [vmem:[%s5300 + $0x30] sm:$0xff]
    %v5308 = vld [vmem:[%s5300 + $0x38] sm:$0xff]
    %v5309 = vld [vmem:[%s5300 + $0x40] sm:$0xff]
    %v5310 = vld [vmem:[%s5300 + $0x48] sm:$0xff]
    %v5311 = vld [vmem:[%s5300 + $0x50] sm:$0xff]
    %v5312 = vld [vmem:[%s5300 + $0x58] sm:$0xff]
    %v5313 = vld [vmem:[%s5300 + $0x60] sm:$0xff]
    %v5314 = vld [vmem:[%s5300 + $0x68] sm:$0xff]
    %v5315 = vld [vmem:[%s5300 + $0x70] sm:$0xff]
    %v5316 = vld [vmem:[%s5300 + $0x78] sm:$0xff]
    %v5317 = vld [vmem:[%s5300 + $0x80] sm:$0xff]
    %v5318 = vld [vmem:[%s5300 + $0x88] sm:$0xff]
    %v5319 = vld [vmem:[%s5300 + $0x90] sm:$0xff]
    %v5320 = vld [vmem:[%s5300 + $0x98] sm:$0xff]
    %v5321 = vld [vmem:[%s5300 + $0xa0] sm:$0xff]
    %v5322 = vld [vmem:[%s5300 + $0xa8] sm:$0xff]
    %v5323 = vld [vmem:[%s5300 + $0xb0] sm:$0xff]
    %v5324 = vld [vmem:[%s5300 + $0xb8] sm:$0xff]
    %v5325 = vld [vmem:[%s5300 + $0xc0] sm:$0xff]
    %v5326 = vld [vmem:[%s5300 + $0xc8] sm:$0xff]
    %v5327 = vld [vmem:[%s5300 + $0xd0] sm:$0xff]
    %v5328 = vld [vmem:[%s5300 + $0xd8] sm:$0xff]
    %v5329 = vld [vmem:[%s5300 + $0xe0] sm:$0xff]
    %v5330 = vld [vmem:[%s5300 + $0xe8] sm:$0xff]
    %v5331 = vld [vmem:[%s5300 + $0xf0] sm:$0xff]
    %v5332 = vld [vmem:[%s5300 + $0xf8] sm:$0xff]
    %v5333 = vld [vmem:[%s5300 + $0x100] sm:$0xff]
    %v5334 = vld [vmem:[%s5300 + $0x108] sm:$0xff]
    %v5335 = vld [vmem:[%s5300 + $0x110] sm:$0xff]
    %v5336 = vld [vmem:[%s5300 + $0x118] sm:$0xff]
    %v5337 = vld [vmem:[%s5300 + $0x120] sm:$0xff]
    %v5338 = vld [vmem:[%s5300 + $0x128] sm:$0xff]
    %v5339 = vld [vmem:[%s5300 + $0x130] sm:$0xff]
    %v5340 = vld [vmem:[%s5300 + $0x138] sm:$0xff]
    %v5341 = vld [vmem:[%s5300 + $0x140] sm:$0xff]
    %v5342 = vld [vmem:[%s5300 + $0x148] sm:$0xff]
    %v5343 = vld [vmem:[%s5300 + $0x150] sm:$0xff]
    %v5344 = vld [vmem:[%s5300 + $0x158] sm:$0xff]
    %v5345 = vld [vmem:[%s5300 + $0x160] sm:$0xff]
    %v5346 = vld [vmem:[%s5300 + $0x168] sm:$0xff]
    %v5347 = vld [vmem:[%s5300 + $0x170] sm:$0xff]
    %v5348 = vld [vmem:[%s5300 + $0x178] sm:$0xff]
    %v5349 = vld [vmem:[%s5300 + $0x180] sm:$0xff]
    %v5350 = vld [vmem:[%s5300 + $0x188] sm:$0xff]
    %v5351 = vld [vmem:[%s5300 + $0x190] sm:$0xff]
    %v5352 = vld [vmem:[%s5300 + $0x198] sm:$0xff]
    %v5353 = vld [vmem:[%s5300 + $0x1a0] sm:$0xff]
    %v5354 = vld [vmem:[%s5300 + $0x1a8] sm:$0xff]
    %v5355 = vld [vmem:[%s5300 + $0x1b0] sm:$0xff]
    %v5356 = vld [vmem:[%s5300 + $0x1b8] sm:$0xff]
    %v5357 = vld [vmem:[%s5300 + $0x1c0] sm:$0xff]
    %v5358 = vld [vmem:[%s5300 + $0x1c8] sm:$0xff]
    %v5359 = vld [vmem:[%s5300 + $0x1d0] sm:$0xff]
    %v5360 = vld [vmem:[%s5300 + $0x1d8] sm:$0xff]
    %v5361 = vld [vmem:[%s5300 + $0x1e0] sm:$0xff]
    %v5362 = vld [vmem:[%s5300 + $0x1e8] sm:$0xff]
    %v5363 = vld [vmem:[%s5300 + $0x1f0] sm:$0xff]
    %v5364 = vld [vmem:[%s5300 + $0x1f8] sm:$0xff]
    %v5365 = vld [vmem:[%s5300 + $0x200] sm:$0xff]
    %v5366 = vld [vmem:[%s5300 + $0x208] sm:$0xff]
    %v5367 = vld [vmem:[%s5300 + $0x210] sm:$0xff]
    %v5368 = vld [vmem:[%s5300 + $0x218] sm:$0xff]
    %v5369 = vld [vmem:[%s5300 + $0x220] sm:$0xff]
    %v5370 = vld [vmem:[%s5300 + $0x228] sm:$0xff]
    %v5371 = vld [vmem:[%s5300 + $0x230] sm:$0xff]
    %v5372 = vld [vmem:[%s5300 + $0x238] sm:$0xff]
    %v5373 = vld [vmem:[%s5300 + $0x240] sm:$0xff]
    %v5374 = vld [vmem:[%s5300 + $0x248] sm:$0xff]
    %v5375 = vld [vmem:[%s5300 + $0x250] sm:$0xff]
    %v5376 = vld [vmem:[%s5300 + $0x258] sm:$0xff]
    %v5377 = vld [vmem:[%s5300 + $0x260] sm:$0xff]
    %v5378 = vld [vmem:[%s5300 + $0x268] sm:$0xff]
    %v5379 = vld [vmem:[%s5300 + $0x270] sm:$0xff]
    %v5380 = vld [vmem:[%s5300 + $0x278] sm:$0xff]
    %v5381 = vld [vmem:[%s5300 + $0x280] sm:$0xff]
    %v5382 = vld [vmem:[%s5300 + $0x288] sm:$0xff]
    %v5383 = vld [vmem:[%s5300 + $0x290] sm:$0xff]
    %v5384 = vld [vmem:[%s5300 + $0x298] sm:$0xff]
    %v5385 = vld [vmem:[%s5300 + $0x2a0] sm:$0xff]
    %v5386 = vld [vmem:[%s5300 + $0x2a8] sm:$0xff]
    %v5387 = vld [vmem:[%s5300 + $0x2b0] sm:$0xff]
    %v5388 = vld [vmem:[%s5300 + $0x2b8] sm:$0xff]
    %v5389 = vld [vmem:[%s5300 + $0x2c0] sm:$0xff]
    %v5390 = vld [vmem:[%s5300 + $0x2c8] sm:$0xff]
    %v5391 = vld [vmem:[%s5300 + $0x2d0] sm:$0xff]
    %v5392 = vld [vmem:[%s5300 + $0x2d8] sm:$0xff]
    %v5393 = vld [vmem:[%s5300 + $0x2e0] sm:$0xff]
    %v5394 = vld [vmem:[%s5300 + $0x2e8] sm:$0xff]
    %v5395 = vld [vmem:[%s5300 + $0x2f0] sm:$0xff]
    %v5396 = vld [vmem:[%s5300 + $0x2f8] sm:$0xff]
    %v5397 = vld [vmem:[%s5300 + $0x300] sm:$0xff]
    %v5398 = vld [vmem:[%s5300 + $0x308] sm:$0xff]
    %v5399 = vld [vmem:[%s5300 + $0x310] sm:$0xff]
    %v5400 = vld [vmem:[%s5300 + $0x318] sm:$0xff]
    %v5401 = vld [vmem:[%s5300 + $0x320] sm:$0xff]
    %v5402 = vld [vmem:[%s5300 + $0x328] sm:$0xff]
    %v5403 = vld [vmem:[%s5300 + $0x330] sm:$0xff]
    %v5404 = vld [vmem:[%s5300 + $0x338] sm:$0xff]
    %v5405 = vld [vmem:[%s5300 + $0x340] sm:$0xff]
    %v5406 = vld [vmem:[%s5300 + $0x348] sm:$0xff]
    %v5407 = vld [vmem:[%s5300 + $0x350] sm:$0xff]
    %v5408 = vld [vmem:[%s5300 + $0x358] sm:$0xff]
    %v5409 = vld [vmem:[%s5300 + $0x360] sm:$0xff]
    %v5410 = vld [vmem:[%s5300 + $0x368] sm:$0xff]
    %v5411 = vld [vmem:[%s5300 + $0x370] sm:$0xff]
    %v5412 = vld [vmem:[%s5300 + $0x378] sm:$0xff]
    %v5413 = vld [vmem:[%s5300 + $0x380] sm:$0xff]
    %v5414 = vld [vmem:[%s5300 + $0x388] sm:$0xff]
    %v5415 = vld [vmem:[%s5300 + $0x390] sm:$0xff]
    %v5416 = vld [vmem:[%s5300 + $0x398] sm:$0xff]
    %v5417 = vld [vmem:[%s5300 + $0x3a0] sm:$0xff]
    %v5418 = vld [vmem:[%s5300 + $0x3a8] sm:$0xff]
    %v5419 = vld [vmem:[%s5300 + $0x3b0] sm:$0xff]
    %v5420 = vld [vmem:[%s5300 + $0x3b8] sm:$0xff]
    %v5421 = vld [vmem:[%s5300 + $0x3c0] sm:$0xff]
    %v5422 = vld [vmem:[%s5300 + $0x3c8] sm:$0xff]
    %v5423 = vld [vmem:[%s5300 + $0x3d0] sm:$0xff]
    %v5424 = vld [vmem:[%s5300 + $0x3d8] sm:$0xff]
    %v5425 = vld [vmem:[%s5300 + $0x3e0] sm:$0xff]
    %v5426 = vld [vmem:[%s5300 + $0x3e8] sm:$0xff]
    %v5427 = vld [vmem:[%s5300 + $0x3f0] sm:$0xff]
    %v5428 = vld [vmem:[%s5300 + $0x3f8] sm:$0xff]
    %v5429 = vcombine.low %v4268, %v4312
    %v5430 = vcombine.low %v4333, %v4370
    %v5432 = vunpack.c.l.s4 1966171168
    %v5433 = vunpack.c.0.s8 %v5432
    %v5434 = vlaneseq
    %v5435 = vshrl.u32 %v5434, 7
    %v5436 = vsub.s32 %v5433, %v5435
    %v5437 = vrot.slane %v5429, %v5436
    %v5439 = vunpack.c.l.s4 1966171168
    %v5440 = vunpack.c.0.s8 %v5439
    %v5441 = vlaneseq
    %v5442 = vshrl.u32 %v5441, 7
    %v5443 = vsub.s32 %v5440, %v5442
    %v5444 = vrot.slane %v5430, %v5443
    %v5445 = vcombine.low %v5437, %v5444
    %v5446 = vcombine.high %v5437, %v5444
    %v5448 = vunpack.c.l.s4 1966171168
    %v5449 = vunpack.c.0.s8 %v5448
    %v5450 = vlaneseq
    %v5451 = vshrl.u32 %v5450, 7
    %v5452 = vsub.s32 %v5449, %v5451
    %v5453 = vrot.slane %v5445, %v5452
    %v5455 = vunpack.c.l.s4 1966171168
    %v5456 = vunpack.c.0.s8 %v5455
    %v5457 = vlaneseq
    %v5458 = vshrl.u32 %v5457, 7
    %v5459 = vsub.s32 %v5456, %v5458
    %v5460 = vrot.slane %v5446, %v5459
    %v5461 = vcombine.high %v5453, %v5453
    %v5462 = vcombine.high %v5460, %v5460
    %5467 = vmatprep.subr.mxu0 %v5302
    %5468 = vmatpush1.msra.mxu0 %v5301
    %5469 = vmatprep.subr.mxu0 %v5304
    %5470 = vmatpush1.msra.mxu0 %v5303
    %5471 = vmatprep.subr.mxu0 %v5306
    %5472 = vmatpush1.msra.mxu0 %v5305
    %5473 = vmatprep.subr.mxu0 %v5308
    %5474 = vmatpush1.msra.mxu0 %v5307
    %5475 = vmatprep.subr.mxu0 %v5310
    %5476 = vmatpush1.msra.mxu0 %v5309
    %5477 = vmatprep.subr.mxu0 %v5312
    %5478 = vmatpush1.msra.mxu0 %v5311
    %5479 = vmatprep.subr.mxu0 %v5314
    %5480 = vmatpush1.msra.mxu0 %v5313
    %5481 = vmatprep.subr.mxu0 %v5316
    %5482 = vmatpush1.msra.mxu0 %v5315
    %5483 = vmatprep.subr.mxu0 %v5318
    %5484 = vmatpush1.msra.mxu0 %v5317
    %5485 = vmatprep.subr.mxu0 %v5320
    %5486 = vmatpush1.msra.mxu0 %v5319
    %5487 = vmatprep.subr.mxu0 %v5322
    %5488 = vmatpush1.msra.mxu0 %v5321
    %5489 = vmatprep.subr.mxu0 %v5324
    %5490 = vmatpush1.msra.mxu0 %v5323
    %5491 = vmatprep.subr.mxu0 %v5326
    %5492 = vmatpush1.msra.mxu0 %v5325
    %5493 = vmatprep.subr.mxu0 %v5328
    %5494 = vmatpush1.msra.mxu0 %v5327
    %5495 = vmatprep.subr.mxu0 %v5330
    %5496 = vmatpush1.msra.mxu0 %v5329
    %5497 = vmatprep.subr.mxu0 %v5332
    %5498 = vmatpush1.msra.mxu0 %v5331
    %5499 = vmatprep.subr.mxu0 %v5334
    %5500 = vmatpush1.msra.mxu0 %v5333
    %5501 = vmatprep.subr.mxu0 %v5336
    %5502 = vmatpush1.msra.mxu0 %v5335
    %5503 = vmatprep.subr.mxu0 %v5338
    %5504 = vmatpush1.msra.mxu0 %v5337
    %5505 = vmatprep.subr.mxu0 %v5340
    %5506 = vmatpush1.msra.mxu0 %v5339
    %5507 = vmatprep.subr.mxu0 %v5342
    %5508 = vmatpush1.msra.mxu0 %v5341
    %5509 = vmatprep.subr.mxu0 %v5344
    %5510 = vmatpush1.msra.mxu0 %v5343
    %5511 = vmatprep.subr.mxu0 %v5346
    %5512 = vmatpush1.msra.mxu0 %v5345
    %5513 = vmatprep.subr.mxu0 %v5348
    %5514 = vmatpush1.msra.mxu0 %v5347
    %5515 = vmatprep.subr.mxu0 %v5350
    %5516 = vmatpush1.msra.mxu0 %v5349
    %5517 = vmatprep.subr.mxu0 %v5352
    %5518 = vmatpush1.msra.mxu0 %v5351
    %5519 = vmatprep.subr.mxu0 %v5354
    %5520 = vmatpush1.msra.mxu0 %v5353
    %5521 = vmatprep.subr.mxu0 %v5356
    %5522 = vmatpush1.msra.mxu0 %v5355
    %5523 = vmatprep.subr.mxu0 %v5358
    %5524 = vmatpush1.msra.mxu0 %v5357
    %5525 = vmatprep.subr.mxu0 %v5360
    %5526 = vmatpush1.msra.mxu0 %v5359
    %5527 = vmatprep.subr.mxu0 %v5362
    %5528 = vmatpush1.msra.mxu0 %v5361
    %5529 = vmatprep.subr.mxu0 %v5364
    %5530 = vmatpush1.msra.mxu0 %v5363
    %5531 = vmatprep.mubr.f32.mxu0 %v5460
    %5532 = vmatmul.mubr.f32.gmra.mrb[0].mxu0 %v5453
    %v5533 = vpop.f32.mrb[0].mxu0
    %v5534 = vadd.f32 0.0, %v5533
    %v5535 = vpop.f32.mrb[0].mxu0
    %v5536 = vadd.f32 0.0, %v5535
    %5537 = vdwg.mxu0
    %5538 = vmatprep.subr.mxu0 %v5366
    %5539 = vmatpush1.msra.mxu0 %v5365
    %5540 = vmatprep.subr.mxu0 %v5368
    %5541 = vmatpush1.msra.mxu0 %v5367
    %5542 = vmatprep.subr.mxu0 %v5370
    %5543 = vmatpush1.msra.mxu0 %v5369
    %5544 = vmatprep.subr.mxu0 %v5372
    %5545 = vmatpush1.msra.mxu0 %v5371
    %5546 = vmatprep.subr.mxu0 %v5374
    %5547 = vmatpush1.msra.mxu0 %v5373
    %5548 = vmatprep.subr.mxu0 %v5376
    %5549 = vmatpush1.msra.mxu0 %v5375
    %5550 = vmatprep.subr.mxu0 %v5378
    %5551 = vmatpush1.msra.mxu0 %v5377
    %5552 = vmatprep.subr.mxu0 %v5380
    %5553 = vmatpush1.msra.mxu0 %v5379
    %5554 = vmatprep.subr.mxu0 %v5382
    %5555 = vmatpush1.msra.mxu0 %v5381
    %5556 = vmatprep.subr.mxu0 %v5384
    %5557 = vmatpush1.msra.mxu0 %v5383
    %5558 = vmatprep.subr.mxu0 %v5386
    %5559 = vmatpush1.msra.mxu0 %v5385
    %5560 = vmatprep.subr.mxu0 %v5388
    %5561 = vmatpush1.msra.mxu0 %v5387
    %5562 = vmatprep.subr.mxu0 %v5390
    %5563 = vmatpush1.msra.mxu0 %v5389
    %5564 = vmatprep.subr.mxu0 %v5392
    %5565 = vmatpush1.msra.mxu0 %v5391
    %5566 = vmatprep.subr.mxu0 %v5394
    %5567 = vmatpush1.msra.mxu0 %v5393
    %5568 = vmatprep.subr.mxu0 %v5396
    %5569 = vmatpush1.msra.mxu0 %v5395
    %5570 = vmatprep.subr.mxu0 %v5398
    %5571 = vmatpush1.msra.mxu0 %v5397
    %5572 = vmatprep.subr.mxu0 %v5400
    %5573 = vmatpush1.msra.mxu0 %v5399
    %5574 = vmatprep.subr.mxu0 %v5402
    %5575 = vmatpush1.msra.mxu0 %v5401
    %5576 = vmatprep.subr.mxu0 %v5404
    %5577 = vmatpush1.msra.mxu0 %v5403
    %5578 = vmatprep.subr.mxu0 %v5406
    %5579 = vmatpush1.msra.mxu0 %v5405
    %5580 = vmatprep.subr.mxu0 %v5408
    %5581 = vmatpush1.msra.mxu0 %v5407
    %5582 = vmatprep.subr.mxu0 %v5410
    %5583 = vmatpush1.msra.mxu0 %v5409
    %5584 = vmatprep.subr.mxu0 %v5412
    %5585 = vmatpush1.msra.mxu0 %v5411
    %5586 = vmatprep.subr.mxu0 %v5414
    %5587 = vmatpush1.msra.mxu0 %v5413
    %5588 = vmatprep.subr.mxu0 %v5416
    %5589 = vmatpush1.msra.mxu0 %v5415
    %5590 = vmatprep.subr.mxu0 %v5418
    %5591 = vmatpush1.msra.mxu0 %v5417
    %5592 = vmatprep.subr.mxu0 %v5420
    %5593 = vmatpush1.msra.mxu0 %v5419
    %5594 = vmatprep.subr.mxu0 %v5422
    %5595 = vmatpush1.msra.mxu0 %v5421
    %5596 = vmatprep.subr.mxu0 %v5424
    %5597 = vmatpush1.msra.mxu0 %v5423
    %5598 = vmatprep.subr.mxu0 %v5426
    %5599 = vmatpush1.msra.mxu0 %v5425
    %5600 = vmatprep.subr.mxu0 %v5428
    %5601 = vmatpush1.msra.mxu0 %v5427
    %5602 = vmatprep.mubr.f32.mxu0 %v5462
    %5603 = vmatmul.mubr.f32.gmra.mrb[0].mxu0 %v5461
    %v5604 = vpop.f32.mrb[0].mxu0
    %v5605 = vadd.f32 %v5534, %v5604
    %v5606 = vpop.f32.mrb[0].mxu0
    %v5607 = vadd.f32 %v5536, %v5606
    %5608 = vdwg.mxu0
    %v5609 = vadd.f32 %v5298, %v5605
    %v5610 = vadd.f32 %v5299, %v5607
    %s5611 = scalar_lea.vmem [#allocation16], 4096
    %v5612 = vld [vmem:[%s5611] sm:$0xff]
    %v5613 = vld [vmem:[%s5611 + $0x8] sm:$0xff]
    %v5614 = vld [vmem:[%s5611 + $0x10] sm:$0xff]
    %v5615 = vld [vmem:[%s5611 + $0x18] sm:$0xff]
    %v5616 = vld [vmem:[%s5611 + $0x20] sm:$0xff]
    %v5617 = vld [vmem:[%s5611 + $0x28] sm:$0xff]
    %v5618 = vld [vmem:[%s5611 + $0x30] sm:$0xff]
    %v5619 = vld [vmem:[%s5611 + $0x38] sm:$0xff]
    %v5620 = vld [vmem:[%s5611 + $0x40] sm:$0xff]
    %v5621 = vld [vmem:[%s5611 + $0x48] sm:$0xff]
    %v5622 = vld [vmem:[%s5611 + $0x50] sm:$0xff]
    %v5623 = vld [vmem:[%s5611 + $0x58] sm:$0xff]
    %v5624 = vld [vmem:[%s5611 + $0x60] sm:$0xff]
    %v5625 = vld [vmem:[%s5611 + $0x68] sm:$0xff]
    %v5626 = vld [vmem:[%s5611 + $0x70] sm:$0xff]
    %v5627 = vld [vmem:[%s5611 + $0x78] sm:$0xff]
    %v5628 = vld [vmem:[%s5611 + $0x80] sm:$0xff]
    %v5629 = vld [vmem:[%s5611 + $0x88] sm:$0xff]
    %v5630 = vld [vmem:[%s5611 + $0x90] sm:$0xff]
    %v5631 = vld [vmem:[%s5611 + $0x98] sm:$0xff]
    %v5632 = vld [vmem:[%s5611 + $0xa0] sm:$0xff]
    %v5633 = vld [vmem:[%s5611 + $0xa8] sm:$0xff]
    %v5634 = vld [vmem:[%s5611 + $0xb0] sm:$0xff]
    %v5635 = vld [vmem:[%s5611 + $0xb8] sm:$0xff]
    %v5636 = vld [vmem:[%s5611 + $0xc0] sm:$0xff]
    %v5637 = vld [vmem:[%s5611 + $0xc8] sm:$0xff]
    %v5638 = vld [vmem:[%s5611 + $0xd0] sm:$0xff]
    %v5639 = vld [vmem:[%s5611 + $0xd8] sm:$0xff]
    %v5640 = vld [vmem:[%s5611 + $0xe0] sm:$0xff]
    %v5641 = vld [vmem:[%s5611 + $0xe8] sm:$0xff]
    %v5642 = vld [vmem:[%s5611 + $0xf0] sm:$0xff]
    %v5643 = vld [vmem:[%s5611 + $0xf8] sm:$0xff]
    %v5644 = vld [vmem:[%s5611 + $0x100] sm:$0xff]
    %v5645 = vld [vmem:[%s5611 + $0x108] sm:$0xff]
    %v5646 = vld [vmem:[%s5611 + $0x110] sm:$0xff]
    %v5647 = vld [vmem:[%s5611 + $0x118] sm:$0xff]
    %v5648 = vld [vmem:[%s5611 + $0x120] sm:$0xff]
    %v5649 = vld [vmem:[%s5611 + $0x128] sm:$0xff]
    %v5650 = vld [vmem:[%s5611 + $0x130] sm:$0xff]
    %v5651 = vld [vmem:[%s5611 + $0x138] sm:$0xff]
    %v5652 = vld [vmem:[%s5611 + $0x140] sm:$0xff]
    %v5653 = vld [vmem:[%s5611 + $0x148] sm:$0xff]
    %v5654 = vld [vmem:[%s5611 + $0x150] sm:$0xff]
    %v5655 = vld [vmem:[%s5611 + $0x158] sm:$0xff]
    %v5656 = vld [vmem:[%s5611 + $0x160] sm:$0xff]
    %v5657 = vld [vmem:[%s5611 + $0x168] sm:$0xff]
    %v5658 = vld [vmem:[%s5611 + $0x170] sm:$0xff]
    %v5659 = vld [vmem:[%s5611 + $0x178] sm:$0xff]
    %v5660 = vld [vmem:[%s5611 + $0x180] sm:$0xff]
    %v5661 = vld [vmem:[%s5611 + $0x188] sm:$0xff]
    %v5662 = vld [vmem:[%s5611 + $0x190] sm:$0xff]
    %v5663 = vld [vmem:[%s5611 + $0x198] sm:$0xff]
    %v5664 = vld [vmem:[%s5611 + $0x1a0] sm:$0xff]
    %v5665 = vld [vmem:[%s5611 + $0x1a8] sm:$0xff]
    %v5666 = vld [vmem:[%s5611 + $0x1b0] sm:$0xff]
    %v5667 = vld [vmem:[%s5611 + $0x1b8] sm:$0xff]
    %v5668 = vld [vmem:[%s5611 + $0x1c0] sm:$0xff]
    %v5669 = vld [vmem:[%s5611 + $0x1c8] sm:$0xff]
    %v5670 = vld [vmem:[%s5611 + $0x1d0] sm:$0xff]
    %v5671 = vld [vmem:[%s5611 + $0x1d8] sm:$0xff]
    %v5672 = vld [vmem:[%s5611 + $0x1e0] sm:$0xff]
    %v5673 = vld [vmem:[%s5611 + $0x1e8] sm:$0xff]
    %v5674 = vld [vmem:[%s5611 + $0x1f0] sm:$0xff]
    %v5675 = vld [vmem:[%s5611 + $0x1f8] sm:$0xff]
    %v5676 = vld [vmem:[%s5611 + $0x200] sm:$0xff]
    %v5677 = vld [vmem:[%s5611 + $0x208] sm:$0xff]
    %v5678 = vld [vmem:[%s5611 + $0x210] sm:$0xff]
    %v5679 = vld [vmem:[%s5611 + $0x218] sm:$0xff]
    %v5680 = vld [vmem:[%s5611 + $0x220] sm:$0xff]
    %v5681 = vld [vmem:[%s5611 + $0x228] sm:$0xff]
    %v5682 = vld [vmem:[%s5611 + $0x230] sm:$0xff]
    %v5683 = vld [vmem:[%s5611 + $0x238] sm:$0xff]
    %v5684 = vld [vmem:[%s5611 + $0x240] sm:$0xff]
    %v5685 = vld [vmem:[%s5611 + $0x248] sm:$0xff]
    %v5686 = vld [vmem:[%s5611 + $0x250] sm:$0xff]
    %v5687 = vld [vmem:[%s5611 + $0x258] sm:$0xff]
    %v5688 = vld [vmem:[%s5611 + $0x260] sm:$0xff]
    %v5689 = vld [vmem:[%s5611 + $0x268] sm:$0xff]
    %v5690 = vld [vmem:[%s5611 + $0x270] sm:$0xff]
    %v5691 = vld [vmem:[%s5611 + $0x278] sm:$0xff]
    %v5692 = vld [vmem:[%s5611 + $0x280] sm:$0xff]
    %v5693 = vld [vmem:[%s5611 + $0x288] sm:$0xff]
    %v5694 = vld [vmem:[%s5611 + $0x290] sm:$0xff]
    %v5695 = vld [vmem:[%s5611 + $0x298] sm:$0xff]
    %v5696 = vld [vmem:[%s5611 + $0x2a0] sm:$0xff]
    %v5697 = vld [vmem:[%s5611 + $0x2a8] sm:$0xff]
    %v5698 = vld [vmem:[%s5611 + $0x2b0] sm:$0xff]
    %v5699 = vld [vmem:[%s5611 + $0x2b8] sm:$0xff]
    %v5700 = vld [vmem:[%s5611 + $0x2c0] sm:$0xff]
    %v5701 = vld [vmem:[%s5611 + $0x2c8] sm:$0xff]
    %v5702 = vld [vmem:[%s5611 + $0x2d0] sm:$0xff]
    %v5703 = vld [vmem:[%s5611 + $0x2d8] sm:$0xff]
    %v5704 = vld [vmem:[%s5611 + $0x2e0] sm:$0xff]
    %v5705 = vld [vmem:[%s5611 + $0x2e8] sm:$0xff]
    %v5706 = vld [vmem:[%s5611 + $0x2f0] sm:$0xff]
    %v5707 = vld [vmem:[%s5611 + $0x2f8] sm:$0xff]
    %v5708 = vld [vmem:[%s5611 + $0x300] sm:$0xff]
    %v5709 = vld [vmem:[%s5611 + $0x308] sm:$0xff]
    %v5710 = vld [vmem:[%s5611 + $0x310] sm:$0xff]
    %v5711 = vld [vmem:[%s5611 + $0x318] sm:$0xff]
    %v5712 = vld [vmem:[%s5611 + $0x320] sm:$0xff]
    %v5713 = vld [vmem:[%s5611 + $0x328] sm:$0xff]
    %v5714 = vld [vmem:[%s5611 + $0x330] sm:$0xff]
    %v5715 = vld [vmem:[%s5611 + $0x338] sm:$0xff]
    %v5716 = vld [vmem:[%s5611 + $0x340] sm:$0xff]
    %v5717 = vld [vmem:[%s5611 + $0x348] sm:$0xff]
    %v5718 = vld [vmem:[%s5611 + $0x350] sm:$0xff]
    %v5719 = vld [vmem:[%s5611 + $0x358] sm:$0xff]
    %v5720 = vld [vmem:[%s5611 + $0x360] sm:$0xff]
    %v5721 = vld [vmem:[%s5611 + $0x368] sm:$0xff]
    %v5722 = vld [vmem:[%s5611 + $0x370] sm:$0xff]
    %v5723 = vld [vmem:[%s5611 + $0x378] sm:$0xff]
    %v5724 = vld [vmem:[%s5611 + $0x380] sm:$0xff]
    %v5725 = vld [vmem:[%s5611 + $0x388] sm:$0xff]
    %v5726 = vld [vmem:[%s5611 + $0x390] sm:$0xff]
    %v5727 = vld [vmem:[%s5611 + $0x398] sm:$0xff]
    %v5728 = vld [vmem:[%s5611 + $0x3a0] sm:$0xff]
    %v5729 = vld [vmem:[%s5611 + $0x3a8] sm:$0xff]
    %v5730 = vld [vmem:[%s5611 + $0x3b0] sm:$0xff]
    %v5731 = vld [vmem:[%s5611 + $0x3b8] sm:$0xff]
    %v5732 = vld [vmem:[%s5611 + $0x3c0] sm:$0xff]
    %v5733 = vld [vmem:[%s5611 + $0x3c8] sm:$0xff]
    %v5734 = vld [vmem:[%s5611 + $0x3d0] sm:$0xff]
    %v5735 = vld [vmem:[%s5611 + $0x3d8] sm:$0xff]
    %v5736 = vld [vmem:[%s5611 + $0x3e0] sm:$0xff]
    %v5737 = vld [vmem:[%s5611 + $0x3e8] sm:$0xff]
    %v5738 = vld [vmem:[%s5611 + $0x3f0] sm:$0xff]
    %v5739 = vld [vmem:[%s5611 + $0x3f8] sm:$0xff]
    %v5740 = vcombine.low %v4251, %v4326
    %v5741 = vcombine.low %v4335, %v4371
    %v5743 = vunpack.c.l.s4 1966171168
    %v5744 = vunpack.c.0.s8 %v5743
    %v5745 = vlaneseq
    %v5746 = vshrl.u32 %v5745, 7
    %v5747 = vsub.s32 %v5744, %v5746
    %v5748 = vrot.slane %v5740, %v5747
    %v5750 = vunpack.c.l.s4 1966171168
    %v5751 = vunpack.c.0.s8 %v5750
    %v5752 = vlaneseq
    %v5753 = vshrl.u32 %v5752, 7
    %v5754 = vsub.s32 %v5751, %v5753
    %v5755 = vrot.slane %v5741, %v5754
    %v5756 = vcombine.low %v5748, %v5755
    %v5757 = vcombine.high %v5748, %v5755
    %v5759 = vunpack.c.l.s4 1966171168
    %v5760 = vunpack.c.0.s8 %v5759
    %v5761 = vlaneseq
    %v5762 = vshrl.u32 %v5761, 7
    %v5763 = vsub.s32 %v5760, %v5762
    %v5764 = vrot.slane %v5756, %v5763
    %v5766 = vunpack.c.l.s4 1966171168
    %v5767 = vunpack.c.0.s8 %v5766
    %v5768 = vlaneseq
    %v5769 = vshrl.u32 %v5768, 7
    %v5770 = vsub.s32 %v5767, %v5769
    %v5771 = vrot.slane %v5757, %v5770
    %v5772 = vcombine.high %v5764, %v5764
    %v5773 = vcombine.high %v5771, %v5771
    %5778 = vmatprep.subr.mxu0 %v5613
    %5779 = vmatpush1.msra.mxu0 %v5612
    %5780 = vmatprep.subr.mxu0 %v5615
    %5781 = vmatpush1.msra.mxu0 %v5614
    %5782 = vmatprep.subr.mxu0 %v5617
    %5783 = vmatpush1.msra.mxu0 %v5616
    %5784 = vmatprep.subr.mxu0 %v5619
    %5785 = vmatpush1.msra.mxu0 %v5618
    %5786 = vmatprep.subr.mxu0 %v5621
    %5787 = vmatpush1.msra.mxu0 %v5620
    %5788 = vmatprep.subr.mxu0 %v5623
    %5789 = vmatpush1.msra.mxu0 %v5622
    %5790 = vmatprep.subr.mxu0 %v5625
    %5791 = vmatpush1.msra.mxu0 %v5624
    %5792 = vmatprep.subr.mxu0 %v5627
    %5793 = vmatpush1.msra.mxu0 %v5626
    %5794 = vmatprep.subr.mxu0 %v5629
    %5795 = vmatpush1.msra.mxu0 %v5628
    %5796 = vmatprep.subr.mxu0 %v5631
    %5797 = vmatpush1.msra.mxu0 %v5630
    %5798 = vmatprep.subr.mxu0 %v5633
    %5799 = vmatpush1.msra.mxu0 %v5632
    %5800 = vmatprep.subr.mxu0 %v5635
    %5801 = vmatpush1.msra.mxu0 %v5634
    %5802 = vmatprep.subr.mxu0 %v5637
    %5803 = vmatpush1.msra.mxu0 %v5636
    %5804 = vmatprep.subr.mxu0 %v5639
    %5805 = vmatpush1.msra.mxu0 %v5638
    %5806 = vmatprep.subr.mxu0 %v5641
    %5807 = vmatpush1.msra.mxu0 %v5640
    %5808 = vmatprep.subr.mxu0 %v5643
    %5809 = vmatpush1.msra.mxu0 %v5642
    %5810 = vmatprep.subr.mxu0 %v5645
    %5811 = vmatpush1.msra.mxu0 %v5644
    %5812 = vmatprep.subr.mxu0 %v5647
    %5813 = vmatpush1.msra.mxu0 %v5646
    %5814 = vmatprep.subr.mxu0 %v5649
    %5815 = vmatpush1.msra.mxu0 %v5648
    %5816 = vmatprep.subr.mxu0 %v5651
    %5817 = vmatpush1.msra.mxu0 %v5650
    %5818 = vmatprep.subr.mxu0 %v5653
    %5819 = vmatpush1.msra.mxu0 %v5652
    %5820 = vmatprep.subr.mxu0 %v5655
    %5821 = vmatpush1.msra.mxu0 %v5654
    %5822 = vmatprep.subr.mxu0 %v5657
    %5823 = vmatpush1.msra.mxu0 %v5656
    %5824 = vmatprep.subr.mxu0 %v5659
    %5825 = vmatpush1.msra.mxu0 %v5658
    %5826 = vmatprep.subr.mxu0 %v5661
    %5827 = vmatpush1.msra.mxu0 %v5660
    %5828 = vmatprep.subr.mxu0 %v5663
    %5829 = vmatpush1.msra.mxu0 %v5662
    %5830 = vmatprep.subr.mxu0 %v5665
    %5831 = vmatpush1.msra.mxu0 %v5664
    %5832 = vmatprep.subr.mxu0 %v5667
    %5833 = vmatpush1.msra.mxu0 %v5666
    %5834 = vmatprep.subr.mxu0 %v5669
    %5835 = vmatpush1.msra.mxu0 %v5668
    %5836 = vmatprep.subr.mxu0 %v5671
    %5837 = vmatpush1.msra.mxu0 %v5670
    %5838 = vmatprep.subr.mxu0 %v5673
    %5839 = vmatpush1.msra.mxu0 %v5672
    %5840 = vmatprep.subr.mxu0 %v5675
    %5841 = vmatpush1.msra.mxu0 %v5674
    %5842 = vmatprep.mubr.f32.mxu0 %v5771
    %5843 = vmatmul.mubr.f32.gmra.mrb[0].mxu0 %v5764
    %v5844 = vpop.f32.mrb[0].mxu0
    %v5845 = vadd.f32 0.0, %v5844
    %v5846 = vpop.f32.mrb[0].mxu0
    %v5847 = vadd.f32 0.0, %v5846
    %5848 = vdwg.mxu0
    %5849 = vmatprep.subr.mxu0 %v5677
    %5850 = vmatpush1.msra.mxu0 %v5676
    %5851 = vmatprep.subr.mxu0 %v5679
    %5852 = vmatpush1.msra.mxu0 %v5678
    %5853 = vmatprep.subr.mxu0 %v5681
    %5854 = vmatpush1.msra.mxu0 %v5680
    %5855 = vmatprep.subr.mxu0 %v5683
    %5856 = vmatpush1.msra.mxu0 %v5682
    %5857 = vmatprep.subr.mxu0 %v5685
    %5858 = vmatpush1.msra.mxu0 %v5684
    %5859 = vmatprep.subr.mxu0 %v5687
    %5860 = vmatpush1.msra.mxu0 %v5686
    %5861 = vmatprep.subr.mxu0 %v5689
    %5862 = vmatpush1.msra.mxu0 %v5688
    %5863 = vmatprep.subr.mxu0 %v5691
    %5864 = vmatpush1.msra.mxu0 %v5690
    %5865 = vmatprep.subr.mxu0 %v5693
    %5866 = vmatpush1.msra.mxu0 %v5692
    %5867 = vmatprep.subr.mxu0 %v5695
    %5868 = vmatpush1.msra.mxu0 %v5694
    %5869 = vmatprep.subr.mxu0 %v5697
    %5870 = vmatpush1.msra.mxu0 %v5696
    %5871 = vmatprep.subr.mxu0 %v5699
    %5872 = vmatpush1.msra.mxu0 %v5698
    %5873 = vmatprep.subr.mxu0 %v5701
    %5874 = vmatpush1.msra.mxu0 %v5700
    %5875 = vmatprep.subr.mxu0 %v5703
    %5876 = vmatpush1.msra.mxu0 %v5702
    %5877 = vmatprep.subr.mxu0 %v5705
    %5878 = vmatpush1.msra.mxu0 %v5704
    %5879 = vmatprep.subr.mxu0 %v5707
    %5880 = vmatpush1.msra.mxu0 %v5706
    %5881 = vmatprep.subr.mxu0 %v5709
    %5882 = vmatpush1.msra.mxu0 %v5708
    %5883 = vmatprep.subr.mxu0 %v5711
    %5884 = vmatpush1.msra.mxu0 %v5710
    %5885 = vmatprep.subr.mxu0 %v5713
    %5886 = vmatpush1.msra.mxu0 %v5712
    %5887 = vmatprep.subr.mxu0 %v5715
    %5888 = vmatpush1.msra.mxu0 %v5714
    %5889 = vmatprep.subr.mxu0 %v5717
    %5890 = vmatpush1.msra.mxu0 %v5716
    %5891 = vmatprep.subr.mxu0 %v5719
    %5892 = vmatpush1.msra.mxu0 %v5718
    %5893 = vmatprep.subr.mxu0 %v5721
    %5894 = vmatpush1.msra.mxu0 %v5720
    %5895 = vmatprep.subr.mxu0 %v5723
    %5896 = vmatpush1.msra.mxu0 %v5722
    %5897 = vmatprep.subr.mxu0 %v5725
    %5898 = vmatpush1.msra.mxu0 %v5724
    %5899 = vmatprep.subr.mxu0 %v5727
    %5900 = vmatpush1.msra.mxu0 %v5726
    %5901 = vmatprep.subr.mxu0 %v5729
    %5902 = vmatpush1.msra.mxu0 %v5728
    %5903 = vmatprep.subr.mxu0 %v5731
    %5904 = vmatpush1.msra.mxu0 %v5730
    %5905 = vmatprep.subr.mxu0 %v5733
    %5906 = vmatpush1.msra.mxu0 %v5732
    %5907 = vmatprep.subr.mxu0 %v5735
    %5908 = vmatpush1.msra.mxu0 %v5734
    %5909 = vmatprep.subr.mxu0 %v5737
    %5910 = vmatpush1.msra.mxu0 %v5736
    %5911 = vmatprep.subr.mxu0 %v5739
    %5912 = vmatpush1.msra.mxu0 %v5738
    %5913 = vmatprep.mubr.f32.mxu0 %v5773
    %5914 = vmatmul.mubr.f32.gmra.mrb[0].mxu0 %v5772
    %v5915 = vpop.f32.mrb[0].mxu0
    %v5916 = vadd.f32 %v5845, %v5915
    %v5917 = vpop.f32.mrb[0].mxu0
    %v5918 = vadd.f32 %v5847, %v5917
    %5919 = vdwg.mxu0
    %v5920 = vadd.f32 %v5609, %v5916
    %v5921 = vadd.f32 %v5610, %v5918
    %v5922 = vld [vmem:[#allocation19] sm:$0x3]
    %v5923 = vld [vmem:[#allocation17] sm:$0x3]
    %v5925 = vlaneseq
    %v5926 = vshrl.u32 %v5925, 7
    %v5927 = vsub.s32 0, %v5926
    %v5928 = vrot.slane %v5923, %v5927
    %v5929 = vlaneseq
    %v5930 = vshrl.u32 %v5929, 7
    %v5931 = vsub.s32 1, %v5930
    %v5932 = vrot.slane %v5923, %v5931
    %v5935 = vadd.f32 %v5920, %v5928
    %v5936 = vadd.f32 %v5921, %v5932
    %vm5937 = vcmp.ge.f32.partialorder %v5935, 0.0
    %vm5938 = vcmp.ge.f32.partialorder %v5936, 0.0
    %v5939 = vmul.f32 %v5935, 0.01
    %v5940 = vmul.f32 %v5936, 0.01
    %v5941 = vsel %vm5937, %v5935, %v5939
    %v5942 = vsel %vm5938, %v5936, %v5940
    %v5944 = vlaneseq
    %v5945 = vshrl.u32 %v5944, 7
    %v5946 = vsub.s32 0, %v5945
    %v5947 = vrot.slane %v5922, %v5946
    %v5948 = vlaneseq
    %v5949 = vshrl.u32 %v5948, 7
    %v5950 = vsub.s32 1, %v5949
    %v5951 = vrot.slane %v5922, %v5950
    %v5954 = vmul.f32 %v5947, %v5941
    %v5955 = vmul.f32 %v5951, %v5942
    %v5956 = vld [vmem:[#allocation20] sm:$0x3]
    %v5958 = vlaneseq
    %v5959 = vshrl.u32 %v5958, 7
    %v5960 = vsub.s32 0, %v5959
    %v5961 = vrot.slane %v5956, %v5960
    %v5962 = vlaneseq
    %v5963 = vshrl.u32 %v5962, 7
    %v5964 = vsub.s32 1, %v5963
    %v5965 = vrot.slane %v5956, %v5964
    %v5968 = vadd.f32 %v5954, %v5961
    %v5969 = vadd.f32 %v5955, %v5965
    %v5972 = vcombine.low %v5968, %v5969
    %v5974 = vunpack.c.l.s4 1983009808
    %v5975 = vunpack.c.0.s8 %v5974
    %v5976 = vlaneseq
    %v5977 = vshrl.u32 %v5976, 7
    %v5978 = vsub.s32 %v5975, %v5977
    %v5979 = vrot.slane %v5972, %v5978
    %v5980 = vcombine.high %v5979, %v5979
    %v5983 = vrot.slane %v5979, 7
    %v5984 = vrot.slane %v5983, 2
    %v5985 = vrot.slane %v5980, 7
    %v5986 = vrot.slane %v5985, 2
    %v5989 = vmax.f32 %v5979, %v5984
    %v5990 = vmax.f32 %v5980, %v5986
    %v5991 = vld [vmem:[%s13] sm:$0xff]
    %v5992 = vld [vmem:[%s13 + $0x8] sm:$0xff]
    %v5993 = vld [vmem:[%s13 + $0x10] sm:$0xff]
    %v5994 = vld [vmem:[%s13 + $0x18] sm:$0xff]
    %v5995 = vld [vmem:[%s13 + $0x20] sm:$0xff]
    %v5996 = vld [vmem:[%s13 + $0x28] sm:$0xff]
    %v5997 = vld [vmem:[%s13 + $0x30] sm:$0xff]
    %v5998 = vld [vmem:[%s13 + $0x38] sm:$0xff]
    %v5999 = vld [vmem:[%s13 + $0x40] sm:$0xff]
    %v6000 = vld [vmem:[%s13 + $0x48] sm:$0xff]
    %v6001 = vld [vmem:[%s13 + $0x50] sm:$0xff]
    %v6002 = vld [vmem:[%s13 + $0x58] sm:$0xff]
    %v6003 = vld [vmem:[%s13 + $0x60] sm:$0xff]
    %v6004 = vld [vmem:[%s13 + $0x68] sm:$0xff]
    %v6005 = vld [vmem:[%s13 + $0x70] sm:$0xff]
    %v6006 = vld [vmem:[%s13 + $0x78] sm:$0xff]
    %v6007 = vld [vmem:[%s13 + $0x80] sm:$0xff]
    %v6008 = vld [vmem:[%s13 + $0x88] sm:$0xff]
    %v6009 = vld [vmem:[%s13 + $0x90] sm:$0xff]
    %v6010 = vld [vmem:[%s13 + $0x98] sm:$0xff]
    %v6011 = vld [vmem:[%s13 + $0xa0] sm:$0xff]
    %v6012 = vld [vmem:[%s13 + $0xa8] sm:$0xff]
    %v6013 = vld [vmem:[%s13 + $0xb0] sm:$0xff]
    %v6014 = vld [vmem:[%s13 + $0xb8] sm:$0xff]
    %v6015 = vld [vmem:[%s13 + $0xc0] sm:$0xff]
    %v6016 = vld [vmem:[%s13 + $0xc8] sm:$0xff]
    %v6017 = vld [vmem:[%s13 + $0xd0] sm:$0xff]
    %v6018 = vld [vmem:[%s13 + $0xd8] sm:$0xff]
    %v6019 = vld [vmem:[%s13 + $0xe0] sm:$0xff]
    %v6020 = vld [vmem:[%s13 + $0xe8] sm:$0xff]
    %v6021 = vld [vmem:[%s13 + $0xf0] sm:$0xff]
    %v6022 = vld [vmem:[%s13 + $0xf8] sm:$0xff]
    %v6025 = vlaneseq
    %v6026 = vshrl.u32 %v6025, 7
    %v6027 = vsub.s32 0, %v6026
    %v6028 = vrot.slane %v5989, %v6027
    %v6029 = vlaneseq
    %v6030 = vshrl.u32 %v6029, 7
    %v6031 = vsub.s32 2, %v6030
    %v6032 = vrot.slane %v5989, %v6031
    %v6033 = vlaneseq
    %v6034 = vshrl.u32 %v6033, 7
    %v6035 = vsub.s32 0, %v6034
    %v6036 = vrot.slane %v5990, %v6035
    %v6037 = vlaneseq
    %v6038 = vshrl.u32 %v6037, 7
    %v6039 = vsub.s32 2, %v6038
    %v6040 = vrot.slane %v5990, %v6039
    %vm6041 = vcmask 1041409
    %v6042 = vsel %vm6041, %v6036, %v6028
    %v6043 = vsel %vm6041, %v6040, %v6032
    %6046 = vmatprep.subr.mxu0 0.0
    %6047 = vmatpush1.msra.mxu0 %v5991
    %6048 = vmatprep.subr.mxu0 0.0
    %6049 = vmatpush1.msra.mxu0 %v5992
    %6050 = vmatprep.subr.mxu0 0.0
    %6051 = vmatpush1.msra.mxu0 %v5993
    %6052 = vmatprep.subr.mxu0 0.0
    %6053 = vmatpush1.msra.mxu0 %v5994
    %6054 = vmatprep.subr.mxu0 0.0
    %6055 = vmatpush1.msra.mxu0 %v5995
    %6056 = vmatprep.subr.mxu0 0.0
    %6057 = vmatpush1.msra.mxu0 %v5996
    %6058 = vmatprep.subr.mxu0 0.0
    %6059 = vmatpush1.msra.mxu0 %v5997
    %6060 = vmatprep.subr.mxu0 0.0
    %6061 = vmatpush1.msra.mxu0 %v5998
    %6062 = vmatprep.subr.mxu0 0.0
    %6063 = vmatpush1.msra.mxu0 %v5999
    %6064 = vmatprep.subr.mxu0 0.0
    %6065 = vmatpush1.msra.mxu0 %v6000
    %6066 = vmatprep.subr.mxu0 0.0
    %6067 = vmatpush1.msra.mxu0 %v6001
    %6068 = vmatprep.subr.mxu0 0.0
    %6069 = vmatpush1.msra.mxu0 %v6002
    %6070 = vmatprep.subr.mxu0 0.0
    %6071 = vmatpush1.msra.mxu0 %v6003
    %6072 = vmatprep.subr.mxu0 0.0
    %6073 = vmatpush1.msra.mxu0 %v6004
    %6074 = vmatprep.subr.mxu0 0.0
    %6075 = vmatpush1.msra.mxu0 %v6005
    %6076 = vmatprep.subr.mxu0 0.0
    %6077 = vmatpush1.msra.mxu0 %v6006
    %6078 = vmatprep.subr.mxu0 0.0
    %6079 = vmatpush1.msra.mxu0 %v6007
    %6080 = vmatprep.subr.mxu0 0.0
    %6081 = vmatpush1.msra.mxu0 %v6008
    %6082 = vmatprep.subr.mxu0 0.0
    %6083 = vmatpush1.msra.mxu0 %v6009
    %6084 = vmatprep.subr.mxu0 0.0
    %6085 = vmatpush1.msra.mxu0 %v6010
    %6086 = vmatprep.subr.mxu0 0.0
    %6087 = vmatpush1.msra.mxu0 %v6011
    %6088 = vmatprep.subr.mxu0 0.0
    %6089 = vmatpush1.msra.mxu0 %v6012
    %6090 = vmatprep.subr.mxu0 0.0
    %6091 = vmatpush1.msra.mxu0 %v6013
    %6092 = vmatprep.subr.mxu0 0.0
    %6093 = vmatpush1.msra.mxu0 %v6014
    %6094 = vmatprep.subr.mxu0 0.0
    %6095 = vmatpush1.msra.mxu0 %v6015
    %6096 = vmatprep.subr.mxu0 0.0
    %6097 = vmatpush1.msra.mxu0 %v6016
    %6098 = vmatprep.subr.mxu0 0.0
    %6099 = vmatpush1.msra.mxu0 %v6017
    %6100 = vmatprep.subr.mxu0 0.0
    %6101 = vmatpush1.msra.mxu0 %v6018
    %6102 = vmatprep.subr.mxu0 0.0
    %6103 = vmatpush1.msra.mxu0 %v6019
    %6104 = vmatprep.subr.mxu0 0.0
    %6105 = vmatpush1.msra.mxu0 %v6020
    %6106 = vmatprep.subr.mxu0 0.0
    %6107 = vmatpush1.msra.mxu0 %v6021
    %6108 = vmatprep.subr.mxu0 0.0
    %6109 = vmatpush1.msra.mxu0 %v6022
    %6110 = vmatprep.mubr.f32.mxu0 %v6043
    %6111 = vmatmul.mubr.f32.gmra.mrb[0].mxu0 %v6042
    %v6112 = vpop.f32.mrb[0].mxu0
    %v6113 = vadd.f32 0.0, %v6112
    %v6114 = vpop.f32.mrb[0].mxu0
    %6115 = vdwg.mxu0
    %v6116 = vld [vmem:[#allocation22] sm:$0x1]
    %v6118 = vlaneseq
    %v6119 = vshrl.u32 %v6118, 7
    %v6120 = vsub.s32 0, %v6119
    %v6121 = vrot.slane %v6116, %v6120
    %v6123 = vmul.f32 %v6121, %v6113
    %v6124 = vld [vmem:[#allocation23] sm:$0x1]
    %v6126 = vlaneseq
    %v6127 = vshrl.u32 %v6126, 7
    %v6128 = vsub.s32 0, %v6127
    %v6129 = vrot.slane %v6124, %v6128
    %v6131 = vadd.f32 %v6123, %v6129
    %v6132 = vld [vmem:[%s16] sm:$0xff]
    %v6133 = vld [vmem:[%s16 + $0x8] sm:$0xff]
    %v6134 = vld [vmem:[%s16 + $0x10] sm:$0xff]
    %v6135 = vld [vmem:[%s16 + $0x18] sm:$0xff]
    %v6136 = vld [vmem:[%s16 + $0x20] sm:$0xff]
    %v6137 = vld [vmem:[%s16 + $0x28] sm:$0xff]
    %v6138 = vld [vmem:[%s16 + $0x30] sm:$0xff]
    %v6139 = vld [vmem:[%s16 + $0x38] sm:$0xff]
    %v6140 = vld [vmem:[#allocation25] sm:$0x1]
    %v6142 = vlaneseq
    %v6143 = vshrl.u32 %v6142, 7
    %v6144 = vsub.s32 0, %v6143
    %v6145 = vrot.slane %v6140, %v6144
    %vm6147 = vcmask 523264
    %v6149 = vsel %vm6147, %v6131, 0
    %6151 = vmatprep.subr.mxu0 0.0
    %6152 = vmatpush1.msra.mxu0 %v6132
    %6153 = vmatprep.subr.mxu0 0.0
    %6154 = vmatpush1.msra.mxu0 %v6133
    %6155 = vmatprep.subr.mxu0 0.0
    %6156 = vmatpush1.msra.mxu0 %v6134
    %6157 = vmatprep.subr.mxu0 0.0
    %6158 = vmatpush1.msra.mxu0 %v6135
    %6159 = vmatprep.subr.mxu0 0.0
    %6160 = vmatpush1.msra.mxu0 %v6136
    %6161 = vmatprep.subr.mxu0 0.0
    %6162 = vmatpush1.msra.mxu0 %v6137
    %6163 = vmatprep.subr.mxu0 0.0
    %6164 = vmatpush1.msra.mxu0 %v6138
    %6165 = vmatprep.subr.mxu0 0.0
    %6166 = vmatpush1.msra.mxu0 %v6139
    %6167 = vmatprep.subr.mxu0 0.0
    %6168 = vmatpush1.msra.mxu0 0.0
    %6169 = vmatprep.subr.mxu0 0.0
    %6170 = vmatpush1.msra.mxu0 0.0
    %6171 = vmatprep.subr.mxu0 0.0
    %6172 = vmatpush1.msra.mxu0 0.0
    %6173 = vmatprep.subr.mxu0 0.0
    %6174 = vmatpush1.msra.mxu0 0.0
    %6175 = vmatprep.subr.mxu0 0.0
    %6176 = vmatpush1.msra.mxu0 0.0
    %6177 = vmatprep.subr.mxu0 0.0
    %6178 = vmatpush1.msra.mxu0 0.0
    %6179 = vmatprep.subr.mxu0 0.0
    %6180 = vmatpush1.msra.mxu0 0.0
    %6181 = vmatprep.subr.mxu0 0.0
    %6182 = vmatpush1.msra.mxu0 0.0
    %6183 = vmatprep.subr.mxu0 0.0
    %6184 = vmatpush1.msra.mxu0 0.0
    %6185 = vmatprep.subr.mxu0 0.0
    %6186 = vmatpush1.msra.mxu0 0.0
    %6187 = vmatprep.subr.mxu0 0.0
    %6188 = vmatpush1.msra.mxu0 0.0
    %6189 = vmatprep.subr.mxu0 0.0
    %6190 = vmatpush1.msra.mxu0 0.0
    %6191 = vmatprep.subr.mxu0 0.0
    %6192 = vmatpush1.msra.mxu0 0.0
    %6193 = vmatprep.subr.mxu0 0.0
    %6194 = vmatpush1.msra.mxu0 0.0
    %6195 = vmatprep.subr.mxu0 0.0
    %6196 = vmatpush1.msra.mxu0 0.0
    %6197 = vmatprep.subr.mxu0 0.0
    %6198 = vmatpush1.msra.mxu0 0.0
    %6199 = vmatprep.subr.mxu0 0.0
    %6200 = vmatpush1.msra.mxu0 0.0
    %6201 = vmatprep.subr.mxu0 0.0
    %6202 = vmatpush1.msra.mxu0 0.0
    %6203 = vmatprep.subr.mxu0 0.0
    %6204 = vmatpush1.msra.mxu0 0.0
    %6205 = vmatprep.subr.mxu0 0.0
    %6206 = vmatpush1.msra.mxu0 0.0
    %6207 = vmatprep.subr.mxu0 0.0
    %6208 = vmatpush1.msra.mxu0 0.0
    %6209 = vmatprep.subr.mxu0 0.0
    %6210 = vmatpush1.msra.mxu0 0.0
    %6211 = vmatprep.subr.mxu0 0.0
    %6212 = vmatpush1.msra.mxu0 0.0
    %6213 = vmatprep.subr.mxu0 0.0
    %6214 = vmatpush1.msra.mxu0 0.0
    %6215 = vmatprep.mubr.f32.mxu0 0.0
    %6216 = vmatmul.mubr.f32.gmra.mrb[0].mxu0 %v6149
    %v6217 = vpop.f32.mrb[0].mxu0
    %v6218 = vadd.f32 %v6145, %v6217
    %v6219 = vpop.f32.mrb[0].mxu0
    %6220 = vdwg.mxu0
    %v6221 = vmax.f32 %v6218, 0.0
    %v6222 = vand.u32 2147483647, %v6218
    %v6223 = vsub.f32 0.0, %v6222
    %v6224 = vmul.f32 %v6223, 1.442695
    %v6225 = vpow.pop %v6224
    %v6226 = vadd.f32 %v6225, 1.0
    %v6227 = vlog2.pop %v6226
    %v6228 = vmul.f32 %v6227, 0.6931472
    %v6229 = vmul.f32 -0.5, %v6225
    %v6230 = vadd.f32 %v6229, 1.0
    %v6231 = vmul.f32 %v6230, %v6225
    %v6232 = vand.u32 2147483647, %v6225
    %vm6233 = vcmp.lt.f32.partialorder %v6232, 0.0004427343
    %v6234 = vsel %vm6233, %v6231, %v6228
    %v6235 = vadd.f32 %v6221, %v6234
    %v6238 = vunpack.c.l.s4 1966171168
    %v6239 = vunpack.c.0.s8 %v6238
    %v6240 = vlaneseq
    %v6241 = vshrl.u32 %v6240, 7
    %v6242 = vsub.s32 %v6239, %v6241
    %v6243 = vrot.slane %v6235, %v6242
    %v6244 = vcombine.high %v6243, %v6243
    %v6246 = vunpack.c.l.s4 1966171168
    %v6247 = vunpack.c.0.s8 %v6246
    %v6248 = vlaneseq
    %v6249 = vshrl.u32 %v6248, 7
    %v6250 = vsub.s32 %v6247, %v6249
    %v6251 = vrot.slane %v6243, %v6250
    %v6253 = vunpack.c.l.s4 1966171168
    %v6254 = vunpack.c.0.s8 %v6253
    %v6255 = vlaneseq
    %v6256 = vshrl.u32 %v6255, 7
    %v6257 = vsub.s32 %v6254, %v6256
    %v6258 = vrot.slane %v6244, %v6257
    %vm6261 = vcmask 24576
    %6262 = vst.msk [vmem:[#allocation26] sm:$0x1] %vm6261, %v6251
    %6263 = vst.msk [vmem:[#allocation26 + $0x1] sm:$0x1] %vm6261, %v6258
    // Predicated region
    $region134: #{cnnnet_forward.1} parent=1 // pred_check
      _
    $region135: #{cnnnet_forward.1} parent=1 // pred_check_branch
      %6265 = sbr.rel (0) target = $region137
    $region136: #{cnnnet_forward.1} parent=1 // pred_region
      %s6267 = ssub.s32 32, 32
      %6268 = vsyncadd [#allocation4], %s6267
      %s6269 = sshll.u32 [#allocation26], 4
      %s6270 = int_to_ptr.vmem [resolvable:$true] %s6269
      %6275 = dma.vmem_to_hbm [thread:$0]  %s6270, 32, %s18, [#allocation4], 16, 16, 1
    $region137: #{cnnnet_forward.1} parent=1 // pred_fallthru
      _
    // Predicated region
    $region138: #{cnnnet_forward.1} parent=1 // pred_check
      _
    $region139: #{cnnnet_forward.1} parent=1 // pred_check_branch
      %6277 = sbr.rel (0) target = $region141
    $region140: #{cnnnet_forward.1} parent=1 // pred_region
      %6278 = dma.done [#allocation4], 32
    $region141: #{cnnnet_forward.1} parent=1 // pred_fallthru
      _
    %6279 = vsyncpa [#allocation3], 1
    %6280 = vsyncpa [#allocation6], 1
    %6281 = vsyncpa [#allocation9], 1
    %6282 = vsyncpa [#allocation12], 1
    %6283 = vsyncpa [#allocation15], 1
    %6284 = vsyncpa [#allocation18], 1
    %6285 = vsyncpa [#allocation21], 1
    %6286 = vsyncpa [#allocation24], 1
    %6287 = vsyncpa [#allocation4], 1

</llo_original>
